<compile_context>
chip_gen: v5e
topology: v5e:2x2
jax: 0.10.0
libtpu: 0.0.40
codegen_flags: <defaults>
</compile_context>

<pallas_src>
import jax
import jax.numpy as jnp
from jax.experimental import pallas as pl
from jax.experimental.pallas import tpu as pltpu


# ----------------------------- Pallas kernels -------------------------------

def fused_gnn_kernel(x_ref, adj_ref, member_ref,
                     w0_ref, asrc0_ref, adst0_ref, b0_ref,
                     w1_ref, asrc1_ref, adst1_ref, b1_ref,
                     w2_ref, asrc2_ref, adst2_ref, b2_ref,
                     w3_ref, asrc3_ref, adst3_ref, b3_ref,
                     gamma_ref, beta_ref, wl1_ref, bl1_ref,
                     hidden_ref):
    """Whole GAT/BN/pool/lin1 stack on resident VMEM tiles.

    x: [N, Fin], adj: [N, N] (adj[dst, src] = 1 incl. self-loops), member: [G, N] one-hot,
    per-layer w: [Fin_l, C], asrc/adst/b: [1, C], gamma/beta: [1, C],
    wl1: [2C, 4C], bl1: [1, 4C], hidden out: [G, 4C] (bf16).
    """
    neg = jnp.float32(-1e30)
    # Additive attention mask, computed once and reused by all 4 GAT layers.
    mask_bias = jnp.where(adj_ref[...] > 0.5, jnp.float32(0.0), neg)          # [N, N]

    def gat_tanh(h_in, w, a_src, a_dst, b):
        h = jnp.dot(h_in, w, preferred_element_type=jnp.float32)              # [N, C]
        s_src = jnp.sum(h * a_src, axis=-1, keepdims=True)                    # [N, 1]
        s_dst = jnp.sum(h * a_dst, axis=-1, keepdims=True)                    # [N, 1]
        e = s_dst + jnp.transpose(s_src)                                      # e[i, j] = dst_i + src_j
        e = jnp.where(e > 0, e, 0.2 * e)                                      # LeakyReLU(0.2)
        e = e + mask_bias                                                     # mask non-edges
        e = e - jnp.max(e, axis=-1, keepdims=True)                            # row max is finite (self-loops)
        p = jnp.exp(e)                                                        # masked entries underflow to 0
        alpha = p / jnp.sum(p, axis=-1, keepdims=True)                        # row softmax over in-neighbours
        return jnp.tanh(jnp.dot(alpha, h, preferred_element_type=jnp.float32) + b)

    def batchnorm(h):
        # Shared (gamma, beta) — faithful to the single self.batchnorm module reused 3x.
        mean = jnp.mean(h, axis=0, keepdims=True)
        var = jnp.mean(jnp.square(h - mean), axis=0, keepdims=True)
        return (h - mean) * jax.lax.rsqrt(var + 1e-5) * gamma_ref[...] + beta_ref[...]

    # TODO(synk): F.dropout(p=0.2, training=True) after each tanh is stochastic; identity here.
    h = gat_tanh(x_ref[...], w0_ref[...], asrc0_ref[...], adst0_ref[...], b0_ref[...])
    h = batchnorm(h)
    h = gat_tanh(h, w1_ref[...], asrc1_ref[...], adst1_ref[...], b1_ref[...])
    h = batchnorm(h)
    h = gat_tanh(h, w2_ref[...], asrc2_ref[...], adst2_ref[...], b2_ref[...])
    h = batchnorm(h)
    h = gat_tanh(h, w3_ref[...], asrc3_ref[...], adst3_ref[...], b3_ref[...])

    # Global pooling: [gmp(h) || gap(h)] per graph, fully vectorized (no per-graph loop).
    m = member_ref[...]                                                       # [G, N]
    cnt = jnp.sum(m, axis=1, keepdims=True)                                   # [G, 1]
    mean = jnp.dot(m, h, preferred_element_type=jnp.float32) / cnt            # [G, C]
    mx = jnp.max(jnp.where(m[:, :, None] > 0.5, h[None, :, :], neg), axis=1)  # [G, C]
    pooled = jnp.concatenate([mx, mean], axis=-1)                             # [G, 2C]

    # lin1: [G, 2C] -> [G, 4C]; emit bf16 so the big HBM-bound matmul gets bf16 LHS.
    hidden = jnp.dot(pooled, wl1_ref[...], preferred_element_type=jnp.float32) + bl1_ref[...]
    hidden_ref[...] = hidden.astype(hidden_ref.dtype)


def big_linear_kernel(x_ref, w_ref, b_ref, o_ref):
    # x: [M, K] bf16, w block: [K, TN] bf16, b block: [1, TN] f32, o block: [M, TN] f32.
    acc = jnp.dot(x_ref[...], w_ref[...], preferred_element_type=jnp.float32)
    o_ref[...] = (acc + b_ref[...]).astype(o_ref.dtype)


# ----------------------------- Wrappers --------------------------------------

def fused_gnn(params, x, adj, member):
    G = member.shape[0]
    out_dim = params["w_lin1"].shape[1]
    return pl.pallas_call(
        fused_gnn_kernel,
        out_shape=jax.ShapeDtypeStruct((G, out_dim), jnp.bfloat16),
    )(x, adj, member,
      params["w0"], params["asrc0"], params["adst0"], params["b0"],
      params["w1"], params["asrc1"], params["adst1"], params["b1"],
      params["w2"], params["asrc2"], params["adst2"], params["b2"],
      params["w3"], params["asrc3"], params["adst3"], params["b3"],
      params["bn_gamma"], params["bn_beta"], params["w_lin1"], params["b_lin1"])


def big_linear(x_bf16, w_bf16, b_f32, tn=4096):
    # HBM-bandwidth-bound weight stream: bf16 weights, large output-column tiles.
    # tn=4096 bf16 -> 2 MiB/tile, 4 MiB double-buffered: fits v5e/v6e/v7x default scoped VMEM.
    M, K = x_bf16.shape
    Nout = w_bf16.shape[1]
    tn = min(tn, Nout)
    grid = (pl.cdiv(Nout, tn),)
    flops = 2 * M * K * Nout
    bytes_accessed = (M * K * 2) + (K * Nout * 2) + (Nout * 4) + (M * Nout * 4)
    return pl.pallas_call(
        big_linear_kernel,
        out_shape=jax.ShapeDtypeStruct((M, Nout), jnp.float32),
        grid=grid,
        in_specs=[
            pl.BlockSpec((M, K), lambda j: (0, 0)),
            pl.BlockSpec((K, tn), lambda j: (0, j)),
            pl.BlockSpec((1, tn), lambda j: (0, j)),
        ],
        out_specs=pl.BlockSpec((M, tn), lambda j: (0, j)),
        compiler_params=pltpu.CompilerParams(
            dimension_semantics=("parallel",),        # lets v7x split the column grid across 2 TCs
            vmem_limit_bytes=32 * 1024 * 1024,
        ),
        cost_estimate=pl.CostEstimate(
            flops=flops, transcendentals=0, bytes_accessed=bytes_accessed),
    )(x_bf16, w_bf16, b_f32)


# ----------------------------- Parameter init --------------------------------

def glorot(key, shape):
    fan_in, fan_out = shape[-2], shape[-1]
    s = (6.0 / (fan_in + fan_out)) ** 0.5
    return jax.random.uniform(key, shape, jnp.float32, -s, s)


def init_params(key, emb=64, in_dim=8, n_out=19110 * 2):
    ks = jax.random.split(key, 16)
    p = {}
    dims = [in_dim, emb, emb, emb]
    for li, din in enumerate(dims):
        p[f"w{li}"] = glorot(ks[li], (din, emb))
        p[f"asrc{li}"] = glorot(ks[4 + li], (1, emb))
        p[f"adst{li}"] = glorot(ks[8 + li], (1, emb))
        p[f"b{li}"] = jnp.zeros((1, emb), jnp.float32)
    p["bn_gamma"] = jnp.ones((1, emb), jnp.float32)
    p["bn_beta"] = jnp.zeros((1, emb), jnp.float32)
    p["w_lin1"] = glorot(ks[12], (emb * 2, emb * 4))
    p["b_lin1"] = jnp.zeros((1, emb * 4), jnp.float32)
    # Final layer weight kept in bf16: its HBM stream dominates end-to-end time.
    p["w_out"] = glorot(ks[13], (emb * 4, n_out)).astype(jnp.bfloat16)
    p["b_out"] = jnp.zeros((1, n_out), jnp.float32)
    return p


# ----------------------------- Forward ----------------------------------------

@jax.jit
def gnn_plus_forward(params, x, adj, member):
    hidden = fused_gnn(params, x, adj, member)                     # [G, 256] bf16 (one kernel)
    out = big_linear(hidden, params["w_out"], params["b_out"])     # [G, 38220] f32 (gridded kernel)
    return out


# ----------------------------- Main -------------------------------------------

if __name__ == "__main__":
    key = jax.random.PRNGKey(0)
    k_x, k_e, k_p = jax.random.split(key, 3)

    N, FIN, G = 64, 8, 2                       # 64 nodes, 8 input features, 2 graphs
    NODES_PER_G = N // G

    # Node features (data.x)
    x = jax.random.normal(k_x, (N, FIN), jnp.float32)

    # Edge index: bidirectional ring inside each graph (PyG [2, E] convention: [src, dst])
    src_list, dst_list = [], []
    for g in range(G):
        base = g * NODES_PER_G
        for i in range(NODES_PER_G):
            j = (i + 1) % NODES_PER_G
            src_list += [base + i, base + j]
            dst_list += [base + j, base + i]
    edge_index = jnp.array([src_list, dst_list], dtype=jnp.int32)
    edge_attr = jax.random.normal(k_e, (edge_index.shape[1], 4), jnp.float32)  # unused (edge_dim=None)

    # Batch assignment (data.batch)
    batch_index = jnp.repeat(jnp.arange(G, dtype=jnp.int32), NODES_PER_G)

    # Dense adjacency: adj[dst, src] = 1, plus self-loops (GATConv add_self_loops=True)
    adj = jnp.zeros((N, N), jnp.float32).at[edge_index[1], edge_index[0]].set(1.0)
    adj = jnp.maximum(adj, jnp.eye(N, dtype=jnp.float32))

    # One-hot graph membership for pooling: [G, N]
    member = (batch_index[None, :] == jnp.arange(G)[:, None]).astype(jnp.float32)

    params = init_params(k_p)

    out = gnn_plus_forward(params, x, adj, member)
    out = jax.block_until_ready(out)

    assert out.shape == (G, 19110 * 2), out.shape
    assert bool(jnp.all(jnp.isfinite(out)))
    print("KERNEL_OK")
</pallas_src>

<mosaic_0001>
module attributes {stable_mosaic.version = 11 : i64} {
  func.func @fused_gnn_kernel(%arg0: memref<64x8xf32, #tpu.memory_space<vmem>>, %arg1: memref<64x64xf32, #tpu.memory_space<vmem>>, %arg2: memref<2x64xf32, #tpu.memory_space<vmem>>, %arg3: memref<8x64xf32, #tpu.memory_space<vmem>>, %arg4: memref<1x64xf32, #tpu.memory_space<vmem>>, %arg5: memref<1x64xf32, #tpu.memory_space<vmem>>, %arg6: memref<1x64xf32, #tpu.memory_space<vmem>>, %arg7: memref<64x64xf32, #tpu.memory_space<vmem>>, %arg8: memref<1x64xf32, #tpu.memory_space<vmem>>, %arg9: memref<1x64xf32, #tpu.memory_space<vmem>>, %arg10: memref<1x64xf32, #tpu.memory_space<vmem>>, %arg11: memref<64x64xf32, #tpu.memory_space<vmem>>, %arg12: memref<1x64xf32, #tpu.memory_space<vmem>>, %arg13: memref<1x64xf32, #tpu.memory_space<vmem>>, %arg14: memref<1x64xf32, #tpu.memory_space<vmem>>, %arg15: memref<64x64xf32, #tpu.memory_space<vmem>>, %arg16: memref<1x64xf32, #tpu.memory_space<vmem>>, %arg17: memref<1x64xf32, #tpu.memory_space<vmem>>, %arg18: memref<1x64xf32, #tpu.memory_space<vmem>>, %arg19: memref<1x64xf32, #tpu.memory_space<vmem>>, %arg20: memref<1x64xf32, #tpu.memory_space<vmem>>, %arg21: memref<128x256xf32, #tpu.memory_space<vmem>>, %arg22: memref<1x256xf32, #tpu.memory_space<vmem>>, %arg23: memref<2x256xbf16, #tpu.memory_space<vmem>>) attributes {dimension_semantics = [], scalar_prefetch = 0 : i64, scratch_operands = 0 : i64, tpu.core_type = #tpu.core_type<tc>} {
    %c0 = arith.constant 0 : index
    %c0_0 = arith.constant 0 : index
    %0 = vector.load %arg1[%c0, %c0_0] : memref<64x64xf32, #tpu.memory_space<vmem>>, vector<64x64xf32>
    %cst = arith.constant 5.000000e-01 : f32
    %1 = vector.broadcast %cst : f32 to vector<64x64xf32>
    %2 = arith.cmpf ogt, %0, %1 : vector<64x64xf32>
    %cst_1 = arith.constant 0.000000e+00 : f32
    %cst_2 = arith.constant -1.000000e+30 : f32
    %3 = vector.broadcast %cst_1 : f32 to vector<64x64xf32>
    %4 = vector.broadcast %cst_2 : f32 to vector<64x64xf32>
    %5 = arith.select %2, %3, %4 : vector<64x64xi1>, vector<64x64xf32>
    %c0_3 = arith.constant 0 : index
    %c0_4 = arith.constant 0 : index
    %6 = vector.load %arg0[%c0_3, %c0_4] : memref<64x8xf32, #tpu.memory_space<vmem>>, vector<64x8xf32>
    %c0_5 = arith.constant 0 : index
    %c0_6 = arith.constant 0 : index
    %7 = vector.load %arg3[%c0_5, %c0_6] : memref<8x64xf32, #tpu.memory_space<vmem>>, vector<8x64xf32>
    %c0_7 = arith.constant 0 : index
    %c0_8 = arith.constant 0 : index
    %8 = vector.load %arg4[%c0_7, %c0_8] : memref<1x64xf32, #tpu.memory_space<vmem>>, vector<1x64xf32>
    %c0_9 = arith.constant 0 : index
    %c0_10 = arith.constant 0 : index
    %9 = vector.load %arg5[%c0_9, %c0_10] : memref<1x64xf32, #tpu.memory_space<vmem>>, vector<1x64xf32>
    %c0_11 = arith.constant 0 : index
    %c0_12 = arith.constant 0 : index
    %10 = vector.load %arg6[%c0_11, %c0_12] : memref<1x64xf32, #tpu.memory_space<vmem>>, vector<1x64xf32>
    %cst_13 = arith.constant dense<0.000000e+00> : vector<64x64xf32>
    %11 = tpu.matmul %6, %7, %cst_13 {dimension_numbers = #tpu.dot_dimension_numbers<[1], [0], [0], [1], [0, 0, 1, 1], [], []>} : vector<64x8xf32>, vector<8x64xf32>, vector<64x64xf32> -> vector<64x64xf32>
    %12 = vector.broadcast %8 : vector<1x64xf32> to vector<64x64xf32>
    %13 = arith.mulf %11, %12 : vector<64x64xf32>
    %cst_14 = arith.constant dense<0.000000e+00> : vector<64xf32>
    %14 = vector.multi_reduction <add>, %13, %cst_14 [1] : vector<64x64xf32> to vector<64xf32>
    %15 = vector.shape_cast %14 : vector<64xf32> to vector<64x1xf32>
    %16 = vector.broadcast %9 : vector<1x64xf32> to vector<64x64xf32>
    %17 = arith.mulf %11, %16 : vector<64x64xf32>
    %cst_15 = arith.constant dense<0.000000e+00> : vector<64xf32>
    %18 = vector.multi_reduction <add>, %17, %cst_15 [1] : vector<64x64xf32> to vector<64xf32>
    %19 = vector.shape_cast %18 : vector<64xf32> to vector<64x1xf32>
    %20 = tpu.transpose %15, [1, 0] : vector<64x1xf32> -> vector<1x64xf32>
    %21 = vector.broadcast %19 : vector<64x1xf32> to vector<64x64xf32>
    %22 = vector.broadcast %20 : vector<1x64xf32> to vector<64x64xf32>
    %23 = arith.addf %21, %22 : vector<64x64xf32>
    %cst_16 = arith.constant 0.000000e+00 : f32
    %24 = vector.broadcast %cst_16 : f32 to vector<64x64xf32>
    %25 = arith.cmpf ogt, %23, %24 : vector<64x64xf32>
    %cst_17 = arith.constant 2.000000e-01 : f32
    %26 = vector.broadcast %cst_17 : f32 to vector<64x64xf32>
    %27 = arith.mulf %26, %23 : vector<64x64xf32>
    %28 = arith.select %25, %23, %27 : vector<64x64xi1>, vector<64x64xf32>
    %29 = arith.addf %28, %5 : vector<64x64xf32>
    %cst_18 = arith.constant dense<0xFF800000> : vector<64xf32>
    %30 = vector.multi_reduction <maximumf>, %29, %cst_18 [1] : vector<64x64xf32> to vector<64xf32>
    %31 = vector.shape_cast %30 : vector<64xf32> to vector<64x1xf32>
    %32 = vector.broadcast %31 : vector<64x1xf32> to vector<64x64xf32>
    %33 = arith.subf %29, %32 : vector<64x64xf32>
    %34 = math.exp %33 : vector<64x64xf32>
    %cst_19 = arith.constant dense<0.000000e+00> : vector<64xf32>
    %35 = vector.multi_reduction <add>, %34, %cst_19 [1] : vector<64x64xf32> to vector<64xf32>
    %36 = vector.shape_cast %35 : vector<64xf32> to vector<64x1xf32>
    %37 = vector.broadcast %36 : vector<64x1xf32> to vector<64x64xf32>
    %38 = arith.divf %34, %37 : vector<64x64xf32>
    %cst_20 = arith.constant dense<0.000000e+00> : vector<64x64xf32>
    %39 = tpu.matmul %38, %11, %cst_20 {dimension_numbers = #tpu.dot_dimension_numbers<[1], [0], [0], [1], [0, 0, 1, 1], [], []>} : vector<64x64xf32>, vector<64x64xf32>, vector<64x64xf32> -> vector<64x64xf32>
    %40 = vector.broadcast %10 : vector<1x64xf32> to vector<64x64xf32>
    %41 = arith.addf %39, %40 : vector<64x64xf32>
    %42 = math.tanh %41 : vector<64x64xf32>
    %cst_21 = arith.constant dense<0.000000e+00> : vector<64xf32>
    %43 = vector.multi_reduction <add>, %42, %cst_21 [0] : vector<64x64xf32> to vector<64xf32>
    %44 = vector.shape_cast %43 : vector<64xf32> to vector<1x64xf32>
    %cst_22 = arith.constant 6.400000e+01 : f32
    %45 = vector.broadcast %cst_22 : f32 to vector<1x64xf32>
    %46 = arith.divf %44, %45 : vector<1x64xf32>
    %47 = vector.broadcast %46 : vector<1x64xf32> to vector<64x64xf32>
    %48 = arith.subf %42, %47 : vector<64x64xf32>
    %49 = arith.mulf %48, %48 : vector<64x64xf32>
    %cst_23 = arith.constant dense<0.000000e+00> : vector<64xf32>
    %50 = vector.multi_reduction <add>, %49, %cst_23 [0] : vector<64x64xf32> to vector<64xf32>
    %51 = vector.shape_cast %50 : vector<64xf32> to vector<1x64xf32>
    %cst_24 = arith.constant 6.400000e+01 : f32
    %52 = vector.broadcast %cst_24 : f32 to vector<1x64xf32>
    %53 = arith.divf %51, %52 : vector<1x64xf32>
    %54 = vector.broadcast %46 : vector<1x64xf32> to vector<64x64xf32>
    %55 = arith.subf %42, %54 : vector<64x64xf32>
    %cst_25 = arith.constant 9.99999974E-6 : f32
    %56 = vector.broadcast %cst_25 : f32 to vector<1x64xf32>
    %57 = arith.addf %53, %56 : vector<1x64xf32>
    %58 = math.rsqrt %57 : vector<1x64xf32>
    %59 = vector.broadcast %58 : vector<1x64xf32> to vector<64x64xf32>
    %60 = arith.mulf %55, %59 : vector<64x64xf32>
    %c0_26 = arith.constant 0 : index
    %c0_27 = arith.constant 0 : index
    %61 = vector.load %arg19[%c0_26, %c0_27] : memref<1x64xf32, #tpu.memory_space<vmem>>, vector<1x64xf32>
    %62 = vector.broadcast %61 : vector<1x64xf32> to vector<64x64xf32>
    %63 = arith.mulf %60, %62 : vector<64x64xf32>
    %c0_28 = arith.constant 0 : index
    %c0_29 = arith.constant 0 : index
    %64 = vector.load %arg20[%c0_28, %c0_29] : memref<1x64xf32, #tpu.memory_space<vmem>>, vector<1x64xf32>
    %65 = vector.broadcast %64 : vector<1x64xf32> to vector<64x64xf32>
    %66 = arith.addf %63, %65 : vector<64x64xf32>
    %c0_30 = arith.constant 0 : index
    %c0_31 = arith.constant 0 : index
    %67 = vector.load %arg7[%c0_30, %c0_31] : memref<64x64xf32, #tpu.memory_space<vmem>>, vector<64x64xf32>
    %c0_32 = arith.constant 0 : index
    %c0_33 = arith.constant 0 : index
    %68 = vector.load %arg8[%c0_32, %c0_33] : memref<1x64xf32, #tpu.memory_space<vmem>>, vector<1x64xf32>
    %c0_34 = arith.constant 0 : index
    %c0_35 = arith.constant 0 : index
    %69 = vector.load %arg9[%c0_34, %c0_35] : memref<1x64xf32, #tpu.memory_space<vmem>>, vector<1x64xf32>
    %c0_36 = arith.constant 0 : index
    %c0_37 = arith.constant 0 : index
    %70 = vector.load %arg10[%c0_36, %c0_37] : memref<1x64xf32, #tpu.memory_space<vmem>>, vector<1x64xf32>
    %cst_38 = arith.constant dense<0.000000e+00> : vector<64x64xf32>
    %71 = tpu.matmul %66, %67, %cst_38 {dimension_numbers = #tpu.dot_dimension_numbers<[1], [0], [0], [1], [0, 0, 1, 1], [], []>} : vector<64x64xf32>, vector<64x64xf32>, vector<64x64xf32> -> vector<64x64xf32>
    %72 = vector.broadcast %68 : vector<1x64xf32> to vector<64x64xf32>
    %73 = arith.mulf %71, %72 : vector<64x64xf32>
    %cst_39 = arith.constant dense<0.000000e+00> : vector<64xf32>
    %74 = vector.multi_reduction <add>, %73, %cst_39 [1] : vector<64x64xf32> to vector<64xf32>
    %75 = vector.shape_cast %74 : vector<64xf32> to vector<64x1xf32>
    %76 = vector.broadcast %69 : vector<1x64xf32> to vector<64x64xf32>
    %77 = arith.mulf %71, %76 : vector<64x64xf32>
    %cst_40 = arith.constant dense<0.000000e+00> : vector<64xf32>
    %78 = vector.multi_reduction <add>, %77, %cst_40 [1] : vector<64x64xf32> to vector<64xf32>
    %79 = vector.shape_cast %78 : vector<64xf32> to vector<64x1xf32>
    %80 = tpu.transpose %75, [1, 0] : vector<64x1xf32> -> vector<1x64xf32>
    %81 = vector.broadcast %79 : vector<64x1xf32> to vector<64x64xf32>
    %82 = vector.broadcast %80 : vector<1x64xf32> to vector<64x64xf32>
    %83 = arith.addf %81, %82 : vector<64x64xf32>
    %cst_41 = arith.constant 0.000000e+00 : f32
    %84 = vector.broadcast %cst_41 : f32 to vector<64x64xf32>
    %85 = arith.cmpf ogt, %83, %84 : vector<64x64xf32>
    %cst_42 = arith.constant 2.000000e-01 : f32
    %86 = vector.broadcast %cst_42 : f32 to vector<64x64xf32>
    %87 = arith.mulf %86, %83 : vector<64x64xf32>
    %88 = arith.select %85, %83, %87 : vector<64x64xi1>, vector<64x64xf32>
    %89 = arith.addf %88, %5 : vector<64x64xf32>
    %cst_43 = arith.constant dense<0xFF800000> : vector<64xf32>
    %90 = vector.multi_reduction <maximumf>, %89, %cst_43 [1] : vector<64x64xf32> to vector<64xf32>
    %91 = vector.shape_cast %90 : vector<64xf32> to vector<64x1xf32>
    %92 = vector.broadcast %91 : vector<64x1xf32> to vector<64x64xf32>
    %93 = arith.subf %89, %92 : vector<64x64xf32>
    %94 = math.exp %93 : vector<64x64xf32>
    %cst_44 = arith.constant dense<0.000000e+00> : vector<64xf32>
    %95 = vector.multi_reduction <add>, %94, %cst_44 [1] : vector<64x64xf32> to vector<64xf32>
    %96 = vector.shape_cast %95 : vector<64xf32> to vector<64x1xf32>
    %97 = vector.broadcast %96 : vector<64x1xf32> to vector<64x64xf32>
    %98 = arith.divf %94, %97 : vector<64x64xf32>
    %cst_45 = arith.constant dense<0.000000e+00> : vector<64x64xf32>
    %99 = tpu.matmul %98, %71, %cst_45 {dimension_numbers = #tpu.dot_dimension_numbers<[1], [0], [0], [1], [0, 0, 1, 1], [], []>} : vector<64x64xf32>, vector<64x64xf32>, vector<64x64xf32> -> vector<64x64xf32>
    %100 = vector.broadcast %70 : vector<1x64xf32> to vector<64x64xf32>
    %101 = arith.addf %99, %100 : vector<64x64xf32>
    %102 = math.tanh %101 : vector<64x64xf32>
    %cst_46 = arith.constant dense<0.000000e+00> : vector<64xf32>
    %103 = vector.multi_reduction <add>, %102, %cst_46 [0] : vector<64x64xf32> to vector<64xf32>
    %104 = vector.shape_cast %103 : vector<64xf32> to vector<1x64xf32>
    %cst_47 = arith.constant 6.400000e+01 : f32
    %105 = vector.broadcast %cst_47 : f32 to vector<1x64xf32>
    %106 = arith.divf %104, %105 : vector<1x64xf32>
    %107 = vector.broadcast %106 : vector<1x64xf32> to vector<64x64xf32>
    %108 = arith.subf %102, %107 : vector<64x64xf32>
    %109 = arith.mulf %108, %108 : vector<64x64xf32>
    %cst_48 = arith.constant dense<0.000000e+00> : vector<64xf32>
    %110 = vector.multi_reduction <add>, %109, %cst_48 [0] : vector<64x64xf32> to vector<64xf32>
    %111 = vector.shape_cast %110 : vector<64xf32> to vector<1x64xf32>
    %cst_49 = arith.constant 6.400000e+01 : f32
    %112 = vector.broadcast %cst_49 : f32 to vector<1x64xf32>
    %113 = arith.divf %111, %112 : vector<1x64xf32>
    %114 = vector.broadcast %106 : vector<1x64xf32> to vector<64x64xf32>
    %115 = arith.subf %102, %114 : vector<64x64xf32>
    %cst_50 = arith.constant 9.99999974E-6 : f32
    %116 = vector.broadcast %cst_50 : f32 to vector<1x64xf32>
    %117 = arith.addf %113, %116 : vector<1x64xf32>
    %118 = math.rsqrt %117 : vector<1x64xf32>
    %119 = vector.broadcast %118 : vector<1x64xf32> to vector<64x64xf32>
    %120 = arith.mulf %115, %119 : vector<64x64xf32>
    %c0_51 = arith.constant 0 : index
    %c0_52 = arith.constant 0 : index
    %121 = vector.load %arg19[%c0_51, %c0_52] : memref<1x64xf32, #tpu.memory_space<vmem>>, vector<1x64xf32>
    %122 = vector.broadcast %121 : vector<1x64xf32> to vector<64x64xf32>
    %123 = arith.mulf %120, %122 : vector<64x64xf32>
    %c0_53 = arith.constant 0 : index
    %c0_54 = arith.constant 0 : index
    %124 = vector.load %arg20[%c0_53, %c0_54] : memref<1x64xf32, #tpu.memory_space<vmem>>, vector<1x64xf32>
    %125 = vector.broadcast %124 : vector<1x64xf32> to vector<64x64xf32>
    %126 = arith.addf %123, %125 : vector<64x64xf32>
    %c0_55 = arith.constant 0 : index
    %c0_56 = arith.constant 0 : index
    %127 = vector.load %arg11[%c0_55, %c0_56] : memref<64x64xf32, #tpu.memory_space<vmem>>, vector<64x64xf32>
    %c0_57 = arith.constant 0 : index
    %c0_58 = arith.constant 0 : index
    %128 = vector.load %arg12[%c0_57, %c0_58] : memref<1x64xf32, #tpu.memory_space<vmem>>, vector<1x64xf32>
    %c0_59 = arith.constant 0 : index
    %c0_60 = arith.constant 0 : index
    %129 = vector.load %arg13[%c0_59, %c0_60] : memref<1x64xf32, #tpu.memory_space<vmem>>, vector<1x64xf32>
    %c0_61 = arith.constant 0 : index
    %c0_62 = arith.constant 0 : index
    %130 = vector.load %arg14[%c0_61, %c0_62] : memref<1x64xf32, #tpu.memory_space<vmem>>, vector<1x64xf32>
    %cst_63 = arith.constant dense<0.000000e+00> : vector<64x64xf32>
    %131 = tpu.matmul %126, %127, %cst_63 {dimension_numbers = #tpu.dot_dimension_numbers<[1], [0], [0], [1], [0, 0, 1, 1], [], []>} : vector<64x64xf32>, vector<64x64xf32>, vector<64x64xf32> -> vector<64x64xf32>
    %132 = vector.broadcast %128 : vector<1x64xf32> to vector<64x64xf32>
    %133 = arith.mulf %131, %132 : vector<64x64xf32>
    %cst_64 = arith.constant dense<0.000000e+00> : vector<64xf32>
    %134 = vector.multi_reduction <add>, %133, %cst_64 [1] : vector<64x64xf32> to vector<64xf32>
    %135 = vector.shape_cast %134 : vector<64xf32> to vector<64x1xf32>
    %136 = vector.broadcast %129 : vector<1x64xf32> to vector<64x64xf32>
    %137 = arith.mulf %131, %136 : vector<64x64xf32>
    %cst_65 = arith.constant dense<0.000000e+00> : vector<64xf32>
    %138 = vector.multi_reduction <add>, %137, %cst_65 [1] : vector<64x64xf32> to vector<64xf32>
    %139 = vector.shape_cast %138 : vector<64xf32> to vector<64x1xf32>
    %140 = tpu.transpose %135, [1, 0] : vector<64x1xf32> -> vector<1x64xf32>
    %141 = vector.broadcast %139 : vector<64x1xf32> to vector<64x64xf32>
    %142 = vector.broadcast %140 : vector<1x64xf32> to vector<64x64xf32>
    %143 = arith.addf %141, %142 : vector<64x64xf32>
    %cst_66 = arith.constant 0.000000e+00 : f32
    %144 = vector.broadcast %cst_66 : f32 to vector<64x64xf32>
    %145 = arith.cmpf ogt, %143, %144 : vector<64x64xf32>
    %cst_67 = arith.constant 2.000000e-01 : f32
    %146 = vector.broadcast %cst_67 : f32 to vector<64x64xf32>
    %147 = arith.mulf %146, %143 : vector<64x64xf32>
    %148 = arith.select %145, %143, %147 : vector<64x64xi1>, vector<64x64xf32>
    %149 = arith.addf %148, %5 : vector<64x64xf32>
    %cst_68 = arith.constant dense<0xFF800000> : vector<64xf32>
    %150 = vector.multi_reduction <maximumf>, %149, %cst_68 [1] : vector<64x64xf32> to vector<64xf32>
    %151 = vector.shape_cast %150 : vector<64xf32> to vector<64x1xf32>
    %152 = vector.broadcast %151 : vector<64x1xf32> to vector<64x64xf32>
    %153 = arith.subf %149, %152 : vector<64x64xf32>
    %154 = math.exp %153 : vector<64x64xf32>
    %cst_69 = arith.constant dense<0.000000e+00> : vector<64xf32>
    %155 = vector.multi_reduction <add>, %154, %cst_69 [1] : vector<64x64xf32> to vector<64xf32>
    %156 = vector.shape_cast %155 : vector<64xf32> to vector<64x1xf32>
    %157 = vector.broadcast %156 : vector<64x1xf32> to vector<64x64xf32>
    %158 = arith.divf %154, %157 : vector<64x64xf32>
    %cst_70 = arith.constant dense<0.000000e+00> : vector<64x64xf32>
    %159 = tpu.matmul %158, %131, %cst_70 {dimension_numbers = #tpu.dot_dimension_numbers<[1], [0], [0], [1], [0, 0, 1, 1], [], []>} : vector<64x64xf32>, vector<64x64xf32>, vector<64x64xf32> -> vector<64x64xf32>
    %160 = vector.broadcast %130 : vector<1x64xf32> to vector<64x64xf32>
    %161 = arith.addf %159, %160 : vector<64x64xf32>
    %162 = math.tanh %161 : vector<64x64xf32>
    %cst_71 = arith.constant dense<0.000000e+00> : vector<64xf32>
    %163 = vector.multi_reduction <add>, %162, %cst_71 [0] : vector<64x64xf32> to vector<64xf32>
    %164 = vector.shape_cast %163 : vector<64xf32> to vector<1x64xf32>
    %cst_72 = arith.constant 6.400000e+01 : f32
    %165 = vector.broadcast %cst_72 : f32 to vector<1x64xf32>
    %166 = arith.divf %164, %165 : vector<1x64xf32>
    %167 = vector.broadcast %166 : vector<1x64xf32> to vector<64x64xf32>
    %168 = arith.subf %162, %167 : vector<64x64xf32>
    %169 = arith.mulf %168, %168 : vector<64x64xf32>
    %cst_73 = arith.constant dense<0.000000e+00> : vector<64xf32>
    %170 = vector.multi_reduction <add>, %169, %cst_73 [0] : vector<64x64xf32> to vector<64xf32>
    %171 = vector.shape_cast %170 : vector<64xf32> to vector<1x64xf32>
    %cst_74 = arith.constant 6.400000e+01 : f32
    %172 = vector.broadcast %cst_74 : f32 to vector<1x64xf32>
    %173 = arith.divf %171, %172 : vector<1x64xf32>
    %174 = vector.broadcast %166 : vector<1x64xf32> to vector<64x64xf32>
    %175 = arith.subf %162, %174 : vector<64x64xf32>
    %cst_75 = arith.constant 9.99999974E-6 : f32
    %176 = vector.broadcast %cst_75 : f32 to vector<1x64xf32>
    %177 = arith.addf %173, %176 : vector<1x64xf32>
    %178 = math.rsqrt %177 : vector<1x64xf32>
    %179 = vector.broadcast %178 : vector<1x64xf32> to vector<64x64xf32>
    %180 = arith.mulf %175, %179 : vector<64x64xf32>
    %c0_76 = arith.constant 0 : index
    %c0_77 = arith.constant 0 : index
    %181 = vector.load %arg19[%c0_76, %c0_77] : memref<1x64xf32, #tpu.memory_space<vmem>>, vector<1x64xf32>
    %182 = vector.broadcast %181 : vector<1x64xf32> to vector<64x64xf32>
    %183 = arith.mulf %180, %182 : vector<64x64xf32>
    %c0_78 = arith.constant 0 : index
    %c0_79 = arith.constant 0 : index
    %184 = vector.load %arg20[%c0_78, %c0_79] : memref<1x64xf32, #tpu.memory_space<vmem>>, vector<1x64xf32>
    %185 = vector.broadcast %184 : vector<1x64xf32> to vector<64x64xf32>
    %186 = arith.addf %183, %185 : vector<64x64xf32>
    %c0_80 = arith.constant 0 : index
    %c0_81 = arith.constant 0 : index
    %187 = vector.load %arg15[%c0_80, %c0_81] : memref<64x64xf32, #tpu.memory_space<vmem>>, vector<64x64xf32>
    %c0_82 = arith.constant 0 : index
    %c0_83 = arith.constant 0 : index
    %188 = vector.load %arg16[%c0_82, %c0_83] : memref<1x64xf32, #tpu.memory_space<vmem>>, vector<1x64xf32>
    %c0_84 = arith.constant 0 : index
    %c0_85 = arith.constant 0 : index
    %189 = vector.load %arg17[%c0_84, %c0_85] : memref<1x64xf32, #tpu.memory_space<vmem>>, vector<1x64xf32>
    %c0_86 = arith.constant 0 : index
    %c0_87 = arith.constant 0 : index
    %190 = vector.load %arg18[%c0_86, %c0_87] : memref<1x64xf32, #tpu.memory_space<vmem>>, vector<1x64xf32>
    %cst_88 = arith.constant dense<0.000000e+00> : vector<64x64xf32>
    %191 = tpu.matmul %186, %187, %cst_88 {dimension_numbers = #tpu.dot_dimension_numbers<[1], [0], [0], [1], [0, 0, 1, 1], [], []>} : vector<64x64xf32>, vector<64x64xf32>, vector<64x64xf32> -> vector<64x64xf32>
    %192 = vector.broadcast %188 : vector<1x64xf32> to vector<64x64xf32>
    %193 = arith.mulf %191, %192 : vector<64x64xf32>
    %cst_89 = arith.constant dense<0.000000e+00> : vector<64xf32>
    %194 = vector.multi_reduction <add>, %193, %cst_89 [1] : vector<64x64xf32> to vector<64xf32>
    %195 = vector.shape_cast %194 : vector<64xf32> to vector<64x1xf32>
    %196 = vector.broadcast %189 : vector<1x64xf32> to vector<64x64xf32>
    %197 = arith.mulf %191, %196 : vector<64x64xf32>
    %cst_90 = arith.constant dense<0.000000e+00> : vector<64xf32>
    %198 = vector.multi_reduction <add>, %197, %cst_90 [1] : vector<64x64xf32> to vector<64xf32>
    %199 = vector.shape_cast %198 : vector<64xf32> to vector<64x1xf32>
    %200 = tpu.transpose %195, [1, 0] : vector<64x1xf32> -> vector<1x64xf32>
    %201 = vector.broadcast %199 : vector<64x1xf32> to vector<64x64xf32>
    %202 = vector.broadcast %200 : vector<1x64xf32> to vector<64x64xf32>
    %203 = arith.addf %201, %202 : vector<64x64xf32>
    %cst_91 = arith.constant 0.000000e+00 : f32
    %204 = vector.broadcast %cst_91 : f32 to vector<64x64xf32>
    %205 = arith.cmpf ogt, %203, %204 : vector<64x64xf32>
    %cst_92 = arith.constant 2.000000e-01 : f32
    %206 = vector.broadcast %cst_92 : f32 to vector<64x64xf32>
    %207 = arith.mulf %206, %203 : vector<64x64xf32>
    %208 = arith.select %205, %203, %207 : vector<64x64xi1>, vector<64x64xf32>
    %209 = arith.addf %208, %5 : vector<64x64xf32>
    %cst_93 = arith.constant dense<0xFF800000> : vector<64xf32>
    %210 = vector.multi_reduction <maximumf>, %209, %cst_93 [1] : vector<64x64xf32> to vector<64xf32>
    %211 = vector.shape_cast %210 : vector<64xf32> to vector<64x1xf32>
    %212 = vector.broadcast %211 : vector<64x1xf32> to vector<64x64xf32>
    %213 = arith.subf %209, %212 : vector<64x64xf32>
    %214 = math.exp %213 : vector<64x64xf32>
    %cst_94 = arith.constant dense<0.000000e+00> : vector<64xf32>
    %215 = vector.multi_reduction <add>, %214, %cst_94 [1] : vector<64x64xf32> to vector<64xf32>
    %216 = vector.shape_cast %215 : vector<64xf32> to vector<64x1xf32>
    %217 = vector.broadcast %216 : vector<64x1xf32> to vector<64x64xf32>
    %218 = arith.divf %214, %217 : vector<64x64xf32>
    %cst_95 = arith.constant dense<0.000000e+00> : vector<64x64xf32>
    %219 = tpu.matmul %218, %191, %cst_95 {dimension_numbers = #tpu.dot_dimension_numbers<[1], [0], [0], [1], [0, 0, 1, 1], [], []>} : vector<64x64xf32>, vector<64x64xf32>, vector<64x64xf32> -> vector<64x64xf32>
    %220 = vector.broadcast %190 : vector<1x64xf32> to vector<64x64xf32>
    %221 = arith.addf %219, %220 : vector<64x64xf32>
    %222 = math.tanh %221 : vector<64x64xf32>
    %c0_96 = arith.constant 0 : index
    %c0_97 = arith.constant 0 : index
    %223 = vector.load %arg2[%c0_96, %c0_97] : memref<2x64xf32, #tpu.memory_space<vmem>>, vector<2x64xf32>
    %cst_98 = arith.constant dense<0.000000e+00> : vector<2xf32>
    %224 = vector.multi_reduction <add>, %223, %cst_98 [1] : vector<2x64xf32> to vector<2xf32>
    %225 = vector.shape_cast %224 : vector<2xf32> to vector<2x1xf32>
    %cst_99 = arith.constant dense<0.000000e+00> : vector<2x64xf32>
    %226 = tpu.matmul %223, %222, %cst_99 {dimension_numbers = #tpu.dot_dimension_numbers<[1], [0], [0], [1], [0, 0, 1, 1], [], []>} : vector<2x64xf32>, vector<64x64xf32>, vector<2x64xf32> -> vector<2x64xf32>
    %227 = vector.broadcast %225 : vector<2x1xf32> to vector<2x64xf32>
    %228 = arith.divf %226, %227 : vector<2x64xf32>
    %229 = vector.shape_cast %223 : vector<2x64xf32> to vector<2x64x1xf32>
    %cst_100 = arith.constant 5.000000e-01 : f32
    %230 = vector.broadcast %cst_100 : f32 to vector<2x64x1xf32>
    %231 = arith.cmpf ogt, %229, %230 : vector<2x64x1xf32>
    %232 = vector.shape_cast %222 : vector<64x64xf32> to vector<1x64x64xf32>
    %cst_101 = arith.constant -1.000000e+30 : f32
    %233 = vector.shape_cast %231 : vector<2x64x1xi1> to vector<2x64x1xi1>
    %234 = vector.broadcast %233 : vector<2x64x1xi1> to vector<2x64x64xi1>
    %235 = vector.shape_cast %232 : vector<1x64x64xf32> to vector<1x64x64xf32>
    %236 = vector.broadcast %235 : vector<1x64x64xf32> to vector<2x64x64xf32>
    %237 = vector.broadcast %cst_101 : f32 to vector<2x64x64xf32>
    %238 = arith.select %234, %236, %237 : vector<2x64x64xi1>, vector<2x64x64xf32>
    %cst_102 = arith.constant dense<0xFF800000> : vector<2x64xf32>
    %239 = vector.multi_reduction <maximumf>, %238, %cst_102 [1] : vector<2x64x64xf32> to vector<2x64xf32>
    %240 = tpu.concatenate %239, %228 in 1 : vector<2x64xf32>, vector<2x64xf32> -> vector<2x128xf32>
    %c0_103 = arith.constant 0 : index
    %c0_104 = arith.constant 0 : index
    %241 = vector.load %arg21[%c0_103, %c0_104] : memref<128x256xf32, #tpu.memory_space<vmem>>, vector<128x256xf32>
    %cst_105 = arith.constant dense<0.000000e+00> : vector<2x256xf32>
    %242 = tpu.matmul %240, %241, %cst_105 {dimension_numbers = #tpu.dot_dimension_numbers<[1], [0], [0], [1], [0, 0, 1, 1], [], []>} : vector<2x128xf32>, vector<128x256xf32>, vector<2x256xf32> -> vector<2x256xf32>
    %c0_106 = arith.constant 0 : index
    %c0_107 = arith.constant 0 : index
    %243 = vector.load %arg22[%c0_106, %c0_107] : memref<1x256xf32, #tpu.memory_space<vmem>>, vector<1x256xf32>
    %244 = vector.broadcast %243 : vector<1x256xf32> to vector<2x256xf32>
    %245 = arith.addf %242, %244 : vector<2x256xf32>
    %246 = arith.truncf %245 : vector<2x256xf32> to vector<2x256xbf16>
    %c0_108 = arith.constant 0 : index
    %c0_109 = arith.constant 0 : index
    %247 = vector.load %arg23[%c0_108, %c0_109] : memref<2x256xbf16, #tpu.memory_space<vmem>>, vector<2x256xbf16>
    tpu.vector_store %arg23[%c0_108, %c0_109], %246 {strides = array<i32>} : memref<2x256xbf16, #tpu.memory_space<vmem>>, vector<2x256xbf16>,
    return
  }
}

module attributes {stable_mosaic.version = 11 : i64} {
  func.func @big_linear_kernel(%arg0: i32, %arg1: memref<2x256xbf16, #tpu.memory_space<vmem>>, %arg2: memref<256x4096xbf16, #tpu.memory_space<vmem>>, %arg3: memref<1x4096xf32, #tpu.memory_space<vmem>>, %arg4: memref<2x4096xf32, #tpu.memory_space<vmem>>) attributes {dimension_semantics = [#tpu.dimension_semantics<parallel>], iteration_bounds = array<i64: 10>, scalar_prefetch = 0 : i64, scratch_operands = 0 : i64, tpu.core_type = #tpu.core_type<tc>, window_params = [{pipeline_mode = #tpu.pipeline_mode<synchronous>, transform_indices = @transform_0, window_bounds = array<i64: 2, 256>}, {transform_indices = @transform_1, window_bounds = array<i64: 256, 4096>}, {transform_indices = @transform_2, window_bounds = array<i64: 1, 4096>}, {transform_indices = @transform_3, window_bounds = array<i64: 2, 4096>}]} {
    %c0 = arith.constant 0 : index
    %c0_0 = arith.constant 0 : index
    %0 = vector.load %arg1[%c0, %c0_0] : memref<2x256xbf16, #tpu.memory_space<vmem>>, vector<2x256xbf16>
    %c0_1 = arith.constant 0 : index
    %c0_2 = arith.constant 0 : index
    %1 = vector.load %arg2[%c0_1, %c0_2] : memref<256x4096xbf16, #tpu.memory_space<vmem>>, vector<256x4096xbf16>
    %cst = arith.constant dense<0.000000e+00> : vector<2x4096xf32>
    %2 = tpu.matmul %0, %1, %cst {dimension_numbers = #tpu.dot_dimension_numbers<[1], [0], [0], [1], [0, 0, 1, 1], [], []>} : vector<2x256xbf16>, vector<256x4096xbf16>, vector<2x4096xf32> -> vector<2x4096xf32>
    %c0_3 = arith.constant 0 : index
    %c0_4 = arith.constant 0 : index
    %3 = vector.load %arg3[%c0_3, %c0_4] : memref<1x4096xf32, #tpu.memory_space<vmem>>, vector<1x4096xf32>
    %4 = vector.broadcast %3 : vector<1x4096xf32> to vector<2x4096xf32>
    %5 = arith.addf %2, %4 : vector<2x4096xf32>
    %c0_5 = arith.constant 0 : index
    %c0_6 = arith.constant 0 : index
    %6 = vector.load %arg4[%c0_5, %c0_6] : memref<2x4096xf32, #tpu.memory_space<vmem>>, vector<2x4096xf32>
    tpu.vector_store %arg4[%c0_5, %c0_6], %5 {strides = array<i32>} : memref<2x4096xf32, #tpu.memory_space<vmem>>, vector<2x4096xf32>,
    return
  }
  func.func @transform_0(%arg0: i32) -> (i32, i32) {
    %c0_i32 = arith.constant 0 : i32
    %c0_i32_0 = arith.constant 0 : i32
    %c0_i32_1 = arith.constant 0 : i32
    return %c0_i32, %c0_i32_0 : i32, i32
  }
  func.func @transform_1(%arg0: i32) -> (i32, i32) {
    %c0_i32 = arith.constant 0 : i32
    %c0_i32_0 = arith.constant 0 : i32
    return %c0_i32, %arg0 : i32, i32
  }
  func.func @transform_2(%arg0: i32) -> (i32, i32) {
    %c0_i32 = arith.constant 0 : i32
    %c0_i32_0 = arith.constant 0 : i32
    return %c0_i32, %arg0 : i32, i32
  }
  func.func @transform_3(%arg0: i32) -> (i32, i32) {
    %c0_i32 = arith.constant 0 : i32
    %c0_i32_0 = arith.constant 0 : i32
    return %c0_i32, %arg0 : i32, i32
  }
}

</mosaic_0001>

<llo_original>
// kernel: gnn_plus_forward.2
$region0: #{gnn_plus_forward.2}
  #allocation0 [shape = 'u32[]', space=smem, size = 0x4, offset = 0x4, fixed_abs, tag = 'smem constant byte address 0x4 - core index']
  #allocation1 [shape = 'u32[72,128]{1,0:T(1,128)}', space=vmem, size = 0x9000, scoped, tag = 'internal scratch']
  %s0 = inlined_call_operand.vmem [shape: f32[64,8], index: 0, kind: input, shape index: {}]
  %s1 = inlined_call_operand.hbm [shape: f32[64,64], index: 1, kind: input, shape index: {}]
  %s2 = inlined_call_operand.hbm [shape: f32[2,64], index: 2, kind: input, shape index: {}]
  %s3 = inlined_call_operand.hbm [shape: f32[8,64], index: 3, kind: input, shape index: {}]
  %s4 = inlined_call_operand.hbm [shape: f32[1,64], index: 4, kind: input, shape index: {}]
  %s5 = inlined_call_operand.hbm [shape: f32[1,64], index: 5, kind: input, shape index: {}]
  %s6 = inlined_call_operand.hbm [shape: f32[1,64], index: 6, kind: input, shape index: {}]
  %s7 = inlined_call_operand.hbm [shape: f32[64,64], index: 7, kind: input, shape index: {}]
  %s8 = inlined_call_operand.hbm [shape: f32[1,64], index: 8, kind: input, shape index: {}]
  %s9 = inlined_call_operand.hbm [shape: f32[1,64], index: 9, kind: input, shape index: {}]
  %s10 = inlined_call_operand.hbm [shape: f32[1,64], index: 10, kind: input, shape index: {}]
  %s11 = inlined_call_operand.hbm [shape: f32[64,64], index: 11, kind: input, shape index: {}]
  %s12 = inlined_call_operand.hbm [shape: f32[1,64], index: 12, kind: input, shape index: {}]
  %s13 = inlined_call_operand.hbm [shape: f32[1,64], index: 13, kind: input, shape index: {}]
  %s14 = inlined_call_operand.hbm [shape: f32[1,64], index: 14, kind: input, shape index: {}]
  %s15 = inlined_call_operand.hbm [shape: f32[64,64], index: 15, kind: input, shape index: {}]
  %s16 = inlined_call_operand.hbm [shape: f32[1,64], index: 16, kind: input, shape index: {}]
  %s17 = inlined_call_operand.hbm [shape: f32[1,64], index: 17, kind: input, shape index: {}]
  %s18 = inlined_call_operand.hbm [shape: f32[1,64], index: 18, kind: input, shape index: {}]
  %s19 = inlined_call_operand.hbm [shape: f32[1,64], index: 19, kind: input, shape index: {}]
  %s20 = inlined_call_operand.hbm [shape: f32[1,64], index: 20, kind: input, shape index: {}]
  %s21 = inlined_call_operand.hbm [shape: f32[128,256], index: 21, kind: input, shape index: {}]
  %s22 = inlined_call_operand.hbm [shape: f32[1,256], index: 22, kind: input, shape index: {}]
  %s23 = inlined_call_operand.vmem [shape: bf16[2,256], index: 23, kind: output, shape index: {}]
  %s24 = sld [smem:[#allocation0]]
  $region190: #{gnn_plus_forward.2} parent=0
    _
  %s26 = ssub.s32 1, %s24
  %s27 = scalar_select 0, %s26, %s24
  $region1: #{gnn_plus_forward.2} parent=0
    #allocation2 [shape = 'u8[32768]{0}', space=vmem, size = 0x8000, scoped, tag = 'input window, operand 1, single buffered']
    #allocation3 [shape = 's32[1]{0}', space=sflag, size = 0x4, scoped, tag = 'scoped memory for gnn_plus_forward.2']
    #allocation4 [shape = 'u8[1024]{0}', space=vmem, size = 0x400, scoped, tag = 'input window, operand 2, single buffered']
    #allocation5 [shape = 's32[1]{0}', space=sflag, size = 0x4, scoped, tag = 'scoped memory for gnn_plus_forward.2']
    #allocation6 [shape = 'u8[4096]{0}', space=vmem, size = 0x1000, scoped, tag = 'input window, operand 3, single buffered']
    #allocation7 [shape = 'u8[512]{0}', space=vmem, size = 0x400, scoped, tag = 'input window, operand 4, single buffered']
    #allocation8 [shape = 's32[1]{0}', space=sflag, size = 0x4, scoped, tag = 'scoped memory for gnn_plus_forward.2']
    #allocation9 [shape = 'u8[512]{0}', space=vmem, size = 0x400, scoped, tag = 'input window, operand 5, single buffered']
    #allocation10 [shape = 'u8[512]{0}', space=vmem, size = 0x400, scoped, tag = 'input window, operand 6, single buffered']
    #allocation11 [shape = 's32[1]{0}', space=sflag, size = 0x4, scoped, tag = 'scoped memory for gnn_plus_forward.2']
    #allocation12 [shape = 'u8[32768]{0}', space=vmem, size = 0x8000, scoped, tag = 'input window, operand 7, single buffered']
    #allocation13 [shape = 'u8[512]{0}', space=vmem, size = 0x400, scoped, tag = 'input window, operand 8, single buffered']
    #allocation14 [shape = 's32[1]{0}', space=sflag, size = 0x4, scoped, tag = 'scoped memory for gnn_plus_forward.2']
    #allocation15 [shape = 'u8[512]{0}', space=vmem, size = 0x400, scoped, tag = 'input window, operand 9, single buffered']
    #allocation16 [shape = 'u8[512]{0}', space=vmem, size = 0x400, scoped, tag = 'input window, operand 10, single buffered']
    #allocation17 [shape = 's32[1]{0}', space=sflag, size = 0x4, scoped, tag = 'scoped memory for gnn_plus_forward.2']
    #allocation18 [shape = 'u8[32768]{0}', space=vmem, size = 0x8000, scoped, tag = 'input window, operand 11, single buffered']
    #allocation19 [shape = 'u8[512]{0}', space=vmem, size = 0x400, scoped, tag = 'input window, operand 12, single buffered']
    #allocation20 [shape = 's32[1]{0}', space=sflag, size = 0x4, scoped, tag = 'scoped memory for gnn_plus_forward.2']
    #allocation21 [shape = 'u8[512]{0}', space=vmem, size = 0x400, scoped, tag = 'input window, operand 13, single buffered']
    #allocation22 [shape = 'u8[512]{0}', space=vmem, size = 0x400, scoped, tag = 'input window, operand 14, single buffered']
    #allocation23 [shape = 's32[1]{0}', space=sflag, size = 0x4, scoped, tag = 'scoped memory for gnn_plus_forward.2']
    #allocation24 [shape = 'u8[32768]{0}', space=vmem, size = 0x8000, scoped, tag = 'input window, operand 15, single buffered']
    #allocation25 [shape = 'u8[512]{0}', space=vmem, size = 0x400, scoped, tag = 'input window, operand 16, single buffered']
    #allocation26 [shape = 's32[1]{0}', space=sflag, size = 0x4, scoped, tag = 'scoped memory for gnn_plus_forward.2']
    #allocation27 [shape = 'u8[512]{0}', space=vmem, size = 0x400, scoped, tag = 'input window, operand 17, single buffered']
    #allocation28 [shape = 'u8[512]{0}', space=vmem, size = 0x400, scoped, tag = 'input window, operand 18, single buffered']
    #allocation29 [shape = 's32[1]{0}', space=sflag, size = 0x4, scoped, tag = 'scoped memory for gnn_plus_forward.2']
    #allocation30 [shape = 'u8[512]{0}', space=vmem, size = 0x400, scoped, tag = 'input window, operand 19, single buffered']
    #allocation31 [shape = 'u8[512]{0}', space=vmem, size = 0x400, scoped, tag = 'input window, operand 20, single buffered']
    #allocation32 [shape = 's32[1]{0}', space=sflag, size = 0x4, scoped, tag = 'scoped memory for gnn_plus_forward.2']
    #allocation33 [shape = 'u8[131072]{0}', space=vmem, size = 0x20000, scoped, tag = 'input window, operand 21, single buffered']
    #allocation34 [shape = 'u8[1024]{0}', space=vmem, size = 0x400, scoped, tag = 'input window, operand 22, single buffered']
    #allocation35 [shape = 's32[1]{0}', space=sflag, size = 0x4, scoped, tag = 'scoped memory for gnn_plus_forward.2']
    %28 = vsyncpa [#allocation3], 0
    %29 = vsyncpa [#allocation5], 0
    %30 = vsyncpa [#allocation8], 0
    %31 = vsyncpa [#allocation11], 0
    %32 = vsyncpa [#allocation14], 0
    %33 = vsyncpa [#allocation17], 0
    %34 = vsyncpa [#allocation20], 0
    %35 = vsyncpa [#allocation23], 0
    %36 = vsyncpa [#allocation26], 0
    %37 = vsyncpa [#allocation29], 0
    %38 = vsyncpa [#allocation32], 0
    %39 = vsyncpa [#allocation35], 0
    // Predicated region
    $region2: #{gnn_plus_forward.2} parent=1 // pred_check
      _
    $region3: #{gnn_plus_forward.2} parent=1 // pred_check_branch
      %41 = sbr.rel (0) target = $region5
    $region4: #{gnn_plus_forward.2} parent=1 // pred_region
      _
    $region5: #{gnn_plus_forward.2} parent=1 // pred_fallthru
      _
    // Predicated region
    $region6: #{gnn_plus_forward.2} parent=1 // pred_check
      _
    $region7: #{gnn_plus_forward.2} parent=1 // pred_check_branch
      %43 = sbr.rel (0) target = $region9
    $region8: #{gnn_plus_forward.2} parent=1 // pred_region
      %45 = vsyncadd [#allocation3], 0
      %s46 = sshll.u32 %s1, 4
      %s47 = int_to_ptr.hbm [resolvable:$true] %s46
      %s48 = sshll.u32 [#allocation2], 4
      %s49 = int_to_ptr.vmem [resolvable:$true] %s48
      %54 = dma.hbm_to_vmem [thread:$0]  %s47, 1024, %s49, [#allocation3], 128, 128, 8
    $region9: #{gnn_plus_forward.2} parent=1 // pred_fallthru
      _
    // Predicated region
    $region10: #{gnn_plus_forward.2} parent=1 // pred_check
      _
    $region11: #{gnn_plus_forward.2} parent=1 // pred_check_branch
      %56 = sbr.rel (0) target = $region13
    $region12: #{gnn_plus_forward.2} parent=1 // pred_region
      %58 = vsyncadd [#allocation5], 0
      %s60 = sshll.u32 %s2, 4
      %s61 = int_to_ptr.hbm [resolvable:$true] %s60
      %s62 = sshll.u32 [#allocation4], 4
      %s63 = int_to_ptr.vmem [resolvable:$true] %s62
      %65 = dma.hbm_to_vmem [thread:$0]  %s61, 32, %s63, [#allocation5]
    $region13: #{gnn_plus_forward.2} parent=1 // pred_fallthru
      _
    // Predicated region
    $region14: #{gnn_plus_forward.2} parent=1 // pred_check
      _
    $region15: #{gnn_plus_forward.2} parent=1 // pred_check_branch
      %67 = sbr.rel (0) target = $region17
    $region16: #{gnn_plus_forward.2} parent=1 // pred_region
      %69 = vsyncadd [#allocation5], 0
      %s71 = sshll.u32 %s3, 4
      %s72 = int_to_ptr.hbm [resolvable:$true] %s71
      %s73 = sshll.u32 [#allocation6], 4
      %s74 = int_to_ptr.vmem [resolvable:$true] %s73
      %76 = dma.hbm_to_vmem [thread:$0]  %s72, 128, %s74, [#allocation5]
    $region17: #{gnn_plus_forward.2} parent=1 // pred_fallthru
      _
    // Predicated region
    $region18: #{gnn_plus_forward.2} parent=1 // pred_check
      _
    $region19: #{gnn_plus_forward.2} parent=1 // pred_check_branch
      %78 = sbr.rel (0) target = $region21
    $region20: #{gnn_plus_forward.2} parent=1 // pred_region
      %80 = vsyncadd [#allocation8], 0
      %s82 = sshll.u32 %s4, 4
      %s83 = int_to_ptr.hbm [resolvable:$true] %s82
      %s84 = sshll.u32 [#allocation7], 4
      %s85 = int_to_ptr.vmem [resolvable:$true] %s84
      %87 = dma.hbm_to_vmem [thread:$0]  %s83, 16, %s85, [#allocation8]
    $region21: #{gnn_plus_forward.2} parent=1 // pred_fallthru
      _
    // Predicated region
    $region22: #{gnn_plus_forward.2} parent=1 // pred_check
      _
    $region23: #{gnn_plus_forward.2} parent=1 // pred_check_branch
      %89 = sbr.rel (0) target = $region25
    $region24: #{gnn_plus_forward.2} parent=1 // pred_region
      %91 = vsyncadd [#allocation8], 0
      %s93 = sshll.u32 %s5, 4
      %s94 = int_to_ptr.hbm [resolvable:$true] %s93
      %s95 = sshll.u32 [#allocation9], 4
      %s96 = int_to_ptr.vmem [resolvable:$true] %s95
      %98 = dma.hbm_to_vmem [thread:$0]  %s94, 16, %s96, [#allocation8]
    $region25: #{gnn_plus_forward.2} parent=1 // pred_fallthru
      _
    // Predicated region
    $region26: #{gnn_plus_forward.2} parent=1 // pred_check
      _
    $region27: #{gnn_plus_forward.2} parent=1 // pred_check_branch
      %100 = sbr.rel (0) target = $region29
    $region28: #{gnn_plus_forward.2} parent=1 // pred_region
      %102 = vsyncadd [#allocation11], 0
      %s104 = sshll.u32 %s6, 4
      %s105 = int_to_ptr.hbm [resolvable:$true] %s104
      %s106 = sshll.u32 [#allocation10], 4
      %s107 = int_to_ptr.vmem [resolvable:$true] %s106
      %109 = dma.hbm_to_vmem [thread:$0]  %s105, 16, %s107, [#allocation11]
    $region29: #{gnn_plus_forward.2} parent=1 // pred_fallthru
      _
    // Predicated region
    $region30: #{gnn_plus_forward.2} parent=1 // pred_check
      _
    $region31: #{gnn_plus_forward.2} parent=1 // pred_check_branch
      %111 = sbr.rel (0) target = $region33
    $region32: #{gnn_plus_forward.2} parent=1 // pred_region
      %113 = vsyncadd [#allocation11], 0
      %s114 = sshll.u32 %s7, 4
      %s115 = int_to_ptr.hbm [resolvable:$true] %s114
      %s116 = sshll.u32 [#allocation12], 4
      %s117 = int_to_ptr.vmem [resolvable:$true] %s116
      %122 = dma.hbm_to_vmem [thread:$0]  %s115, 1024, %s117, [#allocation11], 128, 128, 8
    $region33: #{gnn_plus_forward.2} parent=1 // pred_fallthru
      _
    // Predicated region
    $region34: #{gnn_plus_forward.2} parent=1 // pred_check
      _
    $region35: #{gnn_plus_forward.2} parent=1 // pred_check_branch
      %124 = sbr.rel (0) target = $region37
    $region36: #{gnn_plus_forward.2} parent=1 // pred_region
      %126 = vsyncadd [#allocation14], 0
      %s128 = sshll.u32 %s8, 4
      %s129 = int_to_ptr.hbm [resolvable:$true] %s128
      %s130 = sshll.u32 [#allocation13], 4
      %s131 = int_to_ptr.vmem [resolvable:$true] %s130
      %133 = dma.hbm_to_vmem [thread:$0]  %s129, 16, %s131, [#allocation14]
    $region37: #{gnn_plus_forward.2} parent=1 // pred_fallthru
      _
    // Predicated region
    $region38: #{gnn_plus_forward.2} parent=1 // pred_check
      _
    $region39: #{gnn_plus_forward.2} parent=1 // pred_check_branch
      %135 = sbr.rel (0) target = $region41
    $region40: #{gnn_plus_forward.2} parent=1 // pred_region
      %137 = vsyncadd [#allocation14], 0
      %s139 = sshll.u32 %s9, 4
      %s140 = int_to_ptr.hbm [resolvable:$true] %s139
      %s141 = sshll.u32 [#allocation15], 4
      %s142 = int_to_ptr.vmem [resolvable:$true] %s141
      %144 = dma.hbm_to_vmem [thread:$0]  %s140, 16, %s142, [#allocation14]
    $region41: #{gnn_plus_forward.2} parent=1 // pred_fallthru
      _
    // Predicated region
    $region42: #{gnn_plus_forward.2} parent=1 // pred_check
      _
    $region43: #{gnn_plus_forward.2} parent=1 // pred_check_branch
      %146 = sbr.rel (0) target = $region45
    $region44: #{gnn_plus_forward.2} parent=1 // pred_region
      %148 = vsyncadd [#allocation17], 0
      %s150 = sshll.u32 %s10, 4
      %s151 = int_to_ptr.hbm [resolvable:$true] %s150
      %s152 = sshll.u32 [#allocation16], 4
      %s153 = int_to_ptr.vmem [resolvable:$true] %s152
      %155 = dma.hbm_to_vmem [thread:$0]  %s151, 16, %s153, [#allocation17]
    $region45: #{gnn_plus_forward.2} parent=1 // pred_fallthru
      _
    // Predicated region
    $region46: #{gnn_plus_forward.2} parent=1 // pred_check
      _
    $region47: #{gnn_plus_forward.2} parent=1 // pred_check_branch
      %157 = sbr.rel (0) target = $region49
    $region48: #{gnn_plus_forward.2} parent=1 // pred_region
      %159 = vsyncadd [#allocation17], 0
      %s160 = sshll.u32 %s11, 4
      %s161 = int_to_ptr.hbm [resolvable:$true] %s160
      %s162 = sshll.u32 [#allocation18], 4
      %s163 = int_to_ptr.vmem [resolvable:$true] %s162
      %168 = dma.hbm_to_vmem [thread:$0]  %s161, 1024, %s163, [#allocation17], 128, 128, 8
    $region49: #{gnn_plus_forward.2} parent=1 // pred_fallthru
      _
    // Predicated region
    $region50: #{gnn_plus_forward.2} parent=1 // pred_check
      _
    $region51: #{gnn_plus_forward.2} parent=1 // pred_check_branch
      %170 = sbr.rel (0) target = $region53
    $region52: #{gnn_plus_forward.2} parent=1 // pred_region
      %172 = vsyncadd [#allocation20], 0
      %s174 = sshll.u32 %s12, 4
      %s175 = int_to_ptr.hbm [resolvable:$true] %s174
      %s176 = sshll.u32 [#allocation19], 4
      %s177 = int_to_ptr.vmem [resolvable:$true] %s176
      %179 = dma.hbm_to_vmem [thread:$0]  %s175, 16, %s177, [#allocation20]
    $region53: #{gnn_plus_forward.2} parent=1 // pred_fallthru
      _
    // Predicated region
    $region54: #{gnn_plus_forward.2} parent=1 // pred_check
      _
    $region55: #{gnn_plus_forward.2} parent=1 // pred_check_branch
      %181 = sbr.rel (0) target = $region57
    $region56: #{gnn_plus_forward.2} parent=1 // pred_region
      %183 = vsyncadd [#allocation20], 0
      %s185 = sshll.u32 %s13, 4
      %s186 = int_to_ptr.hbm [resolvable:$true] %s185
      %s187 = sshll.u32 [#allocation21], 4
      %s188 = int_to_ptr.vmem [resolvable:$true] %s187
      %190 = dma.hbm_to_vmem [thread:$0]  %s186, 16, %s188, [#allocation20]
    $region57: #{gnn_plus_forward.2} parent=1 // pred_fallthru
      _
    // Predicated region
    $region58: #{gnn_plus_forward.2} parent=1 // pred_check
      _
    $region59: #{gnn_plus_forward.2} parent=1 // pred_check_branch
      %192 = sbr.rel (0) target = $region61
    $region60: #{gnn_plus_forward.2} parent=1 // pred_region
      %194 = vsyncadd [#allocation23], 0
      %s196 = sshll.u32 %s14, 4
      %s197 = int_to_ptr.hbm [resolvable:$true] %s196
      %s198 = sshll.u32 [#allocation22], 4
      %s199 = int_to_ptr.vmem [resolvable:$true] %s198
      %201 = dma.hbm_to_vmem [thread:$0]  %s197, 16, %s199, [#allocation23]
    $region61: #{gnn_plus_forward.2} parent=1 // pred_fallthru
      _
    // Predicated region
    $region62: #{gnn_plus_forward.2} parent=1 // pred_check
      _
    $region63: #{gnn_plus_forward.2} parent=1 // pred_check_branch
      %203 = sbr.rel (0) target = $region65
    $region64: #{gnn_plus_forward.2} parent=1 // pred_region
      %205 = vsyncadd [#allocation23], 0
      %s206 = sshll.u32 %s15, 4
      %s207 = int_to_ptr.hbm [resolvable:$true] %s206
      %s208 = sshll.u32 [#allocation24], 4
      %s209 = int_to_ptr.vmem [resolvable:$true] %s208
      %214 = dma.hbm_to_vmem [thread:$0]  %s207, 1024, %s209, [#allocation23], 128, 128, 8
    $region65: #{gnn_plus_forward.2} parent=1 // pred_fallthru
      _
    // Predicated region
    $region66: #{gnn_plus_forward.2} parent=1 // pred_check
      _
    $region67: #{gnn_plus_forward.2} parent=1 // pred_check_branch
      %216 = sbr.rel (0) target = $region69
    $region68: #{gnn_plus_forward.2} parent=1 // pred_region
      %218 = vsyncadd [#allocation26], 0
      %s220 = sshll.u32 %s16, 4
      %s221 = int_to_ptr.hbm [resolvable:$true] %s220
      %s222 = sshll.u32 [#allocation25], 4
      %s223 = int_to_ptr.vmem [resolvable:$true] %s222
      %225 = dma.hbm_to_vmem [thread:$0]  %s221, 16, %s223, [#allocation26]
    $region69: #{gnn_plus_forward.2} parent=1 // pred_fallthru
      _
    // Predicated region
    $region70: #{gnn_plus_forward.2} parent=1 // pred_check
      _
    $region71: #{gnn_plus_forward.2} parent=1 // pred_check_branch
      %227 = sbr.rel (0) target = $region73
    $region72: #{gnn_plus_forward.2} parent=1 // pred_region
      %229 = vsyncadd [#allocation26], 0
      %s231 = sshll.u32 %s17, 4
      %s232 = int_to_ptr.hbm [resolvable:$true] %s231
      %s233 = sshll.u32 [#allocation27], 4
      %s234 = int_to_ptr.vmem [resolvable:$true] %s233
      %236 = dma.hbm_to_vmem [thread:$0]  %s232, 16, %s234, [#allocation26]
    $region73: #{gnn_plus_forward.2} parent=1 // pred_fallthru
      _
    // Predicated region
    $region74: #{gnn_plus_forward.2} parent=1 // pred_check
      _
    $region75: #{gnn_plus_forward.2} parent=1 // pred_check_branch
      %238 = sbr.rel (0) target = $region77
    $region76: #{gnn_plus_forward.2} parent=1 // pred_region
      %240 = vsyncadd [#allocation29], 0
      %s242 = sshll.u32 %s18, 4
      %s243 = int_to_ptr.hbm [resolvable:$true] %s242
      %s244 = sshll.u32 [#allocation28], 4
      %s245 = int_to_ptr.vmem [resolvable:$true] %s244
      %247 = dma.hbm_to_vmem [thread:$0]  %s243, 16, %s245, [#allocation29]
    $region77: #{gnn_plus_forward.2} parent=1 // pred_fallthru
      _
    // Predicated region
    $region78: #{gnn_plus_forward.2} parent=1 // pred_check
      _
    $region79: #{gnn_plus_forward.2} parent=1 // pred_check_branch
      %249 = sbr.rel (0) target = $region81
    $region80: #{gnn_plus_forward.2} parent=1 // pred_region
      %251 = vsyncadd [#allocation29], 0
      %s253 = sshll.u32 %s19, 4
      %s254 = int_to_ptr.hbm [resolvable:$true] %s253
      %s255 = sshll.u32 [#allocation30], 4
      %s256 = int_to_ptr.vmem [resolvable:$true] %s255
      %258 = dma.hbm_to_vmem [thread:$0]  %s254, 16, %s256, [#allocation29]
    $region81: #{gnn_plus_forward.2} parent=1 // pred_fallthru
      _
    // Predicated region
    $region82: #{gnn_plus_forward.2} parent=1 // pred_check
      _
    $region83: #{gnn_plus_forward.2} parent=1 // pred_check_branch
      %260 = sbr.rel (0) target = $region85
    $region84: #{gnn_plus_forward.2} parent=1 // pred_region
      %262 = vsyncadd [#allocation32], 0
      %s264 = sshll.u32 %s20, 4
      %s265 = int_to_ptr.hbm [resolvable:$true] %s264
      %s266 = sshll.u32 [#allocation31], 4
      %s267 = int_to_ptr.vmem [resolvable:$true] %s266
      %269 = dma.hbm_to_vmem [thread:$0]  %s265, 16, %s267, [#allocation32]
    $region85: #{gnn_plus_forward.2} parent=1 // pred_fallthru
      _
    // Predicated region
    $region86: #{gnn_plus_forward.2} parent=1 // pred_check
      _
    $region87: #{gnn_plus_forward.2} parent=1 // pred_check_branch
      %271 = sbr.rel (0) target = $region89
    $region88: #{gnn_plus_forward.2} parent=1 // pred_region
      %273 = vsyncadd [#allocation32], 0
      %s274 = sshll.u32 %s21, 4
      %s275 = int_to_ptr.hbm [resolvable:$true] %s274
      %s276 = sshll.u32 [#allocation33], 4
      %s277 = int_to_ptr.vmem [resolvable:$true] %s276
      %282 = dma.hbm_to_vmem [thread:$0]  %s275, 4096, %s277, [#allocation32], 256, 256, 16
    $region89: #{gnn_plus_forward.2} parent=1 // pred_fallthru
      _
    // Predicated region
    $region90: #{gnn_plus_forward.2} parent=1 // pred_check
      _
    $region91: #{gnn_plus_forward.2} parent=1 // pred_check_branch
      %284 = sbr.rel (0) target = $region93
    $region92: #{gnn_plus_forward.2} parent=1 // pred_region
      %286 = vsyncadd [#allocation35], 0
      %s288 = sshll.u32 %s22, 4
      %s289 = int_to_ptr.hbm [resolvable:$true] %s288
      %s290 = sshll.u32 [#allocation34], 4
      %s291 = int_to_ptr.vmem [resolvable:$true] %s290
      %293 = dma.hbm_to_vmem [thread:$0]  %s289, 32, %s291, [#allocation35]
    $region93: #{gnn_plus_forward.2} parent=1 // pred_fallthru
      _
    // Predicated region
    $region94: #{gnn_plus_forward.2} parent=1 // pred_check
      _
    $region95: #{gnn_plus_forward.2} parent=1 // pred_check_branch
      %295 = sbr.rel (0) target = $region97
    $region96: #{gnn_plus_forward.2} parent=1 // pred_region
      %297 = dma.done [#allocation3], 1024
    $region97: #{gnn_plus_forward.2} parent=1 // pred_fallthru
      _
    // Predicated region
    $region98: #{gnn_plus_forward.2} parent=1 // pred_check
      _
    $region99: #{gnn_plus_forward.2} parent=1 // pred_check_branch
      %299 = sbr.rel (0) target = $region101
    $region100: #{gnn_plus_forward.2} parent=1 // pred_region
      %301 = dma.done [#allocation5], 32
    $region101: #{gnn_plus_forward.2} parent=1 // pred_fallthru
      _
    // Predicated region
    $region102: #{gnn_plus_forward.2} parent=1 // pred_check
      _
    $region103: #{gnn_plus_forward.2} parent=1 // pred_check_branch
      %303 = sbr.rel (0) target = $region105
    $region104: #{gnn_plus_forward.2} parent=1 // pred_region
      %305 = dma.done [#allocation5], 128
    $region105: #{gnn_plus_forward.2} parent=1 // pred_fallthru
      _
    // Predicated region
    $region106: #{gnn_plus_forward.2} parent=1 // pred_check
      _
    $region107: #{gnn_plus_forward.2} parent=1 // pred_check_branch
      %307 = sbr.rel (0) target = $region109
    $region108: #{gnn_plus_forward.2} parent=1 // pred_region
      %309 = dma.done [#allocation8], 16
    $region109: #{gnn_plus_forward.2} parent=1 // pred_fallthru
      _
    // Predicated region
    $region110: #{gnn_plus_forward.2} parent=1 // pred_check
      _
    $region111: #{gnn_plus_forward.2} parent=1 // pred_check_branch
      %311 = sbr.rel (0) target = $region113
    $region112: #{gnn_plus_forward.2} parent=1 // pred_region
      %313 = dma.done [#allocation8], 16
    $region113: #{gnn_plus_forward.2} parent=1 // pred_fallthru
      _
    // Predicated region
    $region114: #{gnn_plus_forward.2} parent=1 // pred_check
      _
    $region115: #{gnn_plus_forward.2} parent=1 // pred_check_branch
      %315 = sbr.rel (0) target = $region117
    $region116: #{gnn_plus_forward.2} parent=1 // pred_region
      %317 = dma.done [#allocation11], 16
    $region117: #{gnn_plus_forward.2} parent=1 // pred_fallthru
      _
    // Predicated region
    $region118: #{gnn_plus_forward.2} parent=1 // pred_check
      _
    $region119: #{gnn_plus_forward.2} parent=1 // pred_check_branch
      %319 = sbr.rel (0) target = $region121
    $region120: #{gnn_plus_forward.2} parent=1 // pred_region
      %321 = dma.done [#allocation11], 1024
    $region121: #{gnn_plus_forward.2} parent=1 // pred_fallthru
      _
    // Predicated region
    $region122: #{gnn_plus_forward.2} parent=1 // pred_check
      _
    $region123: #{gnn_plus_forward.2} parent=1 // pred_check_branch
      %323 = sbr.rel (0) target = $region125
    $region124: #{gnn_plus_forward.2} parent=1 // pred_region
      %325 = dma.done [#allocation14], 16
    $region125: #{gnn_plus_forward.2} parent=1 // pred_fallthru
      _
    // Predicated region
    $region126: #{gnn_plus_forward.2} parent=1 // pred_check
      _
    $region127: #{gnn_plus_forward.2} parent=1 // pred_check_branch
      %327 = sbr.rel (0) target = $region129
    $region128: #{gnn_plus_forward.2} parent=1 // pred_region
      %329 = dma.done [#allocation14], 16
    $region129: #{gnn_plus_forward.2} parent=1 // pred_fallthru
      _
    // Predicated region
    $region130: #{gnn_plus_forward.2} parent=1 // pred_check
      _
    $region131: #{gnn_plus_forward.2} parent=1 // pred_check_branch
      %331 = sbr.rel (0) target = $region133
    $region132: #{gnn_plus_forward.2} parent=1 // pred_region
      %333 = dma.done [#allocation17], 16
    $region133: #{gnn_plus_forward.2} parent=1 // pred_fallthru
      _
    // Predicated region
    $region134: #{gnn_plus_forward.2} parent=1 // pred_check
      _
    $region135: #{gnn_plus_forward.2} parent=1 // pred_check_branch
      %335 = sbr.rel (0) target = $region137
    $region136: #{gnn_plus_forward.2} parent=1 // pred_region
      %337 = dma.done [#allocation17], 1024
    $region137: #{gnn_plus_forward.2} parent=1 // pred_fallthru
      _
    // Predicated region
    $region138: #{gnn_plus_forward.2} parent=1 // pred_check
      _
    $region139: #{gnn_plus_forward.2} parent=1 // pred_check_branch
      %339 = sbr.rel (0) target = $region141
    $region140: #{gnn_plus_forward.2} parent=1 // pred_region
      %341 = dma.done [#allocation20], 16
    $region141: #{gnn_plus_forward.2} parent=1 // pred_fallthru
      _
    // Predicated region
    $region142: #{gnn_plus_forward.2} parent=1 // pred_check
      _
    $region143: #{gnn_plus_forward.2} parent=1 // pred_check_branch
      %343 = sbr.rel (0) target = $region145
    $region144: #{gnn_plus_forward.2} parent=1 // pred_region
      %345 = dma.done [#allocation20], 16
    $region145: #{gnn_plus_forward.2} parent=1 // pred_fallthru
      _
    // Predicated region
    $region146: #{gnn_plus_forward.2} parent=1 // pred_check
      _
    $region147: #{gnn_plus_forward.2} parent=1 // pred_check_branch
      %347 = sbr.rel (0) target = $region149
    $region148: #{gnn_plus_forward.2} parent=1 // pred_region
      %349 = dma.done [#allocation23], 16
    $region149: #{gnn_plus_forward.2} parent=1 // pred_fallthru
      _
    // Predicated region
    $region150: #{gnn_plus_forward.2} parent=1 // pred_check
      _
    $region151: #{gnn_plus_forward.2} parent=1 // pred_check_branch
      %351 = sbr.rel (0) target = $region153
    $region152: #{gnn_plus_forward.2} parent=1 // pred_region
      %353 = dma.done [#allocation23], 1024
    $region153: #{gnn_plus_forward.2} parent=1 // pred_fallthru
      _
    // Predicated region
    $region154: #{gnn_plus_forward.2} parent=1 // pred_check
      _
    $region155: #{gnn_plus_forward.2} parent=1 // pred_check_branch
      %355 = sbr.rel (0) target = $region157
    $region156: #{gnn_plus_forward.2} parent=1 // pred_region
      %357 = dma.done [#allocation26], 16
    $region157: #{gnn_plus_forward.2} parent=1 // pred_fallthru
      _
    // Predicated region
    $region158: #{gnn_plus_forward.2} parent=1 // pred_check
      _
    $region159: #{gnn_plus_forward.2} parent=1 // pred_check_branch
      %359 = sbr.rel (0) target = $region161
    $region160: #{gnn_plus_forward.2} parent=1 // pred_region
      %361 = dma.done [#allocation26], 16
    $region161: #{gnn_plus_forward.2} parent=1 // pred_fallthru
      _
    // Predicated region
    $region162: #{gnn_plus_forward.2} parent=1 // pred_check
      _
    $region163: #{gnn_plus_forward.2} parent=1 // pred_check_branch
      %363 = sbr.rel (0) target = $region165
    $region164: #{gnn_plus_forward.2} parent=1 // pred_region
      %365 = dma.done [#allocation29], 16
    $region165: #{gnn_plus_forward.2} parent=1 // pred_fallthru
      _
    // Predicated region
    $region166: #{gnn_plus_forward.2} parent=1 // pred_check
      _
    $region167: #{gnn_plus_forward.2} parent=1 // pred_check_branch
      %367 = sbr.rel (0) target = $region169
    $region168: #{gnn_plus_forward.2} parent=1 // pred_region
      %369 = dma.done [#allocation29], 16
    $region169: #{gnn_plus_forward.2} parent=1 // pred_fallthru
      _
    // Predicated region
    $region170: #{gnn_plus_forward.2} parent=1 // pred_check
      _
    $region171: #{gnn_plus_forward.2} parent=1 // pred_check_branch
      %371 = sbr.rel (0) target = $region173
    $region172: #{gnn_plus_forward.2} parent=1 // pred_region
      %373 = dma.done [#allocation32], 16
    $region173: #{gnn_plus_forward.2} parent=1 // pred_fallthru
      _
    // Predicated region
    $region174: #{gnn_plus_forward.2} parent=1 // pred_check
      _
    $region175: #{gnn_plus_forward.2} parent=1 // pred_check_branch
      %375 = sbr.rel (0) target = $region177
    $region176: #{gnn_plus_forward.2} parent=1 // pred_region
      %377 = dma.done [#allocation32], 4096
    $region177: #{gnn_plus_forward.2} parent=1 // pred_fallthru
      _
    // Predicated region
    $region178: #{gnn_plus_forward.2} parent=1 // pred_check
      _
    $region179: #{gnn_plus_forward.2} parent=1 // pred_check_branch
      %379 = sbr.rel (0) target = $region181
    $region180: #{gnn_plus_forward.2} parent=1 // pred_region
      %381 = dma.done [#allocation35], 32
    $region181: #{gnn_plus_forward.2} parent=1 // pred_fallthru
      _
    %v382 = vld [vmem:[#allocation2] sm:$0xff]
    %v383 = vld [vmem:[#allocation2 + $0x8] sm:$0xff]
    %v384 = vld [vmem:[#allocation2 + $0x10] sm:$0xff]
    %v385 = vld [vmem:[#allocation2 + $0x18] sm:$0xff]
    %v386 = vld [vmem:[#allocation2 + $0x20] sm:$0xff]
    %v387 = vld [vmem:[#allocation2 + $0x28] sm:$0xff]
    %v388 = vld [vmem:[#allocation2 + $0x30] sm:$0xff]
    %v389 = vld [vmem:[#allocation2 + $0x38] sm:$0xff]
    %vm390 = vcmp.gt.f32.partialorder %v382, 0.5
    %vm391 = vcmp.gt.f32.partialorder %v383, 0.5
    %vm392 = vcmp.gt.f32.partialorder %v384, 0.5
    %vm393 = vcmp.gt.f32.partialorder %v385, 0.5
    %vm394 = vcmp.gt.f32.partialorder %v386, 0.5
    %vm395 = vcmp.gt.f32.partialorder %v387, 0.5
    %vm396 = vcmp.gt.f32.partialorder %v388, 0.5
    %vm397 = vcmp.gt.f32.partialorder %v389, 0.5
    %v398 = vsel %vm390, 0.0, -1e+30
    %v399 = vsel %vm391, 0.0, -1e+30
    %v400 = vsel %vm392, 0.0, -1e+30
    %v401 = vsel %vm393, 0.0, -1e+30
    %v402 = vsel %vm394, 0.0, -1e+30
    %v403 = vsel %vm395, 0.0, -1e+30
    %v404 = vsel %vm396, 0.0, -1e+30
    %v405 = vsel %vm397, 0.0, -1e+30
    %v406 = vld [vmem:[%s0] sm:$0xff]
    %v407 = vld [vmem:[%s0 + $0x8] sm:$0xff]
    %v408 = vld [vmem:[%s0 + $0x10] sm:$0xff]
    %v409 = vld [vmem:[%s0 + $0x18] sm:$0xff]
    %v410 = vld [vmem:[%s0 + $0x20] sm:$0xff]
    %v411 = vld [vmem:[%s0 + $0x28] sm:$0xff]
    %v412 = vld [vmem:[%s0 + $0x30] sm:$0xff]
    %v413 = vld [vmem:[%s0 + $0x38] sm:$0xff]
    %v414 = vld [vmem:[#allocation6] sm:$0xff]
    %v415 = vld [vmem:[#allocation7] sm:$0x1]
    %v416 = vld [vmem:[#allocation9] sm:$0x1]
    %v417 = vld [vmem:[#allocation10] sm:$0x1]
    %vm418 = vcmask 64512
    %v420 = vsel %vm418, %v406, 0
    %v423 = vsel %vm418, %v407, 0
    %v426 = vsel %vm418, %v408, 0
    %v429 = vsel %vm418, %v409, 0
    %v432 = vsel %vm418, %v410, 0
    %v435 = vsel %vm418, %v411, 0
    %v438 = vsel %vm418, %v412, 0
    %v441 = vsel %vm418, %v413, 0
    %443 = vmatpush.msra.mxu0 0.0
    %444 = vmatpush.msra.mxu0 0.0
    %445 = vmatpush.msra.mxu0 0.0
    %446 = vmatpush.msra.mxu0 0.0
    %447 = vmatpush.msra.mxu0 0.0
    %448 = vmatpush.msra.mxu0 0.0
    %449 = vmatpush.msra.mxu0 0.0
    %450 = vmatpush.msra.mxu0 0.0
    %451 = vmatpush.msra.mxu0 0.0
    %452 = vmatpush.msra.mxu0 0.0
    %453 = vmatpush.msra.mxu0 0.0
    %454 = vmatpush.msra.mxu0 0.0
    %455 = vmatpush.msra.mxu0 0.0
    %456 = vmatpush.msra.mxu0 0.0
    %457 = vmatpush.msra.mxu0 0.0
    %458 = vmatpush.msra.mxu0 %v414
    %459 = vmatmul.f32.gmra.mxu0 %v420
    %v460 = vpop.f32.mrf.mxu0
    %v461 = vadd.f32 0.0, %v460
    %462 = vmatmul.f32.gmra.mxu0 %v423
    %v463 = vpop.f32.mrf.mxu0
    %v464 = vadd.f32 0.0, %v463
    %465 = vmatmul.f32.gmra.mxu0 %v426
    %v466 = vpop.f32.mrf.mxu0
    %v467 = vadd.f32 0.0, %v466
    %468 = vmatmul.f32.gmra.mxu0 %v429
    %v469 = vpop.f32.mrf.mxu0
    %v470 = vadd.f32 0.0, %v469
    %471 = vmatmul.f32.gmra.mxu0 %v432
    %v472 = vpop.f32.mrf.mxu0
    %v473 = vadd.f32 0.0, %v472
    %474 = vmatmul.f32.gmra.mxu0 %v435
    %v475 = vpop.f32.mrf.mxu0
    %v476 = vadd.f32 0.0, %v475
    %477 = vmatmul.f32.gmra.mxu0 %v438
    %v478 = vpop.f32.mrf.mxu0
    %v479 = vadd.f32 0.0, %v478
    %480 = vmatmul.f32.gmra.mxu0 %v441
    %v481 = vpop.f32.mrf.mxu0
    %v482 = vadd.f32 0.0, %v481
    %483 = vdwg.mxu0
    %v485 = vperm.slane %v415, 0
    %v487 = vmul.f32 %v461, %v485
    %v488 = vmul.f32 %v464, %v485
    %v489 = vmul.f32 %v467, %v485
    %v490 = vmul.f32 %v470, %v485
    %v491 = vmul.f32 %v473, %v485
    %v492 = vmul.f32 %v476, %v485
    %v493 = vmul.f32 %v479, %v485
    %v494 = vmul.f32 %v482, %v485
    %vm495 = vcmask 523264
    %v496 = vsel %vm495, %v487, 0.0
    %497 = vadd.xlane.f32.xlu0 %v496
    %v498 = vpop.xlane.xlu0 %497
    %v499 = vsel %vm495, %v488, 0.0
    %500 = vadd.xlane.f32.xlu0 %v499
    %v501 = vpop.xlane.xlu0 %500
    %v502 = vsel %vm495, %v489, 0.0
    %503 = vadd.xlane.f32.xlu0 %v502
    %v504 = vpop.xlane.xlu0 %503
    %v505 = vsel %vm495, %v490, 0.0
    %506 = vadd.xlane.f32.xlu0 %v505
    %v507 = vpop.xlane.xlu0 %506
    %v508 = vsel %vm495, %v491, 0.0
    %509 = vadd.xlane.f32.xlu0 %v508
    %v510 = vpop.xlane.xlu0 %509
    %v511 = vsel %vm495, %v492, 0.0
    %512 = vadd.xlane.f32.xlu0 %v511
    %v513 = vpop.xlane.xlu0 %512
    %v514 = vsel %vm495, %v493, 0.0
    %515 = vadd.xlane.f32.xlu0 %v514
    %v516 = vpop.xlane.xlu0 %515
    %v517 = vsel %vm495, %v494, 0.0
    %518 = vadd.xlane.f32.xlu0 %v517
    %v519 = vpop.xlane.xlu0 %518
    %v521 = vperm.slane %v416, 0
    %v523 = vmul.f32 %v461, %v521
    %v524 = vmul.f32 %v464, %v521
    %v525 = vmul.f32 %v467, %v521
    %v526 = vmul.f32 %v470, %v521
    %v527 = vmul.f32 %v473, %v521
    %v528 = vmul.f32 %v476, %v521
    %v529 = vmul.f32 %v479, %v521
    %v530 = vmul.f32 %v482, %v521
    %v531 = vsel %vm495, %v523, 0.0
    %532 = vadd.xlane.f32.xlu0 %v531
    %v533 = vpop.xlane.xlu0 %532
    %v534 = vsel %vm495, %v524, 0.0
    %535 = vadd.xlane.f32.xlu0 %v534
    %v536 = vpop.xlane.xlu0 %535
    %v537 = vsel %vm495, %v525, 0.0
    %538 = vadd.xlane.f32.xlu0 %v537
    %v539 = vpop.xlane.xlu0 %538
    %v540 = vsel %vm495, %v526, 0.0
    %541 = vadd.xlane.f32.xlu0 %v540
    %v542 = vpop.xlane.xlu0 %541
    %v543 = vsel %vm495, %v527, 0.0
    %544 = vadd.xlane.f32.xlu0 %v543
    %v545 = vpop.xlane.xlu0 %544
    %v546 = vsel %vm495, %v528, 0.0
    %547 = vadd.xlane.f32.xlu0 %v546
    %v548 = vpop.xlane.xlu0 %547
    %v549 = vsel %vm495, %v529, 0.0
    %550 = vadd.xlane.f32.xlu0 %v549
    %v551 = vpop.xlane.xlu0 %550
    %v552 = vsel %vm495, %v530, 0.0
    %553 = vadd.xlane.f32.xlu0 %v552
    %v554 = vpop.xlane.xlu0 %553
    %555 = vxpose.xlu0.b32.start [1/16] %v498, 128
    %556 = vxpose.xlu0.b32.cont [2/16] %v501, 128
    %557 = vxpose.xlu0.b32.cont [3/16] %v504, 128
    %558 = vxpose.xlu0.b32.cont [4/16] %v507, 128
    %559 = vxpose.xlu0.b32.cont [5/16] %v510, 128
    %560 = vxpose.xlu0.b32.cont [6/16] %v513, 128
    %561 = vxpose.xlu0.b32.cont [7/16] %v516, 128
    %562 = vxpose.xlu0.b32.cont [8/16] %v519, 128
    %563 = vxpose.xlu0.b32.cont [9/16] 0.0, 128
    %564 = vxpose.xlu0.b32.cont [10/16] 0.0, 128
    %565 = vxpose.xlu0.b32.cont [11/16] 0.0, 128
    %566 = vxpose.xlu0.b32.cont [12/16] 0.0, 128
    %567 = vxpose.xlu0.b32.cont [13/16] 0.0, 128
    %568 = vxpose.xlu0.b32.cont [14/16] 0.0, 128
    %569 = vxpose.xlu0.b32.cont [15/16] 0.0, 128
    %570 = vxpose.xlu0.b32.end [16/16] 0.0, 128
    %v571 = vpop.trf.xlu0
    %v572 = vpop.trf.xlu0
    %v573 = vpop.trf.xlu0
    %v574 = vpop.trf.xlu0
    %v575 = vpop.trf.xlu0
    %v576 = vpop.trf.xlu0
    %v577 = vpop.trf.xlu0
    %v578 = vpop.trf.xlu0
    %v579 = vpop.trf.xlu0
    %v580 = vpop.trf.xlu0
    %v581 = vpop.trf.xlu0
    %v582 = vpop.trf.xlu0
    %v583 = vpop.trf.xlu0
    %v584 = vpop.trf.xlu0
    %v585 = vpop.trf.xlu0
    %v586 = vpop.trf.xlu0
    %v587 = vperm.slane %v571, 0
    %v588 = vadd.f32 %v533, %v587
    %v589 = vadd.f32 %v536, %v587
    %v590 = vadd.f32 %v539, %v587
    %v591 = vadd.f32 %v542, %v587
    %v592 = vadd.f32 %v545, %v587
    %v593 = vadd.f32 %v548, %v587
    %v594 = vadd.f32 %v551, %v587
    %v595 = vadd.f32 %v554, %v587
    %vm596 = vcmp.gt.f32.partialorder %v588, 0.0
    %vm597 = vcmp.gt.f32.partialorder %v589, 0.0
    %vm598 = vcmp.gt.f32.partialorder %v590, 0.0
    %vm599 = vcmp.gt.f32.partialorder %v591, 0.0
    %vm600 = vcmp.gt.f32.partialorder %v592, 0.0
    %vm601 = vcmp.gt.f32.partialorder %v593, 0.0
    %vm602 = vcmp.gt.f32.partialorder %v594, 0.0
    %vm603 = vcmp.gt.f32.partialorder %v595, 0.0
    %v604 = vmul.f32 %v588, 0.2
    %v605 = vmul.f32 %v589, 0.2
    %v606 = vmul.f32 %v590, 0.2
    %v607 = vmul.f32 %v591, 0.2
    %v608 = vmul.f32 %v592, 0.2
    %v609 = vmul.f32 %v593, 0.2
    %v610 = vmul.f32 %v594, 0.2
    %v611 = vmul.f32 %v595, 0.2
    %v612 = vsel %vm596, %v588, %v604
    %v613 = vsel %vm597, %v589, %v605
    %v614 = vsel %vm598, %v590, %v606
    %v615 = vsel %vm599, %v591, %v607
    %v616 = vsel %vm600, %v592, %v608
    %v617 = vsel %vm601, %v593, %v609
    %v618 = vsel %vm602, %v594, %v610
    %v619 = vsel %vm603, %v595, %v611
    %v620 = vadd.f32 %v612, %v398
    %v621 = vadd.f32 %v613, %v399
    %v622 = vadd.f32 %v614, %v400
    %v623 = vadd.f32 %v615, %v401
    %v624 = vadd.f32 %v616, %v402
    %v625 = vadd.f32 %v617, %v403
    %v626 = vadd.f32 %v618, %v404
    %v627 = vadd.f32 %v619, %v405
    %v628 = vsel %vm495, %v620, -inf
    %629 = vmax.xlane.f32.xlu0 %v628
    %v630 = vpop.xlane.xlu0 %629
    %v631 = vsel %vm495, %v621, -inf
    %632 = vmax.xlane.f32.xlu0 %v631
    %v633 = vpop.xlane.xlu0 %632
    %v634 = vsel %vm495, %v622, -inf
    %635 = vmax.xlane.f32.xlu0 %v634
    %v636 = vpop.xlane.xlu0 %635
    %v637 = vsel %vm495, %v623, -inf
    %638 = vmax.xlane.f32.xlu0 %v637
    %v639 = vpop.xlane.xlu0 %638
    %v640 = vsel %vm495, %v624, -inf
    %641 = vmax.xlane.f32.xlu0 %v640
    %v642 = vpop.xlane.xlu0 %641
    %v643 = vsel %vm495, %v625, -inf
    %644 = vmax.xlane.f32.xlu0 %v643
    %v645 = vpop.xlane.xlu0 %644
    %v646 = vsel %vm495, %v626, -inf
    %647 = vmax.xlane.f32.xlu0 %v646
    %v648 = vpop.xlane.xlu0 %647
    %v649 = vsel %vm495, %v627, -inf
    %650 = vmax.xlane.f32.xlu0 %v649
    %v651 = vpop.xlane.xlu0 %650
    %v652 = vsub.f32 %v620, %v630
    %v653 = vsub.f32 %v621, %v633
    %v654 = vsub.f32 %v622, %v636
    %v655 = vsub.f32 %v623, %v639
    %v656 = vsub.f32 %v624, %v642
    %v657 = vsub.f32 %v625, %v645
    %v658 = vsub.f32 %v626, %v648
    %v659 = vsub.f32 %v627, %v651
    %v660 = vmul.f32 %v652, 1.442695
    %v661 = vpow.pop %v660
    %v662 = vmul.f32 %v653, 1.442695
    %v663 = vpow.pop %v662
    %v664 = vmul.f32 %v654, 1.442695
    %v665 = vpow.pop %v664
    %v666 = vmul.f32 %v655, 1.442695
    %v667 = vpow.pop %v666
    %v668 = vmul.f32 %v656, 1.442695
    %v669 = vpow.pop %v668
    %v670 = vmul.f32 %v657, 1.442695
    %v671 = vpow.pop %v670
    %v672 = vmul.f32 %v658, 1.442695
    %v673 = vpow.pop %v672
    %v674 = vmul.f32 %v659, 1.442695
    %v675 = vpow.pop %v674
    %v676 = vsel %vm495, %v661, 0.0
    %677 = vadd.xlane.f32.xlu0 %v676
    %v678 = vpop.xlane.xlu0 %677
    %v679 = vsel %vm495, %v663, 0.0
    %680 = vadd.xlane.f32.xlu0 %v679
    %v681 = vpop.xlane.xlu0 %680
    %v682 = vsel %vm495, %v665, 0.0
    %683 = vadd.xlane.f32.xlu0 %v682
    %v684 = vpop.xlane.xlu0 %683
    %v685 = vsel %vm495, %v667, 0.0
    %686 = vadd.xlane.f32.xlu0 %v685
    %v687 = vpop.xlane.xlu0 %686
    %v688 = vsel %vm495, %v669, 0.0
    %689 = vadd.xlane.f32.xlu0 %v688
    %v690 = vpop.xlane.xlu0 %689
    %v691 = vsel %vm495, %v671, 0.0
    %692 = vadd.xlane.f32.xlu0 %v691
    %v693 = vpop.xlane.xlu0 %692
    %v694 = vsel %vm495, %v673, 0.0
    %695 = vadd.xlane.f32.xlu0 %v694
    %v696 = vpop.xlane.xlu0 %695
    %v697 = vsel %vm495, %v675, 0.0
    %698 = vadd.xlane.f32.xlu0 %v697
    %v699 = vpop.xlane.xlu0 %698
    %v700 = vrcp.pop %v678
    %v701 = vmul.f32 %v678, %v700
    %v702 = vsub.f32 1.0, %v701
    %v703 = vmul.f32 %v700, %v702
    %v704 = vadd.f32 %v700, %v703
    %vm705 = vweird.f32 %v678
    %vm706 = vweird.f32 %v700
    %vm707 = vmor %vm705, %vm706
    %v708 = vsel %vm707, %v700, %v704
    %v709 = vand.u32 2147483647, %v678
    %vm710 = vcmp.eq.f32.partialorder %v709, 8.507059e+37
    %v711 = vand.u32 %v678, 2147483648
    %v712 = vor.u32 1.1754944e-38, %v711
    %v713 = vsel %vm710, %v712, %v708
    %v714 = vmul.f32 %v661, %v713
    %v715 = vrcp.pop %v681
    %v716 = vmul.f32 %v681, %v715
    %v717 = vsub.f32 1.0, %v716
    %v718 = vmul.f32 %v715, %v717
    %v719 = vadd.f32 %v715, %v718
    %vm720 = vweird.f32 %v681
    %vm721 = vweird.f32 %v715
    %vm722 = vmor %vm720, %vm721
    %v723 = vsel %vm722, %v715, %v719
    %v724 = vand.u32 2147483647, %v681
    %vm725 = vcmp.eq.f32.partialorder %v724, 8.507059e+37
    %v726 = vand.u32 %v681, 2147483648
    %v727 = vor.u32 1.1754944e-38, %v726
    %v728 = vsel %vm725, %v727, %v723
    %v729 = vmul.f32 %v663, %v728
    %v730 = vrcp.pop %v684
    %v731 = vmul.f32 %v684, %v730
    %v732 = vsub.f32 1.0, %v731
    %v733 = vmul.f32 %v730, %v732
    %v734 = vadd.f32 %v730, %v733
    %vm735 = vweird.f32 %v684
    %vm736 = vweird.f32 %v730
    %vm737 = vmor %vm735, %vm736
    %v738 = vsel %vm737, %v730, %v734
    %v739 = vand.u32 2147483647, %v684
    %vm740 = vcmp.eq.f32.partialorder %v739, 8.507059e+37
    %v741 = vand.u32 %v684, 2147483648
    %v742 = vor.u32 1.1754944e-38, %v741
    %v743 = vsel %vm740, %v742, %v738
    %v744 = vmul.f32 %v665, %v743
    %v745 = vrcp.pop %v687
    %v746 = vmul.f32 %v687, %v745
    %v747 = vsub.f32 1.0, %v746
    %v748 = vmul.f32 %v745, %v747
    %v749 = vadd.f32 %v745, %v748
    %vm750 = vweird.f32 %v687
    %vm751 = vweird.f32 %v745
    %vm752 = vmor %vm750, %vm751
    %v753 = vsel %vm752, %v745, %v749
    %v754 = vand.u32 2147483647, %v687
    %vm755 = vcmp.eq.f32.partialorder %v754, 8.507059e+37
    %v756 = vand.u32 %v687, 2147483648
    %v757 = vor.u32 1.1754944e-38, %v756
    %v758 = vsel %vm755, %v757, %v753
    %v759 = vmul.f32 %v667, %v758
    %v760 = vrcp.pop %v690
    %v761 = vmul.f32 %v690, %v760
    %v762 = vsub.f32 1.0, %v761
    %v763 = vmul.f32 %v760, %v762
    %v764 = vadd.f32 %v760, %v763
    %vm765 = vweird.f32 %v690
    %vm766 = vweird.f32 %v760
    %vm767 = vmor %vm765, %vm766
    %v768 = vsel %vm767, %v760, %v764
    %v769 = vand.u32 2147483647, %v690
    %vm770 = vcmp.eq.f32.partialorder %v769, 8.507059e+37
    %v771 = vand.u32 %v690, 2147483648
    %v772 = vor.u32 1.1754944e-38, %v771
    %v773 = vsel %vm770, %v772, %v768
    %v774 = vmul.f32 %v669, %v773
    %v775 = vrcp.pop %v693
    %v776 = vmul.f32 %v693, %v775
    %v777 = vsub.f32 1.0, %v776
    %v778 = vmul.f32 %v775, %v777
    %v779 = vadd.f32 %v775, %v778
    %vm780 = vweird.f32 %v693
    %vm781 = vweird.f32 %v775
    %vm782 = vmor %vm780, %vm781
    %v783 = vsel %vm782, %v775, %v779
    %v784 = vand.u32 2147483647, %v693
    %vm785 = vcmp.eq.f32.partialorder %v784, 8.507059e+37
    %v786 = vand.u32 %v693, 2147483648
    %v787 = vor.u32 1.1754944e-38, %v786
    %v788 = vsel %vm785, %v787, %v783
    %v789 = vmul.f32 %v671, %v788
    %v790 = vrcp.pop %v696
    %v791 = vmul.f32 %v696, %v790
    %v792 = vsub.f32 1.0, %v791
    %v793 = vmul.f32 %v790, %v792
    %v794 = vadd.f32 %v790, %v793
    %vm795 = vweird.f32 %v696
    %vm796 = vweird.f32 %v790
    %vm797 = vmor %vm795, %vm796
    %v798 = vsel %vm797, %v790, %v794
    %v799 = vand.u32 2147483647, %v696
    %vm800 = vcmp.eq.f32.partialorder %v799, 8.507059e+37
    %v801 = vand.u32 %v696, 2147483648
    %v802 = vor.u32 1.1754944e-38, %v801
    %v803 = vsel %vm800, %v802, %v798
    %v804 = vmul.f32 %v673, %v803
    %v805 = vrcp.pop %v699
    %v806 = vmul.f32 %v699, %v805
    %v807 = vsub.f32 1.0, %v806
    %v808 = vmul.f32 %v805, %v807
    %v809 = vadd.f32 %v805, %v808
    %vm810 = vweird.f32 %v699
    %vm811 = vweird.f32 %v805
    %vm812 = vmor %vm810, %vm811
    %v813 = vsel %vm812, %v805, %v809
    %v814 = vand.u32 2147483647, %v699
    %vm815 = vcmp.eq.f32.partialorder %v814, 8.507059e+37
    %v816 = vand.u32 %v699, 2147483648
    %v817 = vor.u32 1.1754944e-38, %v816
    %v818 = vsel %vm815, %v817, %v813
    %v819 = vmul.f32 %v675, %v818
    %v821 = vperm.slane %v417, 0
    %v824 = vsel %vm495, %v714, 0
    %v827 = vsel %vm495, %v729, 0
    %v830 = vsel %vm495, %v744, 0
    %v833 = vsel %vm495, %v759, 0
    %v836 = vsel %vm495, %v774, 0
    %v839 = vsel %vm495, %v789, 0
    %v842 = vsel %vm495, %v804, 0
    %v845 = vsel %vm495, %v819, 0
    %847 = vmatpush.msra.mxu0 0.0
    %848 = vmatpush.msra.mxu0 0.0
    %849 = vmatpush.msra.mxu0 0.0
    %850 = vmatpush.msra.mxu0 0.0
    %851 = vmatpush.msra.mxu0 0.0
    %852 = vmatpush.msra.mxu0 0.0
    %853 = vmatpush.msra.mxu0 0.0
    %854 = vmatpush.msra.mxu0 0.0
    %855 = vmatpush.msra.mxu0 %v482
    %856 = vmatpush.msra.mxu0 %v479
    %857 = vmatpush.msra.mxu0 %v476
    %858 = vmatpush.msra.mxu0 %v473
    %859 = vmatpush.msra.mxu0 %v470
    %860 = vmatpush.msra.mxu0 %v467
    %861 = vmatpush.msra.mxu0 %v464
    %862 = vmatpush.msra.mxu0 %v461
    %863 = vmatmul.f32.gmra.mxu0 %v824
    %v864 = vpop.f32.mrf.mxu0
    %v865 = vadd.f32 %v821, %v864
    %866 = vmatmul.f32.gmra.mxu0 %v827
    %v867 = vpop.f32.mrf.mxu0
    %v868 = vadd.f32 %v821, %v867
    %869 = vmatmul.f32.gmra.mxu0 %v830
    %v870 = vpop.f32.mrf.mxu0
    %v871 = vadd.f32 %v821, %v870
    %872 = vmatmul.f32.gmra.mxu0 %v833
    %v873 = vpop.f32.mrf.mxu0
    %v874 = vadd.f32 %v821, %v873
    %875 = vmatmul.f32.gmra.mxu0 %v836
    %v876 = vpop.f32.mrf.mxu0
    %v877 = vadd.f32 %v821, %v876
    %878 = vmatmul.f32.gmra.mxu0 %v839
    %v879 = vpop.f32.mrf.mxu0
    %v880 = vadd.f32 %v821, %v879
    %881 = vmatmul.f32.gmra.mxu0 %v842
    %v882 = vpop.f32.mrf.mxu0
    %v883 = vadd.f32 %v821, %v882
    %884 = vmatmul.f32.gmra.mxu0 %v845
    %v885 = vpop.f32.mrf.mxu0
    %v886 = vadd.f32 %v821, %v885
    %887 = vdwg.mxu0
    %v888 = vtanh.pop %v865
    %v889 = vtanh.pop %v868
    %v890 = vtanh.pop %v871
    %v891 = vtanh.pop %v874
    %v892 = vtanh.pop %v877
    %v893 = vtanh.pop %v880
    %v894 = vtanh.pop %v883
    %v895 = vtanh.pop %v886
    %v896 = vsel %vm495, %v888, 0.0
    %v897 = vsel %vm495, %v889, 0.0
    %v898 = vadd.f32 %v896, %v897
    %v899 = vsel %vm495, %v890, 0.0
    %v900 = vadd.f32 %v898, %v899
    %v901 = vsel %vm495, %v891, 0.0
    %v902 = vadd.f32 %v900, %v901
    %v903 = vsel %vm495, %v892, 0.0
    %v904 = vadd.f32 %v902, %v903
    %v905 = vsel %vm495, %v893, 0.0
    %v906 = vadd.f32 %v904, %v905
    %v907 = vsel %vm495, %v894, 0.0
    %v908 = vadd.f32 %v906, %v907
    %v909 = vsel %vm495, %v895, 0.0
    %v910 = vadd.f32 %v908, %v909
    %v911 = vrot.slane %v910, 4
    %v912 = vadd.f32 %v910, %v911
    %v913 = vrot.slane %v912, 2
    %v914 = vadd.f32 %v912, %v913
    %v915 = vrot.slane %v914, 1
    %v916 = vadd.f32 %v914, %v915
    %v917 = vrcp.pop 64.0
    %v918 = vmul.f32 64.0, %v917
    %v919 = vsub.f32 1.0, %v918
    %v920 = vmul.f32 %v917, %v919
    %v921 = vadd.f32 %v917, %v920
    %vm922 = vweird.f32 %v917
    %v923 = vsel %vm922, %v917, %v921
    %v924 = vmul.f32 %v916, %v923
    %v925 = vsub.f32 %v888, %v924
    %v926 = vsub.f32 %v889, %v924
    %v927 = vsub.f32 %v890, %v924
    %v928 = vsub.f32 %v891, %v924
    %v929 = vsub.f32 %v892, %v924
    %v930 = vsub.f32 %v893, %v924
    %v931 = vsub.f32 %v894, %v924
    %v932 = vsub.f32 %v895, %v924
    %v933 = vmul.f32 %v925, %v925
    %v934 = vmul.f32 %v926, %v926
    %v935 = vmul.f32 %v927, %v927
    %v936 = vmul.f32 %v928, %v928
    %v937 = vmul.f32 %v929, %v929
    %v938 = vmul.f32 %v930, %v930
    %v939 = vmul.f32 %v931, %v931
    %v940 = vmul.f32 %v932, %v932
    %v941 = vsel %vm495, %v933, 0.0
    %v942 = vsel %vm495, %v934, 0.0
    %v943 = vadd.f32 %v941, %v942
    %v944 = vsel %vm495, %v935, 0.0
    %v945 = vadd.f32 %v943, %v944
    %v946 = vsel %vm495, %v936, 0.0
    %v947 = vadd.f32 %v945, %v946
    %v948 = vsel %vm495, %v937, 0.0
    %v949 = vadd.f32 %v947, %v948
    %v950 = vsel %vm495, %v938, 0.0
    %v951 = vadd.f32 %v949, %v950
    %v952 = vsel %vm495, %v939, 0.0
    %v953 = vadd.f32 %v951, %v952
    %v954 = vsel %vm495, %v940, 0.0
    %v955 = vadd.f32 %v953, %v954
    %v956 = vrot.slane %v955, 4
    %v957 = vadd.f32 %v955, %v956
    %v958 = vrot.slane %v957, 2
    %v959 = vadd.f32 %v957, %v958
    %v960 = vrot.slane %v959, 1
    %v961 = vadd.f32 %v959, %v960
    %v962 = vmul.f32 %v961, %v923
    %v963 = vadd.f32 %v962, 1e-05
    %v964 = vrsqrt.pop %v963
    %v965 = vmul.f32 %v964, %v963
    %v966 = vmul.f32 %v965, %v964
    %v967 = vmul.f32 0.5, %v966
    %v968 = vsub.f32 1.5, %v967
    %v969 = vmul.f32 %v964, %v968
    %vm970 = vweird.f32 %v963
    %vm971 = vweird.f32 %v964
    %vm972 = vmor %vm970, %vm971
    %v973 = vsel %vm972, %v964, %v969
    %v974 = vmul.f32 %v925, %v973
    %v975 = vmul.f32 %v926, %v973
    %v976 = vmul.f32 %v927, %v973
    %v977 = vmul.f32 %v928, %v973
    %v978 = vmul.f32 %v929, %v973
    %v979 = vmul.f32 %v930, %v973
    %v980 = vmul.f32 %v931, %v973
    %v981 = vmul.f32 %v932, %v973
    %v982 = vld [vmem:[#allocation30] sm:$0x1]
    %v984 = vperm.slane %v982, 0
    %v986 = vmul.f32 %v974, %v984
    %v987 = vmul.f32 %v975, %v984
    %v988 = vmul.f32 %v976, %v984
    %v989 = vmul.f32 %v977, %v984
    %v990 = vmul.f32 %v978, %v984
    %v991 = vmul.f32 %v979, %v984
    %v992 = vmul.f32 %v980, %v984
    %v993 = vmul.f32 %v981, %v984
    %v994 = vld [vmem:[#allocation31] sm:$0x1]
    %v996 = vperm.slane %v994, 0
    %v998 = vadd.f32 %v986, %v996
    %v999 = vadd.f32 %v987, %v996
    %v1000 = vadd.f32 %v988, %v996
    %v1001 = vadd.f32 %v989, %v996
    %v1002 = vadd.f32 %v990, %v996
    %v1003 = vadd.f32 %v991, %v996
    %v1004 = vadd.f32 %v992, %v996
    %v1005 = vadd.f32 %v993, %v996
    %v1006 = vld [vmem:[#allocation12] sm:$0xff]
    %v1007 = vld [vmem:[#allocation12 + $0x8] sm:$0xff]
    %v1008 = vld [vmem:[#allocation12 + $0x10] sm:$0xff]
    %v1009 = vld [vmem:[#allocation12 + $0x18] sm:$0xff]
    %v1010 = vld [vmem:[#allocation12 + $0x20] sm:$0xff]
    %v1011 = vld [vmem:[#allocation12 + $0x28] sm:$0xff]
    %v1012 = vld [vmem:[#allocation12 + $0x30] sm:$0xff]
    %v1013 = vld [vmem:[#allocation12 + $0x38] sm:$0xff]
    %v1014 = vld [vmem:[#allocation13] sm:$0x1]
    %v1015 = vld [vmem:[#allocation15] sm:$0x1]
    %v1016 = vld [vmem:[#allocation16] sm:$0x1]
    %v1018 = vsel %vm495, %v998, 0
    %v1021 = vsel %vm495, %v999, 0
    %v1024 = vsel %vm495, %v1000, 0
    %v1027 = vsel %vm495, %v1001, 0
    %v1030 = vsel %vm495, %v1002, 0
    %v1033 = vsel %vm495, %v1003, 0
    %v1036 = vsel %vm495, %v1004, 0
    %v1039 = vsel %vm495, %v1005, 0
    %1041 = vmatpush.msra.mxu0 0.0
    %1042 = vmatpush.msra.mxu0 0.0
    %1043 = vmatpush.msra.mxu0 0.0
    %1044 = vmatpush.msra.mxu0 0.0
    %1045 = vmatpush.msra.mxu0 0.0
    %1046 = vmatpush.msra.mxu0 0.0
    %1047 = vmatpush.msra.mxu0 0.0
    %1048 = vmatpush.msra.mxu0 0.0
    %1049 = vmatpush.msra.mxu0 %v1013
    %1050 = vmatpush.msra.mxu0 %v1012
    %1051 = vmatpush.msra.mxu0 %v1011
    %1052 = vmatpush.msra.mxu0 %v1010
    %1053 = vmatpush.msra.mxu0 %v1009
    %1054 = vmatpush.msra.mxu0 %v1008
    %1055 = vmatpush.msra.mxu0 %v1007
    %1056 = vmatpush.msra.mxu0 %v1006
    %1057 = vmatmul.f32.gmra.mxu0 %v1018
    %v1058 = vpop.f32.mrf.mxu0
    %v1059 = vadd.f32 0.0, %v1058
    %1060 = vmatmul.f32.gmra.mxu0 %v1021
    %v1061 = vpop.f32.mrf.mxu0
    %v1062 = vadd.f32 0.0, %v1061
    %1063 = vmatmul.f32.gmra.mxu0 %v1024
    %v1064 = vpop.f32.mrf.mxu0
    %v1065 = vadd.f32 0.0, %v1064
    %1066 = vmatmul.f32.gmra.mxu0 %v1027
    %v1067 = vpop.f32.mrf.mxu0
    %v1068 = vadd.f32 0.0, %v1067
    %1069 = vmatmul.f32.gmra.mxu0 %v1030
    %v1070 = vpop.f32.mrf.mxu0
    %v1071 = vadd.f32 0.0, %v1070
    %1072 = vmatmul.f32.gmra.mxu0 %v1033
    %v1073 = vpop.f32.mrf.mxu0
    %v1074 = vadd.f32 0.0, %v1073
    %1075 = vmatmul.f32.gmra.mxu0 %v1036
    %v1076 = vpop.f32.mrf.mxu0
    %v1077 = vadd.f32 0.0, %v1076
    %1078 = vmatmul.f32.gmra.mxu0 %v1039
    %v1079 = vpop.f32.mrf.mxu0
    %v1080 = vadd.f32 0.0, %v1079
    %1081 = vdwg.mxu0
    %v1083 = vperm.slane %v1014, 0
    %v1085 = vmul.f32 %v1059, %v1083
    %v1086 = vmul.f32 %v1062, %v1083
    %v1087 = vmul.f32 %v1065, %v1083
    %v1088 = vmul.f32 %v1068, %v1083
    %v1089 = vmul.f32 %v1071, %v1083
    %v1090 = vmul.f32 %v1074, %v1083
    %v1091 = vmul.f32 %v1077, %v1083
    %v1092 = vmul.f32 %v1080, %v1083
    %v1093 = vsel %vm495, %v1085, 0.0
    %1094 = vadd.xlane.f32.xlu0 %v1093
    %v1095 = vpop.xlane.xlu0 %1094
    %v1096 = vsel %vm495, %v1086, 0.0
    %1097 = vadd.xlane.f32.xlu0 %v1096
    %v1098 = vpop.xlane.xlu0 %1097
    %v1099 = vsel %vm495, %v1087, 0.0
    %1100 = vadd.xlane.f32.xlu0 %v1099
    %v1101 = vpop.xlane.xlu0 %1100
    %v1102 = vsel %vm495, %v1088, 0.0
    %1103 = vadd.xlane.f32.xlu0 %v1102
    %v1104 = vpop.xlane.xlu0 %1103
    %v1105 = vsel %vm495, %v1089, 0.0
    %1106 = vadd.xlane.f32.xlu0 %v1105
    %v1107 = vpop.xlane.xlu0 %1106
    %v1108 = vsel %vm495, %v1090, 0.0
    %1109 = vadd.xlane.f32.xlu0 %v1108
    %v1110 = vpop.xlane.xlu0 %1109
    %v1111 = vsel %vm495, %v1091, 0.0
    %1112 = vadd.xlane.f32.xlu0 %v1111
    %v1113 = vpop.xlane.xlu0 %1112
    %v1114 = vsel %vm495, %v1092, 0.0
    %1115 = vadd.xlane.f32.xlu0 %v1114
    %v1116 = vpop.xlane.xlu0 %1115
    %v1118 = vperm.slane %v1015, 0
    %v1120 = vmul.f32 %v1059, %v1118
    %v1121 = vmul.f32 %v1062, %v1118
    %v1122 = vmul.f32 %v1065, %v1118
    %v1123 = vmul.f32 %v1068, %v1118
    %v1124 = vmul.f32 %v1071, %v1118
    %v1125 = vmul.f32 %v1074, %v1118
    %v1126 = vmul.f32 %v1077, %v1118
    %v1127 = vmul.f32 %v1080, %v1118
    %v1128 = vsel %vm495, %v1120, 0.0
    %1129 = vadd.xlane.f32.xlu0 %v1128
    %v1130 = vpop.xlane.xlu0 %1129
    %v1131 = vsel %vm495, %v1121, 0.0
    %1132 = vadd.xlane.f32.xlu0 %v1131
    %v1133 = vpop.xlane.xlu0 %1132
    %v1134 = vsel %vm495, %v1122, 0.0
    %1135 = vadd.xlane.f32.xlu0 %v1134
    %v1136 = vpop.xlane.xlu0 %1135
    %v1137 = vsel %vm495, %v1123, 0.0
    %1138 = vadd.xlane.f32.xlu0 %v1137
    %v1139 = vpop.xlane.xlu0 %1138
    %v1140 = vsel %vm495, %v1124, 0.0
    %1141 = vadd.xlane.f32.xlu0 %v1140
    %v1142 = vpop.xlane.xlu0 %1141
    %v1143 = vsel %vm495, %v1125, 0.0
    %1144 = vadd.xlane.f32.xlu0 %v1143
    %v1145 = vpop.xlane.xlu0 %1144
    %v1146 = vsel %vm495, %v1126, 0.0
    %1147 = vadd.xlane.f32.xlu0 %v1146
    %v1148 = vpop.xlane.xlu0 %1147
    %v1149 = vsel %vm495, %v1127, 0.0
    %1150 = vadd.xlane.f32.xlu0 %v1149
    %v1151 = vpop.xlane.xlu0 %1150
    %1152 = vxpose.xlu0.b32.start [1/16] %v1095, 128
    %1153 = vxpose.xlu0.b32.cont [2/16] %v1098, 128
    %1154 = vxpose.xlu0.b32.cont [3/16] %v1101, 128
    %1155 = vxpose.xlu0.b32.cont [4/16] %v1104, 128
    %1156 = vxpose.xlu0.b32.cont [5/16] %v1107, 128
    %1157 = vxpose.xlu0.b32.cont [6/16] %v1110, 128
    %1158 = vxpose.xlu0.b32.cont [7/16] %v1113, 128
    %1159 = vxpose.xlu0.b32.cont [8/16] %v1116, 128
    %1160 = vxpose.xlu0.b32.cont [9/16] 0.0, 128
    %1161 = vxpose.xlu0.b32.cont [10/16] 0.0, 128
    %1162 = vxpose.xlu0.b32.cont [11/16] 0.0, 128
    %1163 = vxpose.xlu0.b32.cont [12/16] 0.0, 128
    %1164 = vxpose.xlu0.b32.cont [13/16] 0.0, 128
    %1165 = vxpose.xlu0.b32.cont [14/16] 0.0, 128
    %1166 = vxpose.xlu0.b32.cont [15/16] 0.0, 128
    %1167 = vxpose.xlu0.b32.end [16/16] 0.0, 128
    %v1168 = vpop.trf.xlu0
    %v1169 = vpop.trf.xlu0
    %v1170 = vpop.trf.xlu0
    %v1171 = vpop.trf.xlu0
    %v1172 = vpop.trf.xlu0
    %v1173 = vpop.trf.xlu0
    %v1174 = vpop.trf.xlu0
    %v1175 = vpop.trf.xlu0
    %v1176 = vpop.trf.xlu0
    %v1177 = vpop.trf.xlu0
    %v1178 = vpop.trf.xlu0
    %v1179 = vpop.trf.xlu0
    %v1180 = vpop.trf.xlu0
    %v1181 = vpop.trf.xlu0
    %v1182 = vpop.trf.xlu0
    %v1183 = vpop.trf.xlu0
    %v1184 = vperm.slane %v1168, 0
    %v1185 = vadd.f32 %v1130, %v1184
    %v1186 = vadd.f32 %v1133, %v1184
    %v1187 = vadd.f32 %v1136, %v1184
    %v1188 = vadd.f32 %v1139, %v1184
    %v1189 = vadd.f32 %v1142, %v1184
    %v1190 = vadd.f32 %v1145, %v1184
    %v1191 = vadd.f32 %v1148, %v1184
    %v1192 = vadd.f32 %v1151, %v1184
    %vm1193 = vcmp.gt.f32.partialorder %v1185, 0.0
    %vm1194 = vcmp.gt.f32.partialorder %v1186, 0.0
    %vm1195 = vcmp.gt.f32.partialorder %v1187, 0.0
    %vm1196 = vcmp.gt.f32.partialorder %v1188, 0.0
    %vm1197 = vcmp.gt.f32.partialorder %v1189, 0.0
    %vm1198 = vcmp.gt.f32.partialorder %v1190, 0.0
    %vm1199 = vcmp.gt.f32.partialorder %v1191, 0.0
    %vm1200 = vcmp.gt.f32.partialorder %v1192, 0.0
    %v1201 = vmul.f32 %v1185, 0.2
    %v1202 = vmul.f32 %v1186, 0.2
    %v1203 = vmul.f32 %v1187, 0.2
    %v1204 = vmul.f32 %v1188, 0.2
    %v1205 = vmul.f32 %v1189, 0.2
    %v1206 = vmul.f32 %v1190, 0.2
    %v1207 = vmul.f32 %v1191, 0.2
    %v1208 = vmul.f32 %v1192, 0.2
    %v1209 = vsel %vm1193, %v1185, %v1201
    %v1210 = vsel %vm1194, %v1186, %v1202
    %v1211 = vsel %vm1195, %v1187, %v1203
    %v1212 = vsel %vm1196, %v1188, %v1204
    %v1213 = vsel %vm1197, %v1189, %v1205
    %v1214 = vsel %vm1198, %v1190, %v1206
    %v1215 = vsel %vm1199, %v1191, %v1207
    %v1216 = vsel %vm1200, %v1192, %v1208
    %v1217 = vadd.f32 %v1209, %v398
    %v1218 = vadd.f32 %v1210, %v399
    %v1219 = vadd.f32 %v1211, %v400
    %v1220 = vadd.f32 %v1212, %v401
    %v1221 = vadd.f32 %v1213, %v402
    %v1222 = vadd.f32 %v1214, %v403
    %v1223 = vadd.f32 %v1215, %v404
    %v1224 = vadd.f32 %v1216, %v405
    %v1225 = vsel %vm495, %v1217, -inf
    %1226 = vmax.xlane.f32.xlu0 %v1225
    %v1227 = vpop.xlane.xlu0 %1226
    %v1228 = vsel %vm495, %v1218, -inf
    %1229 = vmax.xlane.f32.xlu0 %v1228
    %v1230 = vpop.xlane.xlu0 %1229
    %v1231 = vsel %vm495, %v1219, -inf
    %1232 = vmax.xlane.f32.xlu0 %v1231
    %v1233 = vpop.xlane.xlu0 %1232
    %v1234 = vsel %vm495, %v1220, -inf
    %1235 = vmax.xlane.f32.xlu0 %v1234
    %v1236 = vpop.xlane.xlu0 %1235
    %v1237 = vsel %vm495, %v1221, -inf
    %1238 = vmax.xlane.f32.xlu0 %v1237
    %v1239 = vpop.xlane.xlu0 %1238
    %v1240 = vsel %vm495, %v1222, -inf
    %1241 = vmax.xlane.f32.xlu0 %v1240
    %v1242 = vpop.xlane.xlu0 %1241
    %v1243 = vsel %vm495, %v1223, -inf
    %1244 = vmax.xlane.f32.xlu0 %v1243
    %v1245 = vpop.xlane.xlu0 %1244
    %v1246 = vsel %vm495, %v1224, -inf
    %1247 = vmax.xlane.f32.xlu0 %v1246
    %v1248 = vpop.xlane.xlu0 %1247
    %v1249 = vsub.f32 %v1217, %v1227
    %v1250 = vsub.f32 %v1218, %v1230
    %v1251 = vsub.f32 %v1219, %v1233
    %v1252 = vsub.f32 %v1220, %v1236
    %v1253 = vsub.f32 %v1221, %v1239
    %v1254 = vsub.f32 %v1222, %v1242
    %v1255 = vsub.f32 %v1223, %v1245
    %v1256 = vsub.f32 %v1224, %v1248
    %v1257 = vmul.f32 %v1249, 1.442695
    %v1258 = vpow.pop %v1257
    %v1259 = vmul.f32 %v1250, 1.442695
    %v1260 = vpow.pop %v1259
    %v1261 = vmul.f32 %v1251, 1.442695
    %v1262 = vpow.pop %v1261
    %v1263 = vmul.f32 %v1252, 1.442695
    %v1264 = vpow.pop %v1263
    %v1265 = vmul.f32 %v1253, 1.442695
    %v1266 = vpow.pop %v1265
    %v1267 = vmul.f32 %v1254, 1.442695
    %v1268 = vpow.pop %v1267
    %v1269 = vmul.f32 %v1255, 1.442695
    %v1270 = vpow.pop %v1269
    %v1271 = vmul.f32 %v1256, 1.442695
    %v1272 = vpow.pop %v1271
    %v1273 = vsel %vm495, %v1258, 0.0
    %1274 = vadd.xlane.f32.xlu0 %v1273
    %v1275 = vpop.xlane.xlu0 %1274
    %v1276 = vsel %vm495, %v1260, 0.0
    %1277 = vadd.xlane.f32.xlu0 %v1276
    %v1278 = vpop.xlane.xlu0 %1277
    %v1279 = vsel %vm495, %v1262, 0.0
    %1280 = vadd.xlane.f32.xlu0 %v1279
    %v1281 = vpop.xlane.xlu0 %1280
    %v1282 = vsel %vm495, %v1264, 0.0
    %1283 = vadd.xlane.f32.xlu0 %v1282
    %v1284 = vpop.xlane.xlu0 %1283
    %v1285 = vsel %vm495, %v1266, 0.0
    %1286 = vadd.xlane.f32.xlu0 %v1285
    %v1287 = vpop.xlane.xlu0 %1286
    %v1288 = vsel %vm495, %v1268, 0.0
    %1289 = vadd.xlane.f32.xlu0 %v1288
    %v1290 = vpop.xlane.xlu0 %1289
    %v1291 = vsel %vm495, %v1270, 0.0
    %1292 = vadd.xlane.f32.xlu0 %v1291
    %v1293 = vpop.xlane.xlu0 %1292
    %v1294 = vsel %vm495, %v1272, 0.0
    %1295 = vadd.xlane.f32.xlu0 %v1294
    %v1296 = vpop.xlane.xlu0 %1295
    %v1297 = vrcp.pop %v1275
    %v1298 = vmul.f32 %v1275, %v1297
    %v1299 = vsub.f32 1.0, %v1298
    %v1300 = vmul.f32 %v1297, %v1299
    %v1301 = vadd.f32 %v1297, %v1300
    %vm1302 = vweird.f32 %v1275
    %vm1303 = vweird.f32 %v1297
    %vm1304 = vmor %vm1302, %vm1303
    %v1305 = vsel %vm1304, %v1297, %v1301
    %v1306 = vand.u32 2147483647, %v1275
    %vm1307 = vcmp.eq.f32.partialorder %v1306, 8.507059e+37
    %v1308 = vand.u32 %v1275, 2147483648
    %v1309 = vor.u32 1.1754944e-38, %v1308
    %v1310 = vsel %vm1307, %v1309, %v1305
    %v1311 = vmul.f32 %v1258, %v1310
    %v1312 = vrcp.pop %v1278
    %v1313 = vmul.f32 %v1278, %v1312
    %v1314 = vsub.f32 1.0, %v1313
    %v1315 = vmul.f32 %v1312, %v1314
    %v1316 = vadd.f32 %v1312, %v1315
    %vm1317 = vweird.f32 %v1278
    %vm1318 = vweird.f32 %v1312
    %vm1319 = vmor %vm1317, %vm1318
    %v1320 = vsel %vm1319, %v1312, %v1316
    %v1321 = vand.u32 2147483647, %v1278
    %vm1322 = vcmp.eq.f32.partialorder %v1321, 8.507059e+37
    %v1323 = vand.u32 %v1278, 2147483648
    %v1324 = vor.u32 1.1754944e-38, %v1323
    %v1325 = vsel %vm1322, %v1324, %v1320
    %v1326 = vmul.f32 %v1260, %v1325
    %v1327 = vrcp.pop %v1281
    %v1328 = vmul.f32 %v1281, %v1327
    %v1329 = vsub.f32 1.0, %v1328
    %v1330 = vmul.f32 %v1327, %v1329
    %v1331 = vadd.f32 %v1327, %v1330
    %vm1332 = vweird.f32 %v1281
    %vm1333 = vweird.f32 %v1327
    %vm1334 = vmor %vm1332, %vm1333
    %v1335 = vsel %vm1334, %v1327, %v1331
    %v1336 = vand.u32 2147483647, %v1281
    %vm1337 = vcmp.eq.f32.partialorder %v1336, 8.507059e+37
    %v1338 = vand.u32 %v1281, 2147483648
    %v1339 = vor.u32 1.1754944e-38, %v1338
    %v1340 = vsel %vm1337, %v1339, %v1335
    %v1341 = vmul.f32 %v1262, %v1340
    %v1342 = vrcp.pop %v1284
    %v1343 = vmul.f32 %v1284, %v1342
    %v1344 = vsub.f32 1.0, %v1343
    %v1345 = vmul.f32 %v1342, %v1344
    %v1346 = vadd.f32 %v1342, %v1345
    %vm1347 = vweird.f32 %v1284
    %vm1348 = vweird.f32 %v1342
    %vm1349 = vmor %vm1347, %vm1348
    %v1350 = vsel %vm1349, %v1342, %v1346
    %v1351 = vand.u32 2147483647, %v1284
    %vm1352 = vcmp.eq.f32.partialorder %v1351, 8.507059e+37
    %v1353 = vand.u32 %v1284, 2147483648
    %v1354 = vor.u32 1.1754944e-38, %v1353
    %v1355 = vsel %vm1352, %v1354, %v1350
    %v1356 = vmul.f32 %v1264, %v1355
    %v1357 = vrcp.pop %v1287
    %v1358 = vmul.f32 %v1287, %v1357
    %v1359 = vsub.f32 1.0, %v1358
    %v1360 = vmul.f32 %v1357, %v1359
    %v1361 = vadd.f32 %v1357, %v1360
    %vm1362 = vweird.f32 %v1287
    %vm1363 = vweird.f32 %v1357
    %vm1364 = vmor %vm1362, %vm1363
    %v1365 = vsel %vm1364, %v1357, %v1361
    %v1366 = vand.u32 2147483647, %v1287
    %vm1367 = vcmp.eq.f32.partialorder %v1366, 8.507059e+37
    %v1368 = vand.u32 %v1287, 2147483648
    %v1369 = vor.u32 1.1754944e-38, %v1368
    %v1370 = vsel %vm1367, %v1369, %v1365
    %v1371 = vmul.f32 %v1266, %v1370
    %v1372 = vrcp.pop %v1290
    %v1373 = vmul.f32 %v1290, %v1372
    %v1374 = vsub.f32 1.0, %v1373
    %v1375 = vmul.f32 %v1372, %v1374
    %v1376 = vadd.f32 %v1372, %v1375
    %vm1377 = vweird.f32 %v1290
    %vm1378 = vweird.f32 %v1372
    %vm1379 = vmor %vm1377, %vm1378
    %v1380 = vsel %vm1379, %v1372, %v1376
    %v1381 = vand.u32 2147483647, %v1290
    %vm1382 = vcmp.eq.f32.partialorder %v1381, 8.507059e+37
    %v1383 = vand.u32 %v1290, 2147483648
    %v1384 = vor.u32 1.1754944e-38, %v1383
    %v1385 = vsel %vm1382, %v1384, %v1380
    %v1386 = vmul.f32 %v1268, %v1385
    %v1387 = vrcp.pop %v1293
    %v1388 = vmul.f32 %v1293, %v1387
    %v1389 = vsub.f32 1.0, %v1388
    %v1390 = vmul.f32 %v1387, %v1389
    %v1391 = vadd.f32 %v1387, %v1390
    %vm1392 = vweird.f32 %v1293
    %vm1393 = vweird.f32 %v1387
    %vm1394 = vmor %vm1392, %vm1393
    %v1395 = vsel %vm1394, %v1387, %v1391
    %v1396 = vand.u32 2147483647, %v1293
    %vm1397 = vcmp.eq.f32.partialorder %v1396, 8.507059e+37
    %v1398 = vand.u32 %v1293, 2147483648
    %v1399 = vor.u32 1.1754944e-38, %v1398
    %v1400 = vsel %vm1397, %v1399, %v1395
    %v1401 = vmul.f32 %v1270, %v1400
    %v1402 = vrcp.pop %v1296
    %v1403 = vmul.f32 %v1296, %v1402
    %v1404 = vsub.f32 1.0, %v1403
    %v1405 = vmul.f32 %v1402, %v1404
    %v1406 = vadd.f32 %v1402, %v1405
    %vm1407 = vweird.f32 %v1296
    %vm1408 = vweird.f32 %v1402
    %vm1409 = vmor %vm1407, %vm1408
    %v1410 = vsel %vm1409, %v1402, %v1406
    %v1411 = vand.u32 2147483647, %v1296
    %vm1412 = vcmp.eq.f32.partialorder %v1411, 8.507059e+37
    %v1413 = vand.u32 %v1296, 2147483648
    %v1414 = vor.u32 1.1754944e-38, %v1413
    %v1415 = vsel %vm1412, %v1414, %v1410
    %v1416 = vmul.f32 %v1272, %v1415
    %v1418 = vperm.slane %v1016, 0
    %v1421 = vsel %vm495, %v1311, 0
    %v1424 = vsel %vm495, %v1326, 0
    %v1427 = vsel %vm495, %v1341, 0
    %v1430 = vsel %vm495, %v1356, 0
    %v1433 = vsel %vm495, %v1371, 0
    %v1436 = vsel %vm495, %v1386, 0
    %v1439 = vsel %vm495, %v1401, 0
    %v1442 = vsel %vm495, %v1416, 0
    %1444 = vmatpush.msra.mxu0 0.0
    %1445 = vmatpush.msra.mxu0 0.0
    %1446 = vmatpush.msra.mxu0 0.0
    %1447 = vmatpush.msra.mxu0 0.0
    %1448 = vmatpush.msra.mxu0 0.0
    %1449 = vmatpush.msra.mxu0 0.0
    %1450 = vmatpush.msra.mxu0 0.0
    %1451 = vmatpush.msra.mxu0 0.0
    %1452 = vmatpush.msra.mxu0 %v1080
    %1453 = vmatpush.msra.mxu0 %v1077
    %1454 = vmatpush.msra.mxu0 %v1074
    %1455 = vmatpush.msra.mxu0 %v1071
    %1456 = vmatpush.msra.mxu0 %v1068
    %1457 = vmatpush.msra.mxu0 %v1065
    %1458 = vmatpush.msra.mxu0 %v1062
    %1459 = vmatpush.msra.mxu0 %v1059
    %1460 = vmatmul.f32.gmra.mxu0 %v1421
    %v1461 = vpop.f32.mrf.mxu0
    %v1462 = vadd.f32 %v1418, %v1461
    %1463 = vmatmul.f32.gmra.mxu0 %v1424
    %v1464 = vpop.f32.mrf.mxu0
    %v1465 = vadd.f32 %v1418, %v1464
    %1466 = vmatmul.f32.gmra.mxu0 %v1427
    %v1467 = vpop.f32.mrf.mxu0
    %v1468 = vadd.f32 %v1418, %v1467
    %1469 = vmatmul.f32.gmra.mxu0 %v1430
    %v1470 = vpop.f32.mrf.mxu0
    %v1471 = vadd.f32 %v1418, %v1470
    %1472 = vmatmul.f32.gmra.mxu0 %v1433
    %v1473 = vpop.f32.mrf.mxu0
    %v1474 = vadd.f32 %v1418, %v1473
    %1475 = vmatmul.f32.gmra.mxu0 %v1436
    %v1476 = vpop.f32.mrf.mxu0
    %v1477 = vadd.f32 %v1418, %v1476
    %1478 = vmatmul.f32.gmra.mxu0 %v1439
    %v1479 = vpop.f32.mrf.mxu0
    %v1480 = vadd.f32 %v1418, %v1479
    %1481 = vmatmul.f32.gmra.mxu0 %v1442
    %v1482 = vpop.f32.mrf.mxu0
    %v1483 = vadd.f32 %v1418, %v1482
    %1484 = vdwg.mxu0
    %v1485 = vtanh.pop %v1462
    %v1486 = vtanh.pop %v1465
    %v1487 = vtanh.pop %v1468
    %v1488 = vtanh.pop %v1471
    %v1489 = vtanh.pop %v1474
    %v1490 = vtanh.pop %v1477
    %v1491 = vtanh.pop %v1480
    %v1492 = vtanh.pop %v1483
    %v1493 = vsel %vm495, %v1485, 0.0
    %v1494 = vsel %vm495, %v1486, 0.0
    %v1495 = vadd.f32 %v1493, %v1494
    %v1496 = vsel %vm495, %v1487, 0.0
    %v1497 = vadd.f32 %v1495, %v1496
    %v1498 = vsel %vm495, %v1488, 0.0
    %v1499 = vadd.f32 %v1497, %v1498
    %v1500 = vsel %vm495, %v1489, 0.0
    %v1501 = vadd.f32 %v1499, %v1500
    %v1502 = vsel %vm495, %v1490, 0.0
    %v1503 = vadd.f32 %v1501, %v1502
    %v1504 = vsel %vm495, %v1491, 0.0
    %v1505 = vadd.f32 %v1503, %v1504
    %v1506 = vsel %vm495, %v1492, 0.0
    %v1507 = vadd.f32 %v1505, %v1506
    %v1508 = vrot.slane %v1507, 4
    %v1509 = vadd.f32 %v1507, %v1508
    %v1510 = vrot.slane %v1509, 2
    %v1511 = vadd.f32 %v1509, %v1510
    %v1512 = vrot.slane %v1511, 1
    %v1513 = vadd.f32 %v1511, %v1512
    %v1514 = vmul.f32 %v1513, %v923
    %v1515 = vsub.f32 %v1485, %v1514
    %v1516 = vsub.f32 %v1486, %v1514
    %v1517 = vsub.f32 %v1487, %v1514
    %v1518 = vsub.f32 %v1488, %v1514
    %v1519 = vsub.f32 %v1489, %v1514
    %v1520 = vsub.f32 %v1490, %v1514
    %v1521 = vsub.f32 %v1491, %v1514
    %v1522 = vsub.f32 %v1492, %v1514
    %v1523 = vmul.f32 %v1515, %v1515
    %v1524 = vmul.f32 %v1516, %v1516
    %v1525 = vmul.f32 %v1517, %v1517
    %v1526 = vmul.f32 %v1518, %v1518
    %v1527 = vmul.f32 %v1519, %v1519
    %v1528 = vmul.f32 %v1520, %v1520
    %v1529 = vmul.f32 %v1521, %v1521
    %v1530 = vmul.f32 %v1522, %v1522
    %v1531 = vsel %vm495, %v1523, 0.0
    %v1532 = vsel %vm495, %v1524, 0.0
    %v1533 = vadd.f32 %v1531, %v1532
    %v1534 = vsel %vm495, %v1525, 0.0
    %v1535 = vadd.f32 %v1533, %v1534
    %v1536 = vsel %vm495, %v1526, 0.0
    %v1537 = vadd.f32 %v1535, %v1536
    %v1538 = vsel %vm495, %v1527, 0.0
    %v1539 = vadd.f32 %v1537, %v1538
    %v1540 = vsel %vm495, %v1528, 0.0
    %v1541 = vadd.f32 %v1539, %v1540
    %v1542 = vsel %vm495, %v1529, 0.0
    %v1543 = vadd.f32 %v1541, %v1542
    %v1544 = vsel %vm495, %v1530, 0.0
    %v1545 = vadd.f32 %v1543, %v1544
    %v1546 = vrot.slane %v1545, 4
    %v1547 = vadd.f32 %v1545, %v1546
    %v1548 = vrot.slane %v1547, 2
    %v1549 = vadd.f32 %v1547, %v1548
    %v1550 = vrot.slane %v1549, 1
    %v1551 = vadd.f32 %v1549, %v1550
    %v1552 = vmul.f32 %v1551, %v923
    %v1553 = vadd.f32 %v1552, 1e-05
    %v1554 = vrsqrt.pop %v1553
    %v1555 = vmul.f32 %v1554, %v1553
    %v1556 = vmul.f32 %v1555, %v1554
    %v1557 = vmul.f32 0.5, %v1556
    %v1558 = vsub.f32 1.5, %v1557
    %v1559 = vmul.f32 %v1554, %v1558
    %vm1560 = vweird.f32 %v1553
    %vm1561 = vweird.f32 %v1554
    %vm1562 = vmor %vm1560, %vm1561
    %v1563 = vsel %vm1562, %v1554, %v1559
    %v1564 = vmul.f32 %v1515, %v1563
    %v1565 = vmul.f32 %v1516, %v1563
    %v1566 = vmul.f32 %v1517, %v1563
    %v1567 = vmul.f32 %v1518, %v1563
    %v1568 = vmul.f32 %v1519, %v1563
    %v1569 = vmul.f32 %v1520, %v1563
    %v1570 = vmul.f32 %v1521, %v1563
    %v1571 = vmul.f32 %v1522, %v1563
    %v1572 = vmul.f32 %v1564, %v984
    %v1573 = vmul.f32 %v1565, %v984
    %v1574 = vmul.f32 %v1566, %v984
    %v1575 = vmul.f32 %v1567, %v984
    %v1576 = vmul.f32 %v1568, %v984
    %v1577 = vmul.f32 %v1569, %v984
    %v1578 = vmul.f32 %v1570, %v984
    %v1579 = vmul.f32 %v1571, %v984
    %v1580 = vadd.f32 %v1572, %v996
    %v1581 = vadd.f32 %v1573, %v996
    %v1582 = vadd.f32 %v1574, %v996
    %v1583 = vadd.f32 %v1575, %v996
    %v1584 = vadd.f32 %v1576, %v996
    %v1585 = vadd.f32 %v1577, %v996
    %v1586 = vadd.f32 %v1578, %v996
    %v1587 = vadd.f32 %v1579, %v996
    %v1588 = vld [vmem:[#allocation18] sm:$0xff]
    %v1589 = vld [vmem:[#allocation18 + $0x8] sm:$0xff]
    %v1590 = vld [vmem:[#allocation18 + $0x10] sm:$0xff]
    %v1591 = vld [vmem:[#allocation18 + $0x18] sm:$0xff]
    %v1592 = vld [vmem:[#allocation18 + $0x20] sm:$0xff]
    %v1593 = vld [vmem:[#allocation18 + $0x28] sm:$0xff]
    %v1594 = vld [vmem:[#allocation18 + $0x30] sm:$0xff]
    %v1595 = vld [vmem:[#allocation18 + $0x38] sm:$0xff]
    %v1596 = vld [vmem:[#allocation19] sm:$0x1]
    %v1597 = vld [vmem:[#allocation21] sm:$0x1]
    %v1598 = vld [vmem:[#allocation22] sm:$0x1]
    %v1600 = vsel %vm495, %v1580, 0
    %v1603 = vsel %vm495, %v1581, 0
    %v1606 = vsel %vm495, %v1582, 0
    %v1609 = vsel %vm495, %v1583, 0
    %v1612 = vsel %vm495, %v1584, 0
    %v1615 = vsel %vm495, %v1585, 0
    %v1618 = vsel %vm495, %v1586, 0
    %v1621 = vsel %vm495, %v1587, 0
    %1623 = vmatpush.msra.mxu0 0.0
    %1624 = vmatpush.msra.mxu0 0.0
    %1625 = vmatpush.msra.mxu0 0.0
    %1626 = vmatpush.msra.mxu0 0.0
    %1627 = vmatpush.msra.mxu0 0.0
    %1628 = vmatpush.msra.mxu0 0.0
    %1629 = vmatpush.msra.mxu0 0.0
    %1630 = vmatpush.msra.mxu0 0.0
    %1631 = vmatpush.msra.mxu0 %v1595
    %1632 = vmatpush.msra.mxu0 %v1594
    %1633 = vmatpush.msra.mxu0 %v1593
    %1634 = vmatpush.msra.mxu0 %v1592
    %1635 = vmatpush.msra.mxu0 %v1591
    %1636 = vmatpush.msra.mxu0 %v1590
    %1637 = vmatpush.msra.mxu0 %v1589
    %1638 = vmatpush.msra.mxu0 %v1588
    %1639 = vmatmul.f32.gmra.mxu0 %v1600
    %v1640 = vpop.f32.mrf.mxu0
    %v1641 = vadd.f32 0.0, %v1640
    %1642 = vmatmul.f32.gmra.mxu0 %v1603
    %v1643 = vpop.f32.mrf.mxu0
    %v1644 = vadd.f32 0.0, %v1643
    %1645 = vmatmul.f32.gmra.mxu0 %v1606
    %v1646 = vpop.f32.mrf.mxu0
    %v1647 = vadd.f32 0.0, %v1646
    %1648 = vmatmul.f32.gmra.mxu0 %v1609
    %v1649 = vpop.f32.mrf.mxu0
    %v1650 = vadd.f32 0.0, %v1649
    %1651 = vmatmul.f32.gmra.mxu0 %v1612
    %v1652 = vpop.f32.mrf.mxu0
    %v1653 = vadd.f32 0.0, %v1652
    %1654 = vmatmul.f32.gmra.mxu0 %v1615
    %v1655 = vpop.f32.mrf.mxu0
    %v1656 = vadd.f32 0.0, %v1655
    %1657 = vmatmul.f32.gmra.mxu0 %v1618
    %v1658 = vpop.f32.mrf.mxu0
    %v1659 = vadd.f32 0.0, %v1658
    %1660 = vmatmul.f32.gmra.mxu0 %v1621
    %v1661 = vpop.f32.mrf.mxu0
    %v1662 = vadd.f32 0.0, %v1661
    %1663 = vdwg.mxu0
    %v1665 = vperm.slane %v1596, 0
    %v1667 = vmul.f32 %v1641, %v1665
    %v1668 = vmul.f32 %v1644, %v1665
    %v1669 = vmul.f32 %v1647, %v1665
    %v1670 = vmul.f32 %v1650, %v1665
    %v1671 = vmul.f32 %v1653, %v1665
    %v1672 = vmul.f32 %v1656, %v1665
    %v1673 = vmul.f32 %v1659, %v1665
    %v1674 = vmul.f32 %v1662, %v1665
    %v1675 = vsel %vm495, %v1667, 0.0
    %1676 = vadd.xlane.f32.xlu0 %v1675
    %v1677 = vpop.xlane.xlu0 %1676
    %v1678 = vsel %vm495, %v1668, 0.0
    %1679 = vadd.xlane.f32.xlu0 %v1678
    %v1680 = vpop.xlane.xlu0 %1679
    %v1681 = vsel %vm495, %v1669, 0.0
    %1682 = vadd.xlane.f32.xlu0 %v1681
    %v1683 = vpop.xlane.xlu0 %1682
    %v1684 = vsel %vm495, %v1670, 0.0
    %1685 = vadd.xlane.f32.xlu0 %v1684
    %v1686 = vpop.xlane.xlu0 %1685
    %v1687 = vsel %vm495, %v1671, 0.0
    %1688 = vadd.xlane.f32.xlu0 %v1687
    %v1689 = vpop.xlane.xlu0 %1688
    %v1690 = vsel %vm495, %v1672, 0.0
    %1691 = vadd.xlane.f32.xlu0 %v1690
    %v1692 = vpop.xlane.xlu0 %1691
    %v1693 = vsel %vm495, %v1673, 0.0
    %1694 = vadd.xlane.f32.xlu0 %v1693
    %v1695 = vpop.xlane.xlu0 %1694
    %v1696 = vsel %vm495, %v1674, 0.0
    %1697 = vadd.xlane.f32.xlu0 %v1696
    %v1698 = vpop.xlane.xlu0 %1697
    %v1700 = vperm.slane %v1597, 0
    %v1702 = vmul.f32 %v1641, %v1700
    %v1703 = vmul.f32 %v1644, %v1700
    %v1704 = vmul.f32 %v1647, %v1700
    %v1705 = vmul.f32 %v1650, %v1700
    %v1706 = vmul.f32 %v1653, %v1700
    %v1707 = vmul.f32 %v1656, %v1700
    %v1708 = vmul.f32 %v1659, %v1700
    %v1709 = vmul.f32 %v1662, %v1700
    %v1710 = vsel %vm495, %v1702, 0.0
    %1711 = vadd.xlane.f32.xlu0 %v1710
    %v1712 = vpop.xlane.xlu0 %1711
    %v1713 = vsel %vm495, %v1703, 0.0
    %1714 = vadd.xlane.f32.xlu0 %v1713
    %v1715 = vpop.xlane.xlu0 %1714
    %v1716 = vsel %vm495, %v1704, 0.0
    %1717 = vadd.xlane.f32.xlu0 %v1716
    %v1718 = vpop.xlane.xlu0 %1717
    %v1719 = vsel %vm495, %v1705, 0.0
    %1720 = vadd.xlane.f32.xlu0 %v1719
    %v1721 = vpop.xlane.xlu0 %1720
    %v1722 = vsel %vm495, %v1706, 0.0
    %1723 = vadd.xlane.f32.xlu0 %v1722
    %v1724 = vpop.xlane.xlu0 %1723
    %v1725 = vsel %vm495, %v1707, 0.0
    %1726 = vadd.xlane.f32.xlu0 %v1725
    %v1727 = vpop.xlane.xlu0 %1726
    %v1728 = vsel %vm495, %v1708, 0.0
    %1729 = vadd.xlane.f32.xlu0 %v1728
    %v1730 = vpop.xlane.xlu0 %1729
    %v1731 = vsel %vm495, %v1709, 0.0
    %1732 = vadd.xlane.f32.xlu0 %v1731
    %v1733 = vpop.xlane.xlu0 %1732
    %1734 = vxpose.xlu0.b32.start [1/16] %v1677, 128
    %1735 = vxpose.xlu0.b32.cont [2/16] %v1680, 128
    %1736 = vxpose.xlu0.b32.cont [3/16] %v1683, 128
    %1737 = vxpose.xlu0.b32.cont [4/16] %v1686, 128
    %1738 = vxpose.xlu0.b32.cont [5/16] %v1689, 128
    %1739 = vxpose.xlu0.b32.cont [6/16] %v1692, 128
    %1740 = vxpose.xlu0.b32.cont [7/16] %v1695, 128
    %1741 = vxpose.xlu0.b32.cont [8/16] %v1698, 128
    %1742 = vxpose.xlu0.b32.cont [9/16] 0.0, 128
    %1743 = vxpose.xlu0.b32.cont [10/16] 0.0, 128
    %1744 = vxpose.xlu0.b32.cont [11/16] 0.0, 128
    %1745 = vxpose.xlu0.b32.cont [12/16] 0.0, 128
    %1746 = vxpose.xlu0.b32.cont [13/16] 0.0, 128
    %1747 = vxpose.xlu0.b32.cont [14/16] 0.0, 128
    %1748 = vxpose.xlu0.b32.cont [15/16] 0.0, 128
    %1749 = vxpose.xlu0.b32.end [16/16] 0.0, 128
    %v1750 = vpop.trf.xlu0
    %v1751 = vpop.trf.xlu0
    %v1752 = vpop.trf.xlu0
    %v1753 = vpop.trf.xlu0
    %v1754 = vpop.trf.xlu0
    %v1755 = vpop.trf.xlu0
    %v1756 = vpop.trf.xlu0
    %v1757 = vpop.trf.xlu0
    %v1758 = vpop.trf.xlu0
    %v1759 = vpop.trf.xlu0
    %v1760 = vpop.trf.xlu0
    %v1761 = vpop.trf.xlu0
    %v1762 = vpop.trf.xlu0
    %v1763 = vpop.trf.xlu0
    %v1764 = vpop.trf.xlu0
    %v1765 = vpop.trf.xlu0
    %v1766 = vperm.slane %v1750, 0
    %v1767 = vadd.f32 %v1712, %v1766
    %v1768 = vadd.f32 %v1715, %v1766
    %v1769 = vadd.f32 %v1718, %v1766
    %v1770 = vadd.f32 %v1721, %v1766
    %v1771 = vadd.f32 %v1724, %v1766
    %v1772 = vadd.f32 %v1727, %v1766
    %v1773 = vadd.f32 %v1730, %v1766
    %v1774 = vadd.f32 %v1733, %v1766
    %vm1775 = vcmp.gt.f32.partialorder %v1767, 0.0
    %vm1776 = vcmp.gt.f32.partialorder %v1768, 0.0
    %vm1777 = vcmp.gt.f32.partialorder %v1769, 0.0
    %vm1778 = vcmp.gt.f32.partialorder %v1770, 0.0
    %vm1779 = vcmp.gt.f32.partialorder %v1771, 0.0
    %vm1780 = vcmp.gt.f32.partialorder %v1772, 0.0
    %vm1781 = vcmp.gt.f32.partialorder %v1773, 0.0
    %vm1782 = vcmp.gt.f32.partialorder %v1774, 0.0
    %v1783 = vmul.f32 %v1767, 0.2
    %v1784 = vmul.f32 %v1768, 0.2
    %v1785 = vmul.f32 %v1769, 0.2
    %v1786 = vmul.f32 %v1770, 0.2
    %v1787 = vmul.f32 %v1771, 0.2
    %v1788 = vmul.f32 %v1772, 0.2
    %v1789 = vmul.f32 %v1773, 0.2
    %v1790 = vmul.f32 %v1774, 0.2
    %v1791 = vsel %vm1775, %v1767, %v1783
    %v1792 = vsel %vm1776, %v1768, %v1784
    %v1793 = vsel %vm1777, %v1769, %v1785
    %v1794 = vsel %vm1778, %v1770, %v1786
    %v1795 = vsel %vm1779, %v1771, %v1787
    %v1796 = vsel %vm1780, %v1772, %v1788
    %v1797 = vsel %vm1781, %v1773, %v1789
    %v1798 = vsel %vm1782, %v1774, %v1790
    %v1799 = vadd.f32 %v1791, %v398
    %v1800 = vadd.f32 %v1792, %v399
    %v1801 = vadd.f32 %v1793, %v400
    %v1802 = vadd.f32 %v1794, %v401
    %v1803 = vadd.f32 %v1795, %v402
    %v1804 = vadd.f32 %v1796, %v403
    %v1805 = vadd.f32 %v1797, %v404
    %v1806 = vadd.f32 %v1798, %v405
    %v1807 = vsel %vm495, %v1799, -inf
    %1808 = vmax.xlane.f32.xlu0 %v1807
    %v1809 = vpop.xlane.xlu0 %1808
    %v1810 = vsel %vm495, %v1800, -inf
    %1811 = vmax.xlane.f32.xlu0 %v1810
    %v1812 = vpop.xlane.xlu0 %1811
    %v1813 = vsel %vm495, %v1801, -inf
    %1814 = vmax.xlane.f32.xlu0 %v1813
    %v1815 = vpop.xlane.xlu0 %1814
    %v1816 = vsel %vm495, %v1802, -inf
    %1817 = vmax.xlane.f32.xlu0 %v1816
    %v1818 = vpop.xlane.xlu0 %1817
    %v1819 = vsel %vm495, %v1803, -inf
    %1820 = vmax.xlane.f32.xlu0 %v1819
    %v1821 = vpop.xlane.xlu0 %1820
    %v1822 = vsel %vm495, %v1804, -inf
    %1823 = vmax.xlane.f32.xlu0 %v1822
    %v1824 = vpop.xlane.xlu0 %1823
    %v1825 = vsel %vm495, %v1805, -inf
    %1826 = vmax.xlane.f32.xlu0 %v1825
    %v1827 = vpop.xlane.xlu0 %1826
    %v1828 = vsel %vm495, %v1806, -inf
    %1829 = vmax.xlane.f32.xlu0 %v1828
    %v1830 = vpop.xlane.xlu0 %1829
    %v1831 = vsub.f32 %v1799, %v1809
    %v1832 = vsub.f32 %v1800, %v1812
    %v1833 = vsub.f32 %v1801, %v1815
    %v1834 = vsub.f32 %v1802, %v1818
    %v1835 = vsub.f32 %v1803, %v1821
    %v1836 = vsub.f32 %v1804, %v1824
    %v1837 = vsub.f32 %v1805, %v1827
    %v1838 = vsub.f32 %v1806, %v1830
    %v1839 = vmul.f32 %v1831, 1.442695
    %v1840 = vpow.pop %v1839
    %v1841 = vmul.f32 %v1832, 1.442695
    %v1842 = vpow.pop %v1841
    %v1843 = vmul.f32 %v1833, 1.442695
    %v1844 = vpow.pop %v1843
    %v1845 = vmul.f32 %v1834, 1.442695
    %v1846 = vpow.pop %v1845
    %v1847 = vmul.f32 %v1835, 1.442695
    %v1848 = vpow.pop %v1847
    %v1849 = vmul.f32 %v1836, 1.442695
    %v1850 = vpow.pop %v1849
    %v1851 = vmul.f32 %v1837, 1.442695
    %v1852 = vpow.pop %v1851
    %v1853 = vmul.f32 %v1838, 1.442695
    %v1854 = vpow.pop %v1853
    %v1855 = vsel %vm495, %v1840, 0.0
    %1856 = vadd.xlane.f32.xlu0 %v1855
    %v1857 = vpop.xlane.xlu0 %1856
    %v1858 = vsel %vm495, %v1842, 0.0
    %1859 = vadd.xlane.f32.xlu0 %v1858
    %v1860 = vpop.xlane.xlu0 %1859
    %v1861 = vsel %vm495, %v1844, 0.0
    %1862 = vadd.xlane.f32.xlu0 %v1861
    %v1863 = vpop.xlane.xlu0 %1862
    %v1864 = vsel %vm495, %v1846, 0.0
    %1865 = vadd.xlane.f32.xlu0 %v1864
    %v1866 = vpop.xlane.xlu0 %1865
    %v1867 = vsel %vm495, %v1848, 0.0
    %1868 = vadd.xlane.f32.xlu0 %v1867
    %v1869 = vpop.xlane.xlu0 %1868
    %v1870 = vsel %vm495, %v1850, 0.0
    %1871 = vadd.xlane.f32.xlu0 %v1870
    %v1872 = vpop.xlane.xlu0 %1871
    %v1873 = vsel %vm495, %v1852, 0.0
    %1874 = vadd.xlane.f32.xlu0 %v1873
    %v1875 = vpop.xlane.xlu0 %1874
    %v1876 = vsel %vm495, %v1854, 0.0
    %1877 = vadd.xlane.f32.xlu0 %v1876
    %v1878 = vpop.xlane.xlu0 %1877
    %v1879 = vrcp.pop %v1857
    %v1880 = vmul.f32 %v1857, %v1879
    %v1881 = vsub.f32 1.0, %v1880
    %v1882 = vmul.f32 %v1879, %v1881
    %v1883 = vadd.f32 %v1879, %v1882
    %vm1884 = vweird.f32 %v1857
    %vm1885 = vweird.f32 %v1879
    %vm1886 = vmor %vm1884, %vm1885
    %v1887 = vsel %vm1886, %v1879, %v1883
    %v1888 = vand.u32 2147483647, %v1857
    %vm1889 = vcmp.eq.f32.partialorder %v1888, 8.507059e+37
    %v1890 = vand.u32 %v1857, 2147483648
    %v1891 = vor.u32 1.1754944e-38, %v1890
    %v1892 = vsel %vm1889, %v1891, %v1887
    %v1893 = vmul.f32 %v1840, %v1892
    %v1894 = vrcp.pop %v1860
    %v1895 = vmul.f32 %v1860, %v1894
    %v1896 = vsub.f32 1.0, %v1895
    %v1897 = vmul.f32 %v1894, %v1896
    %v1898 = vadd.f32 %v1894, %v1897
    %vm1899 = vweird.f32 %v1860
    %vm1900 = vweird.f32 %v1894
    %vm1901 = vmor %vm1899, %vm1900
    %v1902 = vsel %vm1901, %v1894, %v1898
    %v1903 = vand.u32 2147483647, %v1860
    %vm1904 = vcmp.eq.f32.partialorder %v1903, 8.507059e+37
    %v1905 = vand.u32 %v1860, 2147483648
    %v1906 = vor.u32 1.1754944e-38, %v1905
    %v1907 = vsel %vm1904, %v1906, %v1902
    %v1908 = vmul.f32 %v1842, %v1907
    %v1909 = vrcp.pop %v1863
    %v1910 = vmul.f32 %v1863, %v1909
    %v1911 = vsub.f32 1.0, %v1910
    %v1912 = vmul.f32 %v1909, %v1911
    %v1913 = vadd.f32 %v1909, %v1912
    %vm1914 = vweird.f32 %v1863
    %vm1915 = vweird.f32 %v1909
    %vm1916 = vmor %vm1914, %vm1915
    %v1917 = vsel %vm1916, %v1909, %v1913
    %v1918 = vand.u32 2147483647, %v1863
    %vm1919 = vcmp.eq.f32.partialorder %v1918, 8.507059e+37
    %v1920 = vand.u32 %v1863, 2147483648
    %v1921 = vor.u32 1.1754944e-38, %v1920
    %v1922 = vsel %vm1919, %v1921, %v1917
    %v1923 = vmul.f32 %v1844, %v1922
    %v1924 = vrcp.pop %v1866
    %v1925 = vmul.f32 %v1866, %v1924
    %v1926 = vsub.f32 1.0, %v1925
    %v1927 = vmul.f32 %v1924, %v1926
    %v1928 = vadd.f32 %v1924, %v1927
    %vm1929 = vweird.f32 %v1866
    %vm1930 = vweird.f32 %v1924
    %vm1931 = vmor %vm1929, %vm1930
    %v1932 = vsel %vm1931, %v1924, %v1928
    %v1933 = vand.u32 2147483647, %v1866
    %vm1934 = vcmp.eq.f32.partialorder %v1933, 8.507059e+37
    %v1935 = vand.u32 %v1866, 2147483648
    %v1936 = vor.u32 1.1754944e-38, %v1935
    %v1937 = vsel %vm1934, %v1936, %v1932
    %v1938 = vmul.f32 %v1846, %v1937
    %v1939 = vrcp.pop %v1869
    %v1940 = vmul.f32 %v1869, %v1939
    %v1941 = vsub.f32 1.0, %v1940
    %v1942 = vmul.f32 %v1939, %v1941
    %v1943 = vadd.f32 %v1939, %v1942
    %vm1944 = vweird.f32 %v1869
    %vm1945 = vweird.f32 %v1939
    %vm1946 = vmor %vm1944, %vm1945
    %v1947 = vsel %vm1946, %v1939, %v1943
    %v1948 = vand.u32 2147483647, %v1869
    %vm1949 = vcmp.eq.f32.partialorder %v1948, 8.507059e+37
    %v1950 = vand.u32 %v1869, 2147483648
    %v1951 = vor.u32 1.1754944e-38, %v1950
    %v1952 = vsel %vm1949, %v1951, %v1947
    %v1953 = vmul.f32 %v1848, %v1952
    %v1954 = vrcp.pop %v1872
    %v1955 = vmul.f32 %v1872, %v1954
    %v1956 = vsub.f32 1.0, %v1955
    %v1957 = vmul.f32 %v1954, %v1956
    %v1958 = vadd.f32 %v1954, %v1957
    %vm1959 = vweird.f32 %v1872
    %vm1960 = vweird.f32 %v1954
    %vm1961 = vmor %vm1959, %vm1960
    %v1962 = vsel %vm1961, %v1954, %v1958
    %v1963 = vand.u32 2147483647, %v1872
    %vm1964 = vcmp.eq.f32.partialorder %v1963, 8.507059e+37
    %v1965 = vand.u32 %v1872, 2147483648
    %v1966 = vor.u32 1.1754944e-38, %v1965
    %v1967 = vsel %vm1964, %v1966, %v1962
    %v1968 = vmul.f32 %v1850, %v1967
    %v1969 = vrcp.pop %v1875
    %v1970 = vmul.f32 %v1875, %v1969
    %v1971 = vsub.f32 1.0, %v1970
    %v1972 = vmul.f32 %v1969, %v1971
    %v1973 = vadd.f32 %v1969, %v1972
    %vm1974 = vweird.f32 %v1875
    %vm1975 = vweird.f32 %v1969
    %vm1976 = vmor %vm1974, %vm1975
    %v1977 = vsel %vm1976, %v1969, %v1973
    %v1978 = vand.u32 2147483647, %v1875
    %vm1979 = vcmp.eq.f32.partialorder %v1978, 8.507059e+37
    %v1980 = vand.u32 %v1875, 2147483648
    %v1981 = vor.u32 1.1754944e-38, %v1980
    %v1982 = vsel %vm1979, %v1981, %v1977
    %v1983 = vmul.f32 %v1852, %v1982
    %v1984 = vrcp.pop %v1878
    %v1985 = vmul.f32 %v1878, %v1984
    %v1986 = vsub.f32 1.0, %v1985
    %v1987 = vmul.f32 %v1984, %v1986
    %v1988 = vadd.f32 %v1984, %v1987
    %vm1989 = vweird.f32 %v1878
    %vm1990 = vweird.f32 %v1984
    %vm1991 = vmor %vm1989, %vm1990
    %v1992 = vsel %vm1991, %v1984, %v1988
    %v1993 = vand.u32 2147483647, %v1878
    %vm1994 = vcmp.eq.f32.partialorder %v1993, 8.507059e+37
    %v1995 = vand.u32 %v1878, 2147483648
    %v1996 = vor.u32 1.1754944e-38, %v1995
    %v1997 = vsel %vm1994, %v1996, %v1992
    %v1998 = vmul.f32 %v1854, %v1997
    %v2000 = vperm.slane %v1598, 0
    %v2003 = vsel %vm495, %v1893, 0
    %v2006 = vsel %vm495, %v1908, 0
    %v2009 = vsel %vm495, %v1923, 0
    %v2012 = vsel %vm495, %v1938, 0
    %v2015 = vsel %vm495, %v1953, 0
    %v2018 = vsel %vm495, %v1968, 0
    %v2021 = vsel %vm495, %v1983, 0
    %v2024 = vsel %vm495, %v1998, 0
    %2026 = vmatpush.msra.mxu0 0.0
    %2027 = vmatpush.msra.mxu0 0.0
    %2028 = vmatpush.msra.mxu0 0.0
    %2029 = vmatpush.msra.mxu0 0.0
    %2030 = vmatpush.msra.mxu0 0.0
    %2031 = vmatpush.msra.mxu0 0.0
    %2032 = vmatpush.msra.mxu0 0.0
    %2033 = vmatpush.msra.mxu0 0.0
    %2034 = vmatpush.msra.mxu0 %v1662
    %2035 = vmatpush.msra.mxu0 %v1659
    %2036 = vmatpush.msra.mxu0 %v1656
    %2037 = vmatpush.msra.mxu0 %v1653
    %2038 = vmatpush.msra.mxu0 %v1650
    %2039 = vmatpush.msra.mxu0 %v1647
    %2040 = vmatpush.msra.mxu0 %v1644
    %2041 = vmatpush.msra.mxu0 %v1641
    %2042 = vmatmul.f32.gmra.mxu0 %v2003
    %v2043 = vpop.f32.mrf.mxu0
    %v2044 = vadd.f32 %v2000, %v2043
    %2045 = vmatmul.f32.gmra.mxu0 %v2006
    %v2046 = vpop.f32.mrf.mxu0
    %v2047 = vadd.f32 %v2000, %v2046
    %2048 = vmatmul.f32.gmra.mxu0 %v2009
    %v2049 = vpop.f32.mrf.mxu0
    %v2050 = vadd.f32 %v2000, %v2049
    %2051 = vmatmul.f32.gmra.mxu0 %v2012
    %v2052 = vpop.f32.mrf.mxu0
    %v2053 = vadd.f32 %v2000, %v2052
    %2054 = vmatmul.f32.gmra.mxu0 %v2015
    %v2055 = vpop.f32.mrf.mxu0
    %v2056 = vadd.f32 %v2000, %v2055
    %2057 = vmatmul.f32.gmra.mxu0 %v2018
    %v2058 = vpop.f32.mrf.mxu0
    %v2059 = vadd.f32 %v2000, %v2058
    %2060 = vmatmul.f32.gmra.mxu0 %v2021
    %v2061 = vpop.f32.mrf.mxu0
    %v2062 = vadd.f32 %v2000, %v2061
    %2063 = vmatmul.f32.gmra.mxu0 %v2024
    %v2064 = vpop.f32.mrf.mxu0
    %v2065 = vadd.f32 %v2000, %v2064
    %2066 = vdwg.mxu0
    %v2067 = vtanh.pop %v2044
    %v2068 = vtanh.pop %v2047
    %v2069 = vtanh.pop %v2050
    %v2070 = vtanh.pop %v2053
    %v2071 = vtanh.pop %v2056
    %v2072 = vtanh.pop %v2059
    %v2073 = vtanh.pop %v2062
    %v2074 = vtanh.pop %v2065
    %v2075 = vsel %vm495, %v2067, 0.0
    %v2076 = vsel %vm495, %v2068, 0.0
    %v2077 = vadd.f32 %v2075, %v2076
    %v2078 = vsel %vm495, %v2069, 0.0
    %v2079 = vadd.f32 %v2077, %v2078
    %v2080 = vsel %vm495, %v2070, 0.0
    %v2081 = vadd.f32 %v2079, %v2080
    %v2082 = vsel %vm495, %v2071, 0.0
    %v2083 = vadd.f32 %v2081, %v2082
    %v2084 = vsel %vm495, %v2072, 0.0
    %v2085 = vadd.f32 %v2083, %v2084
    %v2086 = vsel %vm495, %v2073, 0.0
    %v2087 = vadd.f32 %v2085, %v2086
    %v2088 = vsel %vm495, %v2074, 0.0
    %v2089 = vadd.f32 %v2087, %v2088
    %v2090 = vrot.slane %v2089, 4
    %v2091 = vadd.f32 %v2089, %v2090
    %v2092 = vrot.slane %v2091, 2
    %v2093 = vadd.f32 %v2091, %v2092
    %v2094 = vrot.slane %v2093, 1
    %v2095 = vadd.f32 %v2093, %v2094
    %v2096 = vmul.f32 %v2095, %v923
    %v2097 = vsub.f32 %v2067, %v2096
    %v2098 = vsub.f32 %v2068, %v2096
    %v2099 = vsub.f32 %v2069, %v2096
    %v2100 = vsub.f32 %v2070, %v2096
    %v2101 = vsub.f32 %v2071, %v2096
    %v2102 = vsub.f32 %v2072, %v2096
    %v2103 = vsub.f32 %v2073, %v2096
    %v2104 = vsub.f32 %v2074, %v2096
    %v2105 = vmul.f32 %v2097, %v2097
    %v2106 = vmul.f32 %v2098, %v2098
    %v2107 = vmul.f32 %v2099, %v2099
    %v2108 = vmul.f32 %v2100, %v2100
    %v2109 = vmul.f32 %v2101, %v2101
    %v2110 = vmul.f32 %v2102, %v2102
    %v2111 = vmul.f32 %v2103, %v2103
    %v2112 = vmul.f32 %v2104, %v2104
    %v2113 = vsel %vm495, %v2105, 0.0
    %v2114 = vsel %vm495, %v2106, 0.0
    %v2115 = vadd.f32 %v2113, %v2114
    %v2116 = vsel %vm495, %v2107, 0.0
    %v2117 = vadd.f32 %v2115, %v2116
    %v2118 = vsel %vm495, %v2108, 0.0
    %v2119 = vadd.f32 %v2117, %v2118
    %v2120 = vsel %vm495, %v2109, 0.0
    %v2121 = vadd.f32 %v2119, %v2120
    %v2122 = vsel %vm495, %v2110, 0.0
    %v2123 = vadd.f32 %v2121, %v2122
    %v2124 = vsel %vm495, %v2111, 0.0
    %v2125 = vadd.f32 %v2123, %v2124
    %v2126 = vsel %vm495, %v2112, 0.0
    %v2127 = vadd.f32 %v2125, %v2126
    %v2128 = vrot.slane %v2127, 4
    %v2129 = vadd.f32 %v2127, %v2128
    %v2130 = vrot.slane %v2129, 2
    %v2131 = vadd.f32 %v2129, %v2130
    %v2132 = vrot.slane %v2131, 1
    %v2133 = vadd.f32 %v2131, %v2132
    %v2134 = vmul.f32 %v2133, %v923
    %v2135 = vadd.f32 %v2134, 1e-05
    %v2136 = vrsqrt.pop %v2135
    %v2137 = vmul.f32 %v2136, %v2135
    %v2138 = vmul.f32 %v2137, %v2136
    %v2139 = vmul.f32 0.5, %v2138
    %v2140 = vsub.f32 1.5, %v2139
    %v2141 = vmul.f32 %v2136, %v2140
    %vm2142 = vweird.f32 %v2135
    %vm2143 = vweird.f32 %v2136
    %vm2144 = vmor %vm2142, %vm2143
    %v2145 = vsel %vm2144, %v2136, %v2141
    %v2146 = vmul.f32 %v2097, %v2145
    %v2147 = vmul.f32 %v2098, %v2145
    %v2148 = vmul.f32 %v2099, %v2145
    %v2149 = vmul.f32 %v2100, %v2145
    %v2150 = vmul.f32 %v2101, %v2145
    %v2151 = vmul.f32 %v2102, %v2145
    %v2152 = vmul.f32 %v2103, %v2145
    %v2153 = vmul.f32 %v2104, %v2145
    %v2154 = vmul.f32 %v2146, %v984
    %v2155 = vmul.f32 %v2147, %v984
    %v2156 = vmul.f32 %v2148, %v984
    %v2157 = vmul.f32 %v2149, %v984
    %v2158 = vmul.f32 %v2150, %v984
    %v2159 = vmul.f32 %v2151, %v984
    %v2160 = vmul.f32 %v2152, %v984
    %v2161 = vmul.f32 %v2153, %v984
    %v2162 = vadd.f32 %v2154, %v996
    %v2163 = vadd.f32 %v2155, %v996
    %v2164 = vadd.f32 %v2156, %v996
    %v2165 = vadd.f32 %v2157, %v996
    %v2166 = vadd.f32 %v2158, %v996
    %v2167 = vadd.f32 %v2159, %v996
    %v2168 = vadd.f32 %v2160, %v996
    %v2169 = vadd.f32 %v2161, %v996
    %v2170 = vld [vmem:[#allocation24] sm:$0xff]
    %v2171 = vld [vmem:[#allocation24 + $0x8] sm:$0xff]
    %v2172 = vld [vmem:[#allocation24 + $0x10] sm:$0xff]
    %v2173 = vld [vmem:[#allocation24 + $0x18] sm:$0xff]
    %v2174 = vld [vmem:[#allocation24 + $0x20] sm:$0xff]
    %v2175 = vld [vmem:[#allocation24 + $0x28] sm:$0xff]
    %v2176 = vld [vmem:[#allocation24 + $0x30] sm:$0xff]
    %v2177 = vld [vmem:[#allocation24 + $0x38] sm:$0xff]
    %v2178 = vld [vmem:[#allocation25] sm:$0x1]
    %v2179 = vld [vmem:[#allocation27] sm:$0x1]
    %v2180 = vld [vmem:[#allocation28] sm:$0x1]
    %v2182 = vsel %vm495, %v2162, 0
    %v2185 = vsel %vm495, %v2163, 0
    %v2188 = vsel %vm495, %v2164, 0
    %v2191 = vsel %vm495, %v2165, 0
    %v2194 = vsel %vm495, %v2166, 0
    %v2197 = vsel %vm495, %v2167, 0
    %v2200 = vsel %vm495, %v2168, 0
    %v2203 = vsel %vm495, %v2169, 0
    %2205 = vmatpush.msra.mxu0 0.0
    %2206 = vmatpush.msra.mxu0 0.0
    %2207 = vmatpush.msra.mxu0 0.0
    %2208 = vmatpush.msra.mxu0 0.0
    %2209 = vmatpush.msra.mxu0 0.0
    %2210 = vmatpush.msra.mxu0 0.0
    %2211 = vmatpush.msra.mxu0 0.0
    %2212 = vmatpush.msra.mxu0 0.0
    %2213 = vmatpush.msra.mxu0 %v2177
    %2214 = vmatpush.msra.mxu0 %v2176
    %2215 = vmatpush.msra.mxu0 %v2175
    %2216 = vmatpush.msra.mxu0 %v2174
    %2217 = vmatpush.msra.mxu0 %v2173
    %2218 = vmatpush.msra.mxu0 %v2172
    %2219 = vmatpush.msra.mxu0 %v2171
    %2220 = vmatpush.msra.mxu0 %v2170
    %2221 = vmatmul.f32.gmra.mxu0 %v2182
    %v2222 = vpop.f32.mrf.mxu0
    %v2223 = vadd.f32 0.0, %v2222
    %2224 = vmatmul.f32.gmra.mxu0 %v2185
    %v2225 = vpop.f32.mrf.mxu0
    %v2226 = vadd.f32 0.0, %v2225
    %2227 = vmatmul.f32.gmra.mxu0 %v2188
    %v2228 = vpop.f32.mrf.mxu0
    %v2229 = vadd.f32 0.0, %v2228
    %2230 = vmatmul.f32.gmra.mxu0 %v2191
    %v2231 = vpop.f32.mrf.mxu0
    %v2232 = vadd.f32 0.0, %v2231
    %2233 = vmatmul.f32.gmra.mxu0 %v2194
    %v2234 = vpop.f32.mrf.mxu0
    %v2235 = vadd.f32 0.0, %v2234
    %2236 = vmatmul.f32.gmra.mxu0 %v2197
    %v2237 = vpop.f32.mrf.mxu0
    %v2238 = vadd.f32 0.0, %v2237
    %2239 = vmatmul.f32.gmra.mxu0 %v2200
    %v2240 = vpop.f32.mrf.mxu0
    %v2241 = vadd.f32 0.0, %v2240
    %2242 = vmatmul.f32.gmra.mxu0 %v2203
    %v2243 = vpop.f32.mrf.mxu0
    %v2244 = vadd.f32 0.0, %v2243
    %2245 = vdwg.mxu0
    %v2247 = vperm.slane %v2178, 0
    %v2249 = vmul.f32 %v2223, %v2247
    %v2250 = vmul.f32 %v2226, %v2247
    %v2251 = vmul.f32 %v2229, %v2247
    %v2252 = vmul.f32 %v2232, %v2247
    %v2253 = vmul.f32 %v2235, %v2247
    %v2254 = vmul.f32 %v2238, %v2247
    %v2255 = vmul.f32 %v2241, %v2247
    %v2256 = vmul.f32 %v2244, %v2247
    %v2257 = vsel %vm495, %v2249, 0.0
    %2258 = vadd.xlane.f32.xlu0 %v2257
    %v2259 = vpop.xlane.xlu0 %2258
    %v2260 = vsel %vm495, %v2250, 0.0
    %2261 = vadd.xlane.f32.xlu0 %v2260
    %v2262 = vpop.xlane.xlu0 %2261
    %v2263 = vsel %vm495, %v2251, 0.0
    %2264 = vadd.xlane.f32.xlu0 %v2263
    %v2265 = vpop.xlane.xlu0 %2264
    %v2266 = vsel %vm495, %v2252, 0.0
    %2267 = vadd.xlane.f32.xlu0 %v2266
    %v2268 = vpop.xlane.xlu0 %2267
    %v2269 = vsel %vm495, %v2253, 0.0
    %2270 = vadd.xlane.f32.xlu0 %v2269
    %v2271 = vpop.xlane.xlu0 %2270
    %v2272 = vsel %vm495, %v2254, 0.0
    %2273 = vadd.xlane.f32.xlu0 %v2272
    %v2274 = vpop.xlane.xlu0 %2273
    %v2275 = vsel %vm495, %v2255, 0.0
    %2276 = vadd.xlane.f32.xlu0 %v2275
    %v2277 = vpop.xlane.xlu0 %2276
    %v2278 = vsel %vm495, %v2256, 0.0
    %2279 = vadd.xlane.f32.xlu0 %v2278
    %v2280 = vpop.xlane.xlu0 %2279
    %v2282 = vperm.slane %v2179, 0
    %v2284 = vmul.f32 %v2223, %v2282
    %v2285 = vmul.f32 %v2226, %v2282
    %v2286 = vmul.f32 %v2229, %v2282
    %v2287 = vmul.f32 %v2232, %v2282
    %v2288 = vmul.f32 %v2235, %v2282
    %v2289 = vmul.f32 %v2238, %v2282
    %v2290 = vmul.f32 %v2241, %v2282
    %v2291 = vmul.f32 %v2244, %v2282
    %v2292 = vsel %vm495, %v2284, 0.0
    %2293 = vadd.xlane.f32.xlu0 %v2292
    %v2294 = vpop.xlane.xlu0 %2293
    %v2295 = vsel %vm495, %v2285, 0.0
    %2296 = vadd.xlane.f32.xlu0 %v2295
    %v2297 = vpop.xlane.xlu0 %2296
    %v2298 = vsel %vm495, %v2286, 0.0
    %2299 = vadd.xlane.f32.xlu0 %v2298
    %v2300 = vpop.xlane.xlu0 %2299
    %v2301 = vsel %vm495, %v2287, 0.0
    %2302 = vadd.xlane.f32.xlu0 %v2301
    %v2303 = vpop.xlane.xlu0 %2302
    %v2304 = vsel %vm495, %v2288, 0.0
    %2305 = vadd.xlane.f32.xlu0 %v2304
    %v2306 = vpop.xlane.xlu0 %2305
    %v2307 = vsel %vm495, %v2289, 0.0
    %2308 = vadd.xlane.f32.xlu0 %v2307
    %v2309 = vpop.xlane.xlu0 %2308
    %v2310 = vsel %vm495, %v2290, 0.0
    %2311 = vadd.xlane.f32.xlu0 %v2310
    %v2312 = vpop.xlane.xlu0 %2311
    %v2313 = vsel %vm495, %v2291, 0.0
    %2314 = vadd.xlane.f32.xlu0 %v2313
    %v2315 = vpop.xlane.xlu0 %2314
    %2316 = vxpose.xlu0.b32.start [1/16] %v2259, 128
    %2317 = vxpose.xlu0.b32.cont [2/16] %v2262, 128
    %2318 = vxpose.xlu0.b32.cont [3/16] %v2265, 128
    %2319 = vxpose.xlu0.b32.cont [4/16] %v2268, 128
    %2320 = vxpose.xlu0.b32.cont [5/16] %v2271, 128
    %2321 = vxpose.xlu0.b32.cont [6/16] %v2274, 128
    %2322 = vxpose.xlu0.b32.cont [7/16] %v2277, 128
    %2323 = vxpose.xlu0.b32.cont [8/16] %v2280, 128
    %2324 = vxpose.xlu0.b32.cont [9/16] 0.0, 128
    %2325 = vxpose.xlu0.b32.cont [10/16] 0.0, 128
    %2326 = vxpose.xlu0.b32.cont [11/16] 0.0, 128
    %2327 = vxpose.xlu0.b32.cont [12/16] 0.0, 128
    %2328 = vxpose.xlu0.b32.cont [13/16] 0.0, 128
    %2329 = vxpose.xlu0.b32.cont [14/16] 0.0, 128
    %2330 = vxpose.xlu0.b32.cont [15/16] 0.0, 128
    %2331 = vxpose.xlu0.b32.end [16/16] 0.0, 128
    %v2332 = vpop.trf.xlu0
    %v2333 = vpop.trf.xlu0
    %v2334 = vpop.trf.xlu0
    %v2335 = vpop.trf.xlu0
    %v2336 = vpop.trf.xlu0
    %v2337 = vpop.trf.xlu0
    %v2338 = vpop.trf.xlu0
    %v2339 = vpop.trf.xlu0
    %v2340 = vpop.trf.xlu0
    %v2341 = vpop.trf.xlu0
    %v2342 = vpop.trf.xlu0
    %v2343 = vpop.trf.xlu0
    %v2344 = vpop.trf.xlu0
    %v2345 = vpop.trf.xlu0
    %v2346 = vpop.trf.xlu0
    %v2347 = vpop.trf.xlu0
    %v2348 = vperm.slane %v2332, 0
    %v2349 = vadd.f32 %v2294, %v2348
    %v2350 = vadd.f32 %v2297, %v2348
    %v2351 = vadd.f32 %v2300, %v2348
    %v2352 = vadd.f32 %v2303, %v2348
    %v2353 = vadd.f32 %v2306, %v2348
    %v2354 = vadd.f32 %v2309, %v2348
    %v2355 = vadd.f32 %v2312, %v2348
    %v2356 = vadd.f32 %v2315, %v2348
    %vm2357 = vcmp.gt.f32.partialorder %v2349, 0.0
    %vm2358 = vcmp.gt.f32.partialorder %v2350, 0.0
    %vm2359 = vcmp.gt.f32.partialorder %v2351, 0.0
    %vm2360 = vcmp.gt.f32.partialorder %v2352, 0.0
    %vm2361 = vcmp.gt.f32.partialorder %v2353, 0.0
    %vm2362 = vcmp.gt.f32.partialorder %v2354, 0.0
    %vm2363 = vcmp.gt.f32.partialorder %v2355, 0.0
    %vm2364 = vcmp.gt.f32.partialorder %v2356, 0.0
    %v2365 = vmul.f32 %v2349, 0.2
    %v2366 = vmul.f32 %v2350, 0.2
    %v2367 = vmul.f32 %v2351, 0.2
    %v2368 = vmul.f32 %v2352, 0.2
    %v2369 = vmul.f32 %v2353, 0.2
    %v2370 = vmul.f32 %v2354, 0.2
    %v2371 = vmul.f32 %v2355, 0.2
    %v2372 = vmul.f32 %v2356, 0.2
    %v2373 = vsel %vm2357, %v2349, %v2365
    %v2374 = vsel %vm2358, %v2350, %v2366
    %v2375 = vsel %vm2359, %v2351, %v2367
    %v2376 = vsel %vm2360, %v2352, %v2368
    %v2377 = vsel %vm2361, %v2353, %v2369
    %v2378 = vsel %vm2362, %v2354, %v2370
    %v2379 = vsel %vm2363, %v2355, %v2371
    %v2380 = vsel %vm2364, %v2356, %v2372
    %v2381 = vadd.f32 %v2373, %v398
    %v2382 = vadd.f32 %v2374, %v399
    %v2383 = vadd.f32 %v2375, %v400
    %v2384 = vadd.f32 %v2376, %v401
    %v2385 = vadd.f32 %v2377, %v402
    %v2386 = vadd.f32 %v2378, %v403
    %v2387 = vadd.f32 %v2379, %v404
    %v2388 = vadd.f32 %v2380, %v405
    %v2389 = vsel %vm495, %v2381, -inf
    %2390 = vmax.xlane.f32.xlu0 %v2389
    %v2391 = vpop.xlane.xlu0 %2390
    %v2392 = vsel %vm495, %v2382, -inf
    %2393 = vmax.xlane.f32.xlu0 %v2392
    %v2394 = vpop.xlane.xlu0 %2393
    %v2395 = vsel %vm495, %v2383, -inf
    %2396 = vmax.xlane.f32.xlu0 %v2395
    %v2397 = vpop.xlane.xlu0 %2396
    %v2398 = vsel %vm495, %v2384, -inf
    %2399 = vmax.xlane.f32.xlu0 %v2398
    %v2400 = vpop.xlane.xlu0 %2399
    %v2401 = vsel %vm495, %v2385, -inf
    %2402 = vmax.xlane.f32.xlu0 %v2401
    %v2403 = vpop.xlane.xlu0 %2402
    %v2404 = vsel %vm495, %v2386, -inf
    %2405 = vmax.xlane.f32.xlu0 %v2404
    %v2406 = vpop.xlane.xlu0 %2405
    %v2407 = vsel %vm495, %v2387, -inf
    %2408 = vmax.xlane.f32.xlu0 %v2407
    %v2409 = vpop.xlane.xlu0 %2408
    %v2410 = vsel %vm495, %v2388, -inf
    %2411 = vmax.xlane.f32.xlu0 %v2410
    %v2412 = vpop.xlane.xlu0 %2411
    %v2413 = vsub.f32 %v2381, %v2391
    %v2414 = vsub.f32 %v2382, %v2394
    %v2415 = vsub.f32 %v2383, %v2397
    %v2416 = vsub.f32 %v2384, %v2400
    %v2417 = vsub.f32 %v2385, %v2403
    %v2418 = vsub.f32 %v2386, %v2406
    %v2419 = vsub.f32 %v2387, %v2409
    %v2420 = vsub.f32 %v2388, %v2412
    %v2421 = vmul.f32 %v2413, 1.442695
    %v2422 = vpow.pop %v2421
    %v2423 = vmul.f32 %v2414, 1.442695
    %v2424 = vpow.pop %v2423
    %v2425 = vmul.f32 %v2415, 1.442695
    %v2426 = vpow.pop %v2425
    %v2427 = vmul.f32 %v2416, 1.442695
    %v2428 = vpow.pop %v2427
    %v2429 = vmul.f32 %v2417, 1.442695
    %v2430 = vpow.pop %v2429
    %v2431 = vmul.f32 %v2418, 1.442695
    %v2432 = vpow.pop %v2431
    %v2433 = vmul.f32 %v2419, 1.442695
    %v2434 = vpow.pop %v2433
    %v2435 = vmul.f32 %v2420, 1.442695
    %v2436 = vpow.pop %v2435
    %v2437 = vsel %vm495, %v2422, 0.0
    %2438 = vadd.xlane.f32.xlu0 %v2437
    %v2439 = vpop.xlane.xlu0 %2438
    %v2440 = vsel %vm495, %v2424, 0.0
    %2441 = vadd.xlane.f32.xlu0 %v2440
    %v2442 = vpop.xlane.xlu0 %2441
    %v2443 = vsel %vm495, %v2426, 0.0
    %2444 = vadd.xlane.f32.xlu0 %v2443
    %v2445 = vpop.xlane.xlu0 %2444
    %v2446 = vsel %vm495, %v2428, 0.0
    %2447 = vadd.xlane.f32.xlu0 %v2446
    %v2448 = vpop.xlane.xlu0 %2447
    %v2449 = vsel %vm495, %v2430, 0.0
    %2450 = vadd.xlane.f32.xlu0 %v2449
    %v2451 = vpop.xlane.xlu0 %2450
    %v2452 = vsel %vm495, %v2432, 0.0
    %2453 = vadd.xlane.f32.xlu0 %v2452
    %v2454 = vpop.xlane.xlu0 %2453
    %v2455 = vsel %vm495, %v2434, 0.0
    %2456 = vadd.xlane.f32.xlu0 %v2455
    %v2457 = vpop.xlane.xlu0 %2456
    %v2458 = vsel %vm495, %v2436, 0.0
    %2459 = vadd.xlane.f32.xlu0 %v2458
    %v2460 = vpop.xlane.xlu0 %2459
    %v2461 = vrcp.pop %v2439
    %v2462 = vmul.f32 %v2439, %v2461
    %v2463 = vsub.f32 1.0, %v2462
    %v2464 = vmul.f32 %v2461, %v2463
    %v2465 = vadd.f32 %v2461, %v2464
    %vm2466 = vweird.f32 %v2439
    %vm2467 = vweird.f32 %v2461
    %vm2468 = vmor %vm2466, %vm2467
    %v2469 = vsel %vm2468, %v2461, %v2465
    %v2470 = vand.u32 2147483647, %v2439
    %vm2471 = vcmp.eq.f32.partialorder %v2470, 8.507059e+37
    %v2472 = vand.u32 %v2439, 2147483648
    %v2473 = vor.u32 1.1754944e-38, %v2472
    %v2474 = vsel %vm2471, %v2473, %v2469
    %v2475 = vmul.f32 %v2422, %v2474
    %v2476 = vrcp.pop %v2442
    %v2477 = vmul.f32 %v2442, %v2476
    %v2478 = vsub.f32 1.0, %v2477
    %v2479 = vmul.f32 %v2476, %v2478
    %v2480 = vadd.f32 %v2476, %v2479
    %vm2481 = vweird.f32 %v2442
    %vm2482 = vweird.f32 %v2476
    %vm2483 = vmor %vm2481, %vm2482
    %v2484 = vsel %vm2483, %v2476, %v2480
    %v2485 = vand.u32 2147483647, %v2442
    %vm2486 = vcmp.eq.f32.partialorder %v2485, 8.507059e+37
    %v2487 = vand.u32 %v2442, 2147483648
    %v2488 = vor.u32 1.1754944e-38, %v2487
    %v2489 = vsel %vm2486, %v2488, %v2484
    %v2490 = vmul.f32 %v2424, %v2489
    %v2491 = vrcp.pop %v2445
    %v2492 = vmul.f32 %v2445, %v2491
    %v2493 = vsub.f32 1.0, %v2492
    %v2494 = vmul.f32 %v2491, %v2493
    %v2495 = vadd.f32 %v2491, %v2494
    %vm2496 = vweird.f32 %v2445
    %vm2497 = vweird.f32 %v2491
    %vm2498 = vmor %vm2496, %vm2497
    %v2499 = vsel %vm2498, %v2491, %v2495
    %v2500 = vand.u32 2147483647, %v2445
    %vm2501 = vcmp.eq.f32.partialorder %v2500, 8.507059e+37
    %v2502 = vand.u32 %v2445, 2147483648
    %v2503 = vor.u32 1.1754944e-38, %v2502
    %v2504 = vsel %vm2501, %v2503, %v2499
    %v2505 = vmul.f32 %v2426, %v2504
    %v2506 = vrcp.pop %v2448
    %v2507 = vmul.f32 %v2448, %v2506
    %v2508 = vsub.f32 1.0, %v2507
    %v2509 = vmul.f32 %v2506, %v2508
    %v2510 = vadd.f32 %v2506, %v2509
    %vm2511 = vweird.f32 %v2448
    %vm2512 = vweird.f32 %v2506
    %vm2513 = vmor %vm2511, %vm2512
    %v2514 = vsel %vm2513, %v2506, %v2510
    %v2515 = vand.u32 2147483647, %v2448
    %vm2516 = vcmp.eq.f32.partialorder %v2515, 8.507059e+37
    %v2517 = vand.u32 %v2448, 2147483648
    %v2518 = vor.u32 1.1754944e-38, %v2517
    %v2519 = vsel %vm2516, %v2518, %v2514
    %v2520 = vmul.f32 %v2428, %v2519
    %v2521 = vrcp.pop %v2451
    %v2522 = vmul.f32 %v2451, %v2521
    %v2523 = vsub.f32 1.0, %v2522
    %v2524 = vmul.f32 %v2521, %v2523
    %v2525 = vadd.f32 %v2521, %v2524
    %vm2526 = vweird.f32 %v2451
    %vm2527 = vweird.f32 %v2521
    %vm2528 = vmor %vm2526, %vm2527
    %v2529 = vsel %vm2528, %v2521, %v2525
    %v2530 = vand.u32 2147483647, %v2451
    %vm2531 = vcmp.eq.f32.partialorder %v2530, 8.507059e+37
    %v2532 = vand.u32 %v2451, 2147483648
    %v2533 = vor.u32 1.1754944e-38, %v2532
    %v2534 = vsel %vm2531, %v2533, %v2529
    %v2535 = vmul.f32 %v2430, %v2534
    %v2536 = vrcp.pop %v2454
    %v2537 = vmul.f32 %v2454, %v2536
    %v2538 = vsub.f32 1.0, %v2537
    %v2539 = vmul.f32 %v2536, %v2538
    %v2540 = vadd.f32 %v2536, %v2539
    %vm2541 = vweird.f32 %v2454
    %vm2542 = vweird.f32 %v2536
    %vm2543 = vmor %vm2541, %vm2542
    %v2544 = vsel %vm2543, %v2536, %v2540
    %v2545 = vand.u32 2147483647, %v2454
    %vm2546 = vcmp.eq.f32.partialorder %v2545, 8.507059e+37
    %v2547 = vand.u32 %v2454, 2147483648
    %v2548 = vor.u32 1.1754944e-38, %v2547
    %v2549 = vsel %vm2546, %v2548, %v2544
    %v2550 = vmul.f32 %v2432, %v2549
    %v2551 = vrcp.pop %v2457
    %v2552 = vmul.f32 %v2457, %v2551
    %v2553 = vsub.f32 1.0, %v2552
    %v2554 = vmul.f32 %v2551, %v2553
    %v2555 = vadd.f32 %v2551, %v2554
    %vm2556 = vweird.f32 %v2457
    %vm2557 = vweird.f32 %v2551
    %vm2558 = vmor %vm2556, %vm2557
    %v2559 = vsel %vm2558, %v2551, %v2555
    %v2560 = vand.u32 2147483647, %v2457
    %vm2561 = vcmp.eq.f32.partialorder %v2560, 8.507059e+37
    %v2562 = vand.u32 %v2457, 2147483648
    %v2563 = vor.u32 1.1754944e-38, %v2562
    %v2564 = vsel %vm2561, %v2563, %v2559
    %v2565 = vmul.f32 %v2434, %v2564
    %v2566 = vrcp.pop %v2460
    %v2567 = vmul.f32 %v2460, %v2566
    %v2568 = vsub.f32 1.0, %v2567
    %v2569 = vmul.f32 %v2566, %v2568
    %v2570 = vadd.f32 %v2566, %v2569
    %vm2571 = vweird.f32 %v2460
    %vm2572 = vweird.f32 %v2566
    %vm2573 = vmor %vm2571, %vm2572
    %v2574 = vsel %vm2573, %v2566, %v2570
    %v2575 = vand.u32 2147483647, %v2460
    %vm2576 = vcmp.eq.f32.partialorder %v2575, 8.507059e+37
    %v2577 = vand.u32 %v2460, 2147483648
    %v2578 = vor.u32 1.1754944e-38, %v2577
    %v2579 = vsel %vm2576, %v2578, %v2574
    %v2580 = vmul.f32 %v2436, %v2579
    %v2582 = vperm.slane %v2180, 0
    %v2585 = vsel %vm495, %v2475, 0
    %v2588 = vsel %vm495, %v2490, 0
    %v2591 = vsel %vm495, %v2505, 0
    %v2594 = vsel %vm495, %v2520, 0
    %v2597 = vsel %vm495, %v2535, 0
    %v2600 = vsel %vm495, %v2550, 0
    %v2603 = vsel %vm495, %v2565, 0
    %v2606 = vsel %vm495, %v2580, 0
    %2608 = vmatpush.msra.mxu0 0.0
    %2609 = vmatpush.msra.mxu0 0.0
    %2610 = vmatpush.msra.mxu0 0.0
    %2611 = vmatpush.msra.mxu0 0.0
    %2612 = vmatpush.msra.mxu0 0.0
    %2613 = vmatpush.msra.mxu0 0.0
    %2614 = vmatpush.msra.mxu0 0.0
    %2615 = vmatpush.msra.mxu0 0.0
    %2616 = vmatpush.msra.mxu0 %v2244
    %2617 = vmatpush.msra.mxu0 %v2241
    %2618 = vmatpush.msra.mxu0 %v2238
    %2619 = vmatpush.msra.mxu0 %v2235
    %2620 = vmatpush.msra.mxu0 %v2232
    %2621 = vmatpush.msra.mxu0 %v2229
    %2622 = vmatpush.msra.mxu0 %v2226
    %2623 = vmatpush.msra.mxu0 %v2223
    %2624 = vmatmul.f32.gmra.mxu0 %v2585
    %v2625 = vpop.f32.mrf.mxu0
    %v2626 = vadd.f32 %v2582, %v2625
    %2627 = vmatmul.f32.gmra.mxu0 %v2588
    %v2628 = vpop.f32.mrf.mxu0
    %v2629 = vadd.f32 %v2582, %v2628
    %2630 = vmatmul.f32.gmra.mxu0 %v2591
    %v2631 = vpop.f32.mrf.mxu0
    %v2632 = vadd.f32 %v2582, %v2631
    %2633 = vmatmul.f32.gmra.mxu0 %v2594
    %v2634 = vpop.f32.mrf.mxu0
    %v2635 = vadd.f32 %v2582, %v2634
    %2636 = vmatmul.f32.gmra.mxu0 %v2597
    %v2637 = vpop.f32.mrf.mxu0
    %v2638 = vadd.f32 %v2582, %v2637
    %2639 = vmatmul.f32.gmra.mxu0 %v2600
    %v2640 = vpop.f32.mrf.mxu0
    %v2641 = vadd.f32 %v2582, %v2640
    %2642 = vmatmul.f32.gmra.mxu0 %v2603
    %v2643 = vpop.f32.mrf.mxu0
    %v2644 = vadd.f32 %v2582, %v2643
    %2645 = vmatmul.f32.gmra.mxu0 %v2606
    %v2646 = vpop.f32.mrf.mxu0
    %v2647 = vadd.f32 %v2582, %v2646
    %2648 = vdwg.mxu0
    %v2649 = vtanh.pop %v2626
    %v2650 = vtanh.pop %v2629
    %v2651 = vtanh.pop %v2632
    %v2652 = vtanh.pop %v2635
    %v2653 = vtanh.pop %v2638
    %v2654 = vtanh.pop %v2641
    %v2655 = vtanh.pop %v2644
    %v2656 = vtanh.pop %v2647
    %v2657 = vld [vmem:[#allocation4] sm:$0x3]
    %vm2658 = vcmask 517120
    %v2659 = vsel %vm2658, %v2657, 0.0
    %2660 = vadd.xlane.f32.xlu0 %v2659
    %v2661 = vpop.xlane.xlu0 %2660
    %v2663 = vsel %vm495, %v2657, 0
    %2665 = vmatpush.msra.mxu0 0.0
    %2666 = vmatpush.msra.mxu0 0.0
    %2667 = vmatpush.msra.mxu0 0.0
    %2668 = vmatpush.msra.mxu0 0.0
    %2669 = vmatpush.msra.mxu0 0.0
    %2670 = vmatpush.msra.mxu0 0.0
    %2671 = vmatpush.msra.mxu0 0.0
    %2672 = vmatpush.msra.mxu0 0.0
    %2673 = vmatpush.msra.mxu0 %v2656
    %2674 = vmatpush.msra.mxu0 %v2655
    %2675 = vmatpush.msra.mxu0 %v2654
    %2676 = vmatpush.msra.mxu0 %v2653
    %2677 = vmatpush.msra.mxu0 %v2652
    %2678 = vmatpush.msra.mxu0 %v2651
    %2679 = vmatpush.msra.mxu0 %v2650
    %2680 = vmatpush.msra.mxu0 %v2649
    %2681 = vmatmul.f32.gmra.mxu0 %v2663
    %v2682 = vpop.f32.mrf.mxu0
    %v2683 = vadd.f32 0.0, %v2682
    %2684 = vdwg.mxu0
    %v2685 = vrcp.pop %v2661
    %v2686 = vmul.f32 %v2661, %v2685
    %v2687 = vsub.f32 1.0, %v2686
    %v2688 = vmul.f32 %v2685, %v2687
    %v2689 = vadd.f32 %v2685, %v2688
    %vm2690 = vweird.f32 %v2661
    %vm2691 = vweird.f32 %v2685
    %vm2692 = vmor %vm2690, %vm2691
    %v2693 = vsel %vm2692, %v2685, %v2689
    %v2694 = vand.u32 2147483647, %v2661
    %vm2695 = vcmp.eq.f32.partialorder %v2694, 8.507059e+37
    %v2696 = vand.u32 %v2661, 2147483648
    %v2697 = vor.u32 1.1754944e-38, %v2696
    %v2698 = vsel %vm2695, %v2697, %v2693
    %v2699 = vmul.f32 %v2683, %v2698
    %v2700 = vperm.slane %v2657, 0
    %v2701 = vlaneseq
    %v2702 = vshrl.u32 %v2701, 7
    %2704 = vset.pattern.permute.xlu0 %v2702
    %2705 = vperm.xlu0 %2704, %v2700
    %v2706 = vpop.permute.xlu0 %2705
    %v2707 = vlaneseq
    %v2708 = vshrl.u32 %v2707, 7
    %v2709 = vadd.s32 %v2708, 8
    %2710 = vset.pattern.permute.xlu0 %v2709
    %2711 = vperm.xlu0 %2710, %v2700
    %v2712 = vpop.permute.xlu0 %2711
    %v2713 = vlaneseq
    %v2714 = vshrl.u32 %v2713, 7
    %v2715 = vadd.s32 %v2714, 16
    %2716 = vset.pattern.permute.xlu0 %v2715
    %2717 = vperm.xlu0 %2716, %v2700
    %v2718 = vpop.permute.xlu0 %2717
    %v2719 = vlaneseq
    %v2720 = vshrl.u32 %v2719, 7
    %v2721 = vadd.s32 %v2720, 24
    %2722 = vset.pattern.permute.xlu0 %v2721
    %2723 = vperm.xlu0 %2722, %v2700
    %v2724 = vpop.permute.xlu0 %2723
    %v2725 = vlaneseq
    %v2726 = vshrl.u32 %v2725, 7
    %v2727 = vadd.s32 %v2726, 32
    %2728 = vset.pattern.permute.xlu0 %v2727
    %2729 = vperm.xlu0 %2728, %v2700
    %v2730 = vpop.permute.xlu0 %2729
    %v2731 = vlaneseq
    %v2732 = vshrl.u32 %v2731, 7
    %v2733 = vadd.s32 %v2732, 40
    %2734 = vset.pattern.permute.xlu0 %v2733
    %2735 = vperm.xlu0 %2734, %v2700
    %v2736 = vpop.permute.xlu0 %2735
    %v2737 = vlaneseq
    %v2738 = vshrl.u32 %v2737, 7
    %v2739 = vadd.s32 %v2738, 48
    %2740 = vset.pattern.permute.xlu0 %v2739
    %2741 = vperm.xlu0 %2740, %v2700
    %v2742 = vpop.permute.xlu0 %2741
    %v2743 = vlaneseq
    %v2744 = vshrl.u32 %v2743, 7
    %v2745 = vadd.s32 %v2744, 56
    %2746 = vset.pattern.permute.xlu0 %v2745
    %2747 = vperm.xlu0 %2746, %v2700
    %v2748 = vpop.permute.xlu0 %2747
    %v2749 = vperm.slane %v2657, 1
    %v2750 = vlaneseq
    %v2751 = vshrl.u32 %v2750, 7
    %2753 = vset.pattern.permute.xlu0 %v2751
    %2754 = vperm.xlu0 %2753, %v2749
    %v2755 = vpop.permute.xlu0 %2754
    %v2756 = vlaneseq
    %v2757 = vshrl.u32 %v2756, 7
    %v2758 = vadd.s32 %v2757, 8
    %2759 = vset.pattern.permute.xlu0 %v2758
    %2760 = vperm.xlu0 %2759, %v2749
    %v2761 = vpop.permute.xlu0 %2760
    %v2762 = vlaneseq
    %v2763 = vshrl.u32 %v2762, 7
    %v2764 = vadd.s32 %v2763, 16
    %2765 = vset.pattern.permute.xlu0 %v2764
    %2766 = vperm.xlu0 %2765, %v2749
    %v2767 = vpop.permute.xlu0 %2766
    %v2768 = vlaneseq
    %v2769 = vshrl.u32 %v2768, 7
    %v2770 = vadd.s32 %v2769, 24
    %2771 = vset.pattern.permute.xlu0 %v2770
    %2772 = vperm.xlu0 %2771, %v2749
    %v2773 = vpop.permute.xlu0 %2772
    %v2774 = vlaneseq
    %v2775 = vshrl.u32 %v2774, 7
    %v2776 = vadd.s32 %v2775, 32
    %2777 = vset.pattern.permute.xlu0 %v2776
    %2778 = vperm.xlu0 %2777, %v2749
    %v2779 = vpop.permute.xlu0 %2778
    %v2780 = vlaneseq
    %v2781 = vshrl.u32 %v2780, 7
    %v2782 = vadd.s32 %v2781, 40
    %2783 = vset.pattern.permute.xlu0 %v2782
    %2784 = vperm.xlu0 %2783, %v2749
    %v2785 = vpop.permute.xlu0 %2784
    %v2786 = vlaneseq
    %v2787 = vshrl.u32 %v2786, 7
    %v2788 = vadd.s32 %v2787, 48
    %2789 = vset.pattern.permute.xlu0 %v2788
    %2790 = vperm.xlu0 %2789, %v2749
    %v2791 = vpop.permute.xlu0 %2790
    %v2792 = vlaneseq
    %v2793 = vshrl.u32 %v2792, 7
    %v2794 = vadd.s32 %v2793, 56
    %2795 = vset.pattern.permute.xlu0 %v2794
    %2796 = vperm.xlu0 %2795, %v2749
    %v2797 = vpop.permute.xlu0 %2796
    %vm2798 = vcmp.gt.f32.partialorder %v2706, 0.5
    %vm2799 = vcmp.gt.f32.partialorder %v2712, 0.5
    %vm2800 = vcmp.gt.f32.partialorder %v2718, 0.5
    %vm2801 = vcmp.gt.f32.partialorder %v2724, 0.5
    %vm2802 = vcmp.gt.f32.partialorder %v2730, 0.5
    %vm2803 = vcmp.gt.f32.partialorder %v2736, 0.5
    %vm2804 = vcmp.gt.f32.partialorder %v2742, 0.5
    %vm2805 = vcmp.gt.f32.partialorder %v2748, 0.5
    %vm2806 = vcmp.gt.f32.partialorder %v2755, 0.5
    %vm2807 = vcmp.gt.f32.partialorder %v2761, 0.5
    %vm2808 = vcmp.gt.f32.partialorder %v2767, 0.5
    %vm2809 = vcmp.gt.f32.partialorder %v2773, 0.5
    %vm2810 = vcmp.gt.f32.partialorder %v2779, 0.5
    %vm2811 = vcmp.gt.f32.partialorder %v2785, 0.5
    %vm2812 = vcmp.gt.f32.partialorder %v2791, 0.5
    %vm2813 = vcmp.gt.f32.partialorder %v2797, 0.5
    %v2814 = vsel %vm2798, 1, 0
    %v2815 = vsel %vm2799, 1, 0
    %v2816 = vsel %vm2800, 1, 0
    %v2817 = vsel %vm2801, 1, 0
    %v2818 = vsel %vm2802, 1, 0
    %v2819 = vsel %vm2803, 1, 0
    %v2820 = vsel %vm2804, 1, 0
    %v2821 = vsel %vm2805, 1, 0
    %v2822 = vsel %vm2806, 1, 0
    %v2823 = vsel %vm2807, 1, 0
    %v2824 = vsel %vm2808, 1, 0
    %v2825 = vsel %vm2809, 1, 0
    %v2826 = vsel %vm2810, 1, 0
    %v2827 = vsel %vm2811, 1, 0
    %v2828 = vsel %vm2812, 1, 0
    %v2829 = vsel %vm2813, 1, 0
    %vm2830 = vcmp.eq.s32.totalorder %v2814, 1
    %vm2831 = vcmp.eq.s32.totalorder %v2815, 1
    %vm2832 = vcmp.eq.s32.totalorder %v2816, 1
    %vm2833 = vcmp.eq.s32.totalorder %v2817, 1
    %vm2834 = vcmp.eq.s32.totalorder %v2818, 1
    %vm2835 = vcmp.eq.s32.totalorder %v2819, 1
    %vm2836 = vcmp.eq.s32.totalorder %v2820, 1
    %vm2837 = vcmp.eq.s32.totalorder %v2821, 1
    %vm2838 = vcmp.eq.s32.totalorder %v2822, 1
    %vm2839 = vcmp.eq.s32.totalorder %v2823, 1
    %vm2840 = vcmp.eq.s32.totalorder %v2824, 1
    %vm2841 = vcmp.eq.s32.totalorder %v2825, 1
    %vm2842 = vcmp.eq.s32.totalorder %v2826, 1
    %vm2843 = vcmp.eq.s32.totalorder %v2827, 1
    %vm2844 = vcmp.eq.s32.totalorder %v2828, 1
    %vm2845 = vcmp.eq.s32.totalorder %v2829, 1
    %v2846 = vsel %vm2830, %v2649, -1e+30
    %v2847 = vsel %vm2831, %v2650, -1e+30
    %v2848 = vsel %vm2832, %v2651, -1e+30
    %v2849 = vsel %vm2833, %v2652, -1e+30
    %v2850 = vsel %vm2834, %v2653, -1e+30
    %v2851 = vsel %vm2835, %v2654, -1e+30
    %v2852 = vsel %vm2836, %v2655, -1e+30
    %v2853 = vsel %vm2837, %v2656, -1e+30
    %v2854 = vsel %vm2838, %v2649, -1e+30
    %v2855 = vsel %vm2839, %v2650, -1e+30
    %v2856 = vsel %vm2840, %v2651, -1e+30
    %v2857 = vsel %vm2841, %v2652, -1e+30
    %v2858 = vsel %vm2842, %v2653, -1e+30
    %v2859 = vsel %vm2843, %v2654, -1e+30
    %v2860 = vsel %vm2844, %v2655, -1e+30
    %v2861 = vsel %vm2845, %v2656, -1e+30
    %v2862 = vsel %vm495, %v2846, -inf
    %v2863 = vsel %vm495, %v2847, -inf
    %v2864 = vsel %vm495, %v2848, -inf
    %v2865 = vmax.f32 %v2862, %v2864
    %v2866 = vsel %vm495, %v2849, -inf
    %v2867 = vmax.f32 %v2863, %v2866
    %v2868 = vsel %vm495, %v2850, -inf
    %v2869 = vmax.f32 %v2865, %v2868
    %v2870 = vsel %vm495, %v2851, -inf
    %v2871 = vmax.f32 %v2867, %v2870
    %v2872 = vsel %vm495, %v2852, -inf
    %v2873 = vmax.f32 %v2869, %v2872
    %v2874 = vsel %vm495, %v2853, -inf
    %v2875 = vmax.f32 %v2871, %v2874
    %v2876 = vmax.f32 %v2873, %v2875
    %v2877 = vrot.slane %v2876, 4
    %v2878 = vmax.f32 %v2876, %v2877
    %v2879 = vrot.slane %v2878, 2
    %v2880 = vmax.f32 %v2878, %v2879
    %v2881 = vrot.slane %v2880, 1
    %v2882 = vmax.f32 %v2880, %v2881
    %v2883 = vsel %vm495, %v2854, -inf
    %v2884 = vsel %vm495, %v2855, -inf
    %v2885 = vsel %vm495, %v2856, -inf
    %v2886 = vmax.f32 %v2883, %v2885
    %v2887 = vsel %vm495, %v2857, -inf
    %v2888 = vmax.f32 %v2884, %v2887
    %v2889 = vsel %vm495, %v2858, -inf
    %v2890 = vmax.f32 %v2886, %v2889
    %v2891 = vsel %vm495, %v2859, -inf
    %v2892 = vmax.f32 %v2888, %v2891
    %v2893 = vsel %vm495, %v2860, -inf
    %v2894 = vmax.f32 %v2890, %v2893
    %v2895 = vsel %vm495, %v2861, -inf
    %v2896 = vmax.f32 %v2892, %v2895
    %v2897 = vmax.f32 %v2894, %v2896
    %v2898 = vrot.slane %v2897, 4
    %v2899 = vmax.f32 %v2897, %v2898
    %v2900 = vrot.slane %v2899, 2
    %v2901 = vmax.f32 %v2899, %v2900
    %v2902 = vrot.slane %v2901, 1
    %v2903 = vmax.f32 %v2901, %v2902
    %vm2906 = vcmask 1041409
    %v2907 = vsel %vm2906, %v2903, %v2882
    %2910 = vrot.lane.b32.xlu0 %v2699, 64
    %v2911 = vpop.permute.xlu0 %2910
    %v2913 = vsel %vm495, %v2907, %v2911
    %v2914 = vld [vmem:[#allocation33] sm:$0xff]
    %v2915 = vld [vmem:[#allocation33 + $0x8] sm:$0xff]
    %v2916 = vld [vmem:[#allocation33 + $0x10] sm:$0xff]
    %v2917 = vld [vmem:[#allocation33 + $0x18] sm:$0xff]
    %v2918 = vld [vmem:[#allocation33 + $0x20] sm:$0xff]
    %v2919 = vld [vmem:[#allocation33 + $0x28] sm:$0xff]
    %v2920 = vld [vmem:[#allocation33 + $0x30] sm:$0xff]
    %v2921 = vld [vmem:[#allocation33 + $0x38] sm:$0xff]
    %v2922 = vld [vmem:[#allocation33 + $0x40] sm:$0xff]
    %v2923 = vld [vmem:[#allocation33 + $0x48] sm:$0xff]
    %v2924 = vld [vmem:[#allocation33 + $0x50] sm:$0xff]
    %v2925 = vld [vmem:[#allocation33 + $0x58] sm:$0xff]
    %v2926 = vld [vmem:[#allocation33 + $0x60] sm:$0xff]
    %v2927 = vld [vmem:[#allocation33 + $0x68] sm:$0xff]
    %v2928 = vld [vmem:[#allocation33 + $0x70] sm:$0xff]
    %v2929 = vld [vmem:[#allocation33 + $0x78] sm:$0xff]
    %v2930 = vld [vmem:[#allocation33 + $0x80] sm:$0xff]
    %v2931 = vld [vmem:[#allocation33 + $0x88] sm:$0xff]
    %v2932 = vld [vmem:[#allocation33 + $0x90] sm:$0xff]
    %v2933 = vld [vmem:[#allocation33 + $0x98] sm:$0xff]
    %v2934 = vld [vmem:[#allocation33 + $0xa0] sm:$0xff]
    %v2935 = vld [vmem:[#allocation33 + $0xa8] sm:$0xff]
    %v2936 = vld [vmem:[#allocation33 + $0xb0] sm:$0xff]
    %v2937 = vld [vmem:[#allocation33 + $0xb8] sm:$0xff]
    %v2938 = vld [vmem:[#allocation33 + $0xc0] sm:$0xff]
    %v2939 = vld [vmem:[#allocation33 + $0xc8] sm:$0xff]
    %v2940 = vld [vmem:[#allocation33 + $0xd0] sm:$0xff]
    %v2941 = vld [vmem:[#allocation33 + $0xd8] sm:$0xff]
    %v2942 = vld [vmem:[#allocation33 + $0xe0] sm:$0xff]
    %v2943 = vld [vmem:[#allocation33 + $0xe8] sm:$0xff]
    %v2944 = vld [vmem:[#allocation33 + $0xf0] sm:$0xff]
    %v2945 = vld [vmem:[#allocation33 + $0xf8] sm:$0xff]
    %v2946 = vld [vmem:[#allocation34] sm:$0x3]
    %v2948 = vperm.slane %v2946, 0
    %v2949 = vperm.slane %v2946, 1
    %2952 = vmatpush.msra.mxu0 %v2944
    %2953 = vmatpush.msra.mxu0 %v2942
    %2954 = vmatpush.msra.mxu0 %v2940
    %2955 = vmatpush.msra.mxu0 %v2938
    %2956 = vmatpush.msra.mxu0 %v2936
    %2957 = vmatpush.msra.mxu0 %v2934
    %2958 = vmatpush.msra.mxu0 %v2932
    %2959 = vmatpush.msra.mxu0 %v2930
    %2960 = vmatpush.msra.mxu0 %v2928
    %2961 = vmatpush.msra.mxu0 %v2926
    %2962 = vmatpush.msra.mxu0 %v2924
    %2963 = vmatpush.msra.mxu0 %v2922
    %2964 = vmatpush.msra.mxu0 %v2920
    %2965 = vmatpush.msra.mxu0 %v2918
    %2966 = vmatpush.msra.mxu0 %v2916
    %2967 = vmatpush.msra.mxu0 %v2914
    %2968 = vmatmul.f32.gmra.mxu0 %v2913
    %v2969 = vpop.f32.mrf.mxu0
    %v2970 = vadd.f32 %v2948, %v2969
    %2971 = vdwg.mxu0
    %2972 = vmatpush.msra.mxu0 %v2945
    %2973 = vmatpush.msra.mxu0 %v2943
    %2974 = vmatpush.msra.mxu0 %v2941
    %2975 = vmatpush.msra.mxu0 %v2939
    %2976 = vmatpush.msra.mxu0 %v2937
    %2977 = vmatpush.msra.mxu0 %v2935
    %2978 = vmatpush.msra.mxu0 %v2933
    %2979 = vmatpush.msra.mxu0 %v2931
    %2980 = vmatpush.msra.mxu0 %v2929
    %2981 = vmatpush.msra.mxu0 %v2927
    %2982 = vmatpush.msra.mxu0 %v2925
    %2983 = vmatpush.msra.mxu0 %v2923
    %2984 = vmatpush.msra.mxu0 %v2921
    %2985 = vmatpush.msra.mxu0 %v2919
    %2986 = vmatpush.msra.mxu0 %v2917
    %2987 = vmatpush.msra.mxu0 %v2915
    %2988 = vmatmul.f32.gmra.mxu0 %v2913
    %v2989 = vpop.f32.mrf.mxu0
    %v2990 = vadd.f32 %v2949, %v2989
    %2991 = vdwg.mxu0
    %v2992 = vpack.c.bf16 %v2990, %v2970
    %v2994 = vrot.slane %v2992, 3
    %vm2995 = vcmask 1040384
    %v2998 = vsel %vm2995, %v2992, %v2994
    %3000 = vst [vmem:[%s23] sm:$0x3] %v2998
    // Predicated region
    $region182: #{gnn_plus_forward.2} parent=1 // pred_check
      _
    $region183: #{gnn_plus_forward.2} parent=1 // pred_check_branch
      %3002 = sbr.rel (0) target = $region185
    $region184: #{gnn_plus_forward.2} parent=1 // pred_region
      _
    $region185: #{gnn_plus_forward.2} parent=1 // pred_fallthru
      _
    // Predicated region
    $region186: #{gnn_plus_forward.2} parent=1 // pred_check
      _
    $region187: #{gnn_plus_forward.2} parent=1 // pred_check_branch
      %3004 = sbr.rel (0) target = $region189
    $region188: #{gnn_plus_forward.2} parent=1 // pred_region
      _
    $region189: #{gnn_plus_forward.2} parent=1 // pred_fallthru
      _
    %3005 = vsyncpa [#allocation3], 1
    %3006 = vsyncpa [#allocation5], 1
    %3007 = vsyncpa [#allocation8], 1
    %3008 = vsyncpa [#allocation11], 1
    %3009 = vsyncpa [#allocation14], 1
    %3010 = vsyncpa [#allocation17], 1
    %3011 = vsyncpa [#allocation20], 1
    %3012 = vsyncpa [#allocation23], 1
    %3013 = vsyncpa [#allocation26], 1
    %3014 = vsyncpa [#allocation29], 1
    %3015 = vsyncpa [#allocation32], 1
    %3016 = vsyncpa [#allocation35], 1

// kernel: gnn_plus_forward.3
$region0: #{gnn_plus_forward.3}
  #allocation0 [shape = 'u32[]', space=smem, size = 0x4, offset = 0x4, fixed_abs, tag = 'smem constant byte address 0x4 - core index']
  #allocation1 [shape = 'u32[72,128]{1,0:T(1,128)}', space=vmem, size = 0x9000, scoped, tag = 'internal scratch']
  %s0 = inlined_call_operand.vmem [shape: bf16[2,256], index: 0, kind: input, shape index: {}]
  %s1 = inlined_call_operand.vmem [shape: bf16[256,38220], index: 1, kind: input, shape index: {}]
  %s2 = inlined_call_operand.vmem [shape: f32[1,38220], index: 2, kind: input, shape index: {}]
  %s3 = inlined_call_operand.hbm [shape: f32[2,38220], index: 3, kind: output, shape index: {}]
  %s4 = sld [smem:[#allocation0]]
  $region97: #{gnn_plus_forward.3} parent=0
    _
  %s6 = ssub.s32 1, %s4
  %s7 = scalar_select 0, %s6, %s4
  $region1: #{gnn_plus_forward.3} parent=0
    #allocation2 [shape = 'u8[4194304]{0}', space=vmem, size = 0x400000, scoped, tag = 'input window, operand 1']
    #allocation3 [shape = 'u8[65536]{0}', space=vmem, size = 0x10000, scoped, tag = 'output window, operand 0']
    #allocation4 [shape = 's32[2]{0}', space=sflag, size = 0x8, scoped, tag = 'scoped memory for gnn_plus_forward.3']
    %8 = vsyncpa [#allocation4], 0
    %s9 = scalar_lea.sflag [#allocation4], 1
    %10 = vsyncpa %s9, 0
    loop: start=0, step=1, limit=12
    $region2: #{gnn_plus_forward.3} parent=1 // loop_pre_header
      _
    $region3: #{gnn_plus_forward.3} parent=1 // loop_header
      %s12 = sphi 0, %s16
      %p13 = scmp.ge.s32.totalorder %s12, 12
      %s20 = sphi 0, %s20
      %s22 = sphi 0, %s20
      %s23 = sphi 0, %s22
      %s37 = sphi 0, %s23
      %s43 = sphi 0, %s45
      %s46 = sphi 0, %s43
      %s47 = sphi 0, %s46
      %s63 = sphi 0, %s47
      %s69 = sphi 0, %s71
      %s72 = sphi 0, %s69
      %s73 = sphi 0, %s72
      %s89 = sphi 0, %s73
      %s95 = sphi 0, %s97
      %s98 = sphi 0, %s95
      %s99 = sphi 0, %s98
      %s115 = sphi 0, %s99
    $region4: #{gnn_plus_forward.3} parent=1 // loop_header_branch
      %15 = sbr.rel (%p13) target = $region8
    $region5: #{gnn_plus_forward.3} parent=1 // loop_body
      %s17 = ssub.s32 %s12, 1
      %s18 = ssub.s32 %s12, 2
      %s19 = sadd.s32 %s12, 1
      %s21 = sadd.s32 %s20, 1
      %p24 = scmp.eq.s32.totalorder %s12, 9
      %p25 = scmp.ne.s32.totalorder %s20, %s22
      %p26 = scmp.eq.s32.totalorder %s12, 0
      %p27 = por %p25, %p26
      %p28 = scmp.ne.s32.totalorder %s20, %s22
      %p29 = scmp.eq.s32.totalorder %s17, 9
      %p30 = por %p28, %p29
      %p31 = scmp.ne.s32.totalorder %s22, %s23
      %p32 = scmp.eq.s32.totalorder %s17, 0
      %p33 = por %p31, %p32
      %p34 = scmp.ne.s32.totalorder %s22, %s23
      %p35 = scmp.eq.s32.totalorder %s18, 9
      %p36 = por %p34, %p35
      %p38 = scmp.ne.s32.totalorder %s23, %s37
      %p39 = scmp.eq.s32.totalorder %s18, 0
      %p40 = por %p38, %p39
      %s41 = ssub.s32 %s12, %s19
      %p42 = scmp.eq.s32.totalorder %s41, 0
      %s44 = sadd.s32 %s43, 1
      %s45 = scalar_select %p42, %s43, %s44
      %p48 = pneg %p42
      %p49 = scmp.eq.s32.totalorder %s12, 9
      %p50 = por %p48, %p49
      %p51 = scmp.ne.s32.totalorder %s43, %s46
      %p52 = scmp.eq.s32.totalorder %s12, 0
      %p53 = por %p51, %p52
      %p54 = scmp.ne.s32.totalorder %s43, %s46
      %p55 = scmp.eq.s32.totalorder %s17, 9
      %p56 = por %p54, %p55
      %p57 = scmp.ne.s32.totalorder %s46, %s47
      %p58 = scmp.eq.s32.totalorder %s17, 0
      %p59 = por %p57, %p58
      %p60 = scmp.ne.s32.totalorder %s46, %s47
      %p61 = scmp.eq.s32.totalorder %s18, 9
      %p62 = por %p60, %p61
      %p64 = scmp.ne.s32.totalorder %s47, %s63
      %p65 = scmp.eq.s32.totalorder %s18, 0
      %p66 = por %p64, %p65
      %s67 = ssub.s32 %s12, %s19
      %p68 = scmp.eq.s32.totalorder %s67, 0
      %s70 = sadd.s32 %s69, 1
      %s71 = scalar_select %p68, %s69, %s70
      %p74 = pneg %p68
      %p75 = scmp.eq.s32.totalorder %s12, 9
      %p76 = por %p74, %p75
      %p77 = scmp.ne.s32.totalorder %s69, %s72
      %p78 = scmp.eq.s32.totalorder %s12, 0
      %p79 = por %p77, %p78
      %p80 = scmp.ne.s32.totalorder %s69, %s72
      %p81 = scmp.eq.s32.totalorder %s17, 9
      %p82 = por %p80, %p81
      %p83 = scmp.ne.s32.totalorder %s72, %s73
      %p84 = scmp.eq.s32.totalorder %s17, 0
      %p85 = por %p83, %p84
      %p86 = scmp.ne.s32.totalorder %s72, %s73
      %p87 = scmp.eq.s32.totalorder %s18, 9
      %p88 = por %p86, %p87
      %p90 = scmp.ne.s32.totalorder %s73, %s89
      %p91 = scmp.eq.s32.totalorder %s18, 0
      %p92 = por %p90, %p91
      %s93 = ssub.s32 %s12, %s19
      %p94 = scmp.eq.s32.totalorder %s93, 0
      %s96 = sadd.s32 %s95, 1
      %s97 = scalar_select %p94, %s95, %s96
      %p100 = pneg %p94
      %p101 = scmp.eq.s32.totalorder %s12, 9
      %p102 = por %p100, %p101
      %p103 = scmp.ne.s32.totalorder %s95, %s98
      %p104 = scmp.eq.s32.totalorder %s12, 0
      %p105 = por %p103, %p104
      %p106 = scmp.ne.s32.totalorder %s95, %s98
      %p107 = scmp.eq.s32.totalorder %s17, 9
      %p108 = por %p106, %p107
      %p109 = scmp.ne.s32.totalorder %s98, %s99
      %p110 = scmp.eq.s32.totalorder %s17, 0
      %p111 = por %p109, %p110
      %p112 = scmp.ne.s32.totalorder %s98, %s99
      %p113 = scmp.eq.s32.totalorder %s18, 9
      %p114 = por %p112, %p113
      %p116 = scmp.ne.s32.totalorder %s99, %s115
      %p117 = scmp.eq.s32.totalorder %s18, 0
      %p118 = por %p116, %p117
      %p119 = scmp.le.s32.totalorder 1, %s12
      %p120 = scmp.lt.s32.totalorder %s12, 11
      %p121 = pnand %p119, %p120
      %p122 = pneg %p121
      // Predicated region
      $region9: #{gnn_plus_forward.3} parent=5 // pred_check
        _
      $region10: #{gnn_plus_forward.3} parent=5 // pred_check_branch
        %124 = sbr.rel (%p121) target = $region12
      $region11: #{gnn_plus_forward.3} parent=5 // pred_region
        %s125 = ssub.s32 %s12, 1
        // Predicated region
        $region13: #{gnn_plus_forward.3} parent=11 // pred_check
          %p126 = pneg %p33
        $region14: #{gnn_plus_forward.3} parent=11 // pred_check_branch
          %128 = sbr.rel (%p126) target = $region16
        $region15: #{gnn_plus_forward.3} parent=11 // pred_region
          _
        $region16: #{gnn_plus_forward.3} parent=11 // pred_fallthru
          _
      $region12: #{gnn_plus_forward.3} parent=5 // pred_fallthru
        _
      %p129 = scmp.lt.s32.totalorder %s12, 10
      // Predicated region
      $region17: #{gnn_plus_forward.3} parent=5 // pred_check
        %p130 = pneg %p129
      $region18: #{gnn_plus_forward.3} parent=5 // pred_check_branch
        %132 = sbr.rel (%p130) target = $region20
      $region19: #{gnn_plus_forward.3} parent=5 // pred_region
        // Predicated region
        $region21: #{gnn_plus_forward.3} parent=19 // pred_check
          %p133 = pneg %p53
        $region22: #{gnn_plus_forward.3} parent=19 // pred_check_branch
          %135 = sbr.rel (%p133) target = $region24
        $region23: #{gnn_plus_forward.3} parent=19 // pred_region
          %s136 = sand.u32 %s43, 1
          %s137 = sand.u32 %s43, 1
          %s138 = smul.addr %s137, 4096
          %s139 = scalar_lea.vmem [#allocation2], %s138
          %s140 = smul.u32 32, %s12
          %s141 = ssub.s32 299, %s140
          %p142 = scmp.lt.s32.totalorder %s141, 32
          %s143 = scalar_select %p142, %s141, 32
          %s144 = smul.u32 128, %s143
          %p145 = scmp.ne.s32.totalorder 0, %s144
          %s146 = smul.addr %s140, 4
          %s147 = scalar_lea.vmem %s1, %s146
          %s148 = smul.u32 %s143, 4
          // Predicated region
          $region25: #{gnn_plus_forward.3} parent=23 // pred_check
            %p149 = pneg %p145
          $region26: #{gnn_plus_forward.3} parent=23 // pred_check_branch
            %151 = sbr.rel (%p149) target = $region28
          $region27: #{gnn_plus_forward.3} parent=23 // pred_region
            %p152 = scmp.lt.u32.totalorder %s148, 8
            %p153 = pneg %p152
            // Predicated region
            $region29: #{gnn_plus_forward.3} parent=27 // pred_check
              _
            $region30: #{gnn_plus_forward.3} parent=27 // pred_check_branch
              %155 = sbr.rel (%p152) target = $region32
            $region31: #{gnn_plus_forward.3} parent=27 // pred_region
              %s233 = sand.u32 %s148, 7
              %p234 = scmp.eq.s32.totalorder %s233, 0
              // Predicated region
              $region44: #{gnn_plus_forward.3} parent=31 // pred_check
                %p235 = pneg %p234
              $region45: #{gnn_plus_forward.3} parent=31 // pred_check_branch
                %237 = sbr.rel (%p235) target = $region47
              $region46: #{gnn_plus_forward.3} parent=31 // pred_region
                %s238 = sshrl.u32 %s148, 3
                // While loop
                $region48: #{gnn_plus_forward.3} parent=46 // loop_pre_header
                  _
                $region49: #{gnn_plus_forward.3} parent=46 // loop_header
                  %s240 = sphi 0, %s242
                  %p241 = scmp.ge.s32.totalorder %s240, %s238
                  %s245 = sphi 0, %s314
                  %s246 = sphi %s147, %s317
                  %s247 = sphi %s139, %s318
                $region50: #{gnn_plus_forward.3} parent=46 // loop_header_branch
                  %244 = sbr.rel (%p241) target = $region54
                $region51: #{gnn_plus_forward.3} parent=46 // loop_body
                  %v248 = vld [vmem:[%s246] sm:$0xff]
                  %249 = vst [vmem:[%s247] sm:$0xff] %v248
                  %v250 = vld [vmem:[%s246 + $0x4ac] sm:$0xff]
                  %251 = vst [vmem:[%s247 + $0x80] sm:$0xff] %v250
                  %v252 = vld [vmem:[%s246 + $0x958] sm:$0xff]
                  %253 = vst [vmem:[%s247 + $0x100] sm:$0xff] %v252
                  %v254 = vld [vmem:[%s246 + $0xe04] sm:$0xff]
                  %255 = vst [vmem:[%s247 + $0x180] sm:$0xff] %v254
                  %v256 = vld [vmem:[%s246 + $0x12b0] sm:$0xff]
                  %257 = vst [vmem:[%s247 + $0x200] sm:$0xff] %v256
                  %v258 = vld [vmem:[%s246 + $0x175c] sm:$0xff]
                  %259 = vst [vmem:[%s247 + $0x280] sm:$0xff] %v258
                  %v260 = vld [vmem:[%s246 + $0x1c08] sm:$0xff]
                  %261 = vst [vmem:[%s247 + $0x300] sm:$0xff] %v260
                  %v262 = vld [vmem:[%s246 + $0x20b4] sm:$0xff]
                  %263 = vst [vmem:[%s247 + $0x380] sm:$0xff] %v262
                  %v264 = vld [vmem:[%s246 + $0x2560] sm:$0xff]
                  %265 = vst [vmem:[%s247 + $0x400] sm:$0xff] %v264
                  %v266 = vld [vmem:[%s246 + $0x2a0c] sm:$0xff]
                  %267 = vst [vmem:[%s247 + $0x480] sm:$0xff] %v266
                  %v268 = vld [vmem:[%s246 + $0x2eb8] sm:$0xff]
                  %269 = vst [vmem:[%s247 + $0x500] sm:$0xff] %v268
                  %v270 = vld [vmem:[%s246 + $0x3364] sm:$0xff]
                  %271 = vst [vmem:[%s247 + $0x580] sm:$0xff] %v270
                  %v272 = vld [vmem:[%s246 + $0x3810] sm:$0xff]
                  %273 = vst [vmem:[%s247 + $0x600] sm:$0xff] %v272
                  %v274 = vld [vmem:[%s246 + $0x3cbc] sm:$0xff]
                  %275 = vst [vmem:[%s247 + $0x680] sm:$0xff] %v274
                  %v276 = vld [vmem:[%s246 + $0x4168] sm:$0xff]
                  %277 = vst [vmem:[%s247 + $0x700] sm:$0xff] %v276
                  %v278 = vld [vmem:[%s246 + $0x4614] sm:$0xff]
                  %279 = vst [vmem:[%s247 + $0x780] sm:$0xff] %v278
                  %v280 = vld [vmem:[%s246 + $0x4ac0] sm:$0xff]
                  %281 = vst [vmem:[%s247 + $0x800] sm:$0xff] %v280
                  %v282 = vld [vmem:[%s246 + $0x4f6c] sm:$0xff]
                  %283 = vst [vmem:[%s247 + $0x880] sm:$0xff] %v282
                  %v284 = vld [vmem:[%s246 + $0x5418] sm:$0xff]
                  %285 = vst [vmem:[%s247 + $0x900] sm:$0xff] %v284
                  %v286 = vld [vmem:[%s246 + $0x58c4] sm:$0xff]
                  %287 = vst [vmem:[%s247 + $0x980] sm:$0xff] %v286
                  %v288 = vld [vmem:[%s246 + $0x5d70] sm:$0xff]
                  %289 = vst [vmem:[%s247 + $0xa00] sm:$0xff] %v288
                  %v290 = vld [vmem:[%s246 + $0x621c] sm:$0xff]
                  %291 = vst [vmem:[%s247 + $0xa80] sm:$0xff] %v290
                  %v292 = vld [vmem:[%s246 + $0x66c8] sm:$0xff]
                  %293 = vst [vmem:[%s247 + $0xb00] sm:$0xff] %v292
                  %v294 = vld [vmem:[%s246 + $0x6b74] sm:$0xff]
                  %295 = vst [vmem:[%s247 + $0xb80] sm:$0xff] %v294
                  %v296 = vld [vmem:[%s246 + $0x7020] sm:$0xff]
                  %297 = vst [vmem:[%s247 + $0xc00] sm:$0xff] %v296
                  %v298 = vld [vmem:[%s246 + $0x74cc] sm:$0xff]
                  %299 = vst [vmem:[%s247 + $0xc80] sm:$0xff] %v298
                  %v300 = vld [vmem:[%s246 + $0x7978] sm:$0xff]
                  %301 = vst [vmem:[%s247 + $0xd00] sm:$0xff] %v300
                  %v302 = vld [vmem:[%s246 + $0x7e24] sm:$0xff]
                  %303 = vst [vmem:[%s247 + $0xd80] sm:$0xff] %v302
                  %v304 = vld [vmem:[%s246 + $0x82d0] sm:$0xff]
                  %305 = vst [vmem:[%s247 + $0xe00] sm:$0xff] %v304
                  %v306 = vld [vmem:[%s246 + $0x877c] sm:$0xff]
                  %307 = vst [vmem:[%s247 + $0xe80] sm:$0xff] %v306
                  %v308 = vld [vmem:[%s246 + $0x8c28] sm:$0xff]
                  %309 = vst [vmem:[%s247 + $0xf00] sm:$0xff] %v308
                  %v310 = vld [vmem:[%s246 + $0x90d4] sm:$0xff]
                  %311 = vst [vmem:[%s247 + $0xf80] sm:$0xff] %v310
                  %s312 = sadd.s32 1, %s245
                  %p313 = scmp.ge.s32.totalorder %s312, %s238
                  %s314 = scalar_select %p313, 0, %s312
                  %s315 = smul.u32 %s314, 8
                  %s316 = smul.u32 %s314, 8
                  %s317 = scalar_lea.vmem %s147, %s315
                  %s318 = scalar_lea.vmem %s139, %s316 [#allocation2]
                $region52: #{gnn_plus_forward.3} parent=46 // loop_footer
                  %s242 = sadd.s32 %s240, 1
                $region53: #{gnn_plus_forward.3} parent=46 // loop_footer_branch
                  %239 = sbr.rel target = $region49
                $region54: #{gnn_plus_forward.3} parent=46 // loop_exit
                  _
              $region47: #{gnn_plus_forward.3} parent=31 // pred_fallthru
                _
              %p319 = pneg %p234
              // Predicated region
              $region55: #{gnn_plus_forward.3} parent=31 // pred_check
                _
              $region56: #{gnn_plus_forward.3} parent=31 // pred_check_branch
                %321 = sbr.rel (%p234) target = $region58
              $region57: #{gnn_plus_forward.3} parent=31 // pred_region
                %s322 = sand.u32 %s148, 7
                %s323 = ssub.s32 %s148, %s322
                %s324 = scalar_lea.vmem %s147, %s323
                %s325 = ssub.s32 %s148, %s322
                %s326 = scalar_lea.vmem %s139, %s325 [#allocation2]
                %s327 = sshrl.u32 %s148, 3
                // While loop
                $region59: #{gnn_plus_forward.3} parent=57 // loop_pre_header
                  _
                $region60: #{gnn_plus_forward.3} parent=57 // loop_header
                  %s329 = sphi 0, %s331
                  %p330 = scmp.ge.s32.totalorder %s329, %s327
                  %s334 = sphi 0, %s403
                  %s335 = sphi %s147, %s406
                  %s336 = sphi %s139, %s407
                $region61: #{gnn_plus_forward.3} parent=57 // loop_header_branch
                  %333 = sbr.rel (%p330) target = $region65
                $region62: #{gnn_plus_forward.3} parent=57 // loop_body
                  %v337 = vld [vmem:[%s335] sm:$0xff]
                  %338 = vst [vmem:[%s336] sm:$0xff] %v337
                  %v339 = vld [vmem:[%s335 + $0x4ac] sm:$0xff]
                  %340 = vst [vmem:[%s336 + $0x80] sm:$0xff] %v339
                  %v341 = vld [vmem:[%s335 + $0x958] sm:$0xff]
                  %342 = vst [vmem:[%s336 + $0x100] sm:$0xff] %v341
                  %v343 = vld [vmem:[%s335 + $0xe04] sm:$0xff]
                  %344 = vst [vmem:[%s336 + $0x180] sm:$0xff] %v343
                  %v345 = vld [vmem:[%s335 + $0x12b0] sm:$0xff]
                  %346 = vst [vmem:[%s336 + $0x200] sm:$0xff] %v345
                  %v347 = vld [vmem:[%s335 + $0x175c] sm:$0xff]
                  %348 = vst [vmem:[%s336 + $0x280] sm:$0xff] %v347
                  %v349 = vld [vmem:[%s335 + $0x1c08] sm:$0xff]
                  %350 = vst [vmem:[%s336 + $0x300] sm:$0xff] %v349
                  %v351 = vld [vmem:[%s335 + $0x20b4] sm:$0xff]
                  %352 = vst [vmem:[%s336 + $0x380] sm:$0xff] %v351
                  %v353 = vld [vmem:[%s335 + $0x2560] sm:$0xff]
                  %354 = vst [vmem:[%s336 + $0x400] sm:$0xff] %v353
                  %v355 = vld [vmem:[%s335 + $0x2a0c] sm:$0xff]
                  %356 = vst [vmem:[%s336 + $0x480] sm:$0xff] %v355
                  %v357 = vld [vmem:[%s335 + $0x2eb8] sm:$0xff]
                  %358 = vst [vmem:[%s336 + $0x500] sm:$0xff] %v357
                  %v359 = vld [vmem:[%s335 + $0x3364] sm:$0xff]
                  %360 = vst [vmem:[%s336 + $0x580] sm:$0xff] %v359
                  %v361 = vld [vmem:[%s335 + $0x3810] sm:$0xff]
                  %362 = vst [vmem:[%s336 + $0x600] sm:$0xff] %v361
                  %v363 = vld [vmem:[%s335 + $0x3cbc] sm:$0xff]
                  %364 = vst [vmem:[%s336 + $0x680] sm:$0xff] %v363
                  %v365 = vld [vmem:[%s335 + $0x4168] sm:$0xff]
                  %366 = vst [vmem:[%s336 + $0x700] sm:$0xff] %v365
                  %v367 = vld [vmem:[%s335 + $0x4614] sm:$0xff]
                  %368 = vst [vmem:[%s336 + $0x780] sm:$0xff] %v367
                  %v369 = vld [vmem:[%s335 + $0x4ac0] sm:$0xff]
                  %370 = vst [vmem:[%s336 + $0x800] sm:$0xff] %v369
                  %v371 = vld [vmem:[%s335 + $0x4f6c] sm:$0xff]
                  %372 = vst [vmem:[%s336 + $0x880] sm:$0xff] %v371
                  %v373 = vld [vmem:[%s335 + $0x5418] sm:$0xff]
                  %374 = vst [vmem:[%s336 + $0x900] sm:$0xff] %v373
                  %v375 = vld [vmem:[%s335 + $0x58c4] sm:$0xff]
                  %376 = vst [vmem:[%s336 + $0x980] sm:$0xff] %v375
                  %v377 = vld [vmem:[%s335 + $0x5d70] sm:$0xff]
                  %378 = vst [vmem:[%s336 + $0xa00] sm:$0xff] %v377
                  %v379 = vld [vmem:[%s335 + $0x621c] sm:$0xff]
                  %380 = vst [vmem:[%s336 + $0xa80] sm:$0xff] %v379
                  %v381 = vld [vmem:[%s335 + $0x66c8] sm:$0xff]
                  %382 = vst [vmem:[%s336 + $0xb00] sm:$0xff] %v381
                  %v383 = vld [vmem:[%s335 + $0x6b74] sm:$0xff]
                  %384 = vst [vmem:[%s336 + $0xb80] sm:$0xff] %v383
                  %v385 = vld [vmem:[%s335 + $0x7020] sm:$0xff]
                  %386 = vst [vmem:[%s336 + $0xc00] sm:$0xff] %v385
                  %v387 = vld [vmem:[%s335 + $0x74cc] sm:$0xff]
                  %388 = vst [vmem:[%s336 + $0xc80] sm:$0xff] %v387
                  %v389 = vld [vmem:[%s335 + $0x7978] sm:$0xff]
                  %390 = vst [vmem:[%s336 + $0xd00] sm:$0xff] %v389
                  %v391 = vld [vmem:[%s335 + $0x7e24] sm:$0xff]
                  %392 = vst [vmem:[%s336 + $0xd80] sm:$0xff] %v391
                  %v393 = vld [vmem:[%s335 + $0x82d0] sm:$0xff]
                  %394 = vst [vmem:[%s336 + $0xe00] sm:$0xff] %v393
                  %v395 = vld [vmem:[%s335 + $0x877c] sm:$0xff]
                  %396 = vst [vmem:[%s336 + $0xe80] sm:$0xff] %v395
                  %v397 = vld [vmem:[%s335 + $0x8c28] sm:$0xff]
                  %398 = vst [vmem:[%s336 + $0xf00] sm:$0xff] %v397
                  %v399 = vld [vmem:[%s335 + $0x90d4] sm:$0xff]
                  %400 = vst [vmem:[%s336 + $0xf80] sm:$0xff] %v399
                  %s401 = sadd.s32 1, %s334
                  %p402 = scmp.ge.s32.totalorder %s401, %s327
                  %s403 = scalar_select %p402, 0, %s401
                  %s404 = smul.u32 %s403, 8
                  %s405 = smul.u32 %s403, 8
                  %s406 = scalar_lea.vmem %s147, %s404
                  %s407 = scalar_lea.vmem %s139, %s405 [#allocation2]
                $region63: #{gnn_plus_forward.3} parent=57 // loop_footer
                  %s331 = sadd.s32 %s329, 1
                $region64: #{gnn_plus_forward.3} parent=57 // loop_footer_branch
                  %328 = sbr.rel target = $region60
                $region65: #{gnn_plus_forward.3} parent=57 // loop_exit
                  _
                %s408 = sshll.u32 1, %s322
                %s409 = ssub.s32 %s408, 1
                loop: start=0, step=1, limit=1
                $region66: #{gnn_plus_forward.3} parent=57 // loop_pre_header
                  _
                $region67: #{gnn_plus_forward.3} parent=57 // loop_header
                  %s411 = sphi 0, %s415
                  %p412 = scmp.ge.s32.totalorder %s411, 1
                  %s416 = sphi %s324, %s324
                  %s417 = sphi %s326, %s326
                $region68: #{gnn_plus_forward.3} parent=57 // loop_header_branch
                  %414 = sbr.rel (%p412) target = $region72
                $region69: #{gnn_plus_forward.3} parent=57 // loop_body
                  %v418 = vld [vmem:[%s416] sm:%s409]
                  %419 = vst [vmem:[%s417] sm:%s409] %v418
                  %v420 = vld [vmem:[%s416 + $0x4ac] sm:%s409]
                  %421 = vst [vmem:[%s417 + $0x80] sm:%s409] %v420
                  %v422 = vld [vmem:[%s416 + $0x958] sm:%s409]
                  %423 = vst [vmem:[%s417 + $0x100] sm:%s409] %v422
                  %v424 = vld [vmem:[%s416 + $0xe04] sm:%s409]
                  %425 = vst [vmem:[%s417 + $0x180] sm:%s409] %v424
                  %v426 = vld [vmem:[%s416 + $0x12b0] sm:%s409]
                  %427 = vst [vmem:[%s417 + $0x200] sm:%s409] %v426
                  %v428 = vld [vmem:[%s416 + $0x175c] sm:%s409]
                  %429 = vst [vmem:[%s417 + $0x280] sm:%s409] %v428
                  %v430 = vld [vmem:[%s416 + $0x1c08] sm:%s409]
                  %431 = vst [vmem:[%s417 + $0x300] sm:%s409] %v430
                  %v432 = vld [vmem:[%s416 + $0x20b4] sm:%s409]
                  %433 = vst [vmem:[%s417 + $0x380] sm:%s409] %v432
                  %v434 = vld [vmem:[%s416 + $0x2560] sm:%s409]
                  %435 = vst [vmem:[%s417 + $0x400] sm:%s409] %v434
                  %v436 = vld [vmem:[%s416 + $0x2a0c] sm:%s409]
                  %437 = vst [vmem:[%s417 + $0x480] sm:%s409] %v436
                  %v438 = vld [vmem:[%s416 + $0x2eb8] sm:%s409]
                  %439 = vst [vmem:[%s417 + $0x500] sm:%s409] %v438
                  %v440 = vld [vmem:[%s416 + $0x3364] sm:%s409]
                  %441 = vst [vmem:[%s417 + $0x580] sm:%s409] %v440
                  %v442 = vld [vmem:[%s416 + $0x3810] sm:%s409]
                  %443 = vst [vmem:[%s417 + $0x600] sm:%s409] %v442
                  %v444 = vld [vmem:[%s416 + $0x3cbc] sm:%s409]
                  %445 = vst [vmem:[%s417 + $0x680] sm:%s409] %v444
                  %v446 = vld [vmem:[%s416 + $0x4168] sm:%s409]
                  %447 = vst [vmem:[%s417 + $0x700] sm:%s409] %v446
                  %v448 = vld [vmem:[%s416 + $0x4614] sm:%s409]
                  %449 = vst [vmem:[%s417 + $0x780] sm:%s409] %v448
                  %v450 = vld [vmem:[%s416 + $0x4ac0] sm:%s409]
                  %451 = vst [vmem:[%s417 + $0x800] sm:%s409] %v450
                  %v452 = vld [vmem:[%s416 + $0x4f6c] sm:%s409]
                  %453 = vst [vmem:[%s417 + $0x880] sm:%s409] %v452
                  %v454 = vld [vmem:[%s416 + $0x5418] sm:%s409]
                  %455 = vst [vmem:[%s417 + $0x900] sm:%s409] %v454
                  %v456 = vld [vmem:[%s416 + $0x58c4] sm:%s409]
                  %457 = vst [vmem:[%s417 + $0x980] sm:%s409] %v456
                  %v458 = vld [vmem:[%s416 + $0x5d70] sm:%s409]
                  %459 = vst [vmem:[%s417 + $0xa00] sm:%s409] %v458
                  %v460 = vld [vmem:[%s416 + $0x621c] sm:%s409]
                  %461 = vst [vmem:[%s417 + $0xa80] sm:%s409] %v460
                  %v462 = vld [vmem:[%s416 + $0x66c8] sm:%s409]
                  %463 = vst [vmem:[%s417 + $0xb00] sm:%s409] %v462
                  %v464 = vld [vmem:[%s416 + $0x6b74] sm:%s409]
                  %465 = vst [vmem:[%s417 + $0xb80] sm:%s409] %v464
                  %v466 = vld [vmem:[%s416 + $0x7020] sm:%s409]
                  %467 = vst [vmem:[%s417 + $0xc00] sm:%s409] %v466
                  %v468 = vld [vmem:[%s416 + $0x74cc] sm:%s409]
                  %469 = vst [vmem:[%s417 + $0xc80] sm:%s409] %v468
                  %v470 = vld [vmem:[%s416 + $0x7978] sm:%s409]
                  %471 = vst [vmem:[%s417 + $0xd00] sm:%s409] %v470
                  %v472 = vld [vmem:[%s416 + $0x7e24] sm:%s409]
                  %473 = vst [vmem:[%s417 + $0xd80] sm:%s409] %v472
                  %v474 = vld [vmem:[%s416 + $0x82d0] sm:%s409]
                  %475 = vst [vmem:[%s417 + $0xe00] sm:%s409] %v474
                  %v476 = vld [vmem:[%s416 + $0x877c] sm:%s409]
                  %477 = vst [vmem:[%s417 + $0xe80] sm:%s409] %v476
                  %v478 = vld [vmem:[%s416 + $0x8c28] sm:%s409]
                  %479 = vst [vmem:[%s417 + $0xf00] sm:%s409] %v478
                  %v480 = vld [vmem:[%s416 + $0x90d4] sm:%s409]
                  %481 = vst [vmem:[%s417 + $0xf80] sm:%s409] %v480
                $region70: #{gnn_plus_forward.3} parent=57 // loop_footer
                  %s415 = sadd.s32 1, %s411
                $region71: #{gnn_plus_forward.3} parent=57 // loop_footer_branch
                  %410 = sbr.rel target = $region67
                $region72: #{gnn_plus_forward.3} parent=57 // loop_exit
                  _
              $region58: #{gnn_plus_forward.3} parent=31 // pred_fallthru
                _
            $region32: #{gnn_plus_forward.3} parent=27 // pred_fallthru
              _
            // Predicated region
            $region33: #{gnn_plus_forward.3} parent=27 // pred_check
              %p156 = pneg %p152
            $region34: #{gnn_plus_forward.3} parent=27 // pred_check_branch
              %158 = sbr.rel (%p156) target = $region36
            $region35: #{gnn_plus_forward.3} parent=27 // pred_region
              %s159 = sshll.u32 1, %s148
              %s160 = ssub.s32 %s159, 1
              loop: start=0, step=1, limit=1
              $region37: #{gnn_plus_forward.3} parent=35 // loop_pre_header
                _
              $region38: #{gnn_plus_forward.3} parent=35 // loop_header
                %s162 = sphi 0, %s166
                %p163 = scmp.ge.s32.totalorder %s162, 1
                %s167 = sphi %s147, %s147
                %s168 = sphi %s139, %s139
              $region39: #{gnn_plus_forward.3} parent=35 // loop_header_branch
                %165 = sbr.rel (%p163) target = $region43
              $region40: #{gnn_plus_forward.3} parent=35 // loop_body
                %v169 = vld [vmem:[%s167] sm:%s160]
                %170 = vst [vmem:[%s168] sm:%s160] %v169
                %v171 = vld [vmem:[%s167 + $0x4ac] sm:%s160]
                %172 = vst [vmem:[%s168 + $0x80] sm:%s160] %v171
                %v173 = vld [vmem:[%s167 + $0x958] sm:%s160]
                %174 = vst [vmem:[%s168 + $0x100] sm:%s160] %v173
                %v175 = vld [vmem:[%s167 + $0xe04] sm:%s160]
                %176 = vst [vmem:[%s168 + $0x180] sm:%s160] %v175
                %v177 = vld [vmem:[%s167 + $0x12b0] sm:%s160]
                %178 = vst [vmem:[%s168 + $0x200] sm:%s160] %v177
                %v179 = vld [vmem:[%s167 + $0x175c] sm:%s160]
                %180 = vst [vmem:[%s168 + $0x280] sm:%s160] %v179
                %v181 = vld [vmem:[%s167 + $0x1c08] sm:%s160]
                %182 = vst [vmem:[%s168 + $0x300] sm:%s160] %v181
                %v183 = vld [vmem:[%s167 + $0x20b4] sm:%s160]
                %184 = vst [vmem:[%s168 + $0x380] sm:%s160] %v183
                %v185 = vld [vmem:[%s167 + $0x2560] sm:%s160]
                %186 = vst [vmem:[%s168 + $0x400] sm:%s160] %v185
                %v187 = vld [vmem:[%s167 + $0x2a0c] sm:%s160]
                %188 = vst [vmem:[%s168 + $0x480] sm:%s160] %v187
                %v189 = vld [vmem:[%s167 + $0x2eb8] sm:%s160]
                %190 = vst [vmem:[%s168 + $0x500] sm:%s160] %v189
                %v191 = vld [vmem:[%s167 + $0x3364] sm:%s160]
                %192 = vst [vmem:[%s168 + $0x580] sm:%s160] %v191
                %v193 = vld [vmem:[%s167 + $0x3810] sm:%s160]
                %194 = vst [vmem:[%s168 + $0x600] sm:%s160] %v193
                %v195 = vld [vmem:[%s167 + $0x3cbc] sm:%s160]
                %196 = vst [vmem:[%s168 + $0x680] sm:%s160] %v195
                %v197 = vld [vmem:[%s167 + $0x4168] sm:%s160]
                %198 = vst [vmem:[%s168 + $0x700] sm:%s160] %v197
                %v199 = vld [vmem:[%s167 + $0x4614] sm:%s160]
                %200 = vst [vmem:[%s168 + $0x780] sm:%s160] %v199
                %v201 = vld [vmem:[%s167 + $0x4ac0] sm:%s160]
                %202 = vst [vmem:[%s168 + $0x800] sm:%s160] %v201
                %v203 = vld [vmem:[%s167 + $0x4f6c] sm:%s160]
                %204 = vst [vmem:[%s168 + $0x880] sm:%s160] %v203
                %v205 = vld [vmem:[%s167 + $0x5418] sm:%s160]
                %206 = vst [vmem:[%s168 + $0x900] sm:%s160] %v205
                %v207 = vld [vmem:[%s167 + $0x58c4] sm:%s160]
                %208 = vst [vmem:[%s168 + $0x980] sm:%s160] %v207
                %v209 = vld [vmem:[%s167 + $0x5d70] sm:%s160]
                %210 = vst [vmem:[%s168 + $0xa00] sm:%s160] %v209
                %v211 = vld [vmem:[%s167 + $0x621c] sm:%s160]
                %212 = vst [vmem:[%s168 + $0xa80] sm:%s160] %v211
                %v213 = vld [vmem:[%s167 + $0x66c8] sm:%s160]
                %214 = vst [vmem:[%s168 + $0xb00] sm:%s160] %v213
                %v215 = vld [vmem:[%s167 + $0x6b74] sm:%s160]
                %216 = vst [vmem:[%s168 + $0xb80] sm:%s160] %v215
                %v217 = vld [vmem:[%s167 + $0x7020] sm:%s160]
                %218 = vst [vmem:[%s168 + $0xc00] sm:%s160] %v217
                %v219 = vld [vmem:[%s167 + $0x74cc] sm:%s160]
                %220 = vst [vmem:[%s168 + $0xc80] sm:%s160] %v219
                %v221 = vld [vmem:[%s167 + $0x7978] sm:%s160]
                %222 = vst [vmem:[%s168 + $0xd00] sm:%s160] %v221
                %v223 = vld [vmem:[%s167 + $0x7e24] sm:%s160]
                %224 = vst [vmem:[%s168 + $0xd80] sm:%s160] %v223
                %v225 = vld [vmem:[%s167 + $0x82d0] sm:%s160]
                %226 = vst [vmem:[%s168 + $0xe00] sm:%s160] %v225
                %v227 = vld [vmem:[%s167 + $0x877c] sm:%s160]
                %228 = vst [vmem:[%s168 + $0xe80] sm:%s160] %v227
                %v229 = vld [vmem:[%s167 + $0x8c28] sm:%s160]
                %230 = vst [vmem:[%s168 + $0xf00] sm:%s160] %v229
                %v231 = vld [vmem:[%s167 + $0x90d4] sm:%s160]
                %232 = vst [vmem:[%s168 + $0xf80] sm:%s160] %v231
              $region41: #{gnn_plus_forward.3} parent=35 // loop_footer
                %s166 = sadd.s32 1, %s162
              $region42: #{gnn_plus_forward.3} parent=35 // loop_footer_branch
                %161 = sbr.rel target = $region38
              $region43: #{gnn_plus_forward.3} parent=35 // loop_exit
                _
            $region36: #{gnn_plus_forward.3} parent=27 // pred_fallthru
              _
          $region28: #{gnn_plus_forward.3} parent=23 // pred_fallthru
            _
          %482 = vnop
        $region24: #{gnn_plus_forward.3} parent=19 // pred_fallthru
          _
        // Predicated region
        $region73: #{gnn_plus_forward.3} parent=19 // pred_check
          %p483 = pneg %p79
        $region74: #{gnn_plus_forward.3} parent=19 // pred_check_branch
          %485 = sbr.rel (%p483) target = $region76
        $region75: #{gnn_plus_forward.3} parent=19 // pred_region
          %s486 = smul.u32 32, %s12
          %s487 = ssub.s32 299, %s486
          %p488 = scmp.lt.s32.totalorder %s487, 32
          %s489 = scalar_select %p488, %s487, 32
          %p490 = scmp.lt.s32.totalorder %s486, 298
          %s491 = scalar_select %p490, %s486, 298
          %s492 = scalar_lea.vmem %s2, %s491
          %s493 = smul.u32 32, %s12
          %s494 = ssub.s32 299, %s493
          %p495 = scmp.lt.s32.totalorder %s494, 32
          %s496 = scalar_select %p495, %s494, 32
        $region76: #{gnn_plus_forward.3} parent=19 // pred_fallthru
          _
      $region20: #{gnn_plus_forward.3} parent=5 // pred_fallthru
        _
      %p497 = scmp.le.s32.totalorder 1, %s12
      %p498 = scmp.lt.s32.totalorder %s12, 11
      %p499 = pnand %p497, %p498
      %p500 = pneg %p499
      // Predicated region
      $region77: #{gnn_plus_forward.3} parent=5 // pred_check
        _
      $region78: #{gnn_plus_forward.3} parent=5 // pred_check_branch
        %502 = sbr.rel (%p499) target = $region80
      $region79: #{gnn_plus_forward.3} parent=5 // pred_region
        %s503 = ssub.s32 %s12, 1
        %s504 = sand.u32 %s46, 1
        %s505 = sand.u32 %s46, 1
        %s506 = smul.addr %s505, 4096
        %s507 = scalar_lea.vmem [#allocation2], %s506
        // Predicated region
        $region81: #{gnn_plus_forward.3} parent=79 // pred_check
          %p508 = pneg %p59
        $region82: #{gnn_plus_forward.3} parent=79 // pred_check_branch
          %510 = sbr.rel (%p508) target = $region84
        $region83: #{gnn_plus_forward.3} parent=79 // pred_region
          _
        $region84: #{gnn_plus_forward.3} parent=79 // pred_fallthru
          _
        %p511 = pneg %p33
        %p512 = pneg %p30
        %s513 = sand.u32 %s46, 1
        %s514 = sand.u32 %s46, 1
        %s515 = smul.addr %s514, 4096
        %s516 = scalar_lea.vmem [#allocation2], %s515
        %p517 = pneg %p59
        %p518 = pneg %p56
        %s519 = smul.u32 32, %s17
        %s520 = ssub.s32 299, %s519
        %p521 = scmp.lt.s32.totalorder %s520, 32
        %s522 = scalar_select %p521, %s520, 32
        %p523 = scmp.lt.s32.totalorder %s519, 298
        %s524 = scalar_select %p523, %s519, 298
        %s525 = scalar_lea.vmem %s2, %s524
        %p526 = pneg %p85
        %p527 = pneg %p82
        %p528 = pneg %p111
        %p529 = pneg %p108
        %s530 = sand.u32 %s98, 1
        %s531 = scalar_lea.sflag [#allocation4], %s530
        %s532 = sand.u32 %s98, 1
        %s533 = smul.addr %s532, 64
        %s534 = scalar_lea.vmem [#allocation3], %s533
        %s535 = smul.u32 32, %s17
        %s536 = ssub.s32 299, %s535
        %p537 = scmp.lt.s32.totalorder %s536, 32
        %s538 = scalar_select %p537, %s536, 32
        %s539 = smul.u32 128, %s538
        %s540 = smul.u32 32, %s17
        %s541 = ssub.s32 299, %s540
        %p542 = scmp.lt.s32.totalorder %s541, 32
        %s543 = scalar_select %p542, %s541, 32
        %p544 = scmp.lt.s32.totalorder %s540, 298
        %s545 = scalar_select %p544, %s540, 298
        %s546 = scalar_lea.vmem %s2, %s545
        %s547 = smul.u32 32, %s17
        %s548 = ssub.s32 299, %s547
        %p549 = scmp.lt.s32.totalorder %s548, 32
        %s550 = scalar_select %p549, %s548, 32
        %s551 = smul.u32 32, %s17
        %s552 = ssub.s32 299, %s551
        %p553 = scmp.lt.s32.totalorder %s552, 32
        %s554 = scalar_select %p553, %s552, 32
        %s555 = smul.u32 2, %s554
        %v556 = vld [vmem:[%s0] sm:$0x3]
        %v557 = vld [vmem:[%s507] sm:$0xff]
        %v558 = vld [vmem:[%s507 + $0x8] sm:$0xff]
        %v559 = vld [vmem:[%s507 + $0x10] sm:$0xff]
        %v560 = vld [vmem:[%s507 + $0x18] sm:$0xff]
        %v561 = vld [vmem:[%s507 + $0x20] sm:$0xff]
        %v562 = vld [vmem:[%s507 + $0x28] sm:$0xff]
        %v563 = vld [vmem:[%s507 + $0x30] sm:$0xff]
        %v564 = vld [vmem:[%s507 + $0x38] sm:$0xff]
        %v565 = vld [vmem:[%s507 + $0x40] sm:$0xff]
        %v566 = vld [vmem:[%s507 + $0x48] sm:$0xff]
        %v567 = vld [vmem:[%s507 + $0x50] sm:$0xff]
        %v568 = vld [vmem:[%s507 + $0x58] sm:$0xff]
        %v569 = vld [vmem:[%s507 + $0x60] sm:$0xff]
        %v570 = vld [vmem:[%s507 + $0x68] sm:$0xff]
        %v571 = vld [vmem:[%s507 + $0x70] sm:$0xff]
        %v572 = vld [vmem:[%s507 + $0x78] sm:$0xff]
        %v573 = vld [vmem:[%s507 + $0x80] sm:$0xff]
        %v574 = vld [vmem:[%s507 + $0x88] sm:$0xff]
        %v575 = vld [vmem:[%s507 + $0x90] sm:$0xff]
        %v576 = vld [vmem:[%s507 + $0x98] sm:$0xff]
        %v577 = vld [vmem:[%s507 + $0xa0] sm:$0xff]
        %v578 = vld [vmem:[%s507 + $0xa8] sm:$0xff]
        %v579 = vld [vmem:[%s507 + $0xb0] sm:$0xff]
        %v580 = vld [vmem:[%s507 + $0xb8] sm:$0xff]
        %v581 = vld [vmem:[%s507 + $0xc0] sm:$0xff]
        %v582 = vld [vmem:[%s507 + $0xc8] sm:$0xff]
        %v583 = vld [vmem:[%s507 + $0xd0] sm:$0xff]
        %v584 = vld [vmem:[%s507 + $0xd8] sm:$0xff]
        %v585 = vld [vmem:[%s507 + $0xe0] sm:$0xff]
        %v586 = vld [vmem:[%s507 + $0xe8] sm:$0xff]
        %v587 = vld [vmem:[%s507 + $0xf0] sm:$0xff]
        %v588 = vld [vmem:[%s507 + $0xf8] sm:$0xff]
        %v589 = vld [vmem:[%s507 + $0x100] sm:$0xff]
        %v590 = vld [vmem:[%s507 + $0x108] sm:$0xff]
        %v591 = vld [vmem:[%s507 + $0x110] sm:$0xff]
        %v592 = vld [vmem:[%s507 + $0x118] sm:$0xff]
        %v593 = vld [vmem:[%s507 + $0x120] sm:$0xff]
        %v594 = vld [vmem:[%s507 + $0x128] sm:$0xff]
        %v595 = vld [vmem:[%s507 + $0x130] sm:$0xff]
        %v596 = vld [vmem:[%s507 + $0x138] sm:$0xff]
        %v597 = vld [vmem:[%s507 + $0x140] sm:$0xff]
        %v598 = vld [vmem:[%s507 + $0x148] sm:$0xff]
        %v599 = vld [vmem:[%s507 + $0x150] sm:$0xff]
        %v600 = vld [vmem:[%s507 + $0x158] sm:$0xff]
        %v601 = vld [vmem:[%s507 + $0x160] sm:$0xff]
        %v602 = vld [vmem:[%s507 + $0x168] sm:$0xff]
        %v603 = vld [vmem:[%s507 + $0x170] sm:$0xff]
        %v604 = vld [vmem:[%s507 + $0x178] sm:$0xff]
        %v605 = vld [vmem:[%s507 + $0x180] sm:$0xff]
        %v606 = vld [vmem:[%s507 + $0x188] sm:$0xff]
        %v607 = vld [vmem:[%s507 + $0x190] sm:$0xff]
        %v608 = vld [vmem:[%s507 + $0x198] sm:$0xff]
        %v609 = vld [vmem:[%s507 + $0x1a0] sm:$0xff]
        %v610 = vld [vmem:[%s507 + $0x1a8] sm:$0xff]
        %v611 = vld [vmem:[%s507 + $0x1b0] sm:$0xff]
        %v612 = vld [vmem:[%s507 + $0x1b8] sm:$0xff]
        %v613 = vld [vmem:[%s507 + $0x1c0] sm:$0xff]
        %v614 = vld [vmem:[%s507 + $0x1c8] sm:$0xff]
        %v615 = vld [vmem:[%s507 + $0x1d0] sm:$0xff]
        %v616 = vld [vmem:[%s507 + $0x1d8] sm:$0xff]
        %v617 = vld [vmem:[%s507 + $0x1e0] sm:$0xff]
        %v618 = vld [vmem:[%s507 + $0x1e8] sm:$0xff]
        %v619 = vld [vmem:[%s507 + $0x1f0] sm:$0xff]
        %v620 = vld [vmem:[%s507 + $0x1f8] sm:$0xff]
        %v621 = vld [vmem:[%s507 + $0x200] sm:$0xff]
        %v622 = vld [vmem:[%s507 + $0x208] sm:$0xff]
        %v623 = vld [vmem:[%s507 + $0x210] sm:$0xff]
        %v624 = vld [vmem:[%s507 + $0x218] sm:$0xff]
        %v625 = vld [vmem:[%s507 + $0x220] sm:$0xff]
        %v626 = vld [vmem:[%s507 + $0x228] sm:$0xff]
        %v627 = vld [vmem:[%s507 + $0x230] sm:$0xff]
        %v628 = vld [vmem:[%s507 + $0x238] sm:$0xff]
        %v629 = vld [vmem:[%s507 + $0x240] sm:$0xff]
        %v630 = vld [vmem:[%s507 + $0x248] sm:$0xff]
        %v631 = vld [vmem:[%s507 + $0x250] sm:$0xff]
        %v632 = vld [vmem:[%s507 + $0x258] sm:$0xff]
        %v633 = vld [vmem:[%s507 + $0x260] sm:$0xff]
        %v634 = vld [vmem:[%s507 + $0x268] sm:$0xff]
        %v635 = vld [vmem:[%s507 + $0x270] sm:$0xff]
        %v636 = vld [vmem:[%s507 + $0x278] sm:$0xff]
        %v637 = vld [vmem:[%s507 + $0x280] sm:$0xff]
        %v638 = vld [vmem:[%s507 + $0x288] sm:$0xff]
        %v639 = vld [vmem:[%s507 + $0x290] sm:$0xff]
        %v640 = vld [vmem:[%s507 + $0x298] sm:$0xff]
        %v641 = vld [vmem:[%s507 + $0x2a0] sm:$0xff]
        %v642 = vld [vmem:[%s507 + $0x2a8] sm:$0xff]
        %v643 = vld [vmem:[%s507 + $0x2b0] sm:$0xff]
        %v644 = vld [vmem:[%s507 + $0x2b8] sm:$0xff]
        %v645 = vld [vmem:[%s507 + $0x2c0] sm:$0xff]
        %v646 = vld [vmem:[%s507 + $0x2c8] sm:$0xff]
        %v647 = vld [vmem:[%s507 + $0x2d0] sm:$0xff]
        %v648 = vld [vmem:[%s507 + $0x2d8] sm:$0xff]
        %v649 = vld [vmem:[%s507 + $0x2e0] sm:$0xff]
        %v650 = vld [vmem:[%s507 + $0x2e8] sm:$0xff]
        %v651 = vld [vmem:[%s507 + $0x2f0] sm:$0xff]
        %v652 = vld [vmem:[%s507 + $0x2f8] sm:$0xff]
        %v653 = vld [vmem:[%s507 + $0x300] sm:$0xff]
        %v654 = vld [vmem:[%s507 + $0x308] sm:$0xff]
        %v655 = vld [vmem:[%s507 + $0x310] sm:$0xff]
        %v656 = vld [vmem:[%s507 + $0x318] sm:$0xff]
        %v657 = vld [vmem:[%s507 + $0x320] sm:$0xff]
        %v658 = vld [vmem:[%s507 + $0x328] sm:$0xff]
        %v659 = vld [vmem:[%s507 + $0x330] sm:$0xff]
        %v660 = vld [vmem:[%s507 + $0x338] sm:$0xff]
        %v661 = vld [vmem:[%s507 + $0x340] sm:$0xff]
        %v662 = vld [vmem:[%s507 + $0x348] sm:$0xff]
        %v663 = vld [vmem:[%s507 + $0x350] sm:$0xff]
        %v664 = vld [vmem:[%s507 + $0x358] sm:$0xff]
        %v665 = vld [vmem:[%s507 + $0x360] sm:$0xff]
        %v666 = vld [vmem:[%s507 + $0x368] sm:$0xff]
        %v667 = vld [vmem:[%s507 + $0x370] sm:$0xff]
        %v668 = vld [vmem:[%s507 + $0x378] sm:$0xff]
        %v669 = vld [vmem:[%s507 + $0x380] sm:$0xff]
        %v670 = vld [vmem:[%s507 + $0x388] sm:$0xff]
        %v671 = vld [vmem:[%s507 + $0x390] sm:$0xff]
        %v672 = vld [vmem:[%s507 + $0x398] sm:$0xff]
        %v673 = vld [vmem:[%s507 + $0x3a0] sm:$0xff]
        %v674 = vld [vmem:[%s507 + $0x3a8] sm:$0xff]
        %v675 = vld [vmem:[%s507 + $0x3b0] sm:$0xff]
        %v676 = vld [vmem:[%s507 + $0x3b8] sm:$0xff]
        %v677 = vld [vmem:[%s507 + $0x3c0] sm:$0xff]
        %v678 = vld [vmem:[%s507 + $0x3c8] sm:$0xff]
        %v679 = vld [vmem:[%s507 + $0x3d0] sm:$0xff]
        %v680 = vld [vmem:[%s507 + $0x3d8] sm:$0xff]
        %v681 = vld [vmem:[%s507 + $0x3e0] sm:$0xff]
        %v682 = vld [vmem:[%s507 + $0x3e8] sm:$0xff]
        %v683 = vld [vmem:[%s507 + $0x3f0] sm:$0xff]
        %v684 = vld [vmem:[%s507 + $0x3f8] sm:$0xff]
        %v685 = vld [vmem:[%s507 + $0x400] sm:$0xff]
        %v686 = vld [vmem:[%s507 + $0x408] sm:$0xff]
        %v687 = vld [vmem:[%s507 + $0x410] sm:$0xff]
        %v688 = vld [vmem:[%s507 + $0x418] sm:$0xff]
        %v689 = vld [vmem:[%s507 + $0x420] sm:$0xff]
        %v690 = vld [vmem:[%s507 + $0x428] sm:$0xff]
        %v691 = vld [vmem:[%s507 + $0x430] sm:$0xff]
        %v692 = vld [vmem:[%s507 + $0x438] sm:$0xff]
        %v693 = vld [vmem:[%s507 + $0x440] sm:$0xff]
        %v694 = vld [vmem:[%s507 + $0x448] sm:$0xff]
        %v695 = vld [vmem:[%s507 + $0x450] sm:$0xff]
        %v696 = vld [vmem:[%s507 + $0x458] sm:$0xff]
        %v697 = vld [vmem:[%s507 + $0x460] sm:$0xff]
        %v698 = vld [vmem:[%s507 + $0x468] sm:$0xff]
        %v699 = vld [vmem:[%s507 + $0x470] sm:$0xff]
        %v700 = vld [vmem:[%s507 + $0x478] sm:$0xff]
        %v701 = vld [vmem:[%s507 + $0x480] sm:$0xff]
        %v702 = vld [vmem:[%s507 + $0x488] sm:$0xff]
        %v703 = vld [vmem:[%s507 + $0x490] sm:$0xff]
        %v704 = vld [vmem:[%s507 + $0x498] sm:$0xff]
        %v705 = vld [vmem:[%s507 + $0x4a0] sm:$0xff]
        %v706 = vld [vmem:[%s507 + $0x4a8] sm:$0xff]
        %v707 = vld [vmem:[%s507 + $0x4b0] sm:$0xff]
        %v708 = vld [vmem:[%s507 + $0x4b8] sm:$0xff]
        %v709 = vld [vmem:[%s507 + $0x4c0] sm:$0xff]
        %v710 = vld [vmem:[%s507 + $0x4c8] sm:$0xff]
        %v711 = vld [vmem:[%s507 + $0x4d0] sm:$0xff]
        %v712 = vld [vmem:[%s507 + $0x4d8] sm:$0xff]
        %v713 = vld [vmem:[%s507 + $0x4e0] sm:$0xff]
        %v714 = vld [vmem:[%s507 + $0x4e8] sm:$0xff]
        %v715 = vld [vmem:[%s507 + $0x4f0] sm:$0xff]
        %v716 = vld [vmem:[%s507 + $0x4f8] sm:$0xff]
        %v717 = vld [vmem:[%s507 + $0x500] sm:$0xff]
        %v718 = vld [vmem:[%s507 + $0x508] sm:$0xff]
        %v719 = vld [vmem:[%s507 + $0x510] sm:$0xff]
        %v720 = vld [vmem:[%s507 + $0x518] sm:$0xff]
        %v721 = vld [vmem:[%s507 + $0x520] sm:$0xff]
        %v722 = vld [vmem:[%s507 + $0x528] sm:$0xff]
        %v723 = vld [vmem:[%s507 + $0x530] sm:$0xff]
        %v724 = vld [vmem:[%s507 + $0x538] sm:$0xff]
        %v725 = vld [vmem:[%s507 + $0x540] sm:$0xff]
        %v726 = vld [vmem:[%s507 + $0x548] sm:$0xff]
        %v727 = vld [vmem:[%s507 + $0x550] sm:$0xff]
        %v728 = vld [vmem:[%s507 + $0x558] sm:$0xff]
        %v729 = vld [vmem:[%s507 + $0x560] sm:$0xff]
        %v730 = vld [vmem:[%s507 + $0x568] sm:$0xff]
        %v731 = vld [vmem:[%s507 + $0x570] sm:$0xff]
        %v732 = vld [vmem:[%s507 + $0x578] sm:$0xff]
        %v733 = vld [vmem:[%s507 + $0x580] sm:$0xff]
        %v734 = vld [vmem:[%s507 + $0x588] sm:$0xff]
        %v735 = vld [vmem:[%s507 + $0x590] sm:$0xff]
        %v736 = vld [vmem:[%s507 + $0x598] sm:$0xff]
        %v737 = vld [vmem:[%s507 + $0x5a0] sm:$0xff]
        %v738 = vld [vmem:[%s507 + $0x5a8] sm:$0xff]
        %v739 = vld [vmem:[%s507 + $0x5b0] sm:$0xff]
        %v740 = vld [vmem:[%s507 + $0x5b8] sm:$0xff]
        %v741 = vld [vmem:[%s507 + $0x5c0] sm:$0xff]
        %v742 = vld [vmem:[%s507 + $0x5c8] sm:$0xff]
        %v743 = vld [vmem:[%s507 + $0x5d0] sm:$0xff]
        %v744 = vld [vmem:[%s507 + $0x5d8] sm:$0xff]
        %v745 = vld [vmem:[%s507 + $0x5e0] sm:$0xff]
        %v746 = vld [vmem:[%s507 + $0x5e8] sm:$0xff]
        %v747 = vld [vmem:[%s507 + $0x5f0] sm:$0xff]
        %v748 = vld [vmem:[%s507 + $0x5f8] sm:$0xff]
        %v749 = vld [vmem:[%s507 + $0x600] sm:$0xff]
        %v750 = vld [vmem:[%s507 + $0x608] sm:$0xff]
        %v751 = vld [vmem:[%s507 + $0x610] sm:$0xff]
        %v752 = vld [vmem:[%s507 + $0x618] sm:$0xff]
        %v753 = vld [vmem:[%s507 + $0x620] sm:$0xff]
        %v754 = vld [vmem:[%s507 + $0x628] sm:$0xff]
        %v755 = vld [vmem:[%s507 + $0x630] sm:$0xff]
        %v756 = vld [vmem:[%s507 + $0x638] sm:$0xff]
        %v757 = vld [vmem:[%s507 + $0x640] sm:$0xff]
        %v758 = vld [vmem:[%s507 + $0x648] sm:$0xff]
        %v759 = vld [vmem:[%s507 + $0x650] sm:$0xff]
        %v760 = vld [vmem:[%s507 + $0x658] sm:$0xff]
        %v761 = vld [vmem:[%s507 + $0x660] sm:$0xff]
        %v762 = vld [vmem:[%s507 + $0x668] sm:$0xff]
        %v763 = vld [vmem:[%s507 + $0x670] sm:$0xff]
        %v764 = vld [vmem:[%s507 + $0x678] sm:$0xff]
        %v765 = vld [vmem:[%s507 + $0x680] sm:$0xff]
        %v766 = vld [vmem:[%s507 + $0x688] sm:$0xff]
        %v767 = vld [vmem:[%s507 + $0x690] sm:$0xff]
        %v768 = vld [vmem:[%s507 + $0x698] sm:$0xff]
        %v769 = vld [vmem:[%s507 + $0x6a0] sm:$0xff]
        %v770 = vld [vmem:[%s507 + $0x6a8] sm:$0xff]
        %v771 = vld [vmem:[%s507 + $0x6b0] sm:$0xff]
        %v772 = vld [vmem:[%s507 + $0x6b8] sm:$0xff]
        %v773 = vld [vmem:[%s507 + $0x6c0] sm:$0xff]
        %v774 = vld [vmem:[%s507 + $0x6c8] sm:$0xff]
        %v775 = vld [vmem:[%s507 + $0x6d0] sm:$0xff]
        %v776 = vld [vmem:[%s507 + $0x6d8] sm:$0xff]
        %v777 = vld [vmem:[%s507 + $0x6e0] sm:$0xff]
        %v778 = vld [vmem:[%s507 + $0x6e8] sm:$0xff]
        %v779 = vld [vmem:[%s507 + $0x6f0] sm:$0xff]
        %v780 = vld [vmem:[%s507 + $0x6f8] sm:$0xff]
        %v781 = vld [vmem:[%s507 + $0x700] sm:$0xff]
        %v782 = vld [vmem:[%s507 + $0x708] sm:$0xff]
        %v783 = vld [vmem:[%s507 + $0x710] sm:$0xff]
        %v784 = vld [vmem:[%s507 + $0x718] sm:$0xff]
        %v785 = vld [vmem:[%s507 + $0x720] sm:$0xff]
        %v786 = vld [vmem:[%s507 + $0x728] sm:$0xff]
        %v787 = vld [vmem:[%s507 + $0x730] sm:$0xff]
        %v788 = vld [vmem:[%s507 + $0x738] sm:$0xff]
        %v789 = vld [vmem:[%s507 + $0x740] sm:$0xff]
        %v790 = vld [vmem:[%s507 + $0x748] sm:$0xff]
        %v791 = vld [vmem:[%s507 + $0x750] sm:$0xff]
        %v792 = vld [vmem:[%s507 + $0x758] sm:$0xff]
        %v793 = vld [vmem:[%s507 + $0x760] sm:$0xff]
        %v794 = vld [vmem:[%s507 + $0x768] sm:$0xff]
        %v795 = vld [vmem:[%s507 + $0x770] sm:$0xff]
        %v796 = vld [vmem:[%s507 + $0x778] sm:$0xff]
        %v797 = vld [vmem:[%s507 + $0x780] sm:$0xff]
        %v798 = vld [vmem:[%s507 + $0x788] sm:$0xff]
        %v799 = vld [vmem:[%s507 + $0x790] sm:$0xff]
        %v800 = vld [vmem:[%s507 + $0x798] sm:$0xff]
        %v801 = vld [vmem:[%s507 + $0x7a0] sm:$0xff]
        %v802 = vld [vmem:[%s507 + $0x7a8] sm:$0xff]
        %v803 = vld [vmem:[%s507 + $0x7b0] sm:$0xff]
        %v804 = vld [vmem:[%s507 + $0x7b8] sm:$0xff]
        %v805 = vld [vmem:[%s507 + $0x7c0] sm:$0xff]
        %v806 = vld [vmem:[%s507 + $0x7c8] sm:$0xff]
        %v807 = vld [vmem:[%s507 + $0x7d0] sm:$0xff]
        %v808 = vld [vmem:[%s507 + $0x7d8] sm:$0xff]
        %v809 = vld [vmem:[%s507 + $0x7e0] sm:$0xff]
        %v810 = vld [vmem:[%s507 + $0x7e8] sm:$0xff]
        %v811 = vld [vmem:[%s507 + $0x7f0] sm:$0xff]
        %v812 = vld [vmem:[%s507 + $0x7f8] sm:$0xff]
        %v813 = vld [vmem:[%s507 + $0x800] sm:$0xff]
        %v814 = vld [vmem:[%s507 + $0x808] sm:$0xff]
        %v815 = vld [vmem:[%s507 + $0x810] sm:$0xff]
        %v816 = vld [vmem:[%s507 + $0x818] sm:$0xff]
        %v817 = vld [vmem:[%s507 + $0x820] sm:$0xff]
        %v818 = vld [vmem:[%s507 + $0x828] sm:$0xff]
        %v819 = vld [vmem:[%s507 + $0x830] sm:$0xff]
        %v820 = vld [vmem:[%s507 + $0x838] sm:$0xff]
        %v821 = vld [vmem:[%s507 + $0x840] sm:$0xff]
        %v822 = vld [vmem:[%s507 + $0x848] sm:$0xff]
        %v823 = vld [vmem:[%s507 + $0x850] sm:$0xff]
        %v824 = vld [vmem:[%s507 + $0x858] sm:$0xff]
        %v825 = vld [vmem:[%s507 + $0x860] sm:$0xff]
        %v826 = vld [vmem:[%s507 + $0x868] sm:$0xff]
        %v827 = vld [vmem:[%s507 + $0x870] sm:$0xff]
        %v828 = vld [vmem:[%s507 + $0x878] sm:$0xff]
        %v829 = vld [vmem:[%s507 + $0x880] sm:$0xff]
        %v830 = vld [vmem:[%s507 + $0x888] sm:$0xff]
        %v831 = vld [vmem:[%s507 + $0x890] sm:$0xff]
        %v832 = vld [vmem:[%s507 + $0x898] sm:$0xff]
        %v833 = vld [vmem:[%s507 + $0x8a0] sm:$0xff]
        %v834 = vld [vmem:[%s507 + $0x8a8] sm:$0xff]
        %v835 = vld [vmem:[%s507 + $0x8b0] sm:$0xff]
        %v836 = vld [vmem:[%s507 + $0x8b8] sm:$0xff]
        %v837 = vld [vmem:[%s507 + $0x8c0] sm:$0xff]
        %v838 = vld [vmem:[%s507 + $0x8c8] sm:$0xff]
        %v839 = vld [vmem:[%s507 + $0x8d0] sm:$0xff]
        %v840 = vld [vmem:[%s507 + $0x8d8] sm:$0xff]
        %v841 = vld [vmem:[%s507 + $0x8e0] sm:$0xff]
        %v842 = vld [vmem:[%s507 + $0x8e8] sm:$0xff]
        %v843 = vld [vmem:[%s507 + $0x8f0] sm:$0xff]
        %v844 = vld [vmem:[%s507 + $0x8f8] sm:$0xff]
        %v845 = vld [vmem:[%s507 + $0x900] sm:$0xff]
        %v846 = vld [vmem:[%s507 + $0x908] sm:$0xff]
        %v847 = vld [vmem:[%s507 + $0x910] sm:$0xff]
        %v848 = vld [vmem:[%s507 + $0x918] sm:$0xff]
        %v849 = vld [vmem:[%s507 + $0x920] sm:$0xff]
        %v850 = vld [vmem:[%s507 + $0x928] sm:$0xff]
        %v851 = vld [vmem:[%s507 + $0x930] sm:$0xff]
        %v852 = vld [vmem:[%s507 + $0x938] sm:$0xff]
        %v853 = vld [vmem:[%s507 + $0x940] sm:$0xff]
        %v854 = vld [vmem:[%s507 + $0x948] sm:$0xff]
        %v855 = vld [vmem:[%s507 + $0x950] sm:$0xff]
        %v856 = vld [vmem:[%s507 + $0x958] sm:$0xff]
        %v857 = vld [vmem:[%s507 + $0x960] sm:$0xff]
        %v858 = vld [vmem:[%s507 + $0x968] sm:$0xff]
        %v859 = vld [vmem:[%s507 + $0x970] sm:$0xff]
        %v860 = vld [vmem:[%s507 + $0x978] sm:$0xff]
        %v861 = vld [vmem:[%s507 + $0x980] sm:$0xff]
        %v862 = vld [vmem:[%s507 + $0x988] sm:$0xff]
        %v863 = vld [vmem:[%s507 + $0x990] sm:$0xff]
        %v864 = vld [vmem:[%s507 + $0x998] sm:$0xff]
        %v865 = vld [vmem:[%s507 + $0x9a0] sm:$0xff]
        %v866 = vld [vmem:[%s507 + $0x9a8] sm:$0xff]
        %v867 = vld [vmem:[%s507 + $0x9b0] sm:$0xff]
        %v868 = vld [vmem:[%s507 + $0x9b8] sm:$0xff]
        %v869 = vld [vmem:[%s507 + $0x9c0] sm:$0xff]
        %v870 = vld [vmem:[%s507 + $0x9c8] sm:$0xff]
        %v871 = vld [vmem:[%s507 + $0x9d0] sm:$0xff]
        %v872 = vld [vmem:[%s507 + $0x9d8] sm:$0xff]
        %v873 = vld [vmem:[%s507 + $0x9e0] sm:$0xff]
        %v874 = vld [vmem:[%s507 + $0x9e8] sm:$0xff]
        %v875 = vld [vmem:[%s507 + $0x9f0] sm:$0xff]
        %v876 = vld [vmem:[%s507 + $0x9f8] sm:$0xff]
        %v877 = vld [vmem:[%s507 + $0xa00] sm:$0xff]
        %v878 = vld [vmem:[%s507 + $0xa08] sm:$0xff]
        %v879 = vld [vmem:[%s507 + $0xa10] sm:$0xff]
        %v880 = vld [vmem:[%s507 + $0xa18] sm:$0xff]
        %v881 = vld [vmem:[%s507 + $0xa20] sm:$0xff]
        %v882 = vld [vmem:[%s507 + $0xa28] sm:$0xff]
        %v883 = vld [vmem:[%s507 + $0xa30] sm:$0xff]
        %v884 = vld [vmem:[%s507 + $0xa38] sm:$0xff]
        %v885 = vld [vmem:[%s507 + $0xa40] sm:$0xff]
        %v886 = vld [vmem:[%s507 + $0xa48] sm:$0xff]
        %v887 = vld [vmem:[%s507 + $0xa50] sm:$0xff]
        %v888 = vld [vmem:[%s507 + $0xa58] sm:$0xff]
        %v889 = vld [vmem:[%s507 + $0xa60] sm:$0xff]
        %v890 = vld [vmem:[%s507 + $0xa68] sm:$0xff]
        %v891 = vld [vmem:[%s507 + $0xa70] sm:$0xff]
        %v892 = vld [vmem:[%s507 + $0xa78] sm:$0xff]
        %v893 = vld [vmem:[%s507 + $0xa80] sm:$0xff]
        %v894 = vld [vmem:[%s507 + $0xa88] sm:$0xff]
        %v895 = vld [vmem:[%s507 + $0xa90] sm:$0xff]
        %v896 = vld [vmem:[%s507 + $0xa98] sm:$0xff]
        %v897 = vld [vmem:[%s507 + $0xaa0] sm:$0xff]
        %v898 = vld [vmem:[%s507 + $0xaa8] sm:$0xff]
        %v899 = vld [vmem:[%s507 + $0xab0] sm:$0xff]
        %v900 = vld [vmem:[%s507 + $0xab8] sm:$0xff]
        %v901 = vld [vmem:[%s507 + $0xac0] sm:$0xff]
        %v902 = vld [vmem:[%s507 + $0xac8] sm:$0xff]
        %v903 = vld [vmem:[%s507 + $0xad0] sm:$0xff]
        %v904 = vld [vmem:[%s507 + $0xad8] sm:$0xff]
        %v905 = vld [vmem:[%s507 + $0xae0] sm:$0xff]
        %v906 = vld [vmem:[%s507 + $0xae8] sm:$0xff]
        %v907 = vld [vmem:[%s507 + $0xaf0] sm:$0xff]
        %v908 = vld [vmem:[%s507 + $0xaf8] sm:$0xff]
        %v909 = vld [vmem:[%s507 + $0xb00] sm:$0xff]
        %v910 = vld [vmem:[%s507 + $0xb08] sm:$0xff]
        %v911 = vld [vmem:[%s507 + $0xb10] sm:$0xff]
        %v912 = vld [vmem:[%s507 + $0xb18] sm:$0xff]
        %v913 = vld [vmem:[%s507 + $0xb20] sm:$0xff]
        %v914 = vld [vmem:[%s507 + $0xb28] sm:$0xff]
        %v915 = vld [vmem:[%s507 + $0xb30] sm:$0xff]
        %v916 = vld [vmem:[%s507 + $0xb38] sm:$0xff]
        %v917 = vld [vmem:[%s507 + $0xb40] sm:$0xff]
        %v918 = vld [vmem:[%s507 + $0xb48] sm:$0xff]
        %v919 = vld [vmem:[%s507 + $0xb50] sm:$0xff]
        %v920 = vld [vmem:[%s507 + $0xb58] sm:$0xff]
        %v921 = vld [vmem:[%s507 + $0xb60] sm:$0xff]
        %v922 = vld [vmem:[%s507 + $0xb68] sm:$0xff]
        %v923 = vld [vmem:[%s507 + $0xb70] sm:$0xff]
        %v924 = vld [vmem:[%s507 + $0xb78] sm:$0xff]
        %v925 = vld [vmem:[%s507 + $0xb80] sm:$0xff]
        %v926 = vld [vmem:[%s507 + $0xb88] sm:$0xff]
        %v927 = vld [vmem:[%s507 + $0xb90] sm:$0xff]
        %v928 = vld [vmem:[%s507 + $0xb98] sm:$0xff]
        %v929 = vld [vmem:[%s507 + $0xba0] sm:$0xff]
        %v930 = vld [vmem:[%s507 + $0xba8] sm:$0xff]
        %v931 = vld [vmem:[%s507 + $0xbb0] sm:$0xff]
        %v932 = vld [vmem:[%s507 + $0xbb8] sm:$0xff]
        %v933 = vld [vmem:[%s507 + $0xbc0] sm:$0xff]
        %v934 = vld [vmem:[%s507 + $0xbc8] sm:$0xff]
        %v935 = vld [vmem:[%s507 + $0xbd0] sm:$0xff]
        %v936 = vld [vmem:[%s507 + $0xbd8] sm:$0xff]
        %v937 = vld [vmem:[%s507 + $0xbe0] sm:$0xff]
        %v938 = vld [vmem:[%s507 + $0xbe8] sm:$0xff]
        %v939 = vld [vmem:[%s507 + $0xbf0] sm:$0xff]
        %v940 = vld [vmem:[%s507 + $0xbf8] sm:$0xff]
        %v941 = vld [vmem:[%s507 + $0xc00] sm:$0xff]
        %v942 = vld [vmem:[%s507 + $0xc08] sm:$0xff]
        %v943 = vld [vmem:[%s507 + $0xc10] sm:$0xff]
        %v944 = vld [vmem:[%s507 + $0xc18] sm:$0xff]
        %v945 = vld [vmem:[%s507 + $0xc20] sm:$0xff]
        %v946 = vld [vmem:[%s507 + $0xc28] sm:$0xff]
        %v947 = vld [vmem:[%s507 + $0xc30] sm:$0xff]
        %v948 = vld [vmem:[%s507 + $0xc38] sm:$0xff]
        %v949 = vld [vmem:[%s507 + $0xc40] sm:$0xff]
        %v950 = vld [vmem:[%s507 + $0xc48] sm:$0xff]
        %v951 = vld [vmem:[%s507 + $0xc50] sm:$0xff]
        %v952 = vld [vmem:[%s507 + $0xc58] sm:$0xff]
        %v953 = vld [vmem:[%s507 + $0xc60] sm:$0xff]
        %v954 = vld [vmem:[%s507 + $0xc68] sm:$0xff]
        %v955 = vld [vmem:[%s507 + $0xc70] sm:$0xff]
        %v956 = vld [vmem:[%s507 + $0xc78] sm:$0xff]
        %v957 = vld [vmem:[%s507 + $0xc80] sm:$0xff]
        %v958 = vld [vmem:[%s507 + $0xc88] sm:$0xff]
        %v959 = vld [vmem:[%s507 + $0xc90] sm:$0xff]
        %v960 = vld [vmem:[%s507 + $0xc98] sm:$0xff]
        %v961 = vld [vmem:[%s507 + $0xca0] sm:$0xff]
        %v962 = vld [vmem:[%s507 + $0xca8] sm:$0xff]
        %v963 = vld [vmem:[%s507 + $0xcb0] sm:$0xff]
        %v964 = vld [vmem:[%s507 + $0xcb8] sm:$0xff]
        %v965 = vld [vmem:[%s507 + $0xcc0] sm:$0xff]
        %v966 = vld [vmem:[%s507 + $0xcc8] sm:$0xff]
        %v967 = vld [vmem:[%s507 + $0xcd0] sm:$0xff]
        %v968 = vld [vmem:[%s507 + $0xcd8] sm:$0xff]
        %v969 = vld [vmem:[%s507 + $0xce0] sm:$0xff]
        %v970 = vld [vmem:[%s507 + $0xce8] sm:$0xff]
        %v971 = vld [vmem:[%s507 + $0xcf0] sm:$0xff]
        %v972 = vld [vmem:[%s507 + $0xcf8] sm:$0xff]
        %v973 = vld [vmem:[%s507 + $0xd00] sm:$0xff]
        %v974 = vld [vmem:[%s507 + $0xd08] sm:$0xff]
        %v975 = vld [vmem:[%s507 + $0xd10] sm:$0xff]
        %v976 = vld [vmem:[%s507 + $0xd18] sm:$0xff]
        %v977 = vld [vmem:[%s507 + $0xd20] sm:$0xff]
        %v978 = vld [vmem:[%s507 + $0xd28] sm:$0xff]
        %v979 = vld [vmem:[%s507 + $0xd30] sm:$0xff]
        %v980 = vld [vmem:[%s507 + $0xd38] sm:$0xff]
        %v981 = vld [vmem:[%s507 + $0xd40] sm:$0xff]
        %v982 = vld [vmem:[%s507 + $0xd48] sm:$0xff]
        %v983 = vld [vmem:[%s507 + $0xd50] sm:$0xff]
        %v984 = vld [vmem:[%s507 + $0xd58] sm:$0xff]
        %v985 = vld [vmem:[%s507 + $0xd60] sm:$0xff]
        %v986 = vld [vmem:[%s507 + $0xd68] sm:$0xff]
        %v987 = vld [vmem:[%s507 + $0xd70] sm:$0xff]
        %v988 = vld [vmem:[%s507 + $0xd78] sm:$0xff]
        %v989 = vld [vmem:[%s507 + $0xd80] sm:$0xff]
        %v990 = vld [vmem:[%s507 + $0xd88] sm:$0xff]
        %v991 = vld [vmem:[%s507 + $0xd90] sm:$0xff]
        %v992 = vld [vmem:[%s507 + $0xd98] sm:$0xff]
        %v993 = vld [vmem:[%s507 + $0xda0] sm:$0xff]
        %v994 = vld [vmem:[%s507 + $0xda8] sm:$0xff]
        %v995 = vld [vmem:[%s507 + $0xdb0] sm:$0xff]
        %v996 = vld [vmem:[%s507 + $0xdb8] sm:$0xff]
        %v997 = vld [vmem:[%s507 + $0xdc0] sm:$0xff]
        %v998 = vld [vmem:[%s507 + $0xdc8] sm:$0xff]
        %v999 = vld [vmem:[%s507 + $0xdd0] sm:$0xff]
        %v1000 = vld [vmem:[%s507 + $0xdd8] sm:$0xff]
        %v1001 = vld [vmem:[%s507 + $0xde0] sm:$0xff]
        %v1002 = vld [vmem:[%s507 + $0xde8] sm:$0xff]
        %v1003 = vld [vmem:[%s507 + $0xdf0] sm:$0xff]
        %v1004 = vld [vmem:[%s507 + $0xdf8] sm:$0xff]
        %v1005 = vld [vmem:[%s507 + $0xe00] sm:$0xff]
        %v1006 = vld [vmem:[%s507 + $0xe08] sm:$0xff]
        %v1007 = vld [vmem:[%s507 + $0xe10] sm:$0xff]
        %v1008 = vld [vmem:[%s507 + $0xe18] sm:$0xff]
        %v1009 = vld [vmem:[%s507 + $0xe20] sm:$0xff]
        %v1010 = vld [vmem:[%s507 + $0xe28] sm:$0xff]
        %v1011 = vld [vmem:[%s507 + $0xe30] sm:$0xff]
        %v1012 = vld [vmem:[%s507 + $0xe38] sm:$0xff]
        %v1013 = vld [vmem:[%s507 + $0xe40] sm:$0xff]
        %v1014 = vld [vmem:[%s507 + $0xe48] sm:$0xff]
        %v1015 = vld [vmem:[%s507 + $0xe50] sm:$0xff]
        %v1016 = vld [vmem:[%s507 + $0xe58] sm:$0xff]
        %v1017 = vld [vmem:[%s507 + $0xe60] sm:$0xff]
        %v1018 = vld [vmem:[%s507 + $0xe68] sm:$0xff]
        %v1019 = vld [vmem:[%s507 + $0xe70] sm:$0xff]
        %v1020 = vld [vmem:[%s507 + $0xe78] sm:$0xff]
        %v1021 = vld [vmem:[%s507 + $0xe80] sm:$0xff]
        %v1022 = vld [vmem:[%s507 + $0xe88] sm:$0xff]
        %v1023 = vld [vmem:[%s507 + $0xe90] sm:$0xff]
        %v1024 = vld [vmem:[%s507 + $0xe98] sm:$0xff]
        %v1025 = vld [vmem:[%s507 + $0xea0] sm:$0xff]
        %v1026 = vld [vmem:[%s507 + $0xea8] sm:$0xff]
        %v1027 = vld [vmem:[%s507 + $0xeb0] sm:$0xff]
        %v1028 = vld [vmem:[%s507 + $0xeb8] sm:$0xff]
        %v1029 = vld [vmem:[%s507 + $0xec0] sm:$0xff]
        %v1030 = vld [vmem:[%s507 + $0xec8] sm:$0xff]
        %v1031 = vld [vmem:[%s507 + $0xed0] sm:$0xff]
        %v1032 = vld [vmem:[%s507 + $0xed8] sm:$0xff]
        %v1033 = vld [vmem:[%s507 + $0xee0] sm:$0xff]
        %v1034 = vld [vmem:[%s507 + $0xee8] sm:$0xff]
        %v1035 = vld [vmem:[%s507 + $0xef0] sm:$0xff]
        %v1036 = vld [vmem:[%s507 + $0xef8] sm:$0xff]
        %v1037 = vld [vmem:[%s507 + $0xf00] sm:$0xff]
        %v1038 = vld [vmem:[%s507 + $0xf08] sm:$0xff]
        %v1039 = vld [vmem:[%s507 + $0xf10] sm:$0xff]
        %v1040 = vld [vmem:[%s507 + $0xf18] sm:$0xff]
        %v1041 = vld [vmem:[%s507 + $0xf20] sm:$0xff]
        %v1042 = vld [vmem:[%s507 + $0xf28] sm:$0xff]
        %v1043 = vld [vmem:[%s507 + $0xf30] sm:$0xff]
        %v1044 = vld [vmem:[%s507 + $0xf38] sm:$0xff]
        %v1045 = vld [vmem:[%s507 + $0xf40] sm:$0xff]
        %v1046 = vld [vmem:[%s507 + $0xf48] sm:$0xff]
        %v1047 = vld [vmem:[%s507 + $0xf50] sm:$0xff]
        %v1048 = vld [vmem:[%s507 + $0xf58] sm:$0xff]
        %v1049 = vld [vmem:[%s507 + $0xf60] sm:$0xff]
        %v1050 = vld [vmem:[%s507 + $0xf68] sm:$0xff]
        %v1051 = vld [vmem:[%s507 + $0xf70] sm:$0xff]
        %v1052 = vld [vmem:[%s507 + $0xf78] sm:$0xff]
        %v1053 = vld [vmem:[%s507 + $0xf80] sm:$0xff]
        %v1054 = vld [vmem:[%s507 + $0xf88] sm:$0xff]
        %v1055 = vld [vmem:[%s507 + $0xf90] sm:$0xff]
        %v1056 = vld [vmem:[%s507 + $0xf98] sm:$0xff]
        %v1057 = vld [vmem:[%s507 + $0xfa0] sm:$0xff]
        %v1058 = vld [vmem:[%s507 + $0xfa8] sm:$0xff]
        %v1059 = vld [vmem:[%s507 + $0xfb0] sm:$0xff]
        %v1060 = vld [vmem:[%s507 + $0xfb8] sm:$0xff]
        %v1061 = vld [vmem:[%s507 + $0xfc0] sm:$0xff]
        %v1062 = vld [vmem:[%s507 + $0xfc8] sm:$0xff]
        %v1063 = vld [vmem:[%s507 + $0xfd0] sm:$0xff]
        %v1064 = vld [vmem:[%s507 + $0xfd8] sm:$0xff]
        %v1065 = vld [vmem:[%s507 + $0xfe0] sm:$0xff]
        %v1066 = vld [vmem:[%s507 + $0xfe8] sm:$0xff]
        %v1067 = vld [vmem:[%s507 + $0xff0] sm:$0xff]
        %v1068 = vld [vmem:[%s507 + $0xff8] sm:$0xff]
        %v1069 = vld [vmem:[%s546] sm:$0xff]
        %v1070 = vld [vmem:[%s546 + $0x8] sm:$0xff]
        %v1071 = vld [vmem:[%s546 + $0x10] sm:$0xff]
        %v1072 = vld [vmem:[%s546 + $0x18] sm:$0xff]
        %v1077 = vperm.slane %v1069, 0
        %v1078 = vperm.slane %v1069, 1
        %v1079 = vperm.slane %v1069, 2
        %v1080 = vperm.slane %v1069, 3
        %v1081 = vperm.slane %v1069, 4
        %v1082 = vperm.slane %v1069, 5
        %v1083 = vperm.slane %v1069, 6
        %v1084 = vperm.slane %v1069, 7
        %v1085 = vperm.slane %v1070, 0
        %v1086 = vperm.slane %v1070, 1
        %v1087 = vperm.slane %v1070, 2
        %v1088 = vperm.slane %v1070, 3
        %v1089 = vperm.slane %v1070, 4
        %v1090 = vperm.slane %v1070, 5
        %v1091 = vperm.slane %v1070, 6
        %v1092 = vperm.slane %v1070, 7
        %v1093 = vperm.slane %v1071, 0
        %v1094 = vperm.slane %v1071, 1
        %v1095 = vperm.slane %v1071, 2
        %v1096 = vperm.slane %v1071, 3
        %v1097 = vperm.slane %v1071, 4
        %v1098 = vperm.slane %v1071, 5
        %v1099 = vperm.slane %v1071, 6
        %v1100 = vperm.slane %v1071, 7
        %v1101 = vperm.slane %v1072, 0
        %v1102 = vperm.slane %v1072, 1
        %v1103 = vperm.slane %v1072, 2
        %v1104 = vperm.slane %v1072, 3
        %v1105 = vperm.slane %v1072, 4
        %v1106 = vperm.slane %v1072, 5
        %v1107 = vperm.slane %v1072, 6
        %v1108 = vperm.slane %v1072, 7
        %1142 = vst [vmem:[#allocation1] ss:$9 sm:$0xff] %v556
        %v1143 = vld [vmem:[#allocation1] sm:$0xff]
        %v1144 = vld [vmem:[#allocation1 + $0x9] sm:$0xff]
        %v1659 = vunpack.c.l.b16 %v557
        %v1660 = vunpack.c.h.b16 %v557
        %v1661 = vunpack.c.l.b16 %v558
        %v1662 = vunpack.c.h.b16 %v558
        %v1663 = vunpack.c.l.b16 %v559
        %v1664 = vunpack.c.h.b16 %v559
        %v1665 = vunpack.c.l.b16 %v560
        %v1666 = vunpack.c.h.b16 %v560
        %v1667 = vunpack.c.l.b16 %v561
        %v1668 = vunpack.c.h.b16 %v561
        %v1669 = vunpack.c.l.b16 %v562
        %v1670 = vunpack.c.h.b16 %v562
        %v1671 = vunpack.c.l.b16 %v563
        %v1672 = vunpack.c.h.b16 %v563
        %v1673 = vunpack.c.l.b16 %v564
        %v1674 = vunpack.c.h.b16 %v564
        %v1675 = vunpack.c.l.b16 %v565
        %v1676 = vunpack.c.h.b16 %v565
        %v1677 = vunpack.c.l.b16 %v566
        %v1678 = vunpack.c.h.b16 %v566
        %v1679 = vunpack.c.l.b16 %v567
        %v1680 = vunpack.c.h.b16 %v567
        %v1681 = vunpack.c.l.b16 %v568
        %v1682 = vunpack.c.h.b16 %v568
        %v1683 = vunpack.c.l.b16 %v569
        %v1684 = vunpack.c.h.b16 %v569
        %v1685 = vunpack.c.l.b16 %v570
        %v1686 = vunpack.c.h.b16 %v570
        %v1687 = vunpack.c.l.b16 %v571
        %v1688 = vunpack.c.h.b16 %v571
        %v1689 = vunpack.c.l.b16 %v572
        %v1690 = vunpack.c.h.b16 %v572
        %v1691 = vunpack.c.l.b16 %v573
        %v1692 = vunpack.c.h.b16 %v573
        %v1693 = vunpack.c.l.b16 %v574
        %v1694 = vunpack.c.h.b16 %v574
        %v1695 = vunpack.c.l.b16 %v575
        %v1696 = vunpack.c.h.b16 %v575
        %v1697 = vunpack.c.l.b16 %v576
        %v1698 = vunpack.c.h.b16 %v576
        %v1699 = vunpack.c.l.b16 %v577
        %v1700 = vunpack.c.h.b16 %v577
        %v1701 = vunpack.c.l.b16 %v578
        %v1702 = vunpack.c.h.b16 %v578
        %v1703 = vunpack.c.l.b16 %v579
        %v1704 = vunpack.c.h.b16 %v579
        %v1705 = vunpack.c.l.b16 %v580
        %v1706 = vunpack.c.h.b16 %v580
        %v1707 = vunpack.c.l.b16 %v581
        %v1708 = vunpack.c.h.b16 %v581
        %v1709 = vunpack.c.l.b16 %v582
        %v1710 = vunpack.c.h.b16 %v582
        %v1711 = vunpack.c.l.b16 %v583
        %v1712 = vunpack.c.h.b16 %v583
        %v1713 = vunpack.c.l.b16 %v584
        %v1714 = vunpack.c.h.b16 %v584
        %v1715 = vunpack.c.l.b16 %v585
        %v1716 = vunpack.c.h.b16 %v585
        %v1717 = vunpack.c.l.b16 %v586
        %v1718 = vunpack.c.h.b16 %v586
        %v1719 = vunpack.c.l.b16 %v587
        %v1720 = vunpack.c.h.b16 %v587
        %v1721 = vunpack.c.l.b16 %v588
        %v1722 = vunpack.c.h.b16 %v588
        %v1723 = vunpack.c.l.b16 %v589
        %v1724 = vunpack.c.h.b16 %v589
        %v1725 = vunpack.c.l.b16 %v590
        %v1726 = vunpack.c.h.b16 %v590
        %v1727 = vunpack.c.l.b16 %v591
        %v1728 = vunpack.c.h.b16 %v591
        %v1729 = vunpack.c.l.b16 %v592
        %v1730 = vunpack.c.h.b16 %v592
        %v1731 = vunpack.c.l.b16 %v593
        %v1732 = vunpack.c.h.b16 %v593
        %v1733 = vunpack.c.l.b16 %v594
        %v1734 = vunpack.c.h.b16 %v594
        %v1735 = vunpack.c.l.b16 %v595
        %v1736 = vunpack.c.h.b16 %v595
        %v1737 = vunpack.c.l.b16 %v596
        %v1738 = vunpack.c.h.b16 %v596
        %v1739 = vunpack.c.l.b16 %v597
        %v1740 = vunpack.c.h.b16 %v597
        %v1741 = vunpack.c.l.b16 %v598
        %v1742 = vunpack.c.h.b16 %v598
        %v1743 = vunpack.c.l.b16 %v599
        %v1744 = vunpack.c.h.b16 %v599
        %v1745 = vunpack.c.l.b16 %v600
        %v1746 = vunpack.c.h.b16 %v600
        %v1747 = vunpack.c.l.b16 %v601
        %v1748 = vunpack.c.h.b16 %v601
        %v1749 = vunpack.c.l.b16 %v602
        %v1750 = vunpack.c.h.b16 %v602
        %v1751 = vunpack.c.l.b16 %v603
        %v1752 = vunpack.c.h.b16 %v603
        %v1753 = vunpack.c.l.b16 %v604
        %v1754 = vunpack.c.h.b16 %v604
        %v1755 = vunpack.c.l.b16 %v605
        %v1756 = vunpack.c.h.b16 %v605
        %v1757 = vunpack.c.l.b16 %v606
        %v1758 = vunpack.c.h.b16 %v606
        %v1759 = vunpack.c.l.b16 %v607
        %v1760 = vunpack.c.h.b16 %v607
        %v1761 = vunpack.c.l.b16 %v608
        %v1762 = vunpack.c.h.b16 %v608
        %v1763 = vunpack.c.l.b16 %v609
        %v1764 = vunpack.c.h.b16 %v609
        %v1765 = vunpack.c.l.b16 %v610
        %v1766 = vunpack.c.h.b16 %v610
        %v1767 = vunpack.c.l.b16 %v611
        %v1768 = vunpack.c.h.b16 %v611
        %v1769 = vunpack.c.l.b16 %v612
        %v1770 = vunpack.c.h.b16 %v612
        %v1771 = vunpack.c.l.b16 %v613
        %v1772 = vunpack.c.h.b16 %v613
        %v1773 = vunpack.c.l.b16 %v614
        %v1774 = vunpack.c.h.b16 %v614
        %v1775 = vunpack.c.l.b16 %v615
        %v1776 = vunpack.c.h.b16 %v615
        %v1777 = vunpack.c.l.b16 %v616
        %v1778 = vunpack.c.h.b16 %v616
        %v1779 = vunpack.c.l.b16 %v617
        %v1780 = vunpack.c.h.b16 %v617
        %v1781 = vunpack.c.l.b16 %v618
        %v1782 = vunpack.c.h.b16 %v618
        %v1783 = vunpack.c.l.b16 %v619
        %v1784 = vunpack.c.h.b16 %v619
        %v1785 = vunpack.c.l.b16 %v620
        %v1786 = vunpack.c.h.b16 %v620
        %v1787 = vunpack.c.l.b16 %v621
        %v1788 = vunpack.c.h.b16 %v621
        %v1789 = vunpack.c.l.b16 %v622
        %v1790 = vunpack.c.h.b16 %v622
        %v1791 = vunpack.c.l.b16 %v623
        %v1792 = vunpack.c.h.b16 %v623
        %v1793 = vunpack.c.l.b16 %v624
        %v1794 = vunpack.c.h.b16 %v624
        %v1795 = vunpack.c.l.b16 %v625
        %v1796 = vunpack.c.h.b16 %v625
        %v1797 = vunpack.c.l.b16 %v626
        %v1798 = vunpack.c.h.b16 %v626
        %v1799 = vunpack.c.l.b16 %v627
        %v1800 = vunpack.c.h.b16 %v627
        %v1801 = vunpack.c.l.b16 %v628
        %v1802 = vunpack.c.h.b16 %v628
        %v1803 = vunpack.c.l.b16 %v629
        %v1804 = vunpack.c.h.b16 %v629
        %v1805 = vunpack.c.l.b16 %v630
        %v1806 = vunpack.c.h.b16 %v630
        %v1807 = vunpack.c.l.b16 %v631
        %v1808 = vunpack.c.h.b16 %v631
        %v1809 = vunpack.c.l.b16 %v632
        %v1810 = vunpack.c.h.b16 %v632
        %v1811 = vunpack.c.l.b16 %v633
        %v1812 = vunpack.c.h.b16 %v633
        %v1813 = vunpack.c.l.b16 %v634
        %v1814 = vunpack.c.h.b16 %v634
        %v1815 = vunpack.c.l.b16 %v635
        %v1816 = vunpack.c.h.b16 %v635
        %v1817 = vunpack.c.l.b16 %v636
        %v1818 = vunpack.c.h.b16 %v636
        %v1819 = vunpack.c.l.b16 %v637
        %v1820 = vunpack.c.h.b16 %v637
        %v1821 = vunpack.c.l.b16 %v638
        %v1822 = vunpack.c.h.b16 %v638
        %v1823 = vunpack.c.l.b16 %v639
        %v1824 = vunpack.c.h.b16 %v639
        %v1825 = vunpack.c.l.b16 %v640
        %v1826 = vunpack.c.h.b16 %v640
        %v1827 = vunpack.c.l.b16 %v641
        %v1828 = vunpack.c.h.b16 %v641
        %v1829 = vunpack.c.l.b16 %v642
        %v1830 = vunpack.c.h.b16 %v642
        %v1831 = vunpack.c.l.b16 %v643
        %v1832 = vunpack.c.h.b16 %v643
        %v1833 = vunpack.c.l.b16 %v644
        %v1834 = vunpack.c.h.b16 %v644
        %v1835 = vunpack.c.l.b16 %v645
        %v1836 = vunpack.c.h.b16 %v645
        %v1837 = vunpack.c.l.b16 %v646
        %v1838 = vunpack.c.h.b16 %v646
        %v1839 = vunpack.c.l.b16 %v647
        %v1840 = vunpack.c.h.b16 %v647
        %v1841 = vunpack.c.l.b16 %v648
        %v1842 = vunpack.c.h.b16 %v648
        %v1843 = vunpack.c.l.b16 %v649
        %v1844 = vunpack.c.h.b16 %v649
        %v1845 = vunpack.c.l.b16 %v650
        %v1846 = vunpack.c.h.b16 %v650
        %v1847 = vunpack.c.l.b16 %v651
        %v1848 = vunpack.c.h.b16 %v651
        %v1849 = vunpack.c.l.b16 %v652
        %v1850 = vunpack.c.h.b16 %v652
        %v1851 = vunpack.c.l.b16 %v653
        %v1852 = vunpack.c.h.b16 %v653
        %v1853 = vunpack.c.l.b16 %v654
        %v1854 = vunpack.c.h.b16 %v654
        %v1855 = vunpack.c.l.b16 %v655
        %v1856 = vunpack.c.h.b16 %v655
        %v1857 = vunpack.c.l.b16 %v656
        %v1858 = vunpack.c.h.b16 %v656
        %v1859 = vunpack.c.l.b16 %v657
        %v1860 = vunpack.c.h.b16 %v657
        %v1861 = vunpack.c.l.b16 %v658
        %v1862 = vunpack.c.h.b16 %v658
        %v1863 = vunpack.c.l.b16 %v659
        %v1864 = vunpack.c.h.b16 %v659
        %v1865 = vunpack.c.l.b16 %v660
        %v1866 = vunpack.c.h.b16 %v660
        %v1867 = vunpack.c.l.b16 %v661
        %v1868 = vunpack.c.h.b16 %v661
        %v1869 = vunpack.c.l.b16 %v662
        %v1870 = vunpack.c.h.b16 %v662
        %v1871 = vunpack.c.l.b16 %v663
        %v1872 = vunpack.c.h.b16 %v663
        %v1873 = vunpack.c.l.b16 %v664
        %v1874 = vunpack.c.h.b16 %v664
        %v1875 = vunpack.c.l.b16 %v665
        %v1876 = vunpack.c.h.b16 %v665
        %v1877 = vunpack.c.l.b16 %v666
        %v1878 = vunpack.c.h.b16 %v666
        %v1879 = vunpack.c.l.b16 %v667
        %v1880 = vunpack.c.h.b16 %v667
        %v1881 = vunpack.c.l.b16 %v668
        %v1882 = vunpack.c.h.b16 %v668
        %v1883 = vunpack.c.l.b16 %v669
        %v1884 = vunpack.c.h.b16 %v669
        %v1885 = vunpack.c.l.b16 %v670
        %v1886 = vunpack.c.h.b16 %v670
        %v1887 = vunpack.c.l.b16 %v671
        %v1888 = vunpack.c.h.b16 %v671
        %v1889 = vunpack.c.l.b16 %v672
        %v1890 = vunpack.c.h.b16 %v672
        %v1891 = vunpack.c.l.b16 %v673
        %v1892 = vunpack.c.h.b16 %v673
        %v1893 = vunpack.c.l.b16 %v674
        %v1894 = vunpack.c.h.b16 %v674
        %v1895 = vunpack.c.l.b16 %v675
        %v1896 = vunpack.c.h.b16 %v675
        %v1897 = vunpack.c.l.b16 %v676
        %v1898 = vunpack.c.h.b16 %v676
        %v1899 = vunpack.c.l.b16 %v677
        %v1900 = vunpack.c.h.b16 %v677
        %v1901 = vunpack.c.l.b16 %v678
        %v1902 = vunpack.c.h.b16 %v678
        %v1903 = vunpack.c.l.b16 %v679
        %v1904 = vunpack.c.h.b16 %v679
        %v1905 = vunpack.c.l.b16 %v680
        %v1906 = vunpack.c.h.b16 %v680
        %v1907 = vunpack.c.l.b16 %v681
        %v1908 = vunpack.c.h.b16 %v681
        %v1909 = vunpack.c.l.b16 %v682
        %v1910 = vunpack.c.h.b16 %v682
        %v1911 = vunpack.c.l.b16 %v683
        %v1912 = vunpack.c.h.b16 %v683
        %v1913 = vunpack.c.l.b16 %v684
        %v1914 = vunpack.c.h.b16 %v684
        %v1915 = vunpack.c.l.b16 %v685
        %v1916 = vunpack.c.h.b16 %v685
        %v1917 = vunpack.c.l.b16 %v686
        %v1918 = vunpack.c.h.b16 %v686
        %v1919 = vunpack.c.l.b16 %v687
        %v1920 = vunpack.c.h.b16 %v687
        %v1921 = vunpack.c.l.b16 %v688
        %v1922 = vunpack.c.h.b16 %v688
        %v1923 = vunpack.c.l.b16 %v689
        %v1924 = vunpack.c.h.b16 %v689
        %v1925 = vunpack.c.l.b16 %v690
        %v1926 = vunpack.c.h.b16 %v690
        %v1927 = vunpack.c.l.b16 %v691
        %v1928 = vunpack.c.h.b16 %v691
        %v1929 = vunpack.c.l.b16 %v692
        %v1930 = vunpack.c.h.b16 %v692
        %v1931 = vunpack.c.l.b16 %v693
        %v1932 = vunpack.c.h.b16 %v693
        %v1933 = vunpack.c.l.b16 %v694
        %v1934 = vunpack.c.h.b16 %v694
        %v1935 = vunpack.c.l.b16 %v695
        %v1936 = vunpack.c.h.b16 %v695
        %v1937 = vunpack.c.l.b16 %v696
        %v1938 = vunpack.c.h.b16 %v696
        %v1939 = vunpack.c.l.b16 %v697
        %v1940 = vunpack.c.h.b16 %v697
        %v1941 = vunpack.c.l.b16 %v698
        %v1942 = vunpack.c.h.b16 %v698
        %v1943 = vunpack.c.l.b16 %v699
        %v1944 = vunpack.c.h.b16 %v699
        %v1945 = vunpack.c.l.b16 %v700
        %v1946 = vunpack.c.h.b16 %v700
        %v1947 = vunpack.c.l.b16 %v701
        %v1948 = vunpack.c.h.b16 %v701
        %v1949 = vunpack.c.l.b16 %v702
        %v1950 = vunpack.c.h.b16 %v702
        %v1951 = vunpack.c.l.b16 %v703
        %v1952 = vunpack.c.h.b16 %v703
        %v1953 = vunpack.c.l.b16 %v704
        %v1954 = vunpack.c.h.b16 %v704
        %v1955 = vunpack.c.l.b16 %v705
        %v1956 = vunpack.c.h.b16 %v705
        %v1957 = vunpack.c.l.b16 %v706
        %v1958 = vunpack.c.h.b16 %v706
        %v1959 = vunpack.c.l.b16 %v707
        %v1960 = vunpack.c.h.b16 %v707
        %v1961 = vunpack.c.l.b16 %v708
        %v1962 = vunpack.c.h.b16 %v708
        %v1963 = vunpack.c.l.b16 %v709
        %v1964 = vunpack.c.h.b16 %v709
        %v1965 = vunpack.c.l.b16 %v710
        %v1966 = vunpack.c.h.b16 %v710
        %v1967 = vunpack.c.l.b16 %v711
        %v1968 = vunpack.c.h.b16 %v711
        %v1969 = vunpack.c.l.b16 %v712
        %v1970 = vunpack.c.h.b16 %v712
        %v1971 = vunpack.c.l.b16 %v713
        %v1972 = vunpack.c.h.b16 %v713
        %v1973 = vunpack.c.l.b16 %v714
        %v1974 = vunpack.c.h.b16 %v714
        %v1975 = vunpack.c.l.b16 %v715
        %v1976 = vunpack.c.h.b16 %v715
        %v1977 = vunpack.c.l.b16 %v716
        %v1978 = vunpack.c.h.b16 %v716
        %v1979 = vunpack.c.l.b16 %v717
        %v1980 = vunpack.c.h.b16 %v717
        %v1981 = vunpack.c.l.b16 %v718
        %v1982 = vunpack.c.h.b16 %v718
        %v1983 = vunpack.c.l.b16 %v719
        %v1984 = vunpack.c.h.b16 %v719
        %v1985 = vunpack.c.l.b16 %v720
        %v1986 = vunpack.c.h.b16 %v720
        %v1987 = vunpack.c.l.b16 %v721
        %v1988 = vunpack.c.h.b16 %v721
        %v1989 = vunpack.c.l.b16 %v722
        %v1990 = vunpack.c.h.b16 %v722
        %v1991 = vunpack.c.l.b16 %v723
        %v1992 = vunpack.c.h.b16 %v723
        %v1993 = vunpack.c.l.b16 %v724
        %v1994 = vunpack.c.h.b16 %v724
        %v1995 = vunpack.c.l.b16 %v725
        %v1996 = vunpack.c.h.b16 %v725
        %v1997 = vunpack.c.l.b16 %v726
        %v1998 = vunpack.c.h.b16 %v726
        %v1999 = vunpack.c.l.b16 %v727
        %v2000 = vunpack.c.h.b16 %v727
        %v2001 = vunpack.c.l.b16 %v728
        %v2002 = vunpack.c.h.b16 %v728
        %v2003 = vunpack.c.l.b16 %v729
        %v2004 = vunpack.c.h.b16 %v729
        %v2005 = vunpack.c.l.b16 %v730
        %v2006 = vunpack.c.h.b16 %v730
        %v2007 = vunpack.c.l.b16 %v731
        %v2008 = vunpack.c.h.b16 %v731
        %v2009 = vunpack.c.l.b16 %v732
        %v2010 = vunpack.c.h.b16 %v732
        %v2011 = vunpack.c.l.b16 %v733
        %v2012 = vunpack.c.h.b16 %v733
        %v2013 = vunpack.c.l.b16 %v734
        %v2014 = vunpack.c.h.b16 %v734
        %v2015 = vunpack.c.l.b16 %v735
        %v2016 = vunpack.c.h.b16 %v735
        %v2017 = vunpack.c.l.b16 %v736
        %v2018 = vunpack.c.h.b16 %v736
        %v2019 = vunpack.c.l.b16 %v737
        %v2020 = vunpack.c.h.b16 %v737
        %v2021 = vunpack.c.l.b16 %v738
        %v2022 = vunpack.c.h.b16 %v738
        %v2023 = vunpack.c.l.b16 %v739
        %v2024 = vunpack.c.h.b16 %v739
        %v2025 = vunpack.c.l.b16 %v740
        %v2026 = vunpack.c.h.b16 %v740
        %v2027 = vunpack.c.l.b16 %v741
        %v2028 = vunpack.c.h.b16 %v741
        %v2029 = vunpack.c.l.b16 %v742
        %v2030 = vunpack.c.h.b16 %v742
        %v2031 = vunpack.c.l.b16 %v743
        %v2032 = vunpack.c.h.b16 %v743
        %v2033 = vunpack.c.l.b16 %v744
        %v2034 = vunpack.c.h.b16 %v744
        %v2035 = vunpack.c.l.b16 %v745
        %v2036 = vunpack.c.h.b16 %v745
        %v2037 = vunpack.c.l.b16 %v746
        %v2038 = vunpack.c.h.b16 %v746
        %v2039 = vunpack.c.l.b16 %v747
        %v2040 = vunpack.c.h.b16 %v747
        %v2041 = vunpack.c.l.b16 %v748
        %v2042 = vunpack.c.h.b16 %v748
        %v2043 = vunpack.c.l.b16 %v749
        %v2044 = vunpack.c.h.b16 %v749
        %v2045 = vunpack.c.l.b16 %v750
        %v2046 = vunpack.c.h.b16 %v750
        %v2047 = vunpack.c.l.b16 %v751
        %v2048 = vunpack.c.h.b16 %v751
        %v2049 = vunpack.c.l.b16 %v752
        %v2050 = vunpack.c.h.b16 %v752
        %v2051 = vunpack.c.l.b16 %v753
        %v2052 = vunpack.c.h.b16 %v753
        %v2053 = vunpack.c.l.b16 %v754
        %v2054 = vunpack.c.h.b16 %v754
        %v2055 = vunpack.c.l.b16 %v755
        %v2056 = vunpack.c.h.b16 %v755
        %v2057 = vunpack.c.l.b16 %v756
        %v2058 = vunpack.c.h.b16 %v756
        %v2059 = vunpack.c.l.b16 %v757
        %v2060 = vunpack.c.h.b16 %v757
        %v2061 = vunpack.c.l.b16 %v758
        %v2062 = vunpack.c.h.b16 %v758
        %v2063 = vunpack.c.l.b16 %v759
        %v2064 = vunpack.c.h.b16 %v759
        %v2065 = vunpack.c.l.b16 %v760
        %v2066 = vunpack.c.h.b16 %v760
        %v2067 = vunpack.c.l.b16 %v761
        %v2068 = vunpack.c.h.b16 %v761
        %v2069 = vunpack.c.l.b16 %v762
        %v2070 = vunpack.c.h.b16 %v762
        %v2071 = vunpack.c.l.b16 %v763
        %v2072 = vunpack.c.h.b16 %v763
        %v2073 = vunpack.c.l.b16 %v764
        %v2074 = vunpack.c.h.b16 %v764
        %v2075 = vunpack.c.l.b16 %v765
        %v2076 = vunpack.c.h.b16 %v765
        %v2077 = vunpack.c.l.b16 %v766
        %v2078 = vunpack.c.h.b16 %v766
        %v2079 = vunpack.c.l.b16 %v767
        %v2080 = vunpack.c.h.b16 %v767
        %v2081 = vunpack.c.l.b16 %v768
        %v2082 = vunpack.c.h.b16 %v768
        %v2083 = vunpack.c.l.b16 %v769
        %v2084 = vunpack.c.h.b16 %v769
        %v2085 = vunpack.c.l.b16 %v770
        %v2086 = vunpack.c.h.b16 %v770
        %v2087 = vunpack.c.l.b16 %v771
        %v2088 = vunpack.c.h.b16 %v771
        %v2089 = vunpack.c.l.b16 %v772
        %v2090 = vunpack.c.h.b16 %v772
        %v2091 = vunpack.c.l.b16 %v773
        %v2092 = vunpack.c.h.b16 %v773
        %v2093 = vunpack.c.l.b16 %v774
        %v2094 = vunpack.c.h.b16 %v774
        %v2095 = vunpack.c.l.b16 %v775
        %v2096 = vunpack.c.h.b16 %v775
        %v2097 = vunpack.c.l.b16 %v776
        %v2098 = vunpack.c.h.b16 %v776
        %v2099 = vunpack.c.l.b16 %v777
        %v2100 = vunpack.c.h.b16 %v777
        %v2101 = vunpack.c.l.b16 %v778
        %v2102 = vunpack.c.h.b16 %v778
        %v2103 = vunpack.c.l.b16 %v779
        %v2104 = vunpack.c.h.b16 %v779
        %v2105 = vunpack.c.l.b16 %v780
        %v2106 = vunpack.c.h.b16 %v780
        %v2107 = vunpack.c.l.b16 %v781
        %v2108 = vunpack.c.h.b16 %v781
        %v2109 = vunpack.c.l.b16 %v782
        %v2110 = vunpack.c.h.b16 %v782
        %v2111 = vunpack.c.l.b16 %v783
        %v2112 = vunpack.c.h.b16 %v783
        %v2113 = vunpack.c.l.b16 %v784
        %v2114 = vunpack.c.h.b16 %v784
        %v2115 = vunpack.c.l.b16 %v785
        %v2116 = vunpack.c.h.b16 %v785
        %v2117 = vunpack.c.l.b16 %v786
        %v2118 = vunpack.c.h.b16 %v786
        %v2119 = vunpack.c.l.b16 %v787
        %v2120 = vunpack.c.h.b16 %v787
        %v2121 = vunpack.c.l.b16 %v788
        %v2122 = vunpack.c.h.b16 %v788
        %v2123 = vunpack.c.l.b16 %v789
        %v2124 = vunpack.c.h.b16 %v789
        %v2125 = vunpack.c.l.b16 %v790
        %v2126 = vunpack.c.h.b16 %v790
        %v2127 = vunpack.c.l.b16 %v791
        %v2128 = vunpack.c.h.b16 %v791
        %v2129 = vunpack.c.l.b16 %v792
        %v2130 = vunpack.c.h.b16 %v792
        %v2131 = vunpack.c.l.b16 %v793
        %v2132 = vunpack.c.h.b16 %v793
        %v2133 = vunpack.c.l.b16 %v794
        %v2134 = vunpack.c.h.b16 %v794
        %v2135 = vunpack.c.l.b16 %v795
        %v2136 = vunpack.c.h.b16 %v795
        %v2137 = vunpack.c.l.b16 %v796
        %v2138 = vunpack.c.h.b16 %v796
        %v2139 = vunpack.c.l.b16 %v797
        %v2140 = vunpack.c.h.b16 %v797
        %v2141 = vunpack.c.l.b16 %v798
        %v2142 = vunpack.c.h.b16 %v798
        %v2143 = vunpack.c.l.b16 %v799
        %v2144 = vunpack.c.h.b16 %v799
        %v2145 = vunpack.c.l.b16 %v800
        %v2146 = vunpack.c.h.b16 %v800
        %v2147 = vunpack.c.l.b16 %v801
        %v2148 = vunpack.c.h.b16 %v801
        %v2149 = vunpack.c.l.b16 %v802
        %v2150 = vunpack.c.h.b16 %v802
        %v2151 = vunpack.c.l.b16 %v803
        %v2152 = vunpack.c.h.b16 %v803
        %v2153 = vunpack.c.l.b16 %v804
        %v2154 = vunpack.c.h.b16 %v804
        %v2155 = vunpack.c.l.b16 %v805
        %v2156 = vunpack.c.h.b16 %v805
        %v2157 = vunpack.c.l.b16 %v806
        %v2158 = vunpack.c.h.b16 %v806
        %v2159 = vunpack.c.l.b16 %v807
        %v2160 = vunpack.c.h.b16 %v807
        %v2161 = vunpack.c.l.b16 %v808
        %v2162 = vunpack.c.h.b16 %v808
        %v2163 = vunpack.c.l.b16 %v809
        %v2164 = vunpack.c.h.b16 %v809
        %v2165 = vunpack.c.l.b16 %v810
        %v2166 = vunpack.c.h.b16 %v810
        %v2167 = vunpack.c.l.b16 %v811
        %v2168 = vunpack.c.h.b16 %v811
        %v2169 = vunpack.c.l.b16 %v812
        %v2170 = vunpack.c.h.b16 %v812
        %v2171 = vunpack.c.l.b16 %v813
        %v2172 = vunpack.c.h.b16 %v813
        %v2173 = vunpack.c.l.b16 %v814
        %v2174 = vunpack.c.h.b16 %v814
        %v2175 = vunpack.c.l.b16 %v815
        %v2176 = vunpack.c.h.b16 %v815
        %v2177 = vunpack.c.l.b16 %v816
        %v2178 = vunpack.c.h.b16 %v816
        %v2179 = vunpack.c.l.b16 %v817
        %v2180 = vunpack.c.h.b16 %v817
        %v2181 = vunpack.c.l.b16 %v818
        %v2182 = vunpack.c.h.b16 %v818
        %v2183 = vunpack.c.l.b16 %v819
        %v2184 = vunpack.c.h.b16 %v819
        %v2185 = vunpack.c.l.b16 %v820
        %v2186 = vunpack.c.h.b16 %v820
        %v2187 = vunpack.c.l.b16 %v821
        %v2188 = vunpack.c.h.b16 %v821
        %v2189 = vunpack.c.l.b16 %v822
        %v2190 = vunpack.c.h.b16 %v822
        %v2191 = vunpack.c.l.b16 %v823
        %v2192 = vunpack.c.h.b16 %v823
        %v2193 = vunpack.c.l.b16 %v824
        %v2194 = vunpack.c.h.b16 %v824
        %v2195 = vunpack.c.l.b16 %v825
        %v2196 = vunpack.c.h.b16 %v825
        %v2197 = vunpack.c.l.b16 %v826
        %v2198 = vunpack.c.h.b16 %v826
        %v2199 = vunpack.c.l.b16 %v827
        %v2200 = vunpack.c.h.b16 %v827
        %v2201 = vunpack.c.l.b16 %v828
        %v2202 = vunpack.c.h.b16 %v828
        %v2203 = vunpack.c.l.b16 %v829
        %v2204 = vunpack.c.h.b16 %v829
        %v2205 = vunpack.c.l.b16 %v830
        %v2206 = vunpack.c.h.b16 %v830
        %v2207 = vunpack.c.l.b16 %v831
        %v2208 = vunpack.c.h.b16 %v831
        %v2209 = vunpack.c.l.b16 %v832
        %v2210 = vunpack.c.h.b16 %v832
        %v2211 = vunpack.c.l.b16 %v833
        %v2212 = vunpack.c.h.b16 %v833
        %v2213 = vunpack.c.l.b16 %v834
        %v2214 = vunpack.c.h.b16 %v834
        %v2215 = vunpack.c.l.b16 %v835
        %v2216 = vunpack.c.h.b16 %v835
        %v2217 = vunpack.c.l.b16 %v836
        %v2218 = vunpack.c.h.b16 %v836
        %v2219 = vunpack.c.l.b16 %v837
        %v2220 = vunpack.c.h.b16 %v837
        %v2221 = vunpack.c.l.b16 %v838
        %v2222 = vunpack.c.h.b16 %v838
        %v2223 = vunpack.c.l.b16 %v839
        %v2224 = vunpack.c.h.b16 %v839
        %v2225 = vunpack.c.l.b16 %v840
        %v2226 = vunpack.c.h.b16 %v840
        %v2227 = vunpack.c.l.b16 %v841
        %v2228 = vunpack.c.h.b16 %v841
        %v2229 = vunpack.c.l.b16 %v842
        %v2230 = vunpack.c.h.b16 %v842
        %v2231 = vunpack.c.l.b16 %v843
        %v2232 = vunpack.c.h.b16 %v843
        %v2233 = vunpack.c.l.b16 %v844
        %v2234 = vunpack.c.h.b16 %v844
        %v2235 = vunpack.c.l.b16 %v845
        %v2236 = vunpack.c.h.b16 %v845
        %v2237 = vunpack.c.l.b16 %v846
        %v2238 = vunpack.c.h.b16 %v846
        %v2239 = vunpack.c.l.b16 %v847
        %v2240 = vunpack.c.h.b16 %v847
        %v2241 = vunpack.c.l.b16 %v848
        %v2242 = vunpack.c.h.b16 %v848
        %v2243 = vunpack.c.l.b16 %v849
        %v2244 = vunpack.c.h.b16 %v849
        %v2245 = vunpack.c.l.b16 %v850
        %v2246 = vunpack.c.h.b16 %v850
        %v2247 = vunpack.c.l.b16 %v851
        %v2248 = vunpack.c.h.b16 %v851
        %v2249 = vunpack.c.l.b16 %v852
        %v2250 = vunpack.c.h.b16 %v852
        %v2251 = vunpack.c.l.b16 %v853
        %v2252 = vunpack.c.h.b16 %v853
        %v2253 = vunpack.c.l.b16 %v854
        %v2254 = vunpack.c.h.b16 %v854
        %v2255 = vunpack.c.l.b16 %v855
        %v2256 = vunpack.c.h.b16 %v855
        %v2257 = vunpack.c.l.b16 %v856
        %v2258 = vunpack.c.h.b16 %v856
        %v2259 = vunpack.c.l.b16 %v857
        %v2260 = vunpack.c.h.b16 %v857
        %v2261 = vunpack.c.l.b16 %v858
        %v2262 = vunpack.c.h.b16 %v858
        %v2263 = vunpack.c.l.b16 %v859
        %v2264 = vunpack.c.h.b16 %v859
        %v2265 = vunpack.c.l.b16 %v860
        %v2266 = vunpack.c.h.b16 %v860
        %v2267 = vunpack.c.l.b16 %v861
        %v2268 = vunpack.c.h.b16 %v861
        %v2269 = vunpack.c.l.b16 %v862
        %v2270 = vunpack.c.h.b16 %v862
        %v2271 = vunpack.c.l.b16 %v863
        %v2272 = vunpack.c.h.b16 %v863
        %v2273 = vunpack.c.l.b16 %v864
        %v2274 = vunpack.c.h.b16 %v864
        %v2275 = vunpack.c.l.b16 %v865
        %v2276 = vunpack.c.h.b16 %v865
        %v2277 = vunpack.c.l.b16 %v866
        %v2278 = vunpack.c.h.b16 %v866
        %v2279 = vunpack.c.l.b16 %v867
        %v2280 = vunpack.c.h.b16 %v867
        %v2281 = vunpack.c.l.b16 %v868
        %v2282 = vunpack.c.h.b16 %v868
        %v2283 = vunpack.c.l.b16 %v869
        %v2284 = vunpack.c.h.b16 %v869
        %v2285 = vunpack.c.l.b16 %v870
        %v2286 = vunpack.c.h.b16 %v870
        %v2287 = vunpack.c.l.b16 %v871
        %v2288 = vunpack.c.h.b16 %v871
        %v2289 = vunpack.c.l.b16 %v872
        %v2290 = vunpack.c.h.b16 %v872
        %v2291 = vunpack.c.l.b16 %v873
        %v2292 = vunpack.c.h.b16 %v873
        %v2293 = vunpack.c.l.b16 %v874
        %v2294 = vunpack.c.h.b16 %v874
        %v2295 = vunpack.c.l.b16 %v875
        %v2296 = vunpack.c.h.b16 %v875
        %v2297 = vunpack.c.l.b16 %v876
        %v2298 = vunpack.c.h.b16 %v876
        %v2299 = vunpack.c.l.b16 %v877
        %v2300 = vunpack.c.h.b16 %v877
        %v2301 = vunpack.c.l.b16 %v878
        %v2302 = vunpack.c.h.b16 %v878
        %v2303 = vunpack.c.l.b16 %v879
        %v2304 = vunpack.c.h.b16 %v879
        %v2305 = vunpack.c.l.b16 %v880
        %v2306 = vunpack.c.h.b16 %v880
        %v2307 = vunpack.c.l.b16 %v881
        %v2308 = vunpack.c.h.b16 %v881
        %v2309 = vunpack.c.l.b16 %v882
        %v2310 = vunpack.c.h.b16 %v882
        %v2311 = vunpack.c.l.b16 %v883
        %v2312 = vunpack.c.h.b16 %v883
        %v2313 = vunpack.c.l.b16 %v884
        %v2314 = vunpack.c.h.b16 %v884
        %v2315 = vunpack.c.l.b16 %v885
        %v2316 = vunpack.c.h.b16 %v885
        %v2317 = vunpack.c.l.b16 %v886
        %v2318 = vunpack.c.h.b16 %v886
        %v2319 = vunpack.c.l.b16 %v887
        %v2320 = vunpack.c.h.b16 %v887
        %v2321 = vunpack.c.l.b16 %v888
        %v2322 = vunpack.c.h.b16 %v888
        %v2323 = vunpack.c.l.b16 %v889
        %v2324 = vunpack.c.h.b16 %v889
        %v2325 = vunpack.c.l.b16 %v890
        %v2326 = vunpack.c.h.b16 %v890
        %v2327 = vunpack.c.l.b16 %v891
        %v2328 = vunpack.c.h.b16 %v891
        %v2329 = vunpack.c.l.b16 %v892
        %v2330 = vunpack.c.h.b16 %v892
        %v2331 = vunpack.c.l.b16 %v893
        %v2332 = vunpack.c.h.b16 %v893
        %v2333 = vunpack.c.l.b16 %v894
        %v2334 = vunpack.c.h.b16 %v894
        %v2335 = vunpack.c.l.b16 %v895
        %v2336 = vunpack.c.h.b16 %v895
        %v2337 = vunpack.c.l.b16 %v896
        %v2338 = vunpack.c.h.b16 %v896
        %v2339 = vunpack.c.l.b16 %v897
        %v2340 = vunpack.c.h.b16 %v897
        %v2341 = vunpack.c.l.b16 %v898
        %v2342 = vunpack.c.h.b16 %v898
        %v2343 = vunpack.c.l.b16 %v899
        %v2344 = vunpack.c.h.b16 %v899
        %v2345 = vunpack.c.l.b16 %v900
        %v2346 = vunpack.c.h.b16 %v900
        %v2347 = vunpack.c.l.b16 %v901
        %v2348 = vunpack.c.h.b16 %v901
        %v2349 = vunpack.c.l.b16 %v902
        %v2350 = vunpack.c.h.b16 %v902
        %v2351 = vunpack.c.l.b16 %v903
        %v2352 = vunpack.c.h.b16 %v903
        %v2353 = vunpack.c.l.b16 %v904
        %v2354 = vunpack.c.h.b16 %v904
        %v2355 = vunpack.c.l.b16 %v905
        %v2356 = vunpack.c.h.b16 %v905
        %v2357 = vunpack.c.l.b16 %v906
        %v2358 = vunpack.c.h.b16 %v906
        %v2359 = vunpack.c.l.b16 %v907
        %v2360 = vunpack.c.h.b16 %v907
        %v2361 = vunpack.c.l.b16 %v908
        %v2362 = vunpack.c.h.b16 %v908
        %v2363 = vunpack.c.l.b16 %v909
        %v2364 = vunpack.c.h.b16 %v909
        %v2365 = vunpack.c.l.b16 %v910
        %v2366 = vunpack.c.h.b16 %v910
        %v2367 = vunpack.c.l.b16 %v911
        %v2368 = vunpack.c.h.b16 %v911
        %v2369 = vunpack.c.l.b16 %v912
        %v2370 = vunpack.c.h.b16 %v912
        %v2371 = vunpack.c.l.b16 %v913
        %v2372 = vunpack.c.h.b16 %v913
        %v2373 = vunpack.c.l.b16 %v914
        %v2374 = vunpack.c.h.b16 %v914
        %v2375 = vunpack.c.l.b16 %v915
        %v2376 = vunpack.c.h.b16 %v915
        %v2377 = vunpack.c.l.b16 %v916
        %v2378 = vunpack.c.h.b16 %v916
        %v2379 = vunpack.c.l.b16 %v917
        %v2380 = vunpack.c.h.b16 %v917
        %v2381 = vunpack.c.l.b16 %v918
        %v2382 = vunpack.c.h.b16 %v918
        %v2383 = vunpack.c.l.b16 %v919
        %v2384 = vunpack.c.h.b16 %v919
        %v2385 = vunpack.c.l.b16 %v920
        %v2386 = vunpack.c.h.b16 %v920
        %v2387 = vunpack.c.l.b16 %v921
        %v2388 = vunpack.c.h.b16 %v921
        %v2389 = vunpack.c.l.b16 %v922
        %v2390 = vunpack.c.h.b16 %v922
        %v2391 = vunpack.c.l.b16 %v923
        %v2392 = vunpack.c.h.b16 %v923
        %v2393 = vunpack.c.l.b16 %v924
        %v2394 = vunpack.c.h.b16 %v924
        %v2395 = vunpack.c.l.b16 %v925
        %v2396 = vunpack.c.h.b16 %v925
        %v2397 = vunpack.c.l.b16 %v926
        %v2398 = vunpack.c.h.b16 %v926
        %v2399 = vunpack.c.l.b16 %v927
        %v2400 = vunpack.c.h.b16 %v927
        %v2401 = vunpack.c.l.b16 %v928
        %v2402 = vunpack.c.h.b16 %v928
        %v2403 = vunpack.c.l.b16 %v929
        %v2404 = vunpack.c.h.b16 %v929
        %v2405 = vunpack.c.l.b16 %v930
        %v2406 = vunpack.c.h.b16 %v930
        %v2407 = vunpack.c.l.b16 %v931
        %v2408 = vunpack.c.h.b16 %v931
        %v2409 = vunpack.c.l.b16 %v932
        %v2410 = vunpack.c.h.b16 %v932
        %v2411 = vunpack.c.l.b16 %v933
        %v2412 = vunpack.c.h.b16 %v933
        %v2413 = vunpack.c.l.b16 %v934
        %v2414 = vunpack.c.h.b16 %v934
        %v2415 = vunpack.c.l.b16 %v935
        %v2416 = vunpack.c.h.b16 %v935
        %v2417 = vunpack.c.l.b16 %v936
        %v2418 = vunpack.c.h.b16 %v936
        %v2419 = vunpack.c.l.b16 %v937
        %v2420 = vunpack.c.h.b16 %v937
        %v2421 = vunpack.c.l.b16 %v938
        %v2422 = vunpack.c.h.b16 %v938
        %v2423 = vunpack.c.l.b16 %v939
        %v2424 = vunpack.c.h.b16 %v939
        %v2425 = vunpack.c.l.b16 %v940
        %v2426 = vunpack.c.h.b16 %v940
        %v2427 = vunpack.c.l.b16 %v941
        %v2428 = vunpack.c.h.b16 %v941
        %v2429 = vunpack.c.l.b16 %v942
        %v2430 = vunpack.c.h.b16 %v942
        %v2431 = vunpack.c.l.b16 %v943
        %v2432 = vunpack.c.h.b16 %v943
        %v2433 = vunpack.c.l.b16 %v944
        %v2434 = vunpack.c.h.b16 %v944
        %v2435 = vunpack.c.l.b16 %v945
        %v2436 = vunpack.c.h.b16 %v945
        %v2437 = vunpack.c.l.b16 %v946
        %v2438 = vunpack.c.h.b16 %v946
        %v2439 = vunpack.c.l.b16 %v947
        %v2440 = vunpack.c.h.b16 %v947
        %v2441 = vunpack.c.l.b16 %v948
        %v2442 = vunpack.c.h.b16 %v948
        %v2443 = vunpack.c.l.b16 %v949
        %v2444 = vunpack.c.h.b16 %v949
        %v2445 = vunpack.c.l.b16 %v950
        %v2446 = vunpack.c.h.b16 %v950
        %v2447 = vunpack.c.l.b16 %v951
        %v2448 = vunpack.c.h.b16 %v951
        %v2449 = vunpack.c.l.b16 %v952
        %v2450 = vunpack.c.h.b16 %v952
        %v2451 = vunpack.c.l.b16 %v953
        %v2452 = vunpack.c.h.b16 %v953
        %v2453 = vunpack.c.l.b16 %v954
        %v2454 = vunpack.c.h.b16 %v954
        %v2455 = vunpack.c.l.b16 %v955
        %v2456 = vunpack.c.h.b16 %v955
        %v2457 = vunpack.c.l.b16 %v956
        %v2458 = vunpack.c.h.b16 %v956
        %v2459 = vunpack.c.l.b16 %v957
        %v2460 = vunpack.c.h.b16 %v957
        %v2461 = vunpack.c.l.b16 %v958
        %v2462 = vunpack.c.h.b16 %v958
        %v2463 = vunpack.c.l.b16 %v959
        %v2464 = vunpack.c.h.b16 %v959
        %v2465 = vunpack.c.l.b16 %v960
        %v2466 = vunpack.c.h.b16 %v960
        %v2467 = vunpack.c.l.b16 %v961
        %v2468 = vunpack.c.h.b16 %v961
        %v2469 = vunpack.c.l.b16 %v962
        %v2470 = vunpack.c.h.b16 %v962
        %v2471 = vunpack.c.l.b16 %v963
        %v2472 = vunpack.c.h.b16 %v963
        %v2473 = vunpack.c.l.b16 %v964
        %v2474 = vunpack.c.h.b16 %v964
        %v2475 = vunpack.c.l.b16 %v965
        %v2476 = vunpack.c.h.b16 %v965
        %v2477 = vunpack.c.l.b16 %v966
        %v2478 = vunpack.c.h.b16 %v966
        %v2479 = vunpack.c.l.b16 %v967
        %v2480 = vunpack.c.h.b16 %v967
        %v2481 = vunpack.c.l.b16 %v968
        %v2482 = vunpack.c.h.b16 %v968
        %v2483 = vunpack.c.l.b16 %v969
        %v2484 = vunpack.c.h.b16 %v969
        %v2485 = vunpack.c.l.b16 %v970
        %v2486 = vunpack.c.h.b16 %v970
        %v2487 = vunpack.c.l.b16 %v971
        %v2488 = vunpack.c.h.b16 %v971
        %v2489 = vunpack.c.l.b16 %v972
        %v2490 = vunpack.c.h.b16 %v972
        %v2491 = vunpack.c.l.b16 %v973
        %v2492 = vunpack.c.h.b16 %v973
        %v2493 = vunpack.c.l.b16 %v974
        %v2494 = vunpack.c.h.b16 %v974
        %v2495 = vunpack.c.l.b16 %v975
        %v2496 = vunpack.c.h.b16 %v975
        %v2497 = vunpack.c.l.b16 %v976
        %v2498 = vunpack.c.h.b16 %v976
        %v2499 = vunpack.c.l.b16 %v977
        %v2500 = vunpack.c.h.b16 %v977
        %v2501 = vunpack.c.l.b16 %v978
        %v2502 = vunpack.c.h.b16 %v978
        %v2503 = vunpack.c.l.b16 %v979
        %v2504 = vunpack.c.h.b16 %v979
        %v2505 = vunpack.c.l.b16 %v980
        %v2506 = vunpack.c.h.b16 %v980
        %v2507 = vunpack.c.l.b16 %v981
        %v2508 = vunpack.c.h.b16 %v981
        %v2509 = vunpack.c.l.b16 %v982
        %v2510 = vunpack.c.h.b16 %v982
        %v2511 = vunpack.c.l.b16 %v983
        %v2512 = vunpack.c.h.b16 %v983
        %v2513 = vunpack.c.l.b16 %v984
        %v2514 = vunpack.c.h.b16 %v984
        %v2515 = vunpack.c.l.b16 %v985
        %v2516 = vunpack.c.h.b16 %v985
        %v2517 = vunpack.c.l.b16 %v986
        %v2518 = vunpack.c.h.b16 %v986
        %v2519 = vunpack.c.l.b16 %v987
        %v2520 = vunpack.c.h.b16 %v987
        %v2521 = vunpack.c.l.b16 %v988
        %v2522 = vunpack.c.h.b16 %v988
        %v2523 = vunpack.c.l.b16 %v989
        %v2524 = vunpack.c.h.b16 %v989
        %v2525 = vunpack.c.l.b16 %v990
        %v2526 = vunpack.c.h.b16 %v990
        %v2527 = vunpack.c.l.b16 %v991
        %v2528 = vunpack.c.h.b16 %v991
        %v2529 = vunpack.c.l.b16 %v992
        %v2530 = vunpack.c.h.b16 %v992
        %v2531 = vunpack.c.l.b16 %v993
        %v2532 = vunpack.c.h.b16 %v993
        %v2533 = vunpack.c.l.b16 %v994
        %v2534 = vunpack.c.h.b16 %v994
        %v2535 = vunpack.c.l.b16 %v995
        %v2536 = vunpack.c.h.b16 %v995
        %v2537 = vunpack.c.l.b16 %v996
        %v2538 = vunpack.c.h.b16 %v996
        %v2539 = vunpack.c.l.b16 %v997
        %v2540 = vunpack.c.h.b16 %v997
        %v2541 = vunpack.c.l.b16 %v998
        %v2542 = vunpack.c.h.b16 %v998
        %v2543 = vunpack.c.l.b16 %v999
        %v2544 = vunpack.c.h.b16 %v999
        %v2545 = vunpack.c.l.b16 %v1000
        %v2546 = vunpack.c.h.b16 %v1000
        %v2547 = vunpack.c.l.b16 %v1001
        %v2548 = vunpack.c.h.b16 %v1001
        %v2549 = vunpack.c.l.b16 %v1002
        %v2550 = vunpack.c.h.b16 %v1002
        %v2551 = vunpack.c.l.b16 %v1003
        %v2552 = vunpack.c.h.b16 %v1003
        %v2553 = vunpack.c.l.b16 %v1004
        %v2554 = vunpack.c.h.b16 %v1004
        %v2555 = vunpack.c.l.b16 %v1005
        %v2556 = vunpack.c.h.b16 %v1005
        %v2557 = vunpack.c.l.b16 %v1006
        %v2558 = vunpack.c.h.b16 %v1006
        %v2559 = vunpack.c.l.b16 %v1007
        %v2560 = vunpack.c.h.b16 %v1007
        %v2561 = vunpack.c.l.b16 %v1008
        %v2562 = vunpack.c.h.b16 %v1008
        %v2563 = vunpack.c.l.b16 %v1009
        %v2564 = vunpack.c.h.b16 %v1009
        %v2565 = vunpack.c.l.b16 %v1010
        %v2566 = vunpack.c.h.b16 %v1010
        %v2567 = vunpack.c.l.b16 %v1011
        %v2568 = vunpack.c.h.b16 %v1011
        %v2569 = vunpack.c.l.b16 %v1012
        %v2570 = vunpack.c.h.b16 %v1012
        %v2571 = vunpack.c.l.b16 %v1013
        %v2572 = vunpack.c.h.b16 %v1013
        %v2573 = vunpack.c.l.b16 %v1014
        %v2574 = vunpack.c.h.b16 %v1014
        %v2575 = vunpack.c.l.b16 %v1015
        %v2576 = vunpack.c.h.b16 %v1015
        %v2577 = vunpack.c.l.b16 %v1016
        %v2578 = vunpack.c.h.b16 %v1016
        %v2579 = vunpack.c.l.b16 %v1017
        %v2580 = vunpack.c.h.b16 %v1017
        %v2581 = vunpack.c.l.b16 %v1018
        %v2582 = vunpack.c.h.b16 %v1018
        %v2583 = vunpack.c.l.b16 %v1019
        %v2584 = vunpack.c.h.b16 %v1019
        %v2585 = vunpack.c.l.b16 %v1020
        %v2586 = vunpack.c.h.b16 %v1020
        %v2587 = vunpack.c.l.b16 %v1021
        %v2588 = vunpack.c.h.b16 %v1021
        %v2589 = vunpack.c.l.b16 %v1022
        %v2590 = vunpack.c.h.b16 %v1022
        %v2591 = vunpack.c.l.b16 %v1023
        %v2592 = vunpack.c.h.b16 %v1023
        %v2593 = vunpack.c.l.b16 %v1024
        %v2594 = vunpack.c.h.b16 %v1024
        %v2595 = vunpack.c.l.b16 %v1025
        %v2596 = vunpack.c.h.b16 %v1025
        %v2597 = vunpack.c.l.b16 %v1026
        %v2598 = vunpack.c.h.b16 %v1026
        %v2599 = vunpack.c.l.b16 %v1027
        %v2600 = vunpack.c.h.b16 %v1027
        %v2601 = vunpack.c.l.b16 %v1028
        %v2602 = vunpack.c.h.b16 %v1028
        %v2603 = vunpack.c.l.b16 %v1029
        %v2604 = vunpack.c.h.b16 %v1029
        %v2605 = vunpack.c.l.b16 %v1030
        %v2606 = vunpack.c.h.b16 %v1030
        %v2607 = vunpack.c.l.b16 %v1031
        %v2608 = vunpack.c.h.b16 %v1031
        %v2609 = vunpack.c.l.b16 %v1032
        %v2610 = vunpack.c.h.b16 %v1032
        %v2611 = vunpack.c.l.b16 %v1033
        %v2612 = vunpack.c.h.b16 %v1033
        %v2613 = vunpack.c.l.b16 %v1034
        %v2614 = vunpack.c.h.b16 %v1034
        %v2615 = vunpack.c.l.b16 %v1035
        %v2616 = vunpack.c.h.b16 %v1035
        %v2617 = vunpack.c.l.b16 %v1036
        %v2618 = vunpack.c.h.b16 %v1036
        %v2619 = vunpack.c.l.b16 %v1037
        %v2620 = vunpack.c.h.b16 %v1037
        %v2621 = vunpack.c.l.b16 %v1038
        %v2622 = vunpack.c.h.b16 %v1038
        %v2623 = vunpack.c.l.b16 %v1039
        %v2624 = vunpack.c.h.b16 %v1039
        %v2625 = vunpack.c.l.b16 %v1040
        %v2626 = vunpack.c.h.b16 %v1040
        %v2627 = vunpack.c.l.b16 %v1041
        %v2628 = vunpack.c.h.b16 %v1041
        %v2629 = vunpack.c.l.b16 %v1042
        %v2630 = vunpack.c.h.b16 %v1042
        %v2631 = vunpack.c.l.b16 %v1043
        %v2632 = vunpack.c.h.b16 %v1043
        %v2633 = vunpack.c.l.b16 %v1044
        %v2634 = vunpack.c.h.b16 %v1044
        %v2635 = vunpack.c.l.b16 %v1045
        %v2636 = vunpack.c.h.b16 %v1045
        %v2637 = vunpack.c.l.b16 %v1046
        %v2638 = vunpack.c.h.b16 %v1046
        %v2639 = vunpack.c.l.b16 %v1047
        %v2640 = vunpack.c.h.b16 %v1047
        %v2641 = vunpack.c.l.b16 %v1048
        %v2642 = vunpack.c.h.b16 %v1048
        %v2643 = vunpack.c.l.b16 %v1049
        %v2644 = vunpack.c.h.b16 %v1049
        %v2645 = vunpack.c.l.b16 %v1050
        %v2646 = vunpack.c.h.b16 %v1050
        %v2647 = vunpack.c.l.b16 %v1051
        %v2648 = vunpack.c.h.b16 %v1051
        %v2649 = vunpack.c.l.b16 %v1052
        %v2650 = vunpack.c.h.b16 %v1052
        %v2651 = vunpack.c.l.b16 %v1053
        %v2652 = vunpack.c.h.b16 %v1053
        %v2653 = vunpack.c.l.b16 %v1054
        %v2654 = vunpack.c.h.b16 %v1054
        %v2655 = vunpack.c.l.b16 %v1055
        %v2656 = vunpack.c.h.b16 %v1055
        %v2657 = vunpack.c.l.b16 %v1056
        %v2658 = vunpack.c.h.b16 %v1056
        %v2659 = vunpack.c.l.b16 %v1057
        %v2660 = vunpack.c.h.b16 %v1057
        %v2661 = vunpack.c.l.b16 %v1058
        %v2662 = vunpack.c.h.b16 %v1058
        %v2663 = vunpack.c.l.b16 %v1059
        %v2664 = vunpack.c.h.b16 %v1059
        %v2665 = vunpack.c.l.b16 %v1060
        %v2666 = vunpack.c.h.b16 %v1060
        %v2667 = vunpack.c.l.b16 %v1061
        %v2668 = vunpack.c.h.b16 %v1061
        %v2669 = vunpack.c.l.b16 %v1062
        %v2670 = vunpack.c.h.b16 %v1062
        %v2671 = vunpack.c.l.b16 %v1063
        %v2672 = vunpack.c.h.b16 %v1063
        %v2673 = vunpack.c.l.b16 %v1064
        %v2674 = vunpack.c.h.b16 %v1064
        %v2675 = vunpack.c.l.b16 %v1065
        %v2676 = vunpack.c.h.b16 %v1065
        %v2677 = vunpack.c.l.b16 %v1066
        %v2678 = vunpack.c.h.b16 %v1066
        %v2679 = vunpack.c.l.b16 %v1067
        %v2680 = vunpack.c.h.b16 %v1067
        %v2681 = vunpack.c.l.b16 %v1068
        %v2682 = vunpack.c.h.b16 %v1068
        %v2683 = vpack.c.b16 %v1691, %v1659
        %v2684 = vpack.c.b16 %v1692, %v1660
        %v2685 = vpack.c.b16 %v1693, %v1661
        %v2686 = vpack.c.b16 %v1694, %v1662
        %v2687 = vpack.c.b16 %v1695, %v1663
        %v2688 = vpack.c.b16 %v1696, %v1664
        %v2689 = vpack.c.b16 %v1697, %v1665
        %v2690 = vpack.c.b16 %v1698, %v1666
        %v2691 = vpack.c.b16 %v1699, %v1667
        %v2692 = vpack.c.b16 %v1700, %v1668
        %v2693 = vpack.c.b16 %v1701, %v1669
        %v2694 = vpack.c.b16 %v1702, %v1670
        %v2695 = vpack.c.b16 %v1703, %v1671
        %v2696 = vpack.c.b16 %v1704, %v1672
        %v2697 = vpack.c.b16 %v1705, %v1673
        %v2698 = vpack.c.b16 %v1706, %v1674
        %v2699 = vpack.c.b16 %v1707, %v1675
        %v2700 = vpack.c.b16 %v1708, %v1676
        %v2701 = vpack.c.b16 %v1709, %v1677
        %v2702 = vpack.c.b16 %v1710, %v1678
        %v2703 = vpack.c.b16 %v1711, %v1679
        %v2704 = vpack.c.b16 %v1712, %v1680
        %v2705 = vpack.c.b16 %v1713, %v1681
        %v2706 = vpack.c.b16 %v1714, %v1682
        %v2707 = vpack.c.b16 %v1715, %v1683
        %v2708 = vpack.c.b16 %v1716, %v1684
        %v2709 = vpack.c.b16 %v1717, %v1685
        %v2710 = vpack.c.b16 %v1718, %v1686
        %v2711 = vpack.c.b16 %v1719, %v1687
        %v2712 = vpack.c.b16 %v1720, %v1688
        %v2713 = vpack.c.b16 %v1721, %v1689
        %v2714 = vpack.c.b16 %v1722, %v1690
        %v2715 = vpack.c.b16 %v1755, %v1723
        %v2716 = vpack.c.b16 %v1756, %v1724
        %v2717 = vpack.c.b16 %v1757, %v1725
        %v2718 = vpack.c.b16 %v1758, %v1726
        %v2719 = vpack.c.b16 %v1759, %v1727
        %v2720 = vpack.c.b16 %v1760, %v1728
        %v2721 = vpack.c.b16 %v1761, %v1729
        %v2722 = vpack.c.b16 %v1762, %v1730
        %v2723 = vpack.c.b16 %v1763, %v1731
        %v2724 = vpack.c.b16 %v1764, %v1732
        %v2725 = vpack.c.b16 %v1765, %v1733
        %v2726 = vpack.c.b16 %v1766, %v1734
        %v2727 = vpack.c.b16 %v1767, %v1735
        %v2728 = vpack.c.b16 %v1768, %v1736
        %v2729 = vpack.c.b16 %v1769, %v1737
        %v2730 = vpack.c.b16 %v1770, %v1738
        %v2731 = vpack.c.b16 %v1771, %v1739
        %v2732 = vpack.c.b16 %v1772, %v1740
        %v2733 = vpack.c.b16 %v1773, %v1741
        %v2734 = vpack.c.b16 %v1774, %v1742
        %v2735 = vpack.c.b16 %v1775, %v1743
        %v2736 = vpack.c.b16 %v1776, %v1744
        %v2737 = vpack.c.b16 %v1777, %v1745
        %v2738 = vpack.c.b16 %v1778, %v1746
        %v2739 = vpack.c.b16 %v1779, %v1747
        %v2740 = vpack.c.b16 %v1780, %v1748
        %v2741 = vpack.c.b16 %v1781, %v1749
        %v2742 = vpack.c.b16 %v1782, %v1750
        %v2743 = vpack.c.b16 %v1783, %v1751
        %v2744 = vpack.c.b16 %v1784, %v1752
        %v2745 = vpack.c.b16 %v1785, %v1753
        %v2746 = vpack.c.b16 %v1786, %v1754
        %v2747 = vpack.c.b16 %v1819, %v1787
        %v2748 = vpack.c.b16 %v1820, %v1788
        %v2749 = vpack.c.b16 %v1821, %v1789
        %v2750 = vpack.c.b16 %v1822, %v1790
        %v2751 = vpack.c.b16 %v1823, %v1791
        %v2752 = vpack.c.b16 %v1824, %v1792
        %v2753 = vpack.c.b16 %v1825, %v1793
        %v2754 = vpack.c.b16 %v1826, %v1794
        %v2755 = vpack.c.b16 %v1827, %v1795
        %v2756 = vpack.c.b16 %v1828, %v1796
        %v2757 = vpack.c.b16 %v1829, %v1797
        %v2758 = vpack.c.b16 %v1830, %v1798
        %v2759 = vpack.c.b16 %v1831, %v1799
        %v2760 = vpack.c.b16 %v1832, %v1800
        %v2761 = vpack.c.b16 %v1833, %v1801
        %v2762 = vpack.c.b16 %v1834, %v1802
        %v2763 = vpack.c.b16 %v1835, %v1803
        %v2764 = vpack.c.b16 %v1836, %v1804
        %v2765 = vpack.c.b16 %v1837, %v1805
        %v2766 = vpack.c.b16 %v1838, %v1806
        %v2767 = vpack.c.b16 %v1839, %v1807
        %v2768 = vpack.c.b16 %v1840, %v1808
        %v2769 = vpack.c.b16 %v1841, %v1809
        %v2770 = vpack.c.b16 %v1842, %v1810
        %v2771 = vpack.c.b16 %v1843, %v1811
        %v2772 = vpack.c.b16 %v1844, %v1812
        %v2773 = vpack.c.b16 %v1845, %v1813
        %v2774 = vpack.c.b16 %v1846, %v1814
        %v2775 = vpack.c.b16 %v1847, %v1815
        %v2776 = vpack.c.b16 %v1848, %v1816
        %v2777 = vpack.c.b16 %v1849, %v1817
        %v2778 = vpack.c.b16 %v1850, %v1818
        %v2779 = vpack.c.b16 %v1883, %v1851
        %v2780 = vpack.c.b16 %v1884, %v1852
        %v2781 = vpack.c.b16 %v1885, %v1853
        %v2782 = vpack.c.b16 %v1886, %v1854
        %v2783 = vpack.c.b16 %v1887, %v1855
        %v2784 = vpack.c.b16 %v1888, %v1856
        %v2785 = vpack.c.b16 %v1889, %v1857
        %v2786 = vpack.c.b16 %v1890, %v1858
        %v2787 = vpack.c.b16 %v1891, %v1859
        %v2788 = vpack.c.b16 %v1892, %v1860
        %v2789 = vpack.c.b16 %v1893, %v1861
        %v2790 = vpack.c.b16 %v1894, %v1862
        %v2791 = vpack.c.b16 %v1895, %v1863
        %v2792 = vpack.c.b16 %v1896, %v1864
        %v2793 = vpack.c.b16 %v1897, %v1865
        %v2794 = vpack.c.b16 %v1898, %v1866
        %v2795 = vpack.c.b16 %v1899, %v1867
        %v2796 = vpack.c.b16 %v1900, %v1868
        %v2797 = vpack.c.b16 %v1901, %v1869
        %v2798 = vpack.c.b16 %v1902, %v1870
        %v2799 = vpack.c.b16 %v1903, %v1871
        %v2800 = vpack.c.b16 %v1904, %v1872
        %v2801 = vpack.c.b16 %v1905, %v1873
        %v2802 = vpack.c.b16 %v1906, %v1874
        %v2803 = vpack.c.b16 %v1907, %v1875
        %v2804 = vpack.c.b16 %v1908, %v1876
        %v2805 = vpack.c.b16 %v1909, %v1877
        %v2806 = vpack.c.b16 %v1910, %v1878
        %v2807 = vpack.c.b16 %v1911, %v1879
        %v2808 = vpack.c.b16 %v1912, %v1880
        %v2809 = vpack.c.b16 %v1913, %v1881
        %v2810 = vpack.c.b16 %v1914, %v1882
        %v2811 = vpack.c.b16 %v1947, %v1915
        %v2812 = vpack.c.b16 %v1948, %v1916
        %v2813 = vpack.c.b16 %v1949, %v1917
        %v2814 = vpack.c.b16 %v1950, %v1918
        %v2815 = vpack.c.b16 %v1951, %v1919
        %v2816 = vpack.c.b16 %v1952, %v1920
        %v2817 = vpack.c.b16 %v1953, %v1921
        %v2818 = vpack.c.b16 %v1954, %v1922
        %v2819 = vpack.c.b16 %v1955, %v1923
        %v2820 = vpack.c.b16 %v1956, %v1924
        %v2821 = vpack.c.b16 %v1957, %v1925
        %v2822 = vpack.c.b16 %v1958, %v1926
        %v2823 = vpack.c.b16 %v1959, %v1927
        %v2824 = vpack.c.b16 %v1960, %v1928
        %v2825 = vpack.c.b16 %v1961, %v1929
        %v2826 = vpack.c.b16 %v1962, %v1930
        %v2827 = vpack.c.b16 %v1963, %v1931
        %v2828 = vpack.c.b16 %v1964, %v1932
        %v2829 = vpack.c.b16 %v1965, %v1933
        %v2830 = vpack.c.b16 %v1966, %v1934
        %v2831 = vpack.c.b16 %v1967, %v1935
        %v2832 = vpack.c.b16 %v1968, %v1936
        %v2833 = vpack.c.b16 %v1969, %v1937
        %v2834 = vpack.c.b16 %v1970, %v1938
        %v2835 = vpack.c.b16 %v1971, %v1939
        %v2836 = vpack.c.b16 %v1972, %v1940
        %v2837 = vpack.c.b16 %v1973, %v1941
        %v2838 = vpack.c.b16 %v1974, %v1942
        %v2839 = vpack.c.b16 %v1975, %v1943
        %v2840 = vpack.c.b16 %v1976, %v1944
        %v2841 = vpack.c.b16 %v1977, %v1945
        %v2842 = vpack.c.b16 %v1978, %v1946
        %v2843 = vpack.c.b16 %v2011, %v1979
        %v2844 = vpack.c.b16 %v2012, %v1980
        %v2845 = vpack.c.b16 %v2013, %v1981
        %v2846 = vpack.c.b16 %v2014, %v1982
        %v2847 = vpack.c.b16 %v2015, %v1983
        %v2848 = vpack.c.b16 %v2016, %v1984
        %v2849 = vpack.c.b16 %v2017, %v1985
        %v2850 = vpack.c.b16 %v2018, %v1986
        %v2851 = vpack.c.b16 %v2019, %v1987
        %v2852 = vpack.c.b16 %v2020, %v1988
        %v2853 = vpack.c.b16 %v2021, %v1989
        %v2854 = vpack.c.b16 %v2022, %v1990
        %v2855 = vpack.c.b16 %v2023, %v1991
        %v2856 = vpack.c.b16 %v2024, %v1992
        %v2857 = vpack.c.b16 %v2025, %v1993
        %v2858 = vpack.c.b16 %v2026, %v1994
        %v2859 = vpack.c.b16 %v2027, %v1995
        %v2860 = vpack.c.b16 %v2028, %v1996
        %v2861 = vpack.c.b16 %v2029, %v1997
        %v2862 = vpack.c.b16 %v2030, %v1998
        %v2863 = vpack.c.b16 %v2031, %v1999
        %v2864 = vpack.c.b16 %v2032, %v2000
        %v2865 = vpack.c.b16 %v2033, %v2001
        %v2866 = vpack.c.b16 %v2034, %v2002
        %v2867 = vpack.c.b16 %v2035, %v2003
        %v2868 = vpack.c.b16 %v2036, %v2004
        %v2869 = vpack.c.b16 %v2037, %v2005
        %v2870 = vpack.c.b16 %v2038, %v2006
        %v2871 = vpack.c.b16 %v2039, %v2007
        %v2872 = vpack.c.b16 %v2040, %v2008
        %v2873 = vpack.c.b16 %v2041, %v2009
        %v2874 = vpack.c.b16 %v2042, %v2010
        %v2875 = vpack.c.b16 %v2075, %v2043
        %v2876 = vpack.c.b16 %v2076, %v2044
        %v2877 = vpack.c.b16 %v2077, %v2045
        %v2878 = vpack.c.b16 %v2078, %v2046
        %v2879 = vpack.c.b16 %v2079, %v2047
        %v2880 = vpack.c.b16 %v2080, %v2048
        %v2881 = vpack.c.b16 %v2081, %v2049
        %v2882 = vpack.c.b16 %v2082, %v2050
        %v2883 = vpack.c.b16 %v2083, %v2051
        %v2884 = vpack.c.b16 %v2084, %v2052
        %v2885 = vpack.c.b16 %v2085, %v2053
        %v2886 = vpack.c.b16 %v2086, %v2054
        %v2887 = vpack.c.b16 %v2087, %v2055
        %v2888 = vpack.c.b16 %v2088, %v2056
        %v2889 = vpack.c.b16 %v2089, %v2057
        %v2890 = vpack.c.b16 %v2090, %v2058
        %v2891 = vpack.c.b16 %v2091, %v2059
        %v2892 = vpack.c.b16 %v2092, %v2060
        %v2893 = vpack.c.b16 %v2093, %v2061
        %v2894 = vpack.c.b16 %v2094, %v2062
        %v2895 = vpack.c.b16 %v2095, %v2063
        %v2896 = vpack.c.b16 %v2096, %v2064
        %v2897 = vpack.c.b16 %v2097, %v2065
        %v2898 = vpack.c.b16 %v2098, %v2066
        %v2899 = vpack.c.b16 %v2099, %v2067
        %v2900 = vpack.c.b16 %v2100, %v2068
        %v2901 = vpack.c.b16 %v2101, %v2069
        %v2902 = vpack.c.b16 %v2102, %v2070
        %v2903 = vpack.c.b16 %v2103, %v2071
        %v2904 = vpack.c.b16 %v2104, %v2072
        %v2905 = vpack.c.b16 %v2105, %v2073
        %v2906 = vpack.c.b16 %v2106, %v2074
        %v2907 = vpack.c.b16 %v2139, %v2107
        %v2908 = vpack.c.b16 %v2140, %v2108
        %v2909 = vpack.c.b16 %v2141, %v2109
        %v2910 = vpack.c.b16 %v2142, %v2110
        %v2911 = vpack.c.b16 %v2143, %v2111
        %v2912 = vpack.c.b16 %v2144, %v2112
        %v2913 = vpack.c.b16 %v2145, %v2113
        %v2914 = vpack.c.b16 %v2146, %v2114
        %v2915 = vpack.c.b16 %v2147, %v2115
        %v2916 = vpack.c.b16 %v2148, %v2116
        %v2917 = vpack.c.b16 %v2149, %v2117
        %v2918 = vpack.c.b16 %v2150, %v2118
        %v2919 = vpack.c.b16 %v2151, %v2119
        %v2920 = vpack.c.b16 %v2152, %v2120
        %v2921 = vpack.c.b16 %v2153, %v2121
        %v2922 = vpack.c.b16 %v2154, %v2122
        %v2923 = vpack.c.b16 %v2155, %v2123
        %v2924 = vpack.c.b16 %v2156, %v2124
        %v2925 = vpack.c.b16 %v2157, %v2125
        %v2926 = vpack.c.b16 %v2158, %v2126
        %v2927 = vpack.c.b16 %v2159, %v2127
        %v2928 = vpack.c.b16 %v2160, %v2128
        %v2929 = vpack.c.b16 %v2161, %v2129
        %v2930 = vpack.c.b16 %v2162, %v2130
        %v2931 = vpack.c.b16 %v2163, %v2131
        %v2932 = vpack.c.b16 %v2164, %v2132
        %v2933 = vpack.c.b16 %v2165, %v2133
        %v2934 = vpack.c.b16 %v2166, %v2134
        %v2935 = vpack.c.b16 %v2167, %v2135
        %v2936 = vpack.c.b16 %v2168, %v2136
        %v2937 = vpack.c.b16 %v2169, %v2137
        %v2938 = vpack.c.b16 %v2170, %v2138
        %v2939 = vpack.c.b16 %v2203, %v2171
        %v2940 = vpack.c.b16 %v2204, %v2172
        %v2941 = vpack.c.b16 %v2205, %v2173
        %v2942 = vpack.c.b16 %v2206, %v2174
        %v2943 = vpack.c.b16 %v2207, %v2175
        %v2944 = vpack.c.b16 %v2208, %v2176
        %v2945 = vpack.c.b16 %v2209, %v2177
        %v2946 = vpack.c.b16 %v2210, %v2178
        %v2947 = vpack.c.b16 %v2211, %v2179
        %v2948 = vpack.c.b16 %v2212, %v2180
        %v2949 = vpack.c.b16 %v2213, %v2181
        %v2950 = vpack.c.b16 %v2214, %v2182
        %v2951 = vpack.c.b16 %v2215, %v2183
        %v2952 = vpack.c.b16 %v2216, %v2184
        %v2953 = vpack.c.b16 %v2217, %v2185
        %v2954 = vpack.c.b16 %v2218, %v2186
        %v2955 = vpack.c.b16 %v2219, %v2187
        %v2956 = vpack.c.b16 %v2220, %v2188
        %v2957 = vpack.c.b16 %v2221, %v2189
        %v2958 = vpack.c.b16 %v2222, %v2190
        %v2959 = vpack.c.b16 %v2223, %v2191
        %v2960 = vpack.c.b16 %v2224, %v2192
        %v2961 = vpack.c.b16 %v2225, %v2193
        %v2962 = vpack.c.b16 %v2226, %v2194
        %v2963 = vpack.c.b16 %v2227, %v2195
        %v2964 = vpack.c.b16 %v2228, %v2196
        %v2965 = vpack.c.b16 %v2229, %v2197
        %v2966 = vpack.c.b16 %v2230, %v2198
        %v2967 = vpack.c.b16 %v2231, %v2199
        %v2968 = vpack.c.b16 %v2232, %v2200
        %v2969 = vpack.c.b16 %v2233, %v2201
        %v2970 = vpack.c.b16 %v2234, %v2202
        %v2971 = vpack.c.b16 %v2267, %v2235
        %v2972 = vpack.c.b16 %v2268, %v2236
        %v2973 = vpack.c.b16 %v2269, %v2237
        %v2974 = vpack.c.b16 %v2270, %v2238
        %v2975 = vpack.c.b16 %v2271, %v2239
        %v2976 = vpack.c.b16 %v2272, %v2240
        %v2977 = vpack.c.b16 %v2273, %v2241
        %v2978 = vpack.c.b16 %v2274, %v2242
        %v2979 = vpack.c.b16 %v2275, %v2243
        %v2980 = vpack.c.b16 %v2276, %v2244
        %v2981 = vpack.c.b16 %v2277, %v2245
        %v2982 = vpack.c.b16 %v2278, %v2246
        %v2983 = vpack.c.b16 %v2279, %v2247
        %v2984 = vpack.c.b16 %v2280, %v2248
        %v2985 = vpack.c.b16 %v2281, %v2249
        %v2986 = vpack.c.b16 %v2282, %v2250
        %v2987 = vpack.c.b16 %v2283, %v2251
        %v2988 = vpack.c.b16 %v2284, %v2252
        %v2989 = vpack.c.b16 %v2285, %v2253
        %v2990 = vpack.c.b16 %v2286, %v2254
        %v2991 = vpack.c.b16 %v2287, %v2255
        %v2992 = vpack.c.b16 %v2288, %v2256
        %v2993 = vpack.c.b16 %v2289, %v2257
        %v2994 = vpack.c.b16 %v2290, %v2258
        %v2995 = vpack.c.b16 %v2291, %v2259
        %v2996 = vpack.c.b16 %v2292, %v2260
        %v2997 = vpack.c.b16 %v2293, %v2261
        %v2998 = vpack.c.b16 %v2294, %v2262
        %v2999 = vpack.c.b16 %v2295, %v2263
        %v3000 = vpack.c.b16 %v2296, %v2264
        %v3001 = vpack.c.b16 %v2297, %v2265
        %v3002 = vpack.c.b16 %v2298, %v2266
        %v3003 = vpack.c.b16 %v2331, %v2299
        %v3004 = vpack.c.b16 %v2332, %v2300
        %v3005 = vpack.c.b16 %v2333, %v2301
        %v3006 = vpack.c.b16 %v2334, %v2302
        %v3007 = vpack.c.b16 %v2335, %v2303
        %v3008 = vpack.c.b16 %v2336, %v2304
        %v3009 = vpack.c.b16 %v2337, %v2305
        %v3010 = vpack.c.b16 %v2338, %v2306
        %v3011 = vpack.c.b16 %v2339, %v2307
        %v3012 = vpack.c.b16 %v2340, %v2308
        %v3013 = vpack.c.b16 %v2341, %v2309
        %v3014 = vpack.c.b16 %v2342, %v2310
        %v3015 = vpack.c.b16 %v2343, %v2311
        %v3016 = vpack.c.b16 %v2344, %v2312
        %v3017 = vpack.c.b16 %v2345, %v2313
        %v3018 = vpack.c.b16 %v2346, %v2314
        %v3019 = vpack.c.b16 %v2347, %v2315
        %v3020 = vpack.c.b16 %v2348, %v2316
        %v3021 = vpack.c.b16 %v2349, %v2317
        %v3022 = vpack.c.b16 %v2350, %v2318
        %v3023 = vpack.c.b16 %v2351, %v2319
        %v3024 = vpack.c.b16 %v2352, %v2320
        %v3025 = vpack.c.b16 %v2353, %v2321
        %v3026 = vpack.c.b16 %v2354, %v2322
        %v3027 = vpack.c.b16 %v2355, %v2323
        %v3028 = vpack.c.b16 %v2356, %v2324
        %v3029 = vpack.c.b16 %v2357, %v2325
        %v3030 = vpack.c.b16 %v2358, %v2326
        %v3031 = vpack.c.b16 %v2359, %v2327
        %v3032 = vpack.c.b16 %v2360, %v2328
        %v3033 = vpack.c.b16 %v2361, %v2329
        %v3034 = vpack.c.b16 %v2362, %v2330
        %v3035 = vpack.c.b16 %v2395, %v2363
        %v3036 = vpack.c.b16 %v2396, %v2364
        %v3037 = vpack.c.b16 %v2397, %v2365
        %v3038 = vpack.c.b16 %v2398, %v2366
        %v3039 = vpack.c.b16 %v2399, %v2367
        %v3040 = vpack.c.b16 %v2400, %v2368
        %v3041 = vpack.c.b16 %v2401, %v2369
        %v3042 = vpack.c.b16 %v2402, %v2370
        %v3043 = vpack.c.b16 %v2403, %v2371
        %v3044 = vpack.c.b16 %v2404, %v2372
        %v3045 = vpack.c.b16 %v2405, %v2373
        %v3046 = vpack.c.b16 %v2406, %v2374
        %v3047 = vpack.c.b16 %v2407, %v2375
        %v3048 = vpack.c.b16 %v2408, %v2376
        %v3049 = vpack.c.b16 %v2409, %v2377
        %v3050 = vpack.c.b16 %v2410, %v2378
        %v3051 = vpack.c.b16 %v2411, %v2379
        %v3052 = vpack.c.b16 %v2412, %v2380
        %v3053 = vpack.c.b16 %v2413, %v2381
        %v3054 = vpack.c.b16 %v2414, %v2382
        %v3055 = vpack.c.b16 %v2415, %v2383
        %v3056 = vpack.c.b16 %v2416, %v2384
        %v3057 = vpack.c.b16 %v2417, %v2385
        %v3058 = vpack.c.b16 %v2418, %v2386
        %v3059 = vpack.c.b16 %v2419, %v2387
        %v3060 = vpack.c.b16 %v2420, %v2388
        %v3061 = vpack.c.b16 %v2421, %v2389
        %v3062 = vpack.c.b16 %v2422, %v2390
        %v3063 = vpack.c.b16 %v2423, %v2391
        %v3064 = vpack.c.b16 %v2424, %v2392
        %v3065 = vpack.c.b16 %v2425, %v2393
        %v3066 = vpack.c.b16 %v2426, %v2394
        %v3067 = vpack.c.b16 %v2459, %v2427
        %v3068 = vpack.c.b16 %v2460, %v2428
        %v3069 = vpack.c.b16 %v2461, %v2429
        %v3070 = vpack.c.b16 %v2462, %v2430
        %v3071 = vpack.c.b16 %v2463, %v2431
        %v3072 = vpack.c.b16 %v2464, %v2432
        %v3073 = vpack.c.b16 %v2465, %v2433
        %v3074 = vpack.c.b16 %v2466, %v2434
        %v3075 = vpack.c.b16 %v2467, %v2435
        %v3076 = vpack.c.b16 %v2468, %v2436
        %v3077 = vpack.c.b16 %v2469, %v2437
        %v3078 = vpack.c.b16 %v2470, %v2438
        %v3079 = vpack.c.b16 %v2471, %v2439
        %v3080 = vpack.c.b16 %v2472, %v2440
        %v3081 = vpack.c.b16 %v2473, %v2441
        %v3082 = vpack.c.b16 %v2474, %v2442
        %v3083 = vpack.c.b16 %v2475, %v2443
        %v3084 = vpack.c.b16 %v2476, %v2444
        %v3085 = vpack.c.b16 %v2477, %v2445
        %v3086 = vpack.c.b16 %v2478, %v2446
        %v3087 = vpack.c.b16 %v2479, %v2447
        %v3088 = vpack.c.b16 %v2480, %v2448
        %v3089 = vpack.c.b16 %v2481, %v2449
        %v3090 = vpack.c.b16 %v2482, %v2450
        %v3091 = vpack.c.b16 %v2483, %v2451
        %v3092 = vpack.c.b16 %v2484, %v2452
        %v3093 = vpack.c.b16 %v2485, %v2453
        %v3094 = vpack.c.b16 %v2486, %v2454
        %v3095 = vpack.c.b16 %v2487, %v2455
        %v3096 = vpack.c.b16 %v2488, %v2456
        %v3097 = vpack.c.b16 %v2489, %v2457
        %v3098 = vpack.c.b16 %v2490, %v2458
        %v3099 = vpack.c.b16 %v2523, %v2491
        %v3100 = vpack.c.b16 %v2524, %v2492
        %v3101 = vpack.c.b16 %v2525, %v2493
        %v3102 = vpack.c.b16 %v2526, %v2494
        %v3103 = vpack.c.b16 %v2527, %v2495
        %v3104 = vpack.c.b16 %v2528, %v2496
        %v3105 = vpack.c.b16 %v2529, %v2497
        %v3106 = vpack.c.b16 %v2530, %v2498
        %v3107 = vpack.c.b16 %v2531, %v2499
        %v3108 = vpack.c.b16 %v2532, %v2500
        %v3109 = vpack.c.b16 %v2533, %v2501
        %v3110 = vpack.c.b16 %v2534, %v2502
        %v3111 = vpack.c.b16 %v2535, %v2503
        %v3112 = vpack.c.b16 %v2536, %v2504
        %v3113 = vpack.c.b16 %v2537, %v2505
        %v3114 = vpack.c.b16 %v2538, %v2506
        %v3115 = vpack.c.b16 %v2539, %v2507
        %v3116 = vpack.c.b16 %v2540, %v2508
        %v3117 = vpack.c.b16 %v2541, %v2509
        %v3118 = vpack.c.b16 %v2542, %v2510
        %v3119 = vpack.c.b16 %v2543, %v2511
        %v3120 = vpack.c.b16 %v2544, %v2512
        %v3121 = vpack.c.b16 %v2545, %v2513
        %v3122 = vpack.c.b16 %v2546, %v2514
        %v3123 = vpack.c.b16 %v2547, %v2515
        %v3124 = vpack.c.b16 %v2548, %v2516
        %v3125 = vpack.c.b16 %v2549, %v2517
        %v3126 = vpack.c.b16 %v2550, %v2518
        %v3127 = vpack.c.b16 %v2551, %v2519
        %v3128 = vpack.c.b16 %v2552, %v2520
        %v3129 = vpack.c.b16 %v2553, %v2521
        %v3130 = vpack.c.b16 %v2554, %v2522
        %v3131 = vpack.c.b16 %v2587, %v2555
        %v3132 = vpack.c.b16 %v2588, %v2556
        %v3133 = vpack.c.b16 %v2589, %v2557
        %v3134 = vpack.c.b16 %v2590, %v2558
        %v3135 = vpack.c.b16 %v2591, %v2559
        %v3136 = vpack.c.b16 %v2592, %v2560
        %v3137 = vpack.c.b16 %v2593, %v2561
        %v3138 = vpack.c.b16 %v2594, %v2562
        %v3139 = vpack.c.b16 %v2595, %v2563
        %v3140 = vpack.c.b16 %v2596, %v2564
        %v3141 = vpack.c.b16 %v2597, %v2565
        %v3142 = vpack.c.b16 %v2598, %v2566
        %v3143 = vpack.c.b16 %v2599, %v2567
        %v3144 = vpack.c.b16 %v2600, %v2568
        %v3145 = vpack.c.b16 %v2601, %v2569
        %v3146 = vpack.c.b16 %v2602, %v2570
        %v3147 = vpack.c.b16 %v2603, %v2571
        %v3148 = vpack.c.b16 %v2604, %v2572
        %v3149 = vpack.c.b16 %v2605, %v2573
        %v3150 = vpack.c.b16 %v2606, %v2574
        %v3151 = vpack.c.b16 %v2607, %v2575
        %v3152 = vpack.c.b16 %v2608, %v2576
        %v3153 = vpack.c.b16 %v2609, %v2577
        %v3154 = vpack.c.b16 %v2610, %v2578
        %v3155 = vpack.c.b16 %v2611, %v2579
        %v3156 = vpack.c.b16 %v2612, %v2580
        %v3157 = vpack.c.b16 %v2613, %v2581
        %v3158 = vpack.c.b16 %v2614, %v2582
        %v3159 = vpack.c.b16 %v2615, %v2583
        %v3160 = vpack.c.b16 %v2616, %v2584
        %v3161 = vpack.c.b16 %v2617, %v2585
        %v3162 = vpack.c.b16 %v2618, %v2586
        %v3163 = vpack.c.b16 %v2651, %v2619
        %v3164 = vpack.c.b16 %v2652, %v2620
        %v3165 = vpack.c.b16 %v2653, %v2621
        %v3166 = vpack.c.b16 %v2654, %v2622
        %v3167 = vpack.c.b16 %v2655, %v2623
        %v3168 = vpack.c.b16 %v2656, %v2624
        %v3169 = vpack.c.b16 %v2657, %v2625
        %v3170 = vpack.c.b16 %v2658, %v2626
        %v3171 = vpack.c.b16 %v2659, %v2627
        %v3172 = vpack.c.b16 %v2660, %v2628
        %v3173 = vpack.c.b16 %v2661, %v2629
        %v3174 = vpack.c.b16 %v2662, %v2630
        %v3175 = vpack.c.b16 %v2663, %v2631
        %v3176 = vpack.c.b16 %v2664, %v2632
        %v3177 = vpack.c.b16 %v2665, %v2633
        %v3178 = vpack.c.b16 %v2666, %v2634
        %v3179 = vpack.c.b16 %v2667, %v2635
        %v3180 = vpack.c.b16 %v2668, %v2636
        %v3181 = vpack.c.b16 %v2669, %v2637
        %v3182 = vpack.c.b16 %v2670, %v2638
        %v3183 = vpack.c.b16 %v2671, %v2639
        %v3184 = vpack.c.b16 %v2672, %v2640
        %v3185 = vpack.c.b16 %v2673, %v2641
        %v3186 = vpack.c.b16 %v2674, %v2642
        %v3187 = vpack.c.b16 %v2675, %v2643
        %v3188 = vpack.c.b16 %v2676, %v2644
        %v3189 = vpack.c.b16 %v2677, %v2645
        %v3190 = vpack.c.b16 %v2678, %v2646
        %v3191 = vpack.c.b16 %v2679, %v2647
        %v3192 = vpack.c.b16 %v2680, %v2648
        %v3193 = vpack.c.b16 %v2681, %v2649
        %v3194 = vpack.c.b16 %v2682, %v2650
        %3707 = vmatpush.bf16.msra.mxu0 %v2907
        %3708 = vmatpush.bf16.msra.mxu0 %v2875
        %3709 = vmatpush.bf16.msra.mxu0 %v2843
        %3710 = vmatpush.bf16.msra.mxu0 %v2811
        %3711 = vmatpush.bf16.msra.mxu0 %v2779
        %3712 = vmatpush.bf16.msra.mxu0 %v2747
        %3713 = vmatpush.bf16.msra.mxu0 %v2715
        %3714 = vmatpush.bf16.msra.mxu0 %v2683
        %3715 = vmatmul.bf16.gmra.mxu0 %v1143
        %v3716 = vpop.f32.mrf.mxu0
        %v3717 = vadd.f32 %v1077, %v3716
        %v3718 = vpop.f32.mrf.mxu0
        %3719 = vdwg.mxu0
        %3720 = vmatpush.bf16.msra.mxu0 %v3163
        %3721 = vmatpush.bf16.msra.mxu0 %v3131
        %3722 = vmatpush.bf16.msra.mxu0 %v3099
        %3723 = vmatpush.bf16.msra.mxu0 %v3067
        %3724 = vmatpush.bf16.msra.mxu0 %v3035
        %3725 = vmatpush.bf16.msra.mxu0 %v3003
        %3726 = vmatpush.bf16.msra.mxu0 %v2971
        %3727 = vmatpush.bf16.msra.mxu0 %v2939
        %3728 = vmatmul.bf16.gmra.mxu0 %v1144
        %v3729 = vpop.f32.mrf.mxu0
        %v3730 = vadd.f32 %v3717, %v3729
        %v3731 = vpop.f32.mrf.mxu0
        %3732 = vdwg.mxu0
        %3733 = vmatpush.bf16.msra.mxu0 %v2908
        %3734 = vmatpush.bf16.msra.mxu0 %v2876
        %3735 = vmatpush.bf16.msra.mxu0 %v2844
        %3736 = vmatpush.bf16.msra.mxu0 %v2812
        %3737 = vmatpush.bf16.msra.mxu0 %v2780
        %3738 = vmatpush.bf16.msra.mxu0 %v2748
        %3739 = vmatpush.bf16.msra.mxu0 %v2716
        %3740 = vmatpush.bf16.msra.mxu0 %v2684
        %3741 = vmatmul.bf16.gmra.mxu0 %v1143
        %v3742 = vpop.f32.mrf.mxu0
        %v3743 = vadd.f32 %v1078, %v3742
        %v3744 = vpop.f32.mrf.mxu0
        %3745 = vdwg.mxu0
        %3746 = vmatpush.bf16.msra.mxu0 %v3164
        %3747 = vmatpush.bf16.msra.mxu0 %v3132
        %3748 = vmatpush.bf16.msra.mxu0 %v3100
        %3749 = vmatpush.bf16.msra.mxu0 %v3068
        %3750 = vmatpush.bf16.msra.mxu0 %v3036
        %3751 = vmatpush.bf16.msra.mxu0 %v3004
        %3752 = vmatpush.bf16.msra.mxu0 %v2972
        %3753 = vmatpush.bf16.msra.mxu0 %v2940
        %3754 = vmatmul.bf16.gmra.mxu0 %v1144
        %v3755 = vpop.f32.mrf.mxu0
        %v3756 = vadd.f32 %v3743, %v3755
        %v3757 = vpop.f32.mrf.mxu0
        %3758 = vdwg.mxu0
        %3759 = vmatpush.bf16.msra.mxu0 %v2909
        %3760 = vmatpush.bf16.msra.mxu0 %v2877
        %3761 = vmatpush.bf16.msra.mxu0 %v2845
        %3762 = vmatpush.bf16.msra.mxu0 %v2813
        %3763 = vmatpush.bf16.msra.mxu0 %v2781
        %3764 = vmatpush.bf16.msra.mxu0 %v2749
        %3765 = vmatpush.bf16.msra.mxu0 %v2717
        %3766 = vmatpush.bf16.msra.mxu0 %v2685
        %3767 = vmatmul.bf16.gmra.mxu0 %v1143
        %v3768 = vpop.f32.mrf.mxu0
        %v3769 = vadd.f32 %v1079, %v3768
        %v3770 = vpop.f32.mrf.mxu0
        %3771 = vdwg.mxu0
        %3772 = vmatpush.bf16.msra.mxu0 %v3165
        %3773 = vmatpush.bf16.msra.mxu0 %v3133
        %3774 = vmatpush.bf16.msra.mxu0 %v3101
        %3775 = vmatpush.bf16.msra.mxu0 %v3069
        %3776 = vmatpush.bf16.msra.mxu0 %v3037
        %3777 = vmatpush.bf16.msra.mxu0 %v3005
        %3778 = vmatpush.bf16.msra.mxu0 %v2973
        %3779 = vmatpush.bf16.msra.mxu0 %v2941
        %3780 = vmatmul.bf16.gmra.mxu0 %v1144
        %v3781 = vpop.f32.mrf.mxu0
        %v3782 = vadd.f32 %v3769, %v3781
        %v3783 = vpop.f32.mrf.mxu0
        %3784 = vdwg.mxu0
        %3785 = vmatpush.bf16.msra.mxu0 %v2910
        %3786 = vmatpush.bf16.msra.mxu0 %v2878
        %3787 = vmatpush.bf16.msra.mxu0 %v2846
        %3788 = vmatpush.bf16.msra.mxu0 %v2814
        %3789 = vmatpush.bf16.msra.mxu0 %v2782
        %3790 = vmatpush.bf16.msra.mxu0 %v2750
        %3791 = vmatpush.bf16.msra.mxu0 %v2718
        %3792 = vmatpush.bf16.msra.mxu0 %v2686
        %3793 = vmatmul.bf16.gmra.mxu0 %v1143
        %v3794 = vpop.f32.mrf.mxu0
        %v3795 = vadd.f32 %v1080, %v3794
        %v3796 = vpop.f32.mrf.mxu0
        %3797 = vdwg.mxu0
        %3798 = vmatpush.bf16.msra.mxu0 %v3166
        %3799 = vmatpush.bf16.msra.mxu0 %v3134
        %3800 = vmatpush.bf16.msra.mxu0 %v3102
        %3801 = vmatpush.bf16.msra.mxu0 %v3070
        %3802 = vmatpush.bf16.msra.mxu0 %v3038
        %3803 = vmatpush.bf16.msra.mxu0 %v3006
        %3804 = vmatpush.bf16.msra.mxu0 %v2974
        %3805 = vmatpush.bf16.msra.mxu0 %v2942
        %3806 = vmatmul.bf16.gmra.mxu0 %v1144
        %v3807 = vpop.f32.mrf.mxu0
        %v3808 = vadd.f32 %v3795, %v3807
        %v3809 = vpop.f32.mrf.mxu0
        %3810 = vdwg.mxu0
        %3811 = vmatpush.bf16.msra.mxu0 %v2911
        %3812 = vmatpush.bf16.msra.mxu0 %v2879
        %3813 = vmatpush.bf16.msra.mxu0 %v2847
        %3814 = vmatpush.bf16.msra.mxu0 %v2815
        %3815 = vmatpush.bf16.msra.mxu0 %v2783
        %3816 = vmatpush.bf16.msra.mxu0 %v2751
        %3817 = vmatpush.bf16.msra.mxu0 %v2719
        %3818 = vmatpush.bf16.msra.mxu0 %v2687
        %3819 = vmatmul.bf16.gmra.mxu0 %v1143
        %v3820 = vpop.f32.mrf.mxu0
        %v3821 = vadd.f32 %v1081, %v3820
        %v3822 = vpop.f32.mrf.mxu0
        %3823 = vdwg.mxu0
        %3824 = vmatpush.bf16.msra.mxu0 %v3167
        %3825 = vmatpush.bf16.msra.mxu0 %v3135
        %3826 = vmatpush.bf16.msra.mxu0 %v3103
        %3827 = vmatpush.bf16.msra.mxu0 %v3071
        %3828 = vmatpush.bf16.msra.mxu0 %v3039
        %3829 = vmatpush.bf16.msra.mxu0 %v3007
        %3830 = vmatpush.bf16.msra.mxu0 %v2975
        %3831 = vmatpush.bf16.msra.mxu0 %v2943
        %3832 = vmatmul.bf16.gmra.mxu0 %v1144
        %v3833 = vpop.f32.mrf.mxu0
        %v3834 = vadd.f32 %v3821, %v3833
        %v3835 = vpop.f32.mrf.mxu0
        %3836 = vdwg.mxu0
        %3837 = vmatpush.bf16.msra.mxu0 %v2912
        %3838 = vmatpush.bf16.msra.mxu0 %v2880
        %3839 = vmatpush.bf16.msra.mxu0 %v2848
        %3840 = vmatpush.bf16.msra.mxu0 %v2816
        %3841 = vmatpush.bf16.msra.mxu0 %v2784
        %3842 = vmatpush.bf16.msra.mxu0 %v2752
        %3843 = vmatpush.bf16.msra.mxu0 %v2720
        %3844 = vmatpush.bf16.msra.mxu0 %v2688
        %3845 = vmatmul.bf16.gmra.mxu0 %v1143
        %v3846 = vpop.f32.mrf.mxu0
        %v3847 = vadd.f32 %v1082, %v3846
        %v3848 = vpop.f32.mrf.mxu0
        %3849 = vdwg.mxu0
        %3850 = vmatpush.bf16.msra.mxu0 %v3168
        %3851 = vmatpush.bf16.msra.mxu0 %v3136
        %3852 = vmatpush.bf16.msra.mxu0 %v3104
        %3853 = vmatpush.bf16.msra.mxu0 %v3072
        %3854 = vmatpush.bf16.msra.mxu0 %v3040
        %3855 = vmatpush.bf16.msra.mxu0 %v3008
        %3856 = vmatpush.bf16.msra.mxu0 %v2976
        %3857 = vmatpush.bf16.msra.mxu0 %v2944
        %3858 = vmatmul.bf16.gmra.mxu0 %v1144
        %v3859 = vpop.f32.mrf.mxu0
        %v3860 = vadd.f32 %v3847, %v3859
        %v3861 = vpop.f32.mrf.mxu0
        %3862 = vdwg.mxu0
        %3863 = vmatpush.bf16.msra.mxu0 %v2913
        %3864 = vmatpush.bf16.msra.mxu0 %v2881
        %3865 = vmatpush.bf16.msra.mxu0 %v2849
        %3866 = vmatpush.bf16.msra.mxu0 %v2817
        %3867 = vmatpush.bf16.msra.mxu0 %v2785
        %3868 = vmatpush.bf16.msra.mxu0 %v2753
        %3869 = vmatpush.bf16.msra.mxu0 %v2721
        %3870 = vmatpush.bf16.msra.mxu0 %v2689
        %3871 = vmatmul.bf16.gmra.mxu0 %v1143
        %v3872 = vpop.f32.mrf.mxu0
        %v3873 = vadd.f32 %v1083, %v3872
        %v3874 = vpop.f32.mrf.mxu0
        %3875 = vdwg.mxu0
        %3876 = vmatpush.bf16.msra.mxu0 %v3169
        %3877 = vmatpush.bf16.msra.mxu0 %v3137
        %3878 = vmatpush.bf16.msra.mxu0 %v3105
        %3879 = vmatpush.bf16.msra.mxu0 %v3073
        %3880 = vmatpush.bf16.msra.mxu0 %v3041
        %3881 = vmatpush.bf16.msra.mxu0 %v3009
        %3882 = vmatpush.bf16.msra.mxu0 %v2977
        %3883 = vmatpush.bf16.msra.mxu0 %v2945
        %3884 = vmatmul.bf16.gmra.mxu0 %v1144
        %v3885 = vpop.f32.mrf.mxu0
        %v3886 = vadd.f32 %v3873, %v3885
        %v3887 = vpop.f32.mrf.mxu0
        %3888 = vdwg.mxu0
        %3889 = vmatpush.bf16.msra.mxu0 %v2914
        %3890 = vmatpush.bf16.msra.mxu0 %v2882
        %3891 = vmatpush.bf16.msra.mxu0 %v2850
        %3892 = vmatpush.bf16.msra.mxu0 %v2818
        %3893 = vmatpush.bf16.msra.mxu0 %v2786
        %3894 = vmatpush.bf16.msra.mxu0 %v2754
        %3895 = vmatpush.bf16.msra.mxu0 %v2722
        %3896 = vmatpush.bf16.msra.mxu0 %v2690
        %3897 = vmatmul.bf16.gmra.mxu0 %v1143
        %v3898 = vpop.f32.mrf.mxu0
        %v3899 = vadd.f32 %v1084, %v3898
        %v3900 = vpop.f32.mrf.mxu0
        %3901 = vdwg.mxu0
        %3902 = vmatpush.bf16.msra.mxu0 %v3170
        %3903 = vmatpush.bf16.msra.mxu0 %v3138
        %3904 = vmatpush.bf16.msra.mxu0 %v3106
        %3905 = vmatpush.bf16.msra.mxu0 %v3074
        %3906 = vmatpush.bf16.msra.mxu0 %v3042
        %3907 = vmatpush.bf16.msra.mxu0 %v3010
        %3908 = vmatpush.bf16.msra.mxu0 %v2978
        %3909 = vmatpush.bf16.msra.mxu0 %v2946
        %3910 = vmatmul.bf16.gmra.mxu0 %v1144
        %v3911 = vpop.f32.mrf.mxu0
        %v3912 = vadd.f32 %v3899, %v3911
        %v3913 = vpop.f32.mrf.mxu0
        %3914 = vdwg.mxu0
        %3915 = vmatpush.bf16.msra.mxu0 %v2915
        %3916 = vmatpush.bf16.msra.mxu0 %v2883
        %3917 = vmatpush.bf16.msra.mxu0 %v2851
        %3918 = vmatpush.bf16.msra.mxu0 %v2819
        %3919 = vmatpush.bf16.msra.mxu0 %v2787
        %3920 = vmatpush.bf16.msra.mxu0 %v2755
        %3921 = vmatpush.bf16.msra.mxu0 %v2723
        %3922 = vmatpush.bf16.msra.mxu0 %v2691
        %3923 = vmatmul.bf16.gmra.mxu0 %v1143
        %v3924 = vpop.f32.mrf.mxu0
        %v3925 = vadd.f32 %v1085, %v3924
        %v3926 = vpop.f32.mrf.mxu0
        %3927 = vdwg.mxu0
        %3928 = vmatpush.bf16.msra.mxu0 %v3171
        %3929 = vmatpush.bf16.msra.mxu0 %v3139
        %3930 = vmatpush.bf16.msra.mxu0 %v3107
        %3931 = vmatpush.bf16.msra.mxu0 %v3075
        %3932 = vmatpush.bf16.msra.mxu0 %v3043
        %3933 = vmatpush.bf16.msra.mxu0 %v3011
        %3934 = vmatpush.bf16.msra.mxu0 %v2979
        %3935 = vmatpush.bf16.msra.mxu0 %v2947
        %3936 = vmatmul.bf16.gmra.mxu0 %v1144
        %v3937 = vpop.f32.mrf.mxu0
        %v3938 = vadd.f32 %v3925, %v3937
        %v3939 = vpop.f32.mrf.mxu0
        %3940 = vdwg.mxu0
        %3941 = vmatpush.bf16.msra.mxu0 %v2916
        %3942 = vmatpush.bf16.msra.mxu0 %v2884
        %3943 = vmatpush.bf16.msra.mxu0 %v2852
        %3944 = vmatpush.bf16.msra.mxu0 %v2820
        %3945 = vmatpush.bf16.msra.mxu0 %v2788
        %3946 = vmatpush.bf16.msra.mxu0 %v2756
        %3947 = vmatpush.bf16.msra.mxu0 %v2724
        %3948 = vmatpush.bf16.msra.mxu0 %v2692
        %3949 = vmatmul.bf16.gmra.mxu0 %v1143
        %v3950 = vpop.f32.mrf.mxu0
        %v3951 = vadd.f32 %v1086, %v3950
        %v3952 = vpop.f32.mrf.mxu0
        %3953 = vdwg.mxu0
        %3954 = vmatpush.bf16.msra.mxu0 %v3172
        %3955 = vmatpush.bf16.msra.mxu0 %v3140
        %3956 = vmatpush.bf16.msra.mxu0 %v3108
        %3957 = vmatpush.bf16.msra.mxu0 %v3076
        %3958 = vmatpush.bf16.msra.mxu0 %v3044
        %3959 = vmatpush.bf16.msra.mxu0 %v3012
        %3960 = vmatpush.bf16.msra.mxu0 %v2980
        %3961 = vmatpush.bf16.msra.mxu0 %v2948
        %3962 = vmatmul.bf16.gmra.mxu0 %v1144
        %v3963 = vpop.f32.mrf.mxu0
        %v3964 = vadd.f32 %v3951, %v3963
        %v3965 = vpop.f32.mrf.mxu0
        %3966 = vdwg.mxu0
        %3967 = vmatpush.bf16.msra.mxu0 %v2917
        %3968 = vmatpush.bf16.msra.mxu0 %v2885
        %3969 = vmatpush.bf16.msra.mxu0 %v2853
        %3970 = vmatpush.bf16.msra.mxu0 %v2821
        %3971 = vmatpush.bf16.msra.mxu0 %v2789
        %3972 = vmatpush.bf16.msra.mxu0 %v2757
        %3973 = vmatpush.bf16.msra.mxu0 %v2725
        %3974 = vmatpush.bf16.msra.mxu0 %v2693
        %3975 = vmatmul.bf16.gmra.mxu0 %v1143
        %v3976 = vpop.f32.mrf.mxu0
        %v3977 = vadd.f32 %v1087, %v3976
        %v3978 = vpop.f32.mrf.mxu0
        %3979 = vdwg.mxu0
        %3980 = vmatpush.bf16.msra.mxu0 %v3173
        %3981 = vmatpush.bf16.msra.mxu0 %v3141
        %3982 = vmatpush.bf16.msra.mxu0 %v3109
        %3983 = vmatpush.bf16.msra.mxu0 %v3077
        %3984 = vmatpush.bf16.msra.mxu0 %v3045
        %3985 = vmatpush.bf16.msra.mxu0 %v3013
        %3986 = vmatpush.bf16.msra.mxu0 %v2981
        %3987 = vmatpush.bf16.msra.mxu0 %v2949
        %3988 = vmatmul.bf16.gmra.mxu0 %v1144
        %v3989 = vpop.f32.mrf.mxu0
        %v3990 = vadd.f32 %v3977, %v3989
        %v3991 = vpop.f32.mrf.mxu0
        %3992 = vdwg.mxu0
        %3993 = vmatpush.bf16.msra.mxu0 %v2918
        %3994 = vmatpush.bf16.msra.mxu0 %v2886
        %3995 = vmatpush.bf16.msra.mxu0 %v2854
        %3996 = vmatpush.bf16.msra.mxu0 %v2822
        %3997 = vmatpush.bf16.msra.mxu0 %v2790
        %3998 = vmatpush.bf16.msra.mxu0 %v2758
        %3999 = vmatpush.bf16.msra.mxu0 %v2726
        %4000 = vmatpush.bf16.msra.mxu0 %v2694
        %4001 = vmatmul.bf16.gmra.mxu0 %v1143
        %v4002 = vpop.f32.mrf.mxu0
        %v4003 = vadd.f32 %v1088, %v4002
        %v4004 = vpop.f32.mrf.mxu0
        %4005 = vdwg.mxu0
        %4006 = vmatpush.bf16.msra.mxu0 %v3174
        %4007 = vmatpush.bf16.msra.mxu0 %v3142
        %4008 = vmatpush.bf16.msra.mxu0 %v3110
        %4009 = vmatpush.bf16.msra.mxu0 %v3078
        %4010 = vmatpush.bf16.msra.mxu0 %v3046
        %4011 = vmatpush.bf16.msra.mxu0 %v3014
        %4012 = vmatpush.bf16.msra.mxu0 %v2982
        %4013 = vmatpush.bf16.msra.mxu0 %v2950
        %4014 = vmatmul.bf16.gmra.mxu0 %v1144
        %v4015 = vpop.f32.mrf.mxu0
        %v4016 = vadd.f32 %v4003, %v4015
        %v4017 = vpop.f32.mrf.mxu0
        %4018 = vdwg.mxu0
        %4019 = vmatpush.bf16.msra.mxu0 %v2919
        %4020 = vmatpush.bf16.msra.mxu0 %v2887
        %4021 = vmatpush.bf16.msra.mxu0 %v2855
        %4022 = vmatpush.bf16.msra.mxu0 %v2823
        %4023 = vmatpush.bf16.msra.mxu0 %v2791
        %4024 = vmatpush.bf16.msra.mxu0 %v2759
        %4025 = vmatpush.bf16.msra.mxu0 %v2727
        %4026 = vmatpush.bf16.msra.mxu0 %v2695
        %4027 = vmatmul.bf16.gmra.mxu0 %v1143
        %v4028 = vpop.f32.mrf.mxu0
        %v4029 = vadd.f32 %v1089, %v4028
        %v4030 = vpop.f32.mrf.mxu0
        %4031 = vdwg.mxu0
        %4032 = vmatpush.bf16.msra.mxu0 %v3175
        %4033 = vmatpush.bf16.msra.mxu0 %v3143
        %4034 = vmatpush.bf16.msra.mxu0 %v3111
        %4035 = vmatpush.bf16.msra.mxu0 %v3079
        %4036 = vmatpush.bf16.msra.mxu0 %v3047
        %4037 = vmatpush.bf16.msra.mxu0 %v3015
        %4038 = vmatpush.bf16.msra.mxu0 %v2983
        %4039 = vmatpush.bf16.msra.mxu0 %v2951
        %4040 = vmatmul.bf16.gmra.mxu0 %v1144
        %v4041 = vpop.f32.mrf.mxu0
        %v4042 = vadd.f32 %v4029, %v4041
        %v4043 = vpop.f32.mrf.mxu0
        %4044 = vdwg.mxu0
        %4045 = vmatpush.bf16.msra.mxu0 %v2920
        %4046 = vmatpush.bf16.msra.mxu0 %v2888
        %4047 = vmatpush.bf16.msra.mxu0 %v2856
        %4048 = vmatpush.bf16.msra.mxu0 %v2824
        %4049 = vmatpush.bf16.msra.mxu0 %v2792
        %4050 = vmatpush.bf16.msra.mxu0 %v2760
        %4051 = vmatpush.bf16.msra.mxu0 %v2728
        %4052 = vmatpush.bf16.msra.mxu0 %v2696
        %4053 = vmatmul.bf16.gmra.mxu0 %v1143
        %v4054 = vpop.f32.mrf.mxu0
        %v4055 = vadd.f32 %v1090, %v4054
        %v4056 = vpop.f32.mrf.mxu0
        %4057 = vdwg.mxu0
        %4058 = vmatpush.bf16.msra.mxu0 %v3176
        %4059 = vmatpush.bf16.msra.mxu0 %v3144
        %4060 = vmatpush.bf16.msra.mxu0 %v3112
        %4061 = vmatpush.bf16.msra.mxu0 %v3080
        %4062 = vmatpush.bf16.msra.mxu0 %v3048
        %4063 = vmatpush.bf16.msra.mxu0 %v3016
        %4064 = vmatpush.bf16.msra.mxu0 %v2984
        %4065 = vmatpush.bf16.msra.mxu0 %v2952
        %4066 = vmatmul.bf16.gmra.mxu0 %v1144
        %v4067 = vpop.f32.mrf.mxu0
        %v4068 = vadd.f32 %v4055, %v4067
        %v4069 = vpop.f32.mrf.mxu0
        %4070 = vdwg.mxu0
        %4071 = vmatpush.bf16.msra.mxu0 %v2921
        %4072 = vmatpush.bf16.msra.mxu0 %v2889
        %4073 = vmatpush.bf16.msra.mxu0 %v2857
        %4074 = vmatpush.bf16.msra.mxu0 %v2825
        %4075 = vmatpush.bf16.msra.mxu0 %v2793
        %4076 = vmatpush.bf16.msra.mxu0 %v2761
        %4077 = vmatpush.bf16.msra.mxu0 %v2729
        %4078 = vmatpush.bf16.msra.mxu0 %v2697
        %4079 = vmatmul.bf16.gmra.mxu0 %v1143
        %v4080 = vpop.f32.mrf.mxu0
        %v4081 = vadd.f32 %v1091, %v4080
        %v4082 = vpop.f32.mrf.mxu0
        %4083 = vdwg.mxu0
        %4084 = vmatpush.bf16.msra.mxu0 %v3177
        %4085 = vmatpush.bf16.msra.mxu0 %v3145
        %4086 = vmatpush.bf16.msra.mxu0 %v3113
        %4087 = vmatpush.bf16.msra.mxu0 %v3081
        %4088 = vmatpush.bf16.msra.mxu0 %v3049
        %4089 = vmatpush.bf16.msra.mxu0 %v3017
        %4090 = vmatpush.bf16.msra.mxu0 %v2985
        %4091 = vmatpush.bf16.msra.mxu0 %v2953
        %4092 = vmatmul.bf16.gmra.mxu0 %v1144
        %v4093 = vpop.f32.mrf.mxu0
        %v4094 = vadd.f32 %v4081, %v4093
        %v4095 = vpop.f32.mrf.mxu0
        %4096 = vdwg.mxu0
        %4097 = vmatpush.bf16.msra.mxu0 %v2922
        %4098 = vmatpush.bf16.msra.mxu0 %v2890
        %4099 = vmatpush.bf16.msra.mxu0 %v2858
        %4100 = vmatpush.bf16.msra.mxu0 %v2826
        %4101 = vmatpush.bf16.msra.mxu0 %v2794
        %4102 = vmatpush.bf16.msra.mxu0 %v2762
        %4103 = vmatpush.bf16.msra.mxu0 %v2730
        %4104 = vmatpush.bf16.msra.mxu0 %v2698
        %4105 = vmatmul.bf16.gmra.mxu0 %v1143
        %v4106 = vpop.f32.mrf.mxu0
        %v4107 = vadd.f32 %v1092, %v4106
        %v4108 = vpop.f32.mrf.mxu0
        %4109 = vdwg.mxu0
        %4110 = vmatpush.bf16.msra.mxu0 %v3178
        %4111 = vmatpush.bf16.msra.mxu0 %v3146
        %4112 = vmatpush.bf16.msra.mxu0 %v3114
        %4113 = vmatpush.bf16.msra.mxu0 %v3082
        %4114 = vmatpush.bf16.msra.mxu0 %v3050
        %4115 = vmatpush.bf16.msra.mxu0 %v3018
        %4116 = vmatpush.bf16.msra.mxu0 %v2986
        %4117 = vmatpush.bf16.msra.mxu0 %v2954
        %4118 = vmatmul.bf16.gmra.mxu0 %v1144
        %v4119 = vpop.f32.mrf.mxu0
        %v4120 = vadd.f32 %v4107, %v4119
        %v4121 = vpop.f32.mrf.mxu0
        %4122 = vdwg.mxu0
        %4123 = vmatpush.bf16.msra.mxu0 %v2923
        %4124 = vmatpush.bf16.msra.mxu0 %v2891
        %4125 = vmatpush.bf16.msra.mxu0 %v2859
        %4126 = vmatpush.bf16.msra.mxu0 %v2827
        %4127 = vmatpush.bf16.msra.mxu0 %v2795
        %4128 = vmatpush.bf16.msra.mxu0 %v2763
        %4129 = vmatpush.bf16.msra.mxu0 %v2731
        %4130 = vmatpush.bf16.msra.mxu0 %v2699
        %4131 = vmatmul.bf16.gmra.mxu0 %v1143
        %v4132 = vpop.f32.mrf.mxu0
        %v4133 = vadd.f32 %v1093, %v4132
        %v4134 = vpop.f32.mrf.mxu0
        %4135 = vdwg.mxu0
        %4136 = vmatpush.bf16.msra.mxu0 %v3179
        %4137 = vmatpush.bf16.msra.mxu0 %v3147
        %4138 = vmatpush.bf16.msra.mxu0 %v3115
        %4139 = vmatpush.bf16.msra.mxu0 %v3083
        %4140 = vmatpush.bf16.msra.mxu0 %v3051
        %4141 = vmatpush.bf16.msra.mxu0 %v3019
        %4142 = vmatpush.bf16.msra.mxu0 %v2987
        %4143 = vmatpush.bf16.msra.mxu0 %v2955
        %4144 = vmatmul.bf16.gmra.mxu0 %v1144
        %v4145 = vpop.f32.mrf.mxu0
        %v4146 = vadd.f32 %v4133, %v4145
        %v4147 = vpop.f32.mrf.mxu0
        %4148 = vdwg.mxu0
        %4149 = vmatpush.bf16.msra.mxu0 %v2924
        %4150 = vmatpush.bf16.msra.mxu0 %v2892
        %4151 = vmatpush.bf16.msra.mxu0 %v2860
        %4152 = vmatpush.bf16.msra.mxu0 %v2828
        %4153 = vmatpush.bf16.msra.mxu0 %v2796
        %4154 = vmatpush.bf16.msra.mxu0 %v2764
        %4155 = vmatpush.bf16.msra.mxu0 %v2732
        %4156 = vmatpush.bf16.msra.mxu0 %v2700
        %4157 = vmatmul.bf16.gmra.mxu0 %v1143
        %v4158 = vpop.f32.mrf.mxu0
        %v4159 = vadd.f32 %v1094, %v4158
        %v4160 = vpop.f32.mrf.mxu0
        %4161 = vdwg.mxu0
        %4162 = vmatpush.bf16.msra.mxu0 %v3180
        %4163 = vmatpush.bf16.msra.mxu0 %v3148
        %4164 = vmatpush.bf16.msra.mxu0 %v3116
        %4165 = vmatpush.bf16.msra.mxu0 %v3084
        %4166 = vmatpush.bf16.msra.mxu0 %v3052
        %4167 = vmatpush.bf16.msra.mxu0 %v3020
        %4168 = vmatpush.bf16.msra.mxu0 %v2988
        %4169 = vmatpush.bf16.msra.mxu0 %v2956
        %4170 = vmatmul.bf16.gmra.mxu0 %v1144
        %v4171 = vpop.f32.mrf.mxu0
        %v4172 = vadd.f32 %v4159, %v4171
        %v4173 = vpop.f32.mrf.mxu0
        %4174 = vdwg.mxu0
        %4175 = vmatpush.bf16.msra.mxu0 %v2925
        %4176 = vmatpush.bf16.msra.mxu0 %v2893
        %4177 = vmatpush.bf16.msra.mxu0 %v2861
        %4178 = vmatpush.bf16.msra.mxu0 %v2829
        %4179 = vmatpush.bf16.msra.mxu0 %v2797
        %4180 = vmatpush.bf16.msra.mxu0 %v2765
        %4181 = vmatpush.bf16.msra.mxu0 %v2733
        %4182 = vmatpush.bf16.msra.mxu0 %v2701
        %4183 = vmatmul.bf16.gmra.mxu0 %v1143
        %v4184 = vpop.f32.mrf.mxu0
        %v4185 = vadd.f32 %v1095, %v4184
        %v4186 = vpop.f32.mrf.mxu0
        %4187 = vdwg.mxu0
        %4188 = vmatpush.bf16.msra.mxu0 %v3181
        %4189 = vmatpush.bf16.msra.mxu0 %v3149
        %4190 = vmatpush.bf16.msra.mxu0 %v3117
        %4191 = vmatpush.bf16.msra.mxu0 %v3085
        %4192 = vmatpush.bf16.msra.mxu0 %v3053
        %4193 = vmatpush.bf16.msra.mxu0 %v3021
        %4194 = vmatpush.bf16.msra.mxu0 %v2989
        %4195 = vmatpush.bf16.msra.mxu0 %v2957
        %4196 = vmatmul.bf16.gmra.mxu0 %v1144
        %v4197 = vpop.f32.mrf.mxu0
        %v4198 = vadd.f32 %v4185, %v4197
        %v4199 = vpop.f32.mrf.mxu0
        %4200 = vdwg.mxu0
        %4201 = vmatpush.bf16.msra.mxu0 %v2926
        %4202 = vmatpush.bf16.msra.mxu0 %v2894
        %4203 = vmatpush.bf16.msra.mxu0 %v2862
        %4204 = vmatpush.bf16.msra.mxu0 %v2830
        %4205 = vmatpush.bf16.msra.mxu0 %v2798
        %4206 = vmatpush.bf16.msra.mxu0 %v2766
        %4207 = vmatpush.bf16.msra.mxu0 %v2734
        %4208 = vmatpush.bf16.msra.mxu0 %v2702
        %4209 = vmatmul.bf16.gmra.mxu0 %v1143
        %v4210 = vpop.f32.mrf.mxu0
        %v4211 = vadd.f32 %v1096, %v4210
        %v4212 = vpop.f32.mrf.mxu0
        %4213 = vdwg.mxu0
        %4214 = vmatpush.bf16.msra.mxu0 %v3182
        %4215 = vmatpush.bf16.msra.mxu0 %v3150
        %4216 = vmatpush.bf16.msra.mxu0 %v3118
        %4217 = vmatpush.bf16.msra.mxu0 %v3086
        %4218 = vmatpush.bf16.msra.mxu0 %v3054
        %4219 = vmatpush.bf16.msra.mxu0 %v3022
        %4220 = vmatpush.bf16.msra.mxu0 %v2990
        %4221 = vmatpush.bf16.msra.mxu0 %v2958
        %4222 = vmatmul.bf16.gmra.mxu0 %v1144
        %v4223 = vpop.f32.mrf.mxu0
        %v4224 = vadd.f32 %v4211, %v4223
        %v4225 = vpop.f32.mrf.mxu0
        %4226 = vdwg.mxu0
        %4227 = vmatpush.bf16.msra.mxu0 %v2927
        %4228 = vmatpush.bf16.msra.mxu0 %v2895
        %4229 = vmatpush.bf16.msra.mxu0 %v2863
        %4230 = vmatpush.bf16.msra.mxu0 %v2831
        %4231 = vmatpush.bf16.msra.mxu0 %v2799
        %4232 = vmatpush.bf16.msra.mxu0 %v2767
        %4233 = vmatpush.bf16.msra.mxu0 %v2735
        %4234 = vmatpush.bf16.msra.mxu0 %v2703
        %4235 = vmatmul.bf16.gmra.mxu0 %v1143
        %v4236 = vpop.f32.mrf.mxu0
        %v4237 = vadd.f32 %v1097, %v4236
        %v4238 = vpop.f32.mrf.mxu0
        %4239 = vdwg.mxu0
        %4240 = vmatpush.bf16.msra.mxu0 %v3183
        %4241 = vmatpush.bf16.msra.mxu0 %v3151
        %4242 = vmatpush.bf16.msra.mxu0 %v3119
        %4243 = vmatpush.bf16.msra.mxu0 %v3087
        %4244 = vmatpush.bf16.msra.mxu0 %v3055
        %4245 = vmatpush.bf16.msra.mxu0 %v3023
        %4246 = vmatpush.bf16.msra.mxu0 %v2991
        %4247 = vmatpush.bf16.msra.mxu0 %v2959
        %4248 = vmatmul.bf16.gmra.mxu0 %v1144
        %v4249 = vpop.f32.mrf.mxu0
        %v4250 = vadd.f32 %v4237, %v4249
        %v4251 = vpop.f32.mrf.mxu0
        %4252 = vdwg.mxu0
        %4253 = vmatpush.bf16.msra.mxu0 %v2928
        %4254 = vmatpush.bf16.msra.mxu0 %v2896
        %4255 = vmatpush.bf16.msra.mxu0 %v2864
        %4256 = vmatpush.bf16.msra.mxu0 %v2832
        %4257 = vmatpush.bf16.msra.mxu0 %v2800
        %4258 = vmatpush.bf16.msra.mxu0 %v2768
        %4259 = vmatpush.bf16.msra.mxu0 %v2736
        %4260 = vmatpush.bf16.msra.mxu0 %v2704
        %4261 = vmatmul.bf16.gmra.mxu0 %v1143
        %v4262 = vpop.f32.mrf.mxu0
        %v4263 = vadd.f32 %v1098, %v4262
        %v4264 = vpop.f32.mrf.mxu0
        %4265 = vdwg.mxu0
        %4266 = vmatpush.bf16.msra.mxu0 %v3184
        %4267 = vmatpush.bf16.msra.mxu0 %v3152
        %4268 = vmatpush.bf16.msra.mxu0 %v3120
        %4269 = vmatpush.bf16.msra.mxu0 %v3088
        %4270 = vmatpush.bf16.msra.mxu0 %v3056
        %4271 = vmatpush.bf16.msra.mxu0 %v3024
        %4272 = vmatpush.bf16.msra.mxu0 %v2992
        %4273 = vmatpush.bf16.msra.mxu0 %v2960
        %4274 = vmatmul.bf16.gmra.mxu0 %v1144
        %v4275 = vpop.f32.mrf.mxu0
        %v4276 = vadd.f32 %v4263, %v4275
        %v4277 = vpop.f32.mrf.mxu0
        %4278 = vdwg.mxu0
        %4279 = vmatpush.bf16.msra.mxu0 %v2929
        %4280 = vmatpush.bf16.msra.mxu0 %v2897
        %4281 = vmatpush.bf16.msra.mxu0 %v2865
        %4282 = vmatpush.bf16.msra.mxu0 %v2833
        %4283 = vmatpush.bf16.msra.mxu0 %v2801
        %4284 = vmatpush.bf16.msra.mxu0 %v2769
        %4285 = vmatpush.bf16.msra.mxu0 %v2737
        %4286 = vmatpush.bf16.msra.mxu0 %v2705
        %4287 = vmatmul.bf16.gmra.mxu0 %v1143
        %v4288 = vpop.f32.mrf.mxu0
        %v4289 = vadd.f32 %v1099, %v4288
        %v4290 = vpop.f32.mrf.mxu0
        %4291 = vdwg.mxu0
        %4292 = vmatpush.bf16.msra.mxu0 %v3185
        %4293 = vmatpush.bf16.msra.mxu0 %v3153
        %4294 = vmatpush.bf16.msra.mxu0 %v3121
        %4295 = vmatpush.bf16.msra.mxu0 %v3089
        %4296 = vmatpush.bf16.msra.mxu0 %v3057
        %4297 = vmatpush.bf16.msra.mxu0 %v3025
        %4298 = vmatpush.bf16.msra.mxu0 %v2993
        %4299 = vmatpush.bf16.msra.mxu0 %v2961
        %4300 = vmatmul.bf16.gmra.mxu0 %v1144
        %v4301 = vpop.f32.mrf.mxu0
        %v4302 = vadd.f32 %v4289, %v4301
        %v4303 = vpop.f32.mrf.mxu0
        %4304 = vdwg.mxu0
        %4305 = vmatpush.bf16.msra.mxu0 %v2930
        %4306 = vmatpush.bf16.msra.mxu0 %v2898
        %4307 = vmatpush.bf16.msra.mxu0 %v2866
        %4308 = vmatpush.bf16.msra.mxu0 %v2834
        %4309 = vmatpush.bf16.msra.mxu0 %v2802
        %4310 = vmatpush.bf16.msra.mxu0 %v2770
        %4311 = vmatpush.bf16.msra.mxu0 %v2738
        %4312 = vmatpush.bf16.msra.mxu0 %v2706
        %4313 = vmatmul.bf16.gmra.mxu0 %v1143
        %v4314 = vpop.f32.mrf.mxu0
        %v4315 = vadd.f32 %v1100, %v4314
        %v4316 = vpop.f32.mrf.mxu0
        %4317 = vdwg.mxu0
        %4318 = vmatpush.bf16.msra.mxu0 %v3186
        %4319 = vmatpush.bf16.msra.mxu0 %v3154
        %4320 = vmatpush.bf16.msra.mxu0 %v3122
        %4321 = vmatpush.bf16.msra.mxu0 %v3090
        %4322 = vmatpush.bf16.msra.mxu0 %v3058
        %4323 = vmatpush.bf16.msra.mxu0 %v3026
        %4324 = vmatpush.bf16.msra.mxu0 %v2994
        %4325 = vmatpush.bf16.msra.mxu0 %v2962
        %4326 = vmatmul.bf16.gmra.mxu0 %v1144
        %v4327 = vpop.f32.mrf.mxu0
        %v4328 = vadd.f32 %v4315, %v4327
        %v4329 = vpop.f32.mrf.mxu0
        %4330 = vdwg.mxu0
        %4331 = vmatpush.bf16.msra.mxu0 %v2931
        %4332 = vmatpush.bf16.msra.mxu0 %v2899
        %4333 = vmatpush.bf16.msra.mxu0 %v2867
        %4334 = vmatpush.bf16.msra.mxu0 %v2835
        %4335 = vmatpush.bf16.msra.mxu0 %v2803
        %4336 = vmatpush.bf16.msra.mxu0 %v2771
        %4337 = vmatpush.bf16.msra.mxu0 %v2739
        %4338 = vmatpush.bf16.msra.mxu0 %v2707
        %4339 = vmatmul.bf16.gmra.mxu0 %v1143
        %v4340 = vpop.f32.mrf.mxu0
        %v4341 = vadd.f32 %v1101, %v4340
        %v4342 = vpop.f32.mrf.mxu0
        %4343 = vdwg.mxu0
        %4344 = vmatpush.bf16.msra.mxu0 %v3187
        %4345 = vmatpush.bf16.msra.mxu0 %v3155
        %4346 = vmatpush.bf16.msra.mxu0 %v3123
        %4347 = vmatpush.bf16.msra.mxu0 %v3091
        %4348 = vmatpush.bf16.msra.mxu0 %v3059
        %4349 = vmatpush.bf16.msra.mxu0 %v3027
        %4350 = vmatpush.bf16.msra.mxu0 %v2995
        %4351 = vmatpush.bf16.msra.mxu0 %v2963
        %4352 = vmatmul.bf16.gmra.mxu0 %v1144
        %v4353 = vpop.f32.mrf.mxu0
        %v4354 = vadd.f32 %v4341, %v4353
        %v4355 = vpop.f32.mrf.mxu0
        %4356 = vdwg.mxu0
        %4357 = vmatpush.bf16.msra.mxu0 %v2932
        %4358 = vmatpush.bf16.msra.mxu0 %v2900
        %4359 = vmatpush.bf16.msra.mxu0 %v2868
        %4360 = vmatpush.bf16.msra.mxu0 %v2836
        %4361 = vmatpush.bf16.msra.mxu0 %v2804
        %4362 = vmatpush.bf16.msra.mxu0 %v2772
        %4363 = vmatpush.bf16.msra.mxu0 %v2740
        %4364 = vmatpush.bf16.msra.mxu0 %v2708
        %4365 = vmatmul.bf16.gmra.mxu0 %v1143
        %v4366 = vpop.f32.mrf.mxu0
        %v4367 = vadd.f32 %v1102, %v4366
        %v4368 = vpop.f32.mrf.mxu0
        %4369 = vdwg.mxu0
        %4370 = vmatpush.bf16.msra.mxu0 %v3188
        %4371 = vmatpush.bf16.msra.mxu0 %v3156
        %4372 = vmatpush.bf16.msra.mxu0 %v3124
        %4373 = vmatpush.bf16.msra.mxu0 %v3092
        %4374 = vmatpush.bf16.msra.mxu0 %v3060
        %4375 = vmatpush.bf16.msra.mxu0 %v3028
        %4376 = vmatpush.bf16.msra.mxu0 %v2996
        %4377 = vmatpush.bf16.msra.mxu0 %v2964
        %4378 = vmatmul.bf16.gmra.mxu0 %v1144
        %v4379 = vpop.f32.mrf.mxu0
        %v4380 = vadd.f32 %v4367, %v4379
        %v4381 = vpop.f32.mrf.mxu0
        %4382 = vdwg.mxu0
        %4383 = vmatpush.bf16.msra.mxu0 %v2933
        %4384 = vmatpush.bf16.msra.mxu0 %v2901
        %4385 = vmatpush.bf16.msra.mxu0 %v2869
        %4386 = vmatpush.bf16.msra.mxu0 %v2837
        %4387 = vmatpush.bf16.msra.mxu0 %v2805
        %4388 = vmatpush.bf16.msra.mxu0 %v2773
        %4389 = vmatpush.bf16.msra.mxu0 %v2741
        %4390 = vmatpush.bf16.msra.mxu0 %v2709
        %4391 = vmatmul.bf16.gmra.mxu0 %v1143
        %v4392 = vpop.f32.mrf.mxu0
        %v4393 = vadd.f32 %v1103, %v4392
        %v4394 = vpop.f32.mrf.mxu0
        %4395 = vdwg.mxu0
        %4396 = vmatpush.bf16.msra.mxu0 %v3189
        %4397 = vmatpush.bf16.msra.mxu0 %v3157
        %4398 = vmatpush.bf16.msra.mxu0 %v3125
        %4399 = vmatpush.bf16.msra.mxu0 %v3093
        %4400 = vmatpush.bf16.msra.mxu0 %v3061
        %4401 = vmatpush.bf16.msra.mxu0 %v3029
        %4402 = vmatpush.bf16.msra.mxu0 %v2997
        %4403 = vmatpush.bf16.msra.mxu0 %v2965
        %4404 = vmatmul.bf16.gmra.mxu0 %v1144
        %v4405 = vpop.f32.mrf.mxu0
        %v4406 = vadd.f32 %v4393, %v4405
        %v4407 = vpop.f32.mrf.mxu0
        %4408 = vdwg.mxu0
        %4409 = vmatpush.bf16.msra.mxu0 %v2934
        %4410 = vmatpush.bf16.msra.mxu0 %v2902
        %4411 = vmatpush.bf16.msra.mxu0 %v2870
        %4412 = vmatpush.bf16.msra.mxu0 %v2838
        %4413 = vmatpush.bf16.msra.mxu0 %v2806
        %4414 = vmatpush.bf16.msra.mxu0 %v2774
        %4415 = vmatpush.bf16.msra.mxu0 %v2742
        %4416 = vmatpush.bf16.msra.mxu0 %v2710
        %4417 = vmatmul.bf16.gmra.mxu0 %v1143
        %v4418 = vpop.f32.mrf.mxu0
        %v4419 = vadd.f32 %v1104, %v4418
        %v4420 = vpop.f32.mrf.mxu0
        %4421 = vdwg.mxu0
        %4422 = vmatpush.bf16.msra.mxu0 %v3190
        %4423 = vmatpush.bf16.msra.mxu0 %v3158
        %4424 = vmatpush.bf16.msra.mxu0 %v3126
        %4425 = vmatpush.bf16.msra.mxu0 %v3094
        %4426 = vmatpush.bf16.msra.mxu0 %v3062
        %4427 = vmatpush.bf16.msra.mxu0 %v3030
        %4428 = vmatpush.bf16.msra.mxu0 %v2998
        %4429 = vmatpush.bf16.msra.mxu0 %v2966
        %4430 = vmatmul.bf16.gmra.mxu0 %v1144
        %v4431 = vpop.f32.mrf.mxu0
        %v4432 = vadd.f32 %v4419, %v4431
        %v4433 = vpop.f32.mrf.mxu0
        %4434 = vdwg.mxu0
        %4435 = vmatpush.bf16.msra.mxu0 %v2935
        %4436 = vmatpush.bf16.msra.mxu0 %v2903
        %4437 = vmatpush.bf16.msra.mxu0 %v2871
        %4438 = vmatpush.bf16.msra.mxu0 %v2839
        %4439 = vmatpush.bf16.msra.mxu0 %v2807
        %4440 = vmatpush.bf16.msra.mxu0 %v2775
        %4441 = vmatpush.bf16.msra.mxu0 %v2743
        %4442 = vmatpush.bf16.msra.mxu0 %v2711
        %4443 = vmatmul.bf16.gmra.mxu0 %v1143
        %v4444 = vpop.f32.mrf.mxu0
        %v4445 = vadd.f32 %v1105, %v4444
        %v4446 = vpop.f32.mrf.mxu0
        %4447 = vdwg.mxu0
        %4448 = vmatpush.bf16.msra.mxu0 %v3191
        %4449 = vmatpush.bf16.msra.mxu0 %v3159
        %4450 = vmatpush.bf16.msra.mxu0 %v3127
        %4451 = vmatpush.bf16.msra.mxu0 %v3095
        %4452 = vmatpush.bf16.msra.mxu0 %v3063
        %4453 = vmatpush.bf16.msra.mxu0 %v3031
        %4454 = vmatpush.bf16.msra.mxu0 %v2999
        %4455 = vmatpush.bf16.msra.mxu0 %v2967
        %4456 = vmatmul.bf16.gmra.mxu0 %v1144
        %v4457 = vpop.f32.mrf.mxu0
        %v4458 = vadd.f32 %v4445, %v4457
        %v4459 = vpop.f32.mrf.mxu0
        %4460 = vdwg.mxu0
        %4461 = vmatpush.bf16.msra.mxu0 %v2936
        %4462 = vmatpush.bf16.msra.mxu0 %v2904
        %4463 = vmatpush.bf16.msra.mxu0 %v2872
        %4464 = vmatpush.bf16.msra.mxu0 %v2840
        %4465 = vmatpush.bf16.msra.mxu0 %v2808
        %4466 = vmatpush.bf16.msra.mxu0 %v2776
        %4467 = vmatpush.bf16.msra.mxu0 %v2744
        %4468 = vmatpush.bf16.msra.mxu0 %v2712
        %4469 = vmatmul.bf16.gmra.mxu0 %v1143
        %v4470 = vpop.f32.mrf.mxu0
        %v4471 = vadd.f32 %v1106, %v4470
        %v4472 = vpop.f32.mrf.mxu0
        %4473 = vdwg.mxu0
        %4474 = vmatpush.bf16.msra.mxu0 %v3192
        %4475 = vmatpush.bf16.msra.mxu0 %v3160
        %4476 = vmatpush.bf16.msra.mxu0 %v3128
        %4477 = vmatpush.bf16.msra.mxu0 %v3096
        %4478 = vmatpush.bf16.msra.mxu0 %v3064
        %4479 = vmatpush.bf16.msra.mxu0 %v3032
        %4480 = vmatpush.bf16.msra.mxu0 %v3000
        %4481 = vmatpush.bf16.msra.mxu0 %v2968
        %4482 = vmatmul.bf16.gmra.mxu0 %v1144
        %v4483 = vpop.f32.mrf.mxu0
        %v4484 = vadd.f32 %v4471, %v4483
        %v4485 = vpop.f32.mrf.mxu0
        %4486 = vdwg.mxu0
        %4487 = vmatpush.bf16.msra.mxu0 %v2937
        %4488 = vmatpush.bf16.msra.mxu0 %v2905
        %4489 = vmatpush.bf16.msra.mxu0 %v2873
        %4490 = vmatpush.bf16.msra.mxu0 %v2841
        %4491 = vmatpush.bf16.msra.mxu0 %v2809
        %4492 = vmatpush.bf16.msra.mxu0 %v2777
        %4493 = vmatpush.bf16.msra.mxu0 %v2745
        %4494 = vmatpush.bf16.msra.mxu0 %v2713
        %4495 = vmatmul.bf16.gmra.mxu0 %v1143
        %v4496 = vpop.f32.mrf.mxu0
        %v4497 = vadd.f32 %v1107, %v4496
        %v4498 = vpop.f32.mrf.mxu0
        %4499 = vdwg.mxu0
        %4500 = vmatpush.bf16.msra.mxu0 %v3193
        %4501 = vmatpush.bf16.msra.mxu0 %v3161
        %4502 = vmatpush.bf16.msra.mxu0 %v3129
        %4503 = vmatpush.bf16.msra.mxu0 %v3097
        %4504 = vmatpush.bf16.msra.mxu0 %v3065
        %4505 = vmatpush.bf16.msra.mxu0 %v3033
        %4506 = vmatpush.bf16.msra.mxu0 %v3001
        %4507 = vmatpush.bf16.msra.mxu0 %v2969
        %4508 = vmatmul.bf16.gmra.mxu0 %v1144
        %v4509 = vpop.f32.mrf.mxu0
        %v4510 = vadd.f32 %v4497, %v4509
        %v4511 = vpop.f32.mrf.mxu0
        %4512 = vdwg.mxu0
        %4513 = vmatpush.bf16.msra.mxu0 %v2938
        %4514 = vmatpush.bf16.msra.mxu0 %v2906
        %4515 = vmatpush.bf16.msra.mxu0 %v2874
        %4516 = vmatpush.bf16.msra.mxu0 %v2842
        %4517 = vmatpush.bf16.msra.mxu0 %v2810
        %4518 = vmatpush.bf16.msra.mxu0 %v2778
        %4519 = vmatpush.bf16.msra.mxu0 %v2746
        %4520 = vmatpush.bf16.msra.mxu0 %v2714
        %4521 = vmatmul.bf16.gmra.mxu0 %v1143
        %v4522 = vpop.f32.mrf.mxu0
        %v4523 = vadd.f32 %v1108, %v4522
        %v4524 = vpop.f32.mrf.mxu0
        %4525 = vdwg.mxu0
        %4526 = vmatpush.bf16.msra.mxu0 %v3194
        %4527 = vmatpush.bf16.msra.mxu0 %v3162
        %4528 = vmatpush.bf16.msra.mxu0 %v3130
        %4529 = vmatpush.bf16.msra.mxu0 %v3098
        %4530 = vmatpush.bf16.msra.mxu0 %v3066
        %4531 = vmatpush.bf16.msra.mxu0 %v3034
        %4532 = vmatpush.bf16.msra.mxu0 %v3002
        %4533 = vmatpush.bf16.msra.mxu0 %v2970
        %4534 = vmatmul.bf16.gmra.mxu0 %v1144
        %v4535 = vpop.f32.mrf.mxu0
        %v4536 = vadd.f32 %v4523, %v4535
        %v4537 = vpop.f32.mrf.mxu0
        %4538 = vdwg.mxu0
        %v4571 = vrot.slane %v3756, 6
        %v4572 = vrot.slane %v3782, 4
        %v4573 = vrot.slane %v3808, 2
        %v4574 = vrot.slane %v3860, 6
        %v4575 = vrot.slane %v3886, 4
        %v4576 = vrot.slane %v3912, 2
        %v4577 = vrot.slane %v3964, 6
        %v4578 = vrot.slane %v3990, 4
        %v4579 = vrot.slane %v4016, 2
        %v4580 = vrot.slane %v4068, 6
        %v4581 = vrot.slane %v4094, 4
        %v4582 = vrot.slane %v4120, 2
        %v4583 = vrot.slane %v4172, 6
        %v4584 = vrot.slane %v4198, 4
        %v4585 = vrot.slane %v4224, 2
        %v4586 = vrot.slane %v4276, 6
        %v4587 = vrot.slane %v4302, 4
        %v4588 = vrot.slane %v4328, 2
        %v4589 = vrot.slane %v4380, 6
        %v4590 = vrot.slane %v4406, 4
        %v4591 = vrot.slane %v4432, 2
        %v4592 = vrot.slane %v4484, 6
        %v4593 = vrot.slane %v4510, 4
        %v4594 = vrot.slane %v4536, 2
        %vm4595 = vcmask 1041408
        %v4596 = vsel %vm4595, %v3730, %v4571
        %vm4597 = vcmask 1045508
        %v4598 = vsel %vm4597, %v4572, %v4573
        %vm4599 = vcmask 1043456
        %v4600 = vsel %vm4599, %v4596, %v4598
        %v4601 = vsel %vm4595, %v3834, %v4574
        %v4602 = vsel %vm4597, %v4575, %v4576
        %v4603 = vsel %vm4599, %v4601, %v4602
        %v4604 = vsel %vm4595, %v3938, %v4577
        %v4605 = vsel %vm4597, %v4578, %v4579
        %v4606 = vsel %vm4599, %v4604, %v4605
        %v4607 = vsel %vm4595, %v4042, %v4580
        %v4608 = vsel %vm4597, %v4581, %v4582
        %v4609 = vsel %vm4599, %v4607, %v4608
        %v4610 = vsel %vm4595, %v4146, %v4583
        %v4611 = vsel %vm4597, %v4584, %v4585
        %v4612 = vsel %vm4599, %v4610, %v4611
        %v4613 = vsel %vm4595, %v4250, %v4586
        %v4614 = vsel %vm4597, %v4587, %v4588
        %v4615 = vsel %vm4599, %v4613, %v4614
        %v4616 = vsel %vm4595, %v4354, %v4589
        %v4617 = vsel %vm4597, %v4590, %v4591
        %v4618 = vsel %vm4599, %v4616, %v4617
        %v4619 = vsel %vm4595, %v4458, %v4592
        %v4620 = vsel %vm4597, %v4593, %v4594
        %v4621 = vsel %vm4599, %v4619, %v4620
        %4630 = vst [vmem:[%s534] sm:$0xff] %v4600
        %4631 = vst [vmem:[%s534 + $0x8] sm:$0xff] %v4603
        %4632 = vst [vmem:[%s534 + $0x10] sm:$0xff] %v4606
        %4633 = vst [vmem:[%s534 + $0x18] sm:$0xff] %v4609
        %4634 = vst [vmem:[%s534 + $0x20] sm:$0xff] %v4612
        %4635 = vst [vmem:[%s534 + $0x28] sm:$0xff] %v4615
        %4636 = vst [vmem:[%s534 + $0x30] sm:$0xff] %v4618
        %4637 = vst [vmem:[%s534 + $0x38] sm:$0xff] %v4621
        %s4638 = sand.u32 %s98, 1
        %s4639 = scalar_lea.sflag [#allocation4], %s4638
        %s4640 = sand.u32 %s98, 1
        %s4641 = smul.addr %s4640, 64
        %s4642 = scalar_lea.vmem [#allocation3], %s4641
        // Predicated region
        $region85: #{gnn_plus_forward.3} parent=79 // pred_check
          %p4643 = pneg %p108
        $region86: #{gnn_plus_forward.3} parent=79 // pred_check_branch
          %4645 = sbr.rel (%p4643) target = $region88
        $region87: #{gnn_plus_forward.3} parent=79 // pred_region
          %s4646 = smul.u32 32, %s17
          %s4647 = ssub.s32 299, %s4646
          %p4648 = scmp.lt.s32.totalorder %s4647, 32
          %s4649 = scalar_select %p4648, %s4647, 32
          %s4650 = smul.u32 2, %s4649
          %s4651 = ssub.s32 64, %s4650
          %s4652 = sshll.u32 %s4651, 4
          %4653 = vsyncadd %s4639, %s4652
          %p4654 = scmp.ne.s32.totalorder 0, %s4650
          %s4655 = smul.addr %s4646, 2
          %s4656 = scalar_lea.hbm %s3, %s4655
          %s4657 = smul.u32 %s4649, 2
          %s4658 = sshll.u32 %s4657, 4
          %s4659 = sshll.u32 %s4642, 4
          %s4660 = int_to_ptr.vmem [resolvable:$true] %s4659
          %s4661 = sshll.u32 %s4656, 4
          %s4662 = int_to_ptr.hbm [resolvable:$true] %s4661
          %4664 = dma.vmem_to_hbm [thread:$0]  (%p4654), %s4660, %s4658, %s4662, %s4639
        $region88: #{gnn_plus_forward.3} parent=79 // pred_fallthru
          _
      $region80: #{gnn_plus_forward.3} parent=5 // pred_fallthru
        _
      %p4665 = scmp.le.s32.totalorder 2, %s12
      // Predicated region
      $region89: #{gnn_plus_forward.3} parent=5 // pred_check
        %p4666 = pneg %p4665
      $region90: #{gnn_plus_forward.3} parent=5 // pred_check_branch
        %4668 = sbr.rel (%p4666) target = $region92
      $region91: #{gnn_plus_forward.3} parent=5 // pred_region
        %s4669 = ssub.s32 %s12, 2
        // Predicated region
        $region93: #{gnn_plus_forward.3} parent=91 // pred_check
          %p4670 = pneg %p114
        $region94: #{gnn_plus_forward.3} parent=91 // pred_check_branch
          %4672 = sbr.rel (%p4670) target = $region96
        $region95: #{gnn_plus_forward.3} parent=91 // pred_region
          %s4673 = sand.u32 %s99, 1
          %s4674 = scalar_lea.sflag [#allocation4], %s4673
          %s4675 = sand.u32 %s99, 1
          %s4676 = smul.addr %s4675, 64
          %s4677 = scalar_lea.vmem [#allocation3], %s4676
          %4679 = dma.done %s4674, 1024
        $region96: #{gnn_plus_forward.3} parent=91 // pred_fallthru
          _
      $region92: #{gnn_plus_forward.3} parent=5 // pred_fallthru
        _
    $region6: #{gnn_plus_forward.3} parent=1 // loop_footer
      %s16 = sadd.s32 1, %s12
    $region7: #{gnn_plus_forward.3} parent=1 // loop_footer_branch
      %11 = sbr.rel target = $region3
    $region8: #{gnn_plus_forward.3} parent=1 // loop_exit
      _
    %4680 = vsyncpa [#allocation4], 1
    %s4681 = scalar_lea.sflag [#allocation4], 1
    %4682 = vsyncpa %s4681, 1

</llo_original>
